<compile_context>
chip_gen: v5e
topology: v5e:2x2
jax: 0.10.0
libtpu: 0.0.40
codegen_flags: <defaults>
</compile_context>

<pallas_src>
import functools

import jax
import jax.numpy as jnp
from jax.experimental import pallas as pl
from jax.experimental.pallas import tpu as pltpu

EPS = 1e-5       # PyTorch GroupNorm default eps
GROUPS = 8


# ------------------------------- in-kernel helpers -----------------------------------
def _silu(x):
    return x * jax.nn.sigmoid(x)


def _zero_halo(pad_ref, H, W, C):
    """Zero only the 1-px border of a (H+2, W+2, C) pad scratch."""
    zrow = jnp.zeros((1, W + 2, C), jnp.float32)
    zcol = jnp.zeros((H + 2, 1, C), jnp.float32)
    pad_ref[0:1, :, :] = zrow
    pad_ref[H + 1:H + 2, :, :] = zrow
    pad_ref[:, 0:1, :] = zcol
    pad_ref[:, W + 1:W + 2, :] = zcol


def _conv3x3(pad_ref, w_ref, b, H, W):
    """3x3 conv (input already zero-padded in pad_ref) as 3 accumulating 2D matmuls.

    pad_ref : (H+2, W+2, Cin) VMEM scratch holding the padded input.
    w_ref   : (3, 3*Cin, Cout) weights, row order within each ky is (kx, cin).
    b       : (1, Cout) bias.
    Returns (H*W, Cout) f32.
    """
    acc = None
    for dy in range(3):
        # dx-tap concat only (K = 3*Cin), flattened spatial as the matmul M dim.
        patch = jnp.concatenate(
            [pad_ref[pl.ds(dy, H), pl.ds(dx, W), :] for dx in range(3)], axis=-1)
        patch2d = patch.reshape(H * W, patch.shape[-1])
        part = jax.lax.dot_general(
            patch2d, w_ref[dy], (((1,), (0,)), ((), ())),
            preferred_element_type=jnp.float32)
        acc = part if acc is None else acc + part
    return acc + b


def _group_norm(x, gamma, beta, gmat, inv_cnt):
    """x: (M, C); gamma/beta: (1, C); gmat: (C, C) same-group indicator matrix.

    One tiny indicator matmul mixes per-channel sums into per-group sums broadcast
    back over channels (kept as a matmul for lowering robustness).
    """
    s = jnp.sum(x, axis=0, keepdims=True)          # (1, C)
    ssq = jnp.sum(x * x, axis=0, keepdims=True)    # (1, C)
    stats = jnp.concatenate([s, ssq], axis=0)      # (2, C)
    gstats = jax.lax.dot_general(
        stats, gmat, (((1,), (0,)), ((), ())), preferred_element_type=jnp.float32)
    mean = gstats[0:1] * inv_cnt                   # (1, C)
    ex2 = gstats[1:2] * inv_cnt                    # (1, C)
    var = jnp.maximum(ex2 - mean * mean, 0.0)      # clamp: single-pass var can dip < 0
    inv = jax.lax.rsqrt(var + EPS)
    return (x - mean) * inv * gamma + beta


# ------------------------------- fused Down kernel ------------------------------------
def _down_kernel(H, W, Cin, Cout,
                 x_ref, w1_ref, b1_ref, g1_ref, be1_ref,
                 w2_ref, b2_ref, g2_ref, be2_ref, gmat_ref,
                 o_conv_ref, o_down_ref, pad1_ref, pad2_ref):
    gs = Cout // GROUPS
    inv_cnt = 1.0 / float(H * W * gs)
    gmat = gmat_ref[...]

    # ---- conv1 input: zero-pad fully in-kernel (halo only; interior overwritten) ----
    _zero_halo(pad1_ref, H, W, Cin)
    pad1_ref[pl.ds(1, H), pl.ds(1, W), :] = x_ref[0]

    # ---- conv1 (3 matmuls, K = 3*Cin) -> GroupNorm -> SiLU ----
    acc1 = _conv3x3(pad1_ref, w1_ref, b1_ref[...], H, W)            # (H*W, Cout)
    act1 = _silu(_group_norm(acc1, g1_ref[...], be1_ref[...], gmat, inv_cnt))

    # ---- conv2 input pad ----
    _zero_halo(pad2_ref, H, W, Cout)
    pad2_ref[pl.ds(1, H), pl.ds(1, W), :] = act1.reshape(H, W, Cout)

    # ---- conv2 (3 matmuls, K = 3*Cout) -> GroupNorm -> SiLU ----
    acc2 = _conv3x3(pad2_ref, w2_ref, b2_ref[...], H, W)            # (H*W, Cout)
    out2 = _silu(_group_norm(acc2, g2_ref[...], be2_ref[...], gmat, inv_cnt))
    out2_3d = out2.reshape(H, W, Cout)

    # ---- store x_conv (output block stays write-only) ----
    o_conv_ref[0] = out2_3d.astype(o_conv_ref.dtype)

    # ---- MaxPool2d(2): park out2 in pad2 (contents dead after conv2) and do
    #      stride-2 ref reads there instead of re-reading the output block. ----
    pad2_ref[pl.ds(1, H), pl.ds(1, W), :] = out2_3d
    Hh, Wh = H // 2, W // 2
    p00 = pad2_ref[pl.ds(1, Hh, 2), pl.ds(1, Wh, 2), :]
    p01 = pad2_ref[pl.ds(1, Hh, 2), pl.ds(2, Wh, 2), :]
    p10 = pad2_ref[pl.ds(2, Hh, 2), pl.ds(1, Wh, 2), :]
    p11 = pad2_ref[pl.ds(2, Hh, 2), pl.ds(2, Wh, 2), :]
    o_down_ref[0] = jnp.maximum(jnp.maximum(p00, p01),
                                jnp.maximum(p10, p11)).astype(o_down_ref.dtype)


def double_conv_pool(x_nhwc, w1, b1, g1, be1, w2, b2, g2, be2):
    """Fused DoubleConv + MaxPool2d(2) on NHWC input.

    w1: (Cout, Cin, 3, 3); w2: (Cout, Cout, 3, 3) (PyTorch OIHW layout).
    Returns (x_conv NHWC, x_down NHWC).
    """
    N, H, W, Cin = x_nhwc.shape
    Cout = w1.shape[0]
    assert Cout % GROUPS == 0 and H % 2 == 0 and W % 2 == 0

    # Small wrapper-side glue only (weight relayout + param reshapes); NO jnp.pad.
    # Weight rows per ky ordered (kx, cin) to match the in-kernel dx-tap concat.
    w1r = jnp.transpose(w1, (2, 3, 1, 0)).reshape(3, 3 * Cin, Cout)
    w2r = jnp.transpose(w2, (2, 3, 1, 0)).reshape(3, 3 * Cout, Cout)
    b1r, g1r, be1r = b1.reshape(1, Cout), g1.reshape(1, Cout), be1.reshape(1, Cout)
    b2r, g2r, be2r = b2.reshape(1, Cout), g2.reshape(1, Cout), be2.reshape(1, Cout)
    gidx = jnp.arange(Cout) // (Cout // GROUPS)
    gmat = (gidx[:, None] == gidx[None, :]).astype(jnp.float32)      # (Cout, Cout)

    kern = functools.partial(_down_kernel, H, W, Cin, Cout)
    vec_spec = pl.BlockSpec((1, Cout), lambda i: (0, 0))
    conv_out, down_out = pl.pallas_call(
        kern,
        grid=(N,),
        in_specs=[
            pl.BlockSpec((1, H, W, Cin), lambda i: (i, 0, 0, 0)),
            pl.BlockSpec((3, 3 * Cin, Cout), lambda i: (0, 0, 0)),
            vec_spec, vec_spec, vec_spec,
            pl.BlockSpec((3, 3 * Cout, Cout), lambda i: (0, 0, 0)),
            vec_spec, vec_spec, vec_spec,
            pl.BlockSpec((Cout, Cout), lambda i: (0, 0)),
        ],
        out_specs=[
            pl.BlockSpec((1, H, W, Cout), lambda i: (i, 0, 0, 0)),
            pl.BlockSpec((1, H // 2, W // 2, Cout), lambda i: (i, 0, 0, 0)),
        ],
        out_shape=[
            jax.ShapeDtypeStruct((N, H, W, Cout), jnp.float32),
            jax.ShapeDtypeStruct((N, H // 2, W // 2, Cout), jnp.float32),
        ],
        scratch_shapes=[
            pltpu.VMEM((H + 2, W + 2, Cin), jnp.float32),    # conv1 pad scratch
            pltpu.VMEM((H + 2, W + 2, Cout), jnp.float32),   # conv2 pad / pool scratch
        ],
        compiler_params=pltpu.CompilerParams(dimension_semantics=("parallel",)),
    )(x_nhwc, w1r, b1r, g1r, be1r, w2r, b2r, g2r, be2r, gmat)
    return conv_out, down_out


# ------------------------------- Down.forward -----------------------------------------
def down_forward(x_nchw, p):
    # NCHW public interface to match the PyTorch module; the transposes are wrapper
    # glue (drop them if the surrounding model stays NHWC).
    x = jnp.transpose(x_nchw, (0, 2, 3, 1)).astype(jnp.float32)      # NHWC
    conv_nhwc, down_nhwc = double_conv_pool(
        x,
        p["c1_w"], p["c1_b"], p["g1_w"], p["g1_b"],
        p["c2_w"], p["c2_b"], p["g2_w"], p["g2_b"])
    x_conv = jnp.transpose(conv_nhwc, (0, 3, 1, 2))                  # NCHW
    x_down = jnp.transpose(down_nhwc, (0, 3, 1, 2))
    return x_conv, x_down


# ------------------------------- pure-JAX reference ------------------------------------
def _gn_ref(x, gamma, beta):
    N, H, W, C = x.shape
    gs = C // GROUPS
    xr = x.reshape(N, H, W, GROUPS, gs)
    mean = xr.mean(axis=(1, 2, 4), keepdims=True)
    var = ((xr - mean) ** 2).mean(axis=(1, 2, 4), keepdims=True)
    xn = ((xr - mean) / jnp.sqrt(var + EPS)).reshape(N, H, W, C)
    return xn * gamma + beta


def _conv3x3_ref(x, w_oihw, b):
    w = jnp.transpose(w_oihw, (2, 3, 1, 0))  # HWIO
    y = jax.lax.conv_general_dilated(x, w, (1, 1), "SAME",
                                     dimension_numbers=("NHWC", "HWIO", "NHWC"))
    return y + b


def down_forward_ref(x_nchw, p):
    x = jnp.transpose(x_nchw, (0, 2, 3, 1)).astype(jnp.float32)
    h = jax.nn.silu(_gn_ref(_conv3x3_ref(x, p["c1_w"], p["c1_b"]), p["g1_w"], p["g1_b"]))
    h = jax.nn.silu(_gn_ref(_conv3x3_ref(h, p["c2_w"], p["c2_b"]), p["g2_w"], p["g2_b"]))
    N, H, W, C = h.shape
    pooled = h.reshape(N, H // 2, 2, W // 2, 2, C).max(axis=(2, 4))
    return jnp.transpose(h, (0, 3, 1, 2)), jnp.transpose(pooled, (0, 3, 1, 2))


# ------------------------------- main ---------------------------------------------------
if __name__ == "__main__":
    N = 2
    in_ch, out_ch = 16, 32          # out_ch must be divisible by GroupNorm's 8 groups
    H = W = 16

    key = jax.random.PRNGKey(0)
    ks = jax.random.split(key, 10)
    params = {
        "c1_w": jax.random.normal(ks[0], (out_ch, in_ch, 3, 3), jnp.float32) * 0.05,
        "c1_b": jax.random.normal(ks[1], (out_ch,), jnp.float32) * 0.05,
        "g1_w": 1.0 + 0.1 * jax.random.normal(ks[2], (out_ch,), jnp.float32),
        "g1_b": 0.1 * jax.random.normal(ks[3], (out_ch,), jnp.float32),
        "c2_w": jax.random.normal(ks[4], (out_ch, out_ch, 3, 3), jnp.float32) * 0.05,
        "c2_b": jax.random.normal(ks[5], (out_ch,), jnp.float32) * 0.05,
        "g2_w": 1.0 + 0.1 * jax.random.normal(ks[6], (out_ch,), jnp.float32),
        "g2_b": 0.1 * jax.random.normal(ks[7], (out_ch,), jnp.float32),
    }
    x = jax.random.normal(ks[8], (N, in_ch, H, W), jnp.float32)

    x_conv, x_down = down_forward(x, params)
    x_conv = jax.block_until_ready(x_conv)
    x_down = jax.block_until_ready(x_down)

    ref_conv, ref_down = down_forward_ref(x, params)
    ref_conv = jax.block_until_ready(ref_conv)
    ref_down = jax.block_until_ready(ref_down)

    assert x_conv.shape == (N, out_ch, H, W), x_conv.shape
    assert x_down.shape == (N, out_ch, H // 2, W // 2), x_down.shape
    assert jnp.allclose(x_conv, ref_conv, rtol=2e-3, atol=2e-3), \
        float(jnp.max(jnp.abs(x_conv - ref_conv)))
    assert jnp.allclose(x_down, ref_down, rtol=2e-3, atol=2e-3), \
        float(jnp.max(jnp.abs(x_down - ref_down)))

    print("KERNEL_OK")
</pallas_src>

<mosaic_0001>
module attributes {stable_mosaic.version = 11 : i64} {
  func.func @_down_kernel(%arg0: i32, %arg1: memref<1x16x16x16xf32, #tpu.memory_space<vmem>>, %arg2: memref<3x48x32xf32, #tpu.memory_space<vmem>>, %arg3: memref<1x32xf32, #tpu.memory_space<vmem>>, %arg4: memref<1x32xf32, #tpu.memory_space<vmem>>, %arg5: memref<1x32xf32, #tpu.memory_space<vmem>>, %arg6: memref<3x96x32xf32, #tpu.memory_space<vmem>>, %arg7: memref<1x32xf32, #tpu.memory_space<vmem>>, %arg8: memref<1x32xf32, #tpu.memory_space<vmem>>, %arg9: memref<1x32xf32, #tpu.memory_space<vmem>>, %arg10: memref<32x32xf32, #tpu.memory_space<vmem>>, %arg11: memref<1x16x16x32xf32, #tpu.memory_space<vmem>>, %arg12: memref<1x8x8x32xf32, #tpu.memory_space<vmem>>, %arg13: memref<18x18x16xf32, #tpu.memory_space<vmem>>, %arg14: memref<18x18x32xf32, #tpu.memory_space<vmem>>) attributes {dimension_semantics = [#tpu.dimension_semantics<parallel>], iteration_bounds = array<i64: 2>, scalar_prefetch = 0 : i64, scratch_operands = 2 : i64, tpu.core_type = #tpu.core_type<tc>, window_params = [{transform_indices = @transform_0, window_bounds = array<i64: 1, 16, 16, 16>}, {pipeline_mode = #tpu.pipeline_mode<synchronous>, transform_indices = @transform_1, window_bounds = array<i64: 3, 48, 32>}, {pipeline_mode = #tpu.pipeline_mode<synchronous>, transform_indices = @transform_2, window_bounds = array<i64: 1, 32>}, {pipeline_mode = #tpu.pipeline_mode<synchronous>, transform_indices = @transform_3, window_bounds = array<i64: 1, 32>}, {pipeline_mode = #tpu.pipeline_mode<synchronous>, transform_indices = @transform_4, window_bounds = array<i64: 1, 32>}, {pipeline_mode = #tpu.pipeline_mode<synchronous>, transform_indices = @transform_5, window_bounds = array<i64: 3, 96, 32>}, {pipeline_mode = #tpu.pipeline_mode<synchronous>, transform_indices = @transform_6, window_bounds = array<i64: 1, 32>}, {pipeline_mode = #tpu.pipeline_mode<synchronous>, transform_indices = @transform_7, window_bounds = array<i64: 1, 32>}, {pipeline_mode = #tpu.pipeline_mode<synchronous>, transform_indices = @transform_8, window_bounds = array<i64: 1, 32>}, {pipeline_mode = #tpu.pipeline_mode<synchronous>, transform_indices = @transform_9, window_bounds = array<i64: 32, 32>}, {transform_indices = @transform_10, window_bounds = array<i64: 1, 16, 16, 32>}, {transform_indices = @transform_11, window_bounds = array<i64: 1, 8, 8, 32>}]} {
    %c0 = arith.constant 0 : index
    %c0_0 = arith.constant 0 : index
    %0 = vector.load %arg10[%c0, %c0_0] : memref<32x32xf32, #tpu.memory_space<vmem>>, vector<32x32xf32>
    %cst = arith.constant 0.000000e+00 : f32
    %1 = vector.broadcast %cst : f32 to vector<1x18x16xf32>
    %cst_1 = arith.constant 0.000000e+00 : f32
    %2 = vector.broadcast %cst_1 : f32 to vector<18x1x16xf32>
    %c0_2 = arith.constant 0 : index
    %c0_3 = arith.constant 0 : index
    %c0_4 = arith.constant 0 : index
    %3 = vector.load %arg13[%c0_2, %c0_3, %c0_4] : memref<18x18x16xf32, #tpu.memory_space<vmem>>, vector<1x18x16xf32>
    tpu.vector_store %arg13[%c0_2, %c0_3, %c0_4], %1 {strides = array<i32>} : memref<18x18x16xf32, #tpu.memory_space<vmem>>, vector<1x18x16xf32>,
    %c17 = arith.constant 17 : index
    %c0_5 = arith.constant 0 : index
    %c0_6 = arith.constant 0 : index
    %4 = vector.load %arg13[%c17, %c0_5, %c0_6] : memref<18x18x16xf32, #tpu.memory_space<vmem>>, vector<1x18x16xf32>
    tpu.vector_store %arg13[%c17, %c0_5, %c0_6], %1 {strides = array<i32>} : memref<18x18x16xf32, #tpu.memory_space<vmem>>, vector<1x18x16xf32>,
    %c0_7 = arith.constant 0 : index
    %c0_8 = arith.constant 0 : index
    %c0_9 = arith.constant 0 : index
    %5 = vector.load %arg13[%c0_7, %c0_8, %c0_9] : memref<18x18x16xf32, #tpu.memory_space<vmem>>, vector<18x1x16xf32>
    tpu.vector_store %arg13[%c0_7, %c0_8, %c0_9], %2 {strides = array<i32>} : memref<18x18x16xf32, #tpu.memory_space<vmem>>, vector<18x1x16xf32>,
    %c0_10 = arith.constant 0 : index
    %c17_11 = arith.constant 17 : index
    %c0_12 = arith.constant 0 : index
    %6 = vector.load %arg13[%c0_10, %c17_11, %c0_12] : memref<18x18x16xf32, #tpu.memory_space<vmem>>, vector<18x1x16xf32>
    tpu.vector_store %arg13[%c0_10, %c17_11, %c0_12], %2 {strides = array<i32>} : memref<18x18x16xf32, #tpu.memory_space<vmem>>, vector<18x1x16xf32>,
    %c0_13 = arith.constant 0 : index
    %c0_14 = arith.constant 0 : index
    %c0_15 = arith.constant 0 : index
    %c0_16 = arith.constant 0 : index
    %7 = vector.load %arg1[%c0_13, %c0_14, %c0_15, %c0_16] : memref<1x16x16x16xf32, #tpu.memory_space<vmem>>, vector<1x16x16x16xf32>
    %8 = vector.shape_cast %7 : vector<1x16x16x16xf32> to vector<16x16x16xf32>
    %c1 = arith.constant 1 : index
    %c1_17 = arith.constant 1 : index
    %c0_18 = arith.constant 0 : index
    %9 = vector.load %arg13[%c1, %c1_17, %c0_18] : memref<18x18x16xf32, #tpu.memory_space<vmem>>, vector<16x16x16xf32>
    tpu.vector_store %arg13[%c1, %c1_17, %c0_18], %8 {strides = array<i32>} : memref<18x18x16xf32, #tpu.memory_space<vmem>>, vector<16x16x16xf32>,
    %c0_19 = arith.constant 0 : index
    %c0_20 = arith.constant 0 : index
    %10 = vector.load %arg3[%c0_19, %c0_20] : memref<1x32xf32, #tpu.memory_space<vmem>>, vector<1x32xf32>
    %c0_21 = arith.constant 0 : index
    %c0_22 = arith.constant 0 : index
    %c0_23 = arith.constant 0 : index
    %11 = vector.load %arg13[%c0_21, %c0_22, %c0_23] : memref<18x18x16xf32, #tpu.memory_space<vmem>>, vector<16x16x16xf32>
    %c0_24 = arith.constant 0 : index
    %c1_25 = arith.constant 1 : index
    %c0_26 = arith.constant 0 : index
    %12 = vector.load %arg13[%c0_24, %c1_25, %c0_26] : memref<18x18x16xf32, #tpu.memory_space<vmem>>, vector<16x16x16xf32>
    %c0_27 = arith.constant 0 : index
    %c2 = arith.constant 2 : index
    %c0_28 = arith.constant 0 : index
    %13 = vector.load %arg13[%c0_27, %c2, %c0_28] : memref<18x18x16xf32, #tpu.memory_space<vmem>>, vector<16x16x16xf32>
    %14 = tpu.concatenate %11, %12, %13 in 2 : vector<16x16x16xf32>, vector<16x16x16xf32>, vector<16x16x16xf32> -> vector<16x16x48xf32>
    %15 = vector.shape_cast %14 : vector<16x16x48xf32> to vector<256x48xf32>
    %c0_29 = arith.constant 0 : index
    %c0_30 = arith.constant 0 : index
    %c0_31 = arith.constant 0 : index
    %16 = vector.load %arg2[%c0_29, %c0_30, %c0_31] : memref<3x48x32xf32, #tpu.memory_space<vmem>>, vector<1x48x32xf32>
    %17 = vector.shape_cast %16 : vector<1x48x32xf32> to vector<48x32xf32>
    %cst_32 = arith.constant dense<0.000000e+00> : vector<256x32xf32>
    %18 = tpu.matmul %15, %17, %cst_32 {dimension_numbers = #tpu.dot_dimension_numbers<[1], [0], [0], [1], [0, 0, 1, 1], [], []>} : vector<256x48xf32>, vector<48x32xf32>, vector<256x32xf32> -> vector<256x32xf32>
    %c1_33 = arith.constant 1 : index
    %c0_34 = arith.constant 0 : index
    %c0_35 = arith.constant 0 : index
    %19 = vector.load %arg13[%c1_33, %c0_34, %c0_35] : memref<18x18x16xf32, #tpu.memory_space<vmem>>, vector<16x16x16xf32>
    %c1_36 = arith.constant 1 : index
    %c1_37 = arith.constant 1 : index
    %c0_38 = arith.constant 0 : index
    %20 = vector.load %arg13[%c1_36, %c1_37, %c0_38] : memref<18x18x16xf32, #tpu.memory_space<vmem>>, vector<16x16x16xf32>
    %c1_39 = arith.constant 1 : index
    %c2_40 = arith.constant 2 : index
    %c0_41 = arith.constant 0 : index
    %21 = vector.load %arg13[%c1_39, %c2_40, %c0_41] : memref<18x18x16xf32, #tpu.memory_space<vmem>>, vector<16x16x16xf32>
    %22 = tpu.concatenate %19, %20, %21 in 2 : vector<16x16x16xf32>, vector<16x16x16xf32>, vector<16x16x16xf32> -> vector<16x16x48xf32>
    %23 = vector.shape_cast %22 : vector<16x16x48xf32> to vector<256x48xf32>
    %c1_42 = arith.constant 1 : index
    %c0_43 = arith.constant 0 : index
    %c0_44 = arith.constant 0 : index
    %24 = vector.load %arg2[%c1_42, %c0_43, %c0_44] : memref<3x48x32xf32, #tpu.memory_space<vmem>>, vector<1x48x32xf32>
    %25 = vector.shape_cast %24 : vector<1x48x32xf32> to vector<48x32xf32>
    %cst_45 = arith.constant dense<0.000000e+00> : vector<256x32xf32>
    %26 = tpu.matmul %23, %25, %cst_45 {dimension_numbers = #tpu.dot_dimension_numbers<[1], [0], [0], [1], [0, 0, 1, 1], [], []>} : vector<256x48xf32>, vector<48x32xf32>, vector<256x32xf32> -> vector<256x32xf32>
    %27 = arith.addf %18, %26 : vector<256x32xf32>
    %c2_46 = arith.constant 2 : index
    %c0_47 = arith.constant 0 : index
    %c0_48 = arith.constant 0 : index
    %28 = vector.load %arg13[%c2_46, %c0_47, %c0_48] : memref<18x18x16xf32, #tpu.memory_space<vmem>>, vector<16x16x16xf32>
    %c2_49 = arith.constant 2 : index
    %c1_50 = arith.constant 1 : index
    %c0_51 = arith.constant 0 : index
    %29 = vector.load %arg13[%c2_49, %c1_50, %c0_51] : memref<18x18x16xf32, #tpu.memory_space<vmem>>, vector<16x16x16xf32>
    %c2_52 = arith.constant 2 : index
    %c2_53 = arith.constant 2 : index
    %c0_54 = arith.constant 0 : index
    %30 = vector.load %arg13[%c2_52, %c2_53, %c0_54] : memref<18x18x16xf32, #tpu.memory_space<vmem>>, vector<16x16x16xf32>
    %31 = tpu.concatenate %28, %29, %30 in 2 : vector<16x16x16xf32>, vector<16x16x16xf32>, vector<16x16x16xf32> -> vector<16x16x48xf32>
    %32 = vector.shape_cast %31 : vector<16x16x48xf32> to vector<256x48xf32>
    %c2_55 = arith.constant 2 : index
    %c0_56 = arith.constant 0 : index
    %c0_57 = arith.constant 0 : index
    %33 = vector.load %arg2[%c2_55, %c0_56, %c0_57] : memref<3x48x32xf32, #tpu.memory_space<vmem>>, vector<1x48x32xf32>
    %34 = vector.shape_cast %33 : vector<1x48x32xf32> to vector<48x32xf32>
    %cst_58 = arith.constant dense<0.000000e+00> : vector<256x32xf32>
    %35 = tpu.matmul %32, %34, %cst_58 {dimension_numbers = #tpu.dot_dimension_numbers<[1], [0], [0], [1], [0, 0, 1, 1], [], []>} : vector<256x48xf32>, vector<48x32xf32>, vector<256x32xf32> -> vector<256x32xf32>
    %36 = arith.addf %27, %35 : vector<256x32xf32>
    %37 = vector.broadcast %10 : vector<1x32xf32> to vector<256x32xf32>
    %38 = arith.addf %36, %37 : vector<256x32xf32>
    %c0_59 = arith.constant 0 : index
    %c0_60 = arith.constant 0 : index
    %39 = vector.load %arg4[%c0_59, %c0_60] : memref<1x32xf32, #tpu.memory_space<vmem>>, vector<1x32xf32>
    %c0_61 = arith.constant 0 : index
    %c0_62 = arith.constant 0 : index
    %40 = vector.load %arg5[%c0_61, %c0_62] : memref<1x32xf32, #tpu.memory_space<vmem>>, vector<1x32xf32>
    %cst_63 = arith.constant dense<0.000000e+00> : vector<32xf32>
    %41 = vector.multi_reduction <add>, %38, %cst_63 [0] : vector<256x32xf32> to vector<32xf32>
    %42 = vector.shape_cast %41 : vector<32xf32> to vector<1x32xf32>
    %43 = arith.mulf %38, %38 : vector<256x32xf32>
    %cst_64 = arith.constant dense<0.000000e+00> : vector<32xf32>
    %44 = vector.multi_reduction <add>, %43, %cst_64 [0] : vector<256x32xf32> to vector<32xf32>
    %45 = vector.shape_cast %44 : vector<32xf32> to vector<1x32xf32>
    %46 = tpu.concatenate %42, %45 in 0 : vector<1x32xf32>, vector<1x32xf32> -> vector<2x32xf32>
    %cst_65 = arith.constant dense<0.000000e+00> : vector<2x32xf32>
    %47 = tpu.matmul %46, %0, %cst_65 {dimension_numbers = #tpu.dot_dimension_numbers<[1], [0], [0], [1], [0, 0, 1, 1], [], []>} : vector<2x32xf32>, vector<32x32xf32>, vector<2x32xf32> -> vector<2x32xf32>
    %48 = vector.extract_strided_slice %47 {offsets = [0, 0], sizes = [1, 32], strides = [1, 1]} : vector<2x32xf32> to vector<1x32xf32>
    %cst_66 = arith.constant 9.765625E-4 : f32
    %49 = vector.broadcast %cst_66 : f32 to vector<1x32xf32>
    %50 = arith.mulf %48, %49 : vector<1x32xf32>
    %51 = vector.extract_strided_slice %47 {offsets = [1, 0], sizes = [1, 32], strides = [1, 1]} : vector<2x32xf32> to vector<1x32xf32>
    %cst_67 = arith.constant 9.765625E-4 : f32
    %52 = vector.broadcast %cst_67 : f32 to vector<1x32xf32>
    %53 = arith.mulf %51, %52 : vector<1x32xf32>
    %54 = arith.mulf %50, %50 : vector<1x32xf32>
    %55 = arith.subf %53, %54 : vector<1x32xf32>
    %cst_68 = arith.constant 0.000000e+00 : f32
    %56 = vector.broadcast %cst_68 : f32 to vector<1x32xf32>
    %57 = arith.maximumf %55, %56 : vector<1x32xf32>
    %cst_69 = arith.constant 9.99999974E-6 : f32
    %58 = vector.broadcast %cst_69 : f32 to vector<1x32xf32>
    %59 = arith.addf %57, %58 : vector<1x32xf32>
    %60 = math.rsqrt %59 : vector<1x32xf32>
    %61 = vector.broadcast %50 : vector<1x32xf32> to vector<256x32xf32>
    %62 = arith.subf %38, %61 : vector<256x32xf32>
    %63 = vector.broadcast %60 : vector<1x32xf32> to vector<256x32xf32>
    %64 = arith.mulf %62, %63 : vector<256x32xf32>
    %65 = vector.broadcast %39 : vector<1x32xf32> to vector<256x32xf32>
    %66 = arith.mulf %64, %65 : vector<256x32xf32>
    %67 = vector.broadcast %40 : vector<1x32xf32> to vector<256x32xf32>
    %68 = arith.addf %66, %67 : vector<256x32xf32>
    %69 = arith.negf %68 : vector<256x32xf32>
    %70 = math.exp %69 : vector<256x32xf32>
    %cst_70 = arith.constant 1.000000e+00 : f32
    %71 = vector.broadcast %cst_70 : f32 to vector<256x32xf32>
    %72 = arith.addf %71, %70 : vector<256x32xf32>
    %73 = arith.divf %71, %72 : vector<256x32xf32>
    %74 = arith.mulf %68, %73 : vector<256x32xf32>
    %cst_71 = arith.constant 0.000000e+00 : f32
    %75 = vector.broadcast %cst_71 : f32 to vector<1x18x32xf32>
    %cst_72 = arith.constant 0.000000e+00 : f32
    %76 = vector.broadcast %cst_72 : f32 to vector<18x1x32xf32>
    %c0_73 = arith.constant 0 : index
    %c0_74 = arith.constant 0 : index
    %c0_75 = arith.constant 0 : index
    %77 = vector.load %arg14[%c0_73, %c0_74, %c0_75] : memref<18x18x32xf32, #tpu.memory_space<vmem>>, vector<1x18x32xf32>
    tpu.vector_store %arg14[%c0_73, %c0_74, %c0_75], %75 {strides = array<i32>} : memref<18x18x32xf32, #tpu.memory_space<vmem>>, vector<1x18x32xf32>,
    %c17_76 = arith.constant 17 : index
    %c0_77 = arith.constant 0 : index
    %c0_78 = arith.constant 0 : index
    %78 = vector.load %arg14[%c17_76, %c0_77, %c0_78] : memref<18x18x32xf32, #tpu.memory_space<vmem>>, vector<1x18x32xf32>
    tpu.vector_store %arg14[%c17_76, %c0_77, %c0_78], %75 {strides = array<i32>} : memref<18x18x32xf32, #tpu.memory_space<vmem>>, vector<1x18x32xf32>,
    %c0_79 = arith.constant 0 : index
    %c0_80 = arith.constant 0 : index
    %c0_81 = arith.constant 0 : index
    %79 = vector.load %arg14[%c0_79, %c0_80, %c0_81] : memref<18x18x32xf32, #tpu.memory_space<vmem>>, vector<18x1x32xf32>
    tpu.vector_store %arg14[%c0_79, %c0_80, %c0_81], %76 {strides = array<i32>} : memref<18x18x32xf32, #tpu.memory_space<vmem>>, vector<18x1x32xf32>,
    %c0_82 = arith.constant 0 : index
    %c17_83 = arith.constant 17 : index
    %c0_84 = arith.constant 0 : index
    %80 = vector.load %arg14[%c0_82, %c17_83, %c0_84] : memref<18x18x32xf32, #tpu.memory_space<vmem>>, vector<18x1x32xf32>
    tpu.vector_store %arg14[%c0_82, %c17_83, %c0_84], %76 {strides = array<i32>} : memref<18x18x32xf32, #tpu.memory_space<vmem>>, vector<18x1x32xf32>,
    %81 = vector.shape_cast %74 : vector<256x32xf32> to vector<16x16x32xf32>
    %c1_85 = arith.constant 1 : index
    %c1_86 = arith.constant 1 : index
    %c0_87 = arith.constant 0 : index
    %82 = vector.load %arg14[%c1_85, %c1_86, %c0_87] : memref<18x18x32xf32, #tpu.memory_space<vmem>>, vector<16x16x32xf32>
    tpu.vector_store %arg14[%c1_85, %c1_86, %c0_87], %81 {strides = array<i32>} : memref<18x18x32xf32, #tpu.memory_space<vmem>>, vector<16x16x32xf32>,
    %c0_88 = arith.constant 0 : index
    %c0_89 = arith.constant 0 : index
    %83 = vector.load %arg7[%c0_88, %c0_89] : memref<1x32xf32, #tpu.memory_space<vmem>>, vector<1x32xf32>
    %c0_90 = arith.constant 0 : index
    %c0_91 = arith.constant 0 : index
    %c0_92 = arith.constant 0 : index
    %84 = vector.load %arg14[%c0_90, %c0_91, %c0_92] : memref<18x18x32xf32, #tpu.memory_space<vmem>>, vector<16x16x32xf32>
    %c0_93 = arith.constant 0 : index
    %c1_94 = arith.constant 1 : index
    %c0_95 = arith.constant 0 : index
    %85 = vector.load %arg14[%c0_93, %c1_94, %c0_95] : memref<18x18x32xf32, #tpu.memory_space<vmem>>, vector<16x16x32xf32>
    %c0_96 = arith.constant 0 : index
    %c2_97 = arith.constant 2 : index
    %c0_98 = arith.constant 0 : index
    %86 = vector.load %arg14[%c0_96, %c2_97, %c0_98] : memref<18x18x32xf32, #tpu.memory_space<vmem>>, vector<16x16x32xf32>
    %87 = tpu.concatenate %84, %85, %86 in 2 : vector<16x16x32xf32>, vector<16x16x32xf32>, vector<16x16x32xf32> -> vector<16x16x96xf32>
    %88 = vector.shape_cast %87 : vector<16x16x96xf32> to vector<256x96xf32>
    %c0_99 = arith.constant 0 : index
    %c0_100 = arith.constant 0 : index
    %c0_101 = arith.constant 0 : index
    %89 = vector.load %arg6[%c0_99, %c0_100, %c0_101] : memref<3x96x32xf32, #tpu.memory_space<vmem>>, vector<1x96x32xf32>
    %90 = vector.shape_cast %89 : vector<1x96x32xf32> to vector<96x32xf32>
    %cst_102 = arith.constant dense<0.000000e+00> : vector<256x32xf32>
    %91 = tpu.matmul %88, %90, %cst_102 {dimension_numbers = #tpu.dot_dimension_numbers<[1], [0], [0], [1], [0, 0, 1, 1], [], []>} : vector<256x96xf32>, vector<96x32xf32>, vector<256x32xf32> -> vector<256x32xf32>
    %c1_103 = arith.constant 1 : index
    %c0_104 = arith.constant 0 : index
    %c0_105 = arith.constant 0 : index
    %92 = vector.load %arg14[%c1_103, %c0_104, %c0_105] : memref<18x18x32xf32, #tpu.memory_space<vmem>>, vector<16x16x32xf32>
    %c1_106 = arith.constant 1 : index
    %c1_107 = arith.constant 1 : index
    %c0_108 = arith.constant 0 : index
    %93 = vector.load %arg14[%c1_106, %c1_107, %c0_108] : memref<18x18x32xf32, #tpu.memory_space<vmem>>, vector<16x16x32xf32>
    %c1_109 = arith.constant 1 : index
    %c2_110 = arith.constant 2 : index
    %c0_111 = arith.constant 0 : index
    %94 = vector.load %arg14[%c1_109, %c2_110, %c0_111] : memref<18x18x32xf32, #tpu.memory_space<vmem>>, vector<16x16x32xf32>
    %95 = tpu.concatenate %92, %93, %94 in 2 : vector<16x16x32xf32>, vector<16x16x32xf32>, vector<16x16x32xf32> -> vector<16x16x96xf32>
    %96 = vector.shape_cast %95 : vector<16x16x96xf32> to vector<256x96xf32>
    %c1_112 = arith.constant 1 : index
    %c0_113 = arith.constant 0 : index
    %c0_114 = arith.constant 0 : index
    %97 = vector.load %arg6[%c1_112, %c0_113, %c0_114] : memref<3x96x32xf32, #tpu.memory_space<vmem>>, vector<1x96x32xf32>
    %98 = vector.shape_cast %97 : vector<1x96x32xf32> to vector<96x32xf32>
    %cst_115 = arith.constant dense<0.000000e+00> : vector<256x32xf32>
    %99 = tpu.matmul %96, %98, %cst_115 {dimension_numbers = #tpu.dot_dimension_numbers<[1], [0], [0], [1], [0, 0, 1, 1], [], []>} : vector<256x96xf32>, vector<96x32xf32>, vector<256x32xf32> -> vector<256x32xf32>
    %100 = arith.addf %91, %99 : vector<256x32xf32>
    %c2_116 = arith.constant 2 : index
    %c0_117 = arith.constant 0 : index
    %c0_118 = arith.constant 0 : index
    %101 = vector.load %arg14[%c2_116, %c0_117, %c0_118] : memref<18x18x32xf32, #tpu.memory_space<vmem>>, vector<16x16x32xf32>
    %c2_119 = arith.constant 2 : index
    %c1_120 = arith.constant 1 : index
    %c0_121 = arith.constant 0 : index
    %102 = vector.load %arg14[%c2_119, %c1_120, %c0_121] : memref<18x18x32xf32, #tpu.memory_space<vmem>>, vector<16x16x32xf32>
    %c2_122 = arith.constant 2 : index
    %c2_123 = arith.constant 2 : index
    %c0_124 = arith.constant 0 : index
    %103 = vector.load %arg14[%c2_122, %c2_123, %c0_124] : memref<18x18x32xf32, #tpu.memory_space<vmem>>, vector<16x16x32xf32>
    %104 = tpu.concatenate %101, %102, %103 in 2 : vector<16x16x32xf32>, vector<16x16x32xf32>, vector<16x16x32xf32> -> vector<16x16x96xf32>
    %105 = vector.shape_cast %104 : vector<16x16x96xf32> to vector<256x96xf32>
    %c2_125 = arith.constant 2 : index
    %c0_126 = arith.constant 0 : index
    %c0_127 = arith.constant 0 : index
    %106 = vector.load %arg6[%c2_125, %c0_126, %c0_127] : memref<3x96x32xf32, #tpu.memory_space<vmem>>, vector<1x96x32xf32>
    %107 = vector.shape_cast %106 : vector<1x96x32xf32> to vector<96x32xf32>
    %cst_128 = arith.constant dense<0.000000e+00> : vector<256x32xf32>
    %108 = tpu.matmul %105, %107, %cst_128 {dimension_numbers = #tpu.dot_dimension_numbers<[1], [0], [0], [1], [0, 0, 1, 1], [], []>} : vector<256x96xf32>, vector<96x32xf32>, vector<256x32xf32> -> vector<256x32xf32>
    %109 = arith.addf %100, %108 : vector<256x32xf32>
    %110 = vector.broadcast %83 : vector<1x32xf32> to vector<256x32xf32>
    %111 = arith.addf %109, %110 : vector<256x32xf32>
    %c0_129 = arith.constant 0 : index
    %c0_130 = arith.constant 0 : index
    %112 = vector.load %arg8[%c0_129, %c0_130] : memref<1x32xf32, #tpu.memory_space<vmem>>, vector<1x32xf32>
    %c0_131 = arith.constant 0 : index
    %c0_132 = arith.constant 0 : index
    %113 = vector.load %arg9[%c0_131, %c0_132] : memref<1x32xf32, #tpu.memory_space<vmem>>, vector<1x32xf32>
    %cst_133 = arith.constant dense<0.000000e+00> : vector<32xf32>
    %114 = vector.multi_reduction <add>, %111, %cst_133 [0] : vector<256x32xf32> to vector<32xf32>
    %115 = vector.shape_cast %114 : vector<32xf32> to vector<1x32xf32>
    %116 = arith.mulf %111, %111 : vector<256x32xf32>
    %cst_134 = arith.constant dense<0.000000e+00> : vector<32xf32>
    %117 = vector.multi_reduction <add>, %116, %cst_134 [0] : vector<256x32xf32> to vector<32xf32>
    %118 = vector.shape_cast %117 : vector<32xf32> to vector<1x32xf32>
    %119 = tpu.concatenate %115, %118 in 0 : vector<1x32xf32>, vector<1x32xf32> -> vector<2x32xf32>
    %cst_135 = arith.constant dense<0.000000e+00> : vector<2x32xf32>
    %120 = tpu.matmul %119, %0, %cst_135 {dimension_numbers = #tpu.dot_dimension_numbers<[1], [0], [0], [1], [0, 0, 1, 1], [], []>} : vector<2x32xf32>, vector<32x32xf32>, vector<2x32xf32> -> vector<2x32xf32>
    %121 = vector.extract_strided_slice %120 {offsets = [0, 0], sizes = [1, 32], strides = [1, 1]} : vector<2x32xf32> to vector<1x32xf32>
    %cst_136 = arith.constant 9.765625E-4 : f32
    %122 = vector.broadcast %cst_136 : f32 to vector<1x32xf32>
    %123 = arith.mulf %121, %122 : vector<1x32xf32>
    %124 = vector.extract_strided_slice %120 {offsets = [1, 0], sizes = [1, 32], strides = [1, 1]} : vector<2x32xf32> to vector<1x32xf32>
    %cst_137 = arith.constant 9.765625E-4 : f32
    %125 = vector.broadcast %cst_137 : f32 to vector<1x32xf32>
    %126 = arith.mulf %124, %125 : vector<1x32xf32>
    %127 = arith.mulf %123, %123 : vector<1x32xf32>
    %128 = arith.subf %126, %127 : vector<1x32xf32>
    %cst_138 = arith.constant 0.000000e+00 : f32
    %129 = vector.broadcast %cst_138 : f32 to vector<1x32xf32>
    %130 = arith.maximumf %128, %129 : vector<1x32xf32>
    %cst_139 = arith.constant 9.99999974E-6 : f32
    %131 = vector.broadcast %cst_139 : f32 to vector<1x32xf32>
    %132 = arith.addf %130, %131 : vector<1x32xf32>
    %133 = math.rsqrt %132 : vector<1x32xf32>
    %134 = vector.broadcast %123 : vector<1x32xf32> to vector<256x32xf32>
    %135 = arith.subf %111, %134 : vector<256x32xf32>
    %136 = vector.broadcast %133 : vector<1x32xf32> to vector<256x32xf32>
    %137 = arith.mulf %135, %136 : vector<256x32xf32>
    %138 = vector.broadcast %112 : vector<1x32xf32> to vector<256x32xf32>
    %139 = arith.mulf %137, %138 : vector<256x32xf32>
    %140 = vector.broadcast %113 : vector<1x32xf32> to vector<256x32xf32>
    %141 = arith.addf %139, %140 : vector<256x32xf32>
    %142 = arith.negf %141 : vector<256x32xf32>
    %143 = math.exp %142 : vector<256x32xf32>
    %cst_140 = arith.constant 1.000000e+00 : f32
    %144 = vector.broadcast %cst_140 : f32 to vector<256x32xf32>
    %145 = arith.addf %144, %143 : vector<256x32xf32>
    %146 = arith.divf %144, %145 : vector<256x32xf32>
    %147 = arith.mulf %141, %146 : vector<256x32xf32>
    %148 = vector.shape_cast %147 : vector<256x32xf32> to vector<16x16x32xf32>
    %c0_141 = arith.constant 0 : index
    %c0_142 = arith.constant 0 : index
    %c0_143 = arith.constant 0 : index
    %c0_144 = arith.constant 0 : index
    %149 = vector.load %arg11[%c0_141, %c0_142, %c0_143, %c0_144] : memref<1x16x16x32xf32, #tpu.memory_space<vmem>>, vector<1x16x16x32xf32>
    %150 = vector.shape_cast %149 : vector<1x16x16x32xf32> to vector<16x16x32xf32>
    %151 = vector.shape_cast %148 : vector<16x16x32xf32> to vector<1x16x16x32xf32>
    tpu.vector_store %arg11[%c0_141, %c0_142, %c0_143, %c0_144], %151 {strides = array<i32>} : memref<1x16x16x32xf32, #tpu.memory_space<vmem>>, vector<1x16x16x32xf32>,
    %c1_145 = arith.constant 1 : index
    %c1_146 = arith.constant 1 : index
    %c0_147 = arith.constant 0 : index
    %152 = vector.load %arg14[%c1_145, %c1_146, %c0_147] : memref<18x18x32xf32, #tpu.memory_space<vmem>>, vector<16x16x32xf32>
    tpu.vector_store %arg14[%c1_145, %c1_146, %c0_147], %148 {strides = array<i32>} : memref<18x18x32xf32, #tpu.memory_space<vmem>>, vector<16x16x32xf32>,
    %c1_148 = arith.constant 1 : index
    %c1_149 = arith.constant 1 : index
    %c0_150 = arith.constant 0 : index
    %153 = tpu.strided_load %arg14[%c1_148, %c1_149, %c0_150] {strides = array<i32: 2, 2, 1>} : memref<18x18x32xf32, #tpu.memory_space<vmem>>, vector<8x8x32xf32>
    %c1_151 = arith.constant 1 : index
    %c2_152 = arith.constant 2 : index
    %c0_153 = arith.constant 0 : index
    %154 = tpu.strided_load %arg14[%c1_151, %c2_152, %c0_153] {strides = array<i32: 2, 2, 1>} : memref<18x18x32xf32, #tpu.memory_space<vmem>>, vector<8x8x32xf32>
    %c2_154 = arith.constant 2 : index
    %c1_155 = arith.constant 1 : index
    %c0_156 = arith.constant 0 : index
    %155 = tpu.strided_load %arg14[%c2_154, %c1_155, %c0_156] {strides = array<i32: 2, 2, 1>} : memref<18x18x32xf32, #tpu.memory_space<vmem>>, vector<8x8x32xf32>
    %c2_157 = arith.constant 2 : index
    %c2_158 = arith.constant 2 : index
    %c0_159 = arith.constant 0 : index
    %156 = tpu.strided_load %arg14[%c2_157, %c2_158, %c0_159] {strides = array<i32: 2, 2, 1>} : memref<18x18x32xf32, #tpu.memory_space<vmem>>, vector<8x8x32xf32>
    %157 = arith.maximumf %153, %154 : vector<8x8x32xf32>
    %158 = arith.maximumf %155, %156 : vector<8x8x32xf32>
    %159 = arith.maximumf %157, %158 : vector<8x8x32xf32>
    %c0_160 = arith.constant 0 : index
    %c0_161 = arith.constant 0 : index
    %c0_162 = arith.constant 0 : index
    %c0_163 = arith.constant 0 : index
    %160 = vector.load %arg12[%c0_160, %c0_161, %c0_162, %c0_163] : memref<1x8x8x32xf32, #tpu.memory_space<vmem>>, vector<1x8x8x32xf32>
    %161 = vector.shape_cast %160 : vector<1x8x8x32xf32> to vector<8x8x32xf32>
    %162 = vector.shape_cast %159 : vector<8x8x32xf32> to vector<1x8x8x32xf32>
    tpu.vector_store %arg12[%c0_160, %c0_161, %c0_162, %c0_163], %162 {strides = array<i32>} : memref<1x8x8x32xf32, #tpu.memory_space<vmem>>, vector<1x8x8x32xf32>,
    return
  }
  func.func @transform_0(%arg0: i32) -> (i32, i32, i32, i32) {
    %c0_i32 = arith.constant 0 : i32
    %c0_i32_0 = arith.constant 0 : i32
    %c0_i32_1 = arith.constant 0 : i32
    %c0_i32_2 = arith.constant 0 : i32
    return %arg0, %c0_i32, %c0_i32_0, %c0_i32_1 : i32, i32, i32, i32
  }
  func.func @transform_1(%arg0: i32) -> (i32, i32, i32) {
    %c0_i32 = arith.constant 0 : i32
    %c0_i32_0 = arith.constant 0 : i32
    %c0_i32_1 = arith.constant 0 : i32
    %c0_i32_2 = arith.constant 0 : i32
    return %c0_i32, %c0_i32_0, %c0_i32_1 : i32, i32, i32
  }
  func.func @transform_2(%arg0: i32) -> (i32, i32) {
    %c0_i32 = arith.constant 0 : i32
    %c0_i32_0 = arith.constant 0 : i32
    %c0_i32_1 = arith.constant 0 : i32
    return %c0_i32, %c0_i32_0 : i32, i32
  }
  func.func @transform_3(%arg0: i32) -> (i32, i32) {
    %c0_i32 = arith.constant 0 : i32
    %c0_i32_0 = arith.constant 0 : i32
    %c0_i32_1 = arith.constant 0 : i32
    return %c0_i32, %c0_i32_0 : i32, i32
  }
  func.func @transform_4(%arg0: i32) -> (i32, i32) {
    %c0_i32 = arith.constant 0 : i32
    %c0_i32_0 = arith.constant 0 : i32
    %c0_i32_1 = arith.constant 0 : i32
    return %c0_i32, %c0_i32_0 : i32, i32
  }
  func.func @transform_5(%arg0: i32) -> (i32, i32, i32) {
    %c0_i32 = arith.constant 0 : i32
    %c0_i32_0 = arith.constant 0 : i32
    %c0_i32_1 = arith.constant 0 : i32
    %c0_i32_2 = arith.constant 0 : i32
    return %c0_i32, %c0_i32_0, %c0_i32_1 : i32, i32, i32
  }
  func.func @transform_6(%arg0: i32) -> (i32, i32) {
    %c0_i32 = arith.constant 0 : i32
    %c0_i32_0 = arith.constant 0 : i32
    %c0_i32_1 = arith.constant 0 : i32
    return %c0_i32, %c0_i32_0 : i32, i32
  }
  func.func @transform_7(%arg0: i32) -> (i32, i32) {
    %c0_i32 = arith.constant 0 : i32
    %c0_i32_0 = arith.constant 0 : i32
    %c0_i32_1 = arith.constant 0 : i32
    return %c0_i32, %c0_i32_0 : i32, i32
  }
  func.func @transform_8(%arg0: i32) -> (i32, i32) {
    %c0_i32 = arith.constant 0 : i32
    %c0_i32_0 = arith.constant 0 : i32
    %c0_i32_1 = arith.constant 0 : i32
    return %c0_i32, %c0_i32_0 : i32, i32
  }
  func.func @transform_9(%arg0: i32) -> (i32, i32) {
    %c0_i32 = arith.constant 0 : i32
    %c0_i32_0 = arith.constant 0 : i32
    %c0_i32_1 = arith.constant 0 : i32
    return %c0_i32, %c0_i32_0 : i32, i32
  }
  func.func @transform_10(%arg0: i32) -> (i32, i32, i32, i32) {
    %c0_i32 = arith.constant 0 : i32
    %c0_i32_0 = arith.constant 0 : i32
    %c0_i32_1 = arith.constant 0 : i32
    %c0_i32_2 = arith.constant 0 : i32
    return %arg0, %c0_i32, %c0_i32_0, %c0_i32_1 : i32, i32, i32, i32
  }
  func.func @transform_11(%arg0: i32) -> (i32, i32, i32, i32) {
    %c0_i32 = arith.constant 0 : i32
    %c0_i32_0 = arith.constant 0 : i32
    %c0_i32_1 = arith.constant 0 : i32
    %c0_i32_2 = arith.constant 0 : i32
    return %arg0, %c0_i32, %c0_i32_0, %c0_i32_1 : i32, i32, i32, i32
  }
}

</mosaic_0001>

<llo_original>
// kernel: tpu_custom_call.1
$region0: #{tpu_custom_call.1}
  #allocation0 [shape = 'u32[]', space=smem, size = 0x4, offset = 0x4, fixed_abs, tag = 'smem constant byte address 0x4 - core index']
  #allocation1 [shape = 'u32[72,128]{1,0:T(1,128)}', space=vmem, size = 0x9000, scoped, tag = 'internal scratch']
  #allocation2 [shape = 'f32[18,18,16]{2,1,0:T(8,128)}', space=vmem, size = 0x36000, scoped, tag = 'scratch operand']
  #allocation3 [shape = 'f32[18,18,32]{2,1,0:T(8,128)}', space=vmem, size = 0x36000, scoped, tag = 'scratch operand']
  %s0 = inlined_call_operand.vmem [shape: f32[2,16,16,16], index: 0, kind: input, shape index: {}]
  %s1 = inlined_call_operand.vmem [shape: f32[3,48,32], index: 1, kind: input, shape index: {}]
  %s2 = inlined_call_operand.vmem [shape: f32[1,32], index: 2, kind: input, shape index: {}]
  %s3 = inlined_call_operand.vmem [shape: f32[1,32], index: 3, kind: input, shape index: {}]
  %s4 = inlined_call_operand.vmem [shape: f32[1,32], index: 4, kind: input, shape index: {}]
  %s5 = inlined_call_operand.vmem [shape: f32[3,96,32], index: 5, kind: input, shape index: {}]
  %s6 = inlined_call_operand.vmem [shape: f32[1,32], index: 6, kind: input, shape index: {}]
  %s7 = inlined_call_operand.vmem [shape: f32[1,32], index: 7, kind: input, shape index: {}]
  %s8 = inlined_call_operand.vmem [shape: f32[1,32], index: 8, kind: input, shape index: {}]
  %s9 = inlined_call_operand.hbm [shape: f32[32,32], index: 9, kind: input, shape index: {}]
  %s10 = inlined_call_operand.hbm [shape: f32[2,16,16,32], index: 10, kind: output, shape index: {0}]
  %s11 = inlined_call_operand.hbm [shape: f32[2,8,8,32], index: 11, kind: output, shape index: {1}]
  %12 = xla_tuple %s10, %s11
  %s13 = sld [smem:[#allocation0]]
  $region85: #{tpu_custom_call.1} parent=0
    _
  %s15 = ssub.s32 1, %s13
  %s16 = scalar_select 0, %s15, %s13
  $region1: #{tpu_custom_call.1} parent=0
    #allocation4 [shape = 'u8[16384]{0}', space=vmem, size = 0x4000, scoped, tag = 'input window, operand 9, single buffered']
    #allocation5 [shape = 's32[2]{0}', space=sflag, size = 0x8, scoped, tag = 'scoped memory for tpu_custom_call.1']
    #allocation6 [shape = 's32[2]{0}', space=sflag, size = 0x8, scoped, tag = 'scoped memory for tpu_custom_call.1']
    #allocation7 [shape = 'u8[262144]{0}', space=vmem, size = 0x40000, scoped, tag = 'output window, operand 0']
    #allocation8 [shape = 'u8[65536]{0}', space=vmem, size = 0x10000, scoped, tag = 'output window, operand 1']
    #allocation9 [shape = 's32[2]{0}', space=sflag, size = 0x8, scoped, tag = 'scoped memory for tpu_custom_call.1']
    %17 = vsyncpa [#allocation5], 0
    %18 = vsyncpa [#allocation6], 0
    %s19 = scalar_lea.sflag [#allocation6], 1
    %20 = vsyncpa %s19, 0
    %21 = vsyncpa [#allocation9], 0
    %s22 = scalar_lea.sflag [#allocation9], 1
    %23 = vsyncpa %s22, 0
    loop: start=0, step=1, limit=4
    $region2: #{tpu_custom_call.1} parent=1 // loop_pre_header
      _
    $region3: #{tpu_custom_call.1} parent=1 // loop_header
      %s25 = sphi 0, %s29
      %p26 = scmp.ge.s32.totalorder %s25, 4
      %s35 = sphi 0, %s37
      %s38 = sphi 0, %s35
      %s39 = sphi 0, %s38
      %s55 = sphi 0, %s39
      %s59 = sphi 0, %s59
      %s61 = sphi 0, %s59
      %s62 = sphi 0, %s61
      %s76 = sphi 0, %s62
      %s80 = sphi 0, %s80
      %s82 = sphi 0, %s80
      %s83 = sphi 0, %s82
      %s97 = sphi 0, %s83
      %s101 = sphi 0, %s101
      %s103 = sphi 0, %s101
      %s104 = sphi 0, %s103
      %s118 = sphi 0, %s104
      %s122 = sphi 0, %s122
      %s124 = sphi 0, %s122
      %s125 = sphi 0, %s124
      %s139 = sphi 0, %s125
      %s143 = sphi 0, %s143
      %s145 = sphi 0, %s143
      %s146 = sphi 0, %s145
      %s160 = sphi 0, %s146
      %s164 = sphi 0, %s164
      %s166 = sphi 0, %s164
      %s167 = sphi 0, %s166
      %s181 = sphi 0, %s167
      %s185 = sphi 0, %s185
      %s187 = sphi 0, %s185
      %s188 = sphi 0, %s187
      %s202 = sphi 0, %s188
      %s206 = sphi 0, %s206
      %s208 = sphi 0, %s206
      %s209 = sphi 0, %s208
      %s223 = sphi 0, %s209
      %s227 = sphi 0, %s227
      %s229 = sphi 0, %s227
      %s230 = sphi 0, %s229
      %s244 = sphi 0, %s230
      %s250 = sphi 0, %s252
      %s253 = sphi 0, %s250
      %s254 = sphi 0, %s253
      %s270 = sphi 0, %s254
      %s276 = sphi 0, %s278
      %s279 = sphi 0, %s276
      %s280 = sphi 0, %s279
      %s296 = sphi 0, %s280
    $region4: #{tpu_custom_call.1} parent=1 // loop_header_branch
      %28 = sbr.rel (%p26) target = $region8
    $region5: #{tpu_custom_call.1} parent=1 // loop_body
      %s30 = ssub.s32 %s25, 1
      %s31 = ssub.s32 %s25, 2
      %s32 = sadd.s32 %s25, 1
      %s33 = ssub.s32 %s25, %s32
      %p34 = scmp.eq.s32.totalorder %s33, 0
      %s36 = sadd.s32 %s35, 1
      %s37 = scalar_select %p34, %s35, %s36
      %p40 = pneg %p34
      %p41 = scmp.eq.s32.totalorder %s25, 1
      %p42 = por %p40, %p41
      %p43 = scmp.ne.s32.totalorder %s35, %s38
      %p44 = scmp.eq.s32.totalorder %s25, 0
      %p45 = por %p43, %p44
      %p46 = scmp.ne.s32.totalorder %s35, %s38
      %p47 = scmp.eq.s32.totalorder %s30, 1
      %p48 = por %p46, %p47
      %p49 = scmp.ne.s32.totalorder %s38, %s39
      %p50 = scmp.eq.s32.totalorder %s30, 0
      %p51 = por %p49, %p50
      %p52 = scmp.ne.s32.totalorder %s38, %s39
      %p53 = scmp.eq.s32.totalorder %s31, 1
      %p54 = por %p52, %p53
      %p56 = scmp.ne.s32.totalorder %s39, %s55
      %p57 = scmp.eq.s32.totalorder %s31, 0
      %p58 = por %p56, %p57
      %s60 = sadd.s32 %s59, 1
      %p63 = scmp.eq.s32.totalorder %s25, 1
      %p64 = scmp.ne.s32.totalorder %s59, %s61
      %p65 = scmp.eq.s32.totalorder %s25, 0
      %p66 = por %p64, %p65
      %p67 = scmp.ne.s32.totalorder %s59, %s61
      %p68 = scmp.eq.s32.totalorder %s30, 1
      %p69 = por %p67, %p68
      %p70 = scmp.ne.s32.totalorder %s61, %s62
      %p71 = scmp.eq.s32.totalorder %s30, 0
      %p72 = por %p70, %p71
      %p73 = scmp.ne.s32.totalorder %s61, %s62
      %p74 = scmp.eq.s32.totalorder %s31, 1
      %p75 = por %p73, %p74
      %p77 = scmp.ne.s32.totalorder %s62, %s76
      %p78 = scmp.eq.s32.totalorder %s31, 0
      %p79 = por %p77, %p78
      %s81 = sadd.s32 %s80, 1
      %p84 = scmp.eq.s32.totalorder %s25, 1
      %p85 = scmp.ne.s32.totalorder %s80, %s82
      %p86 = scmp.eq.s32.totalorder %s25, 0
      %p87 = por %p85, %p86
      %p88 = scmp.ne.s32.totalorder %s80, %s82
      %p89 = scmp.eq.s32.totalorder %s30, 1
      %p90 = por %p88, %p89
      %p91 = scmp.ne.s32.totalorder %s82, %s83
      %p92 = scmp.eq.s32.totalorder %s30, 0
      %p93 = por %p91, %p92
      %p94 = scmp.ne.s32.totalorder %s82, %s83
      %p95 = scmp.eq.s32.totalorder %s31, 1
      %p96 = por %p94, %p95
      %p98 = scmp.ne.s32.totalorder %s83, %s97
      %p99 = scmp.eq.s32.totalorder %s31, 0
      %p100 = por %p98, %p99
      %s102 = sadd.s32 %s101, 1
      %p105 = scmp.eq.s32.totalorder %s25, 1
      %p106 = scmp.ne.s32.totalorder %s101, %s103
      %p107 = scmp.eq.s32.totalorder %s25, 0
      %p108 = por %p106, %p107
      %p109 = scmp.ne.s32.totalorder %s101, %s103
      %p110 = scmp.eq.s32.totalorder %s30, 1
      %p111 = por %p109, %p110
      %p112 = scmp.ne.s32.totalorder %s103, %s104
      %p113 = scmp.eq.s32.totalorder %s30, 0
      %p114 = por %p112, %p113
      %p115 = scmp.ne.s32.totalorder %s103, %s104
      %p116 = scmp.eq.s32.totalorder %s31, 1
      %p117 = por %p115, %p116
      %p119 = scmp.ne.s32.totalorder %s104, %s118
      %p120 = scmp.eq.s32.totalorder %s31, 0
      %p121 = por %p119, %p120
      %s123 = sadd.s32 %s122, 1
      %p126 = scmp.eq.s32.totalorder %s25, 1
      %p127 = scmp.ne.s32.totalorder %s122, %s124
      %p128 = scmp.eq.s32.totalorder %s25, 0
      %p129 = por %p127, %p128
      %p130 = scmp.ne.s32.totalorder %s122, %s124
      %p131 = scmp.eq.s32.totalorder %s30, 1
      %p132 = por %p130, %p131
      %p133 = scmp.ne.s32.totalorder %s124, %s125
      %p134 = scmp.eq.s32.totalorder %s30, 0
      %p135 = por %p133, %p134
      %p136 = scmp.ne.s32.totalorder %s124, %s125
      %p137 = scmp.eq.s32.totalorder %s31, 1
      %p138 = por %p136, %p137
      %p140 = scmp.ne.s32.totalorder %s125, %s139
      %p141 = scmp.eq.s32.totalorder %s31, 0
      %p142 = por %p140, %p141
      %s144 = sadd.s32 %s143, 1
      %p147 = scmp.eq.s32.totalorder %s25, 1
      %p148 = scmp.ne.s32.totalorder %s143, %s145
      %p149 = scmp.eq.s32.totalorder %s25, 0
      %p150 = por %p148, %p149
      %p151 = scmp.ne.s32.totalorder %s143, %s145
      %p152 = scmp.eq.s32.totalorder %s30, 1
      %p153 = por %p151, %p152
      %p154 = scmp.ne.s32.totalorder %s145, %s146
      %p155 = scmp.eq.s32.totalorder %s30, 0
      %p156 = por %p154, %p155
      %p157 = scmp.ne.s32.totalorder %s145, %s146
      %p158 = scmp.eq.s32.totalorder %s31, 1
      %p159 = por %p157, %p158
      %p161 = scmp.ne.s32.totalorder %s146, %s160
      %p162 = scmp.eq.s32.totalorder %s31, 0
      %p163 = por %p161, %p162
      %s165 = sadd.s32 %s164, 1
      %p168 = scmp.eq.s32.totalorder %s25, 1
      %p169 = scmp.ne.s32.totalorder %s164, %s166
      %p170 = scmp.eq.s32.totalorder %s25, 0
      %p171 = por %p169, %p170
      %p172 = scmp.ne.s32.totalorder %s164, %s166
      %p173 = scmp.eq.s32.totalorder %s30, 1
      %p174 = por %p172, %p173
      %p175 = scmp.ne.s32.totalorder %s166, %s167
      %p176 = scmp.eq.s32.totalorder %s30, 0
      %p177 = por %p175, %p176
      %p178 = scmp.ne.s32.totalorder %s166, %s167
      %p179 = scmp.eq.s32.totalorder %s31, 1
      %p180 = por %p178, %p179
      %p182 = scmp.ne.s32.totalorder %s167, %s181
      %p183 = scmp.eq.s32.totalorder %s31, 0
      %p184 = por %p182, %p183
      %s186 = sadd.s32 %s185, 1
      %p189 = scmp.eq.s32.totalorder %s25, 1
      %p190 = scmp.ne.s32.totalorder %s185, %s187
      %p191 = scmp.eq.s32.totalorder %s25, 0
      %p192 = por %p190, %p191
      %p193 = scmp.ne.s32.totalorder %s185, %s187
      %p194 = scmp.eq.s32.totalorder %s30, 1
      %p195 = por %p193, %p194
      %p196 = scmp.ne.s32.totalorder %s187, %s188
      %p197 = scmp.eq.s32.totalorder %s30, 0
      %p198 = por %p196, %p197
      %p199 = scmp.ne.s32.totalorder %s187, %s188
      %p200 = scmp.eq.s32.totalorder %s31, 1
      %p201 = por %p199, %p200
      %p203 = scmp.ne.s32.totalorder %s188, %s202
      %p204 = scmp.eq.s32.totalorder %s31, 0
      %p205 = por %p203, %p204
      %s207 = sadd.s32 %s206, 1
      %p210 = scmp.eq.s32.totalorder %s25, 1
      %p211 = scmp.ne.s32.totalorder %s206, %s208
      %p212 = scmp.eq.s32.totalorder %s25, 0
      %p213 = por %p211, %p212
      %p214 = scmp.ne.s32.totalorder %s206, %s208
      %p215 = scmp.eq.s32.totalorder %s30, 1
      %p216 = por %p214, %p215
      %p217 = scmp.ne.s32.totalorder %s208, %s209
      %p218 = scmp.eq.s32.totalorder %s30, 0
      %p219 = por %p217, %p218
      %p220 = scmp.ne.s32.totalorder %s208, %s209
      %p221 = scmp.eq.s32.totalorder %s31, 1
      %p222 = por %p220, %p221
      %p224 = scmp.ne.s32.totalorder %s209, %s223
      %p225 = scmp.eq.s32.totalorder %s31, 0
      %p226 = por %p224, %p225
      %s228 = sadd.s32 %s227, 1
      %p231 = scmp.eq.s32.totalorder %s25, 1
      %p232 = scmp.ne.s32.totalorder %s227, %s229
      %p233 = scmp.eq.s32.totalorder %s25, 0
      %p234 = por %p232, %p233
      %p235 = scmp.ne.s32.totalorder %s227, %s229
      %p236 = scmp.eq.s32.totalorder %s30, 1
      %p237 = por %p235, %p236
      %p238 = scmp.ne.s32.totalorder %s229, %s230
      %p239 = scmp.eq.s32.totalorder %s30, 0
      %p240 = por %p238, %p239
      %p241 = scmp.ne.s32.totalorder %s229, %s230
      %p242 = scmp.eq.s32.totalorder %s31, 1
      %p243 = por %p241, %p242
      %p245 = scmp.ne.s32.totalorder %s230, %s244
      %p246 = scmp.eq.s32.totalorder %s31, 0
      %p247 = por %p245, %p246
      %s248 = ssub.s32 %s25, %s32
      %p249 = scmp.eq.s32.totalorder %s248, 0
      %s251 = sadd.s32 %s250, 1
      %s252 = scalar_select %p249, %s250, %s251
      %p255 = pneg %p249
      %p256 = scmp.eq.s32.totalorder %s25, 1
      %p257 = por %p255, %p256
      %p258 = scmp.ne.s32.totalorder %s250, %s253
      %p259 = scmp.eq.s32.totalorder %s25, 0
      %p260 = por %p258, %p259
      %p261 = scmp.ne.s32.totalorder %s250, %s253
      %p262 = scmp.eq.s32.totalorder %s30, 1
      %p263 = por %p261, %p262
      %p264 = scmp.ne.s32.totalorder %s253, %s254
      %p265 = scmp.eq.s32.totalorder %s30, 0
      %p266 = por %p264, %p265
      %p267 = scmp.ne.s32.totalorder %s253, %s254
      %p268 = scmp.eq.s32.totalorder %s31, 1
      %p269 = por %p267, %p268
      %p271 = scmp.ne.s32.totalorder %s254, %s270
      %p272 = scmp.eq.s32.totalorder %s31, 0
      %p273 = por %p271, %p272
      %s274 = ssub.s32 %s25, %s32
      %p275 = scmp.eq.s32.totalorder %s274, 0
      %s277 = sadd.s32 %s276, 1
      %s278 = scalar_select %p275, %s276, %s277
      %p281 = pneg %p275
      %p282 = scmp.eq.s32.totalorder %s25, 1
      %p283 = por %p281, %p282
      %p284 = scmp.ne.s32.totalorder %s276, %s279
      %p285 = scmp.eq.s32.totalorder %s25, 0
      %p286 = por %p284, %p285
      %p287 = scmp.ne.s32.totalorder %s276, %s279
      %p288 = scmp.eq.s32.totalorder %s30, 1
      %p289 = por %p287, %p288
      %p290 = scmp.ne.s32.totalorder %s279, %s280
      %p291 = scmp.eq.s32.totalorder %s30, 0
      %p292 = por %p290, %p291
      %p293 = scmp.ne.s32.totalorder %s279, %s280
      %p294 = scmp.eq.s32.totalorder %s31, 1
      %p295 = por %p293, %p294
      %p297 = scmp.ne.s32.totalorder %s280, %s296
      %p298 = scmp.eq.s32.totalorder %s31, 0
      %p299 = por %p297, %p298
      %p300 = scmp.le.s32.totalorder 1, %s25
      %p301 = scmp.lt.s32.totalorder %s25, 3
      %p302 = pnand %p300, %p301
      %p303 = pneg %p302
      // Predicated region
      $region9: #{tpu_custom_call.1} parent=5 // pred_check
        _
      $region10: #{tpu_custom_call.1} parent=5 // pred_check_branch
        %305 = sbr.rel (%p302) target = $region12
      $region11: #{tpu_custom_call.1} parent=5 // pred_region
        %s306 = ssub.s32 %s25, 1
        // Predicated region
        $region13: #{tpu_custom_call.1} parent=11 // pred_check
          %p307 = pneg %p72
        $region14: #{tpu_custom_call.1} parent=11 // pred_check_branch
          %309 = sbr.rel (%p307) target = $region16
        $region15: #{tpu_custom_call.1} parent=11 // pred_region
          _
        $region16: #{tpu_custom_call.1} parent=11 // pred_fallthru
          _
        // Predicated region
        $region17: #{tpu_custom_call.1} parent=11 // pred_check
          %p310 = pneg %p93
        $region18: #{tpu_custom_call.1} parent=11 // pred_check_branch
          %312 = sbr.rel (%p310) target = $region20
        $region19: #{tpu_custom_call.1} parent=11 // pred_region
          _
        $region20: #{tpu_custom_call.1} parent=11 // pred_fallthru
          _
        // Predicated region
        $region21: #{tpu_custom_call.1} parent=11 // pred_check
          %p313 = pneg %p114
        $region22: #{tpu_custom_call.1} parent=11 // pred_check_branch
          %315 = sbr.rel (%p313) target = $region24
        $region23: #{tpu_custom_call.1} parent=11 // pred_region
          _
        $region24: #{tpu_custom_call.1} parent=11 // pred_fallthru
          _
        // Predicated region
        $region25: #{tpu_custom_call.1} parent=11 // pred_check
          %p316 = pneg %p135
        $region26: #{tpu_custom_call.1} parent=11 // pred_check_branch
          %318 = sbr.rel (%p316) target = $region28
        $region27: #{tpu_custom_call.1} parent=11 // pred_region
          _
        $region28: #{tpu_custom_call.1} parent=11 // pred_fallthru
          _
        // Predicated region
        $region29: #{tpu_custom_call.1} parent=11 // pred_check
          %p319 = pneg %p156
        $region30: #{tpu_custom_call.1} parent=11 // pred_check_branch
          %321 = sbr.rel (%p319) target = $region32
        $region31: #{tpu_custom_call.1} parent=11 // pred_region
          _
        $region32: #{tpu_custom_call.1} parent=11 // pred_fallthru
          _
        // Predicated region
        $region33: #{tpu_custom_call.1} parent=11 // pred_check
          %p322 = pneg %p177
        $region34: #{tpu_custom_call.1} parent=11 // pred_check_branch
          %324 = sbr.rel (%p322) target = $region36
        $region35: #{tpu_custom_call.1} parent=11 // pred_region
          _
        $region36: #{tpu_custom_call.1} parent=11 // pred_fallthru
          _
        // Predicated region
        $region37: #{tpu_custom_call.1} parent=11 // pred_check
          %p325 = pneg %p198
        $region38: #{tpu_custom_call.1} parent=11 // pred_check_branch
          %327 = sbr.rel (%p325) target = $region40
        $region39: #{tpu_custom_call.1} parent=11 // pred_region
          _
        $region40: #{tpu_custom_call.1} parent=11 // pred_fallthru
          _
        // Predicated region
        $region41: #{tpu_custom_call.1} parent=11 // pred_check
          %p328 = pneg %p219
        $region42: #{tpu_custom_call.1} parent=11 // pred_check_branch
          %330 = sbr.rel (%p328) target = $region44
        $region43: #{tpu_custom_call.1} parent=11 // pred_region
          _
        $region44: #{tpu_custom_call.1} parent=11 // pred_fallthru
          _
        // Predicated region
        $region45: #{tpu_custom_call.1} parent=11 // pred_check
          %p331 = pneg %p240
        $region46: #{tpu_custom_call.1} parent=11 // pred_check_branch
          %333 = sbr.rel (%p331) target = $region48
        $region47: #{tpu_custom_call.1} parent=11 // pred_region
          %335 = vsyncadd [#allocation5], 0
          %s336 = sshll.u32 %s9, 4
          %s337 = int_to_ptr.hbm [resolvable:$true] %s336
          %s338 = sshll.u32 [#allocation4], 4
          %s339 = int_to_ptr.vmem [resolvable:$true] %s338
          %344 = dma.hbm_to_vmem [thread:$0]  %s337, 512, %s339, [#allocation5], 128, 128, 8
        $region48: #{tpu_custom_call.1} parent=11 // pred_fallthru
          _
      $region12: #{tpu_custom_call.1} parent=5 // pred_fallthru
        _
      %p345 = scmp.lt.s32.totalorder %s25, 2
      // Predicated region
      $region49: #{tpu_custom_call.1} parent=5 // pred_check
        %p346 = pneg %p345
      $region50: #{tpu_custom_call.1} parent=5 // pred_check_branch
        %348 = sbr.rel (%p346) target = $region52
      $region51: #{tpu_custom_call.1} parent=5 // pred_region
        // Predicated region
        $region53: #{tpu_custom_call.1} parent=51 // pred_check
          %p349 = pneg %p45
        $region54: #{tpu_custom_call.1} parent=51 // pred_check_branch
          %351 = sbr.rel (%p349) target = $region56
        $region55: #{tpu_custom_call.1} parent=51 // pred_region
          %p352 = scmp.lt.s32.totalorder %s25, 1
          %s353 = scalar_select %p352, %s25, 1
          %s354 = smul.addr %s353, 32
          %s355 = smul.addr %s354, 8
          %s356 = scalar_lea.vmem %s0, %s355
        $region56: #{tpu_custom_call.1} parent=51 // pred_fallthru
          _
      $region52: #{tpu_custom_call.1} parent=5 // pred_fallthru
        _
      %p357 = scmp.le.s32.totalorder 1, %s25
      %p358 = scmp.lt.s32.totalorder %s25, 3
      %p359 = pnand %p357, %p358
      %p360 = pneg %p359
      // Predicated region
      $region57: #{tpu_custom_call.1} parent=5 // pred_check
        _
      $region58: #{tpu_custom_call.1} parent=5 // pred_check_branch
        %362 = sbr.rel (%p359) target = $region60
      $region59: #{tpu_custom_call.1} parent=5 // pred_region
        %s363 = ssub.s32 %s25, 1
        // Predicated region
        $region61: #{tpu_custom_call.1} parent=59 // pred_check
          %p364 = pneg %p240
        $region62: #{tpu_custom_call.1} parent=59 // pred_check_branch
          %366 = sbr.rel (%p364) target = $region64
        $region63: #{tpu_custom_call.1} parent=59 // pred_region
          %368 = dma.done [#allocation5], 512
        $region64: #{tpu_custom_call.1} parent=59 // pred_fallthru
          _
        %p369 = scmp.lt.s32.totalorder %s30, 1
        %s370 = scalar_select %p369, %s30, 1
        %s371 = smul.addr %s370, 32
        %s372 = smul.addr %s371, 8
        %s373 = scalar_lea.vmem %s0, %s372
        %p374 = pneg %p51
        %p375 = pneg %p48
        %p376 = pneg %p72
        %p377 = pneg %p69
        %p378 = pneg %p93
        %p379 = pneg %p90
        %p380 = pneg %p114
        %p381 = pneg %p111
        %p382 = pneg %p135
        %p383 = pneg %p132
        %p384 = pneg %p156
        %p385 = pneg %p153
        %p386 = pneg %p177
        %p387 = pneg %p174
        %p388 = pneg %p198
        %p389 = pneg %p195
        %p390 = pneg %p219
        %p391 = pneg %p216
        %p392 = pneg %p240
        %p393 = pneg %p237
        %p394 = pneg %p266
        %p395 = pneg %p263
        %s396 = sand.u32 %s253, 1
        %s397 = scalar_lea.sflag [#allocation6], %s396
        %s398 = sand.u32 %s253, 1
        %s399 = smul.addr %s398, 256
        %s400 = scalar_lea.vmem [#allocation7], %s399
        %p401 = pneg %p292
        %p402 = pneg %p289
        %s403 = sand.u32 %s279, 1
        %s404 = scalar_lea.sflag [#allocation9], %s403
        %s405 = sand.u32 %s279, 1
        %s406 = smul.addr %s405, 64
        %s407 = scalar_lea.vmem [#allocation8], %s406
        %p408 = scmp.lt.s32.totalorder %s30, 1
        %s409 = scalar_select %p408, %s30, 1
        %s410 = smul.addr %s409, 32
        %s411 = smul.addr %s410, 8
        %s412 = scalar_lea.vmem %s0, %s411
        %v413 = vld [vmem:[#allocation4] sm:$0xff]
        %v414 = vld [vmem:[#allocation4 + $0x8] sm:$0xff]
        %v415 = vld [vmem:[#allocation4 + $0x10] sm:$0xff]
        %v416 = vld [vmem:[#allocation4 + $0x18] sm:$0xff]
        %vm417 = vcmask 130048
        %418 = vst.msk [vmem:[#allocation2] sm:$0xff] %vm417, 0.0
        %419 = vst.msk [vmem:[#allocation2 + $0x8] sm:$0xff] %vm417, 0.0
        %vm420 = vcmask 123904
        %421 = vst.msk [vmem:[#allocation2 + $0x10] sm:$0x3] %vm420, 0.0
        %s422 = scalar_lea.vmem [#allocation2], 408
        %423 = vst.msk [vmem:[%s422] sm:$0xff] %vm417, 0.0
        %424 = vst.msk [vmem:[%s422 + $0x8] sm:$0xff] %vm417, 0.0
        %425 = vst.msk [vmem:[%s422 + $0x10] sm:$0x3] %vm420, 0.0
        %vm426 = vcmask 122880
        %427 = vst.msk [vmem:[#allocation2] sm:$0x1] %vm426, 0.0
        %428 = vst.msk [vmem:[#allocation2 + $0x18] sm:$0x1] %vm426, 0.0
        %429 = vst.msk [vmem:[#allocation2 + $0x30] sm:$0x1] %vm426, 0.0
        %430 = vst.msk [vmem:[#allocation2 + $0x48] sm:$0x1] %vm426, 0.0
        %431 = vst.msk [vmem:[#allocation2 + $0x60] sm:$0x1] %vm426, 0.0
        %432 = vst.msk [vmem:[#allocation2 + $0x78] sm:$0x1] %vm426, 0.0
        %433 = vst.msk [vmem:[#allocation2 + $0x90] sm:$0x1] %vm426, 0.0
        %434 = vst.msk [vmem:[#allocation2 + $0xa8] sm:$0x1] %vm426, 0.0
        %435 = vst.msk [vmem:[#allocation2 + $0xc0] sm:$0x1] %vm426, 0.0
        %436 = vst.msk [vmem:[#allocation2 + $0xd8] sm:$0x1] %vm426, 0.0
        %437 = vst.msk [vmem:[#allocation2 + $0xf0] sm:$0x1] %vm426, 0.0
        %438 = vst.msk [vmem:[#allocation2 + $0x108] sm:$0x1] %vm426, 0.0
        %439 = vst.msk [vmem:[#allocation2 + $0x120] sm:$0x1] %vm426, 0.0
        %440 = vst.msk [vmem:[#allocation2 + $0x138] sm:$0x1] %vm426, 0.0
        %441 = vst.msk [vmem:[#allocation2 + $0x150] sm:$0x1] %vm426, 0.0
        %442 = vst.msk [vmem:[#allocation2 + $0x168] sm:$0x1] %vm426, 0.0
        %443 = vst.msk [vmem:[#allocation2 + $0x180] sm:$0x1] %vm426, 0.0
        %444 = vst.msk [vmem:[#allocation2 + $0x198] sm:$0x1] %vm426, 0.0
        %445 = vst.msk [vmem:[#allocation2 + $0x11] sm:$0x1] %vm426, 0.0
        %446 = vst.msk [vmem:[#allocation2 + $0x29] sm:$0x1] %vm426, 0.0
        %447 = vst.msk [vmem:[#allocation2 + $0x41] sm:$0x1] %vm426, 0.0
        %448 = vst.msk [vmem:[#allocation2 + $0x59] sm:$0x1] %vm426, 0.0
        %449 = vst.msk [vmem:[#allocation2 + $0x71] sm:$0x1] %vm426, 0.0
        %450 = vst.msk [vmem:[#allocation2 + $0x89] sm:$0x1] %vm426, 0.0
        %451 = vst.msk [vmem:[#allocation2 + $0xa1] sm:$0x1] %vm426, 0.0
        %452 = vst.msk [vmem:[#allocation2 + $0xb9] sm:$0x1] %vm426, 0.0
        %453 = vst.msk [vmem:[#allocation2 + $0xd1] sm:$0x1] %vm426, 0.0
        %454 = vst.msk [vmem:[#allocation2 + $0xe9] sm:$0x1] %vm426, 0.0
        %455 = vst.msk [vmem:[#allocation2 + $0x101] sm:$0x1] %vm426, 0.0
        %456 = vst.msk [vmem:[#allocation2 + $0x119] sm:$0x1] %vm426, 0.0
        %457 = vst.msk [vmem:[#allocation2 + $0x131] sm:$0x1] %vm426, 0.0
        %458 = vst.msk [vmem:[#allocation2 + $0x149] sm:$0x1] %vm426, 0.0
        %459 = vst.msk [vmem:[#allocation2 + $0x161] sm:$0x1] %vm426, 0.0
        %460 = vst.msk [vmem:[#allocation2 + $0x179] sm:$0x1] %vm426, 0.0
        %461 = vst.msk [vmem:[#allocation2 + $0x191] sm:$0x1] %vm426, 0.0
        %462 = vst.msk [vmem:[#allocation2 + $0x1a9] sm:$0x1] %vm426, 0.0
        %v463 = vld [vmem:[%s412] sm:$0xff]
        %v464 = vld [vmem:[%s412 + $0x8] sm:$0xff]
        %v465 = vld [vmem:[%s412 + $0x10] sm:$0xff]
        %v466 = vld [vmem:[%s412 + $0x18] sm:$0xff]
        %v467 = vld [vmem:[%s412 + $0x20] sm:$0xff]
        %v468 = vld [vmem:[%s412 + $0x28] sm:$0xff]
        %v469 = vld [vmem:[%s412 + $0x30] sm:$0xff]
        %v470 = vld [vmem:[%s412 + $0x38] sm:$0xff]
        %v471 = vld [vmem:[%s412 + $0x40] sm:$0xff]
        %v472 = vld [vmem:[%s412 + $0x48] sm:$0xff]
        %v473 = vld [vmem:[%s412 + $0x50] sm:$0xff]
        %v474 = vld [vmem:[%s412 + $0x58] sm:$0xff]
        %v475 = vld [vmem:[%s412 + $0x60] sm:$0xff]
        %v476 = vld [vmem:[%s412 + $0x68] sm:$0xff]
        %v477 = vld [vmem:[%s412 + $0x70] sm:$0xff]
        %v478 = vld [vmem:[%s412 + $0x78] sm:$0xff]
        %v479 = vld [vmem:[%s412 + $0x80] sm:$0xff]
        %v480 = vld [vmem:[%s412 + $0x88] sm:$0xff]
        %v481 = vld [vmem:[%s412 + $0x90] sm:$0xff]
        %v482 = vld [vmem:[%s412 + $0x98] sm:$0xff]
        %v483 = vld [vmem:[%s412 + $0xa0] sm:$0xff]
        %v484 = vld [vmem:[%s412 + $0xa8] sm:$0xff]
        %v485 = vld [vmem:[%s412 + $0xb0] sm:$0xff]
        %v486 = vld [vmem:[%s412 + $0xb8] sm:$0xff]
        %v487 = vld [vmem:[%s412 + $0xc0] sm:$0xff]
        %v488 = vld [vmem:[%s412 + $0xc8] sm:$0xff]
        %v489 = vld [vmem:[%s412 + $0xd0] sm:$0xff]
        %v490 = vld [vmem:[%s412 + $0xd8] sm:$0xff]
        %v491 = vld [vmem:[%s412 + $0xe0] sm:$0xff]
        %v492 = vld [vmem:[%s412 + $0xe8] sm:$0xff]
        %v493 = vld [vmem:[%s412 + $0xf0] sm:$0xff]
        %v494 = vld [vmem:[%s412 + $0xf8] sm:$0xff]
        %s495 = scalar_lea.vmem [#allocation2], 24
        %496 = vst.msk [vmem:[%s495 + $0x1] sm:$0xff] %vm417, %v463
        %497 = vst.msk [vmem:[%s495 + $0x9] sm:$0xff] %vm417, %v464
        %498 = vst.msk [vmem:[%s495 + $0x19] sm:$0xff] %vm417, %v465
        %499 = vst.msk [vmem:[%s495 + $0x21] sm:$0xff] %vm417, %v466
        %500 = vst.msk [vmem:[%s495 + $0x31] sm:$0xff] %vm417, %v467
        %501 = vst.msk [vmem:[%s495 + $0x39] sm:$0xff] %vm417, %v468
        %502 = vst.msk [vmem:[%s495 + $0x49] sm:$0xff] %vm417, %v469
        %503 = vst.msk [vmem:[%s495 + $0x51] sm:$0xff] %vm417, %v470
        %504 = vst.msk [vmem:[%s495 + $0x61] sm:$0xff] %vm417, %v471
        %505 = vst.msk [vmem:[%s495 + $0x69] sm:$0xff] %vm417, %v472
        %506 = vst.msk [vmem:[%s495 + $0x79] sm:$0xff] %vm417, %v473
        %507 = vst.msk [vmem:[%s495 + $0x81] sm:$0xff] %vm417, %v474
        %508 = vst.msk [vmem:[%s495 + $0x91] sm:$0xff] %vm417, %v475
        %509 = vst.msk [vmem:[%s495 + $0x99] sm:$0xff] %vm417, %v476
        %510 = vst.msk [vmem:[%s495 + $0xa9] sm:$0xff] %vm417, %v477
        %511 = vst.msk [vmem:[%s495 + $0xb1] sm:$0xff] %vm417, %v478
        %512 = vst.msk [vmem:[%s495 + $0xc1] sm:$0xff] %vm417, %v479
        %513 = vst.msk [vmem:[%s495 + $0xc9] sm:$0xff] %vm417, %v480
        %514 = vst.msk [vmem:[%s495 + $0xd9] sm:$0xff] %vm417, %v481
        %515 = vst.msk [vmem:[%s495 + $0xe1] sm:$0xff] %vm417, %v482
        %516 = vst.msk [vmem:[%s495 + $0xf1] sm:$0xff] %vm417, %v483
        %517 = vst.msk [vmem:[%s495 + $0xf9] sm:$0xff] %vm417, %v484
        %518 = vst.msk [vmem:[%s495 + $0x109] sm:$0xff] %vm417, %v485
        %519 = vst.msk [vmem:[%s495 + $0x111] sm:$0xff] %vm417, %v486
        %520 = vst.msk [vmem:[%s495 + $0x121] sm:$0xff] %vm417, %v487
        %521 = vst.msk [vmem:[%s495 + $0x129] sm:$0xff] %vm417, %v488
        %522 = vst.msk [vmem:[%s495 + $0x139] sm:$0xff] %vm417, %v489
        %523 = vst.msk [vmem:[%s495 + $0x141] sm:$0xff] %vm417, %v490
        %524 = vst.msk [vmem:[%s495 + $0x151] sm:$0xff] %vm417, %v491
        %525 = vst.msk [vmem:[%s495 + $0x159] sm:$0xff] %vm417, %v492
        %526 = vst.msk [vmem:[%s495 + $0x169] sm:$0xff] %vm417, %v493
        %527 = vst.msk [vmem:[%s495 + $0x171] sm:$0xff] %vm417, %v494
        %v528 = vld [vmem:[%s2] sm:$0x1]
        %v529 = vld [vmem:[#allocation2] sm:$0xff]
        %v530 = vld [vmem:[#allocation2 + $0x8] sm:$0xff]
        %v531 = vld [vmem:[#allocation2 + $0x18] sm:$0xff]
        %v532 = vld [vmem:[#allocation2 + $0x20] sm:$0xff]
        %v533 = vld [vmem:[#allocation2 + $0x30] sm:$0xff]
        %v534 = vld [vmem:[#allocation2 + $0x38] sm:$0xff]
        %v535 = vld [vmem:[#allocation2 + $0x48] sm:$0xff]
        %v536 = vld [vmem:[#allocation2 + $0x50] sm:$0xff]
        %v537 = vld [vmem:[#allocation2 + $0x60] sm:$0xff]
        %v538 = vld [vmem:[#allocation2 + $0x68] sm:$0xff]
        %v539 = vld [vmem:[#allocation2 + $0x78] sm:$0xff]
        %v540 = vld [vmem:[#allocation2 + $0x80] sm:$0xff]
        %v541 = vld [vmem:[#allocation2 + $0x90] sm:$0xff]
        %v542 = vld [vmem:[#allocation2 + $0x98] sm:$0xff]
        %v543 = vld [vmem:[#allocation2 + $0xa8] sm:$0xff]
        %v544 = vld [vmem:[#allocation2 + $0xb0] sm:$0xff]
        %v545 = vld [vmem:[#allocation2 + $0xc0] sm:$0xff]
        %v546 = vld [vmem:[#allocation2 + $0xc8] sm:$0xff]
        %v547 = vld [vmem:[#allocation2 + $0xd8] sm:$0xff]
        %v548 = vld [vmem:[#allocation2 + $0xe0] sm:$0xff]
        %v549 = vld [vmem:[#allocation2 + $0xf0] sm:$0xff]
        %v550 = vld [vmem:[#allocation2 + $0xf8] sm:$0xff]
        %v551 = vld [vmem:[#allocation2 + $0x108] sm:$0xff]
        %v552 = vld [vmem:[#allocation2 + $0x110] sm:$0xff]
        %v553 = vld [vmem:[#allocation2 + $0x120] sm:$0xff]
        %v554 = vld [vmem:[#allocation2 + $0x128] sm:$0xff]
        %v555 = vld [vmem:[#allocation2 + $0x138] sm:$0xff]
        %v556 = vld [vmem:[#allocation2 + $0x140] sm:$0xff]
        %v557 = vld [vmem:[#allocation2 + $0x150] sm:$0xff]
        %v558 = vld [vmem:[#allocation2 + $0x158] sm:$0xff]
        %v559 = vld [vmem:[#allocation2 + $0x168] sm:$0xff]
        %v560 = vld [vmem:[#allocation2 + $0x170] sm:$0xff]
        %v561 = vld [vmem:[#allocation2 + $0x1] sm:$0xff]
        %v562 = vld [vmem:[#allocation2 + $0x9] sm:$0xff]
        %v563 = vld [vmem:[#allocation2 + $0x19] sm:$0xff]
        %v564 = vld [vmem:[#allocation2 + $0x21] sm:$0xff]
        %v565 = vld [vmem:[#allocation2 + $0x31] sm:$0xff]
        %v566 = vld [vmem:[#allocation2 + $0x39] sm:$0xff]
        %v567 = vld [vmem:[#allocation2 + $0x49] sm:$0xff]
        %v568 = vld [vmem:[#allocation2 + $0x51] sm:$0xff]
        %v569 = vld [vmem:[#allocation2 + $0x61] sm:$0xff]
        %v570 = vld [vmem:[#allocation2 + $0x69] sm:$0xff]
        %v571 = vld [vmem:[#allocation2 + $0x79] sm:$0xff]
        %v572 = vld [vmem:[#allocation2 + $0x81] sm:$0xff]
        %v573 = vld [vmem:[#allocation2 + $0x91] sm:$0xff]
        %v574 = vld [vmem:[#allocation2 + $0x99] sm:$0xff]
        %v575 = vld [vmem:[#allocation2 + $0xa9] sm:$0xff]
        %v576 = vld [vmem:[#allocation2 + $0xb1] sm:$0xff]
        %v577 = vld [vmem:[#allocation2 + $0xc1] sm:$0xff]
        %v578 = vld [vmem:[#allocation2 + $0xc9] sm:$0xff]
        %v579 = vld [vmem:[#allocation2 + $0xd9] sm:$0xff]
        %v580 = vld [vmem:[#allocation2 + $0xe1] sm:$0xff]
        %v581 = vld [vmem:[#allocation2 + $0xf1] sm:$0xff]
        %v582 = vld [vmem:[#allocation2 + $0xf9] sm:$0xff]
        %v583 = vld [vmem:[#allocation2 + $0x109] sm:$0xff]
        %v584 = vld [vmem:[#allocation2 + $0x111] sm:$0xff]
        %v585 = vld [vmem:[#allocation2 + $0x121] sm:$0xff]
        %v586 = vld [vmem:[#allocation2 + $0x129] sm:$0xff]
        %v587 = vld [vmem:[#allocation2 + $0x139] sm:$0xff]
        %v588 = vld [vmem:[#allocation2 + $0x141] sm:$0xff]
        %v589 = vld [vmem:[#allocation2 + $0x151] sm:$0xff]
        %v590 = vld [vmem:[#allocation2 + $0x159] sm:$0xff]
        %v591 = vld [vmem:[#allocation2 + $0x169] sm:$0xff]
        %v592 = vld [vmem:[#allocation2 + $0x171] sm:$0xff]
        %v593 = vld [vmem:[#allocation2 + $0x2] sm:$0xff]
        %v594 = vld [vmem:[#allocation2 + $0xa] sm:$0xff]
        %v595 = vld [vmem:[#allocation2 + $0x1a] sm:$0xff]
        %v596 = vld [vmem:[#allocation2 + $0x22] sm:$0xff]
        %v597 = vld [vmem:[#allocation2 + $0x32] sm:$0xff]
        %v598 = vld [vmem:[#allocation2 + $0x3a] sm:$0xff]
        %v599 = vld [vmem:[#allocation2 + $0x4a] sm:$0xff]
        %v600 = vld [vmem:[#allocation2 + $0x52] sm:$0xff]
        %v601 = vld [vmem:[#allocation2 + $0x62] sm:$0xff]
        %v602 = vld [vmem:[#allocation2 + $0x6a] sm:$0xff]
        %v603 = vld [vmem:[#allocation2 + $0x7a] sm:$0xff]
        %v604 = vld [vmem:[#allocation2 + $0x82] sm:$0xff]
        %v605 = vld [vmem:[#allocation2 + $0x92] sm:$0xff]
        %v606 = vld [vmem:[#allocation2 + $0x9a] sm:$0xff]
        %v607 = vld [vmem:[#allocation2 + $0xaa] sm:$0xff]
        %v608 = vld [vmem:[#allocation2 + $0xb2] sm:$0xff]
        %v609 = vld [vmem:[#allocation2 + $0xc2] sm:$0xff]
        %v610 = vld [vmem:[#allocation2 + $0xca] sm:$0xff]
        %v611 = vld [vmem:[#allocation2 + $0xda] sm:$0xff]
        %v612 = vld [vmem:[#allocation2 + $0xe2] sm:$0xff]
        %v613 = vld [vmem:[#allocation2 + $0xf2] sm:$0xff]
        %v614 = vld [vmem:[#allocation2 + $0xfa] sm:$0xff]
        %v615 = vld [vmem:[#allocation2 + $0x10a] sm:$0xff]
        %v616 = vld [vmem:[#allocation2 + $0x112] sm:$0xff]
        %v617 = vld [vmem:[#allocation2 + $0x122] sm:$0xff]
        %v618 = vld [vmem:[#allocation2 + $0x12a] sm:$0xff]
        %v619 = vld [vmem:[#allocation2 + $0x13a] sm:$0xff]
        %v620 = vld [vmem:[#allocation2 + $0x142] sm:$0xff]
        %v621 = vld [vmem:[#allocation2 + $0x152] sm:$0xff]
        %v622 = vld [vmem:[#allocation2 + $0x15a] sm:$0xff]
        %v623 = vld [vmem:[#allocation2 + $0x16a] sm:$0xff]
        %v624 = vld [vmem:[#allocation2 + $0x172] sm:$0xff]
        %657 = vrot.lane.b32.xlu0 %v561, 16
        %v658 = vpop.permute.xlu0 %657
        %659 = vrot.lane.b32.xlu0 %v562, 16
        %v660 = vpop.permute.xlu0 %659
        %661 = vrot.lane.b32.xlu0 %v563, 16
        %v662 = vpop.permute.xlu0 %661
        %663 = vrot.lane.b32.xlu0 %v564, 16
        %v664 = vpop.permute.xlu0 %663
        %665 = vrot.lane.b32.xlu0 %v565, 16
        %v666 = vpop.permute.xlu0 %665
        %667 = vrot.lane.b32.xlu0 %v566, 16
        %v668 = vpop.permute.xlu0 %667
        %669 = vrot.lane.b32.xlu0 %v567, 16
        %v670 = vpop.permute.xlu0 %669
        %671 = vrot.lane.b32.xlu0 %v568, 16
        %v672 = vpop.permute.xlu0 %671
        %673 = vrot.lane.b32.xlu0 %v569, 16
        %v674 = vpop.permute.xlu0 %673
        %675 = vrot.lane.b32.xlu0 %v570, 16
        %v676 = vpop.permute.xlu0 %675
        %677 = vrot.lane.b32.xlu0 %v571, 16
        %v678 = vpop.permute.xlu0 %677
        %679 = vrot.lane.b32.xlu0 %v572, 16
        %v680 = vpop.permute.xlu0 %679
        %681 = vrot.lane.b32.xlu0 %v573, 16
        %v682 = vpop.permute.xlu0 %681
        %683 = vrot.lane.b32.xlu0 %v574, 16
        %v684 = vpop.permute.xlu0 %683
        %685 = vrot.lane.b32.xlu0 %v575, 16
        %v686 = vpop.permute.xlu0 %685
        %687 = vrot.lane.b32.xlu0 %v576, 16
        %v688 = vpop.permute.xlu0 %687
        %689 = vrot.lane.b32.xlu0 %v577, 16
        %v690 = vpop.permute.xlu0 %689
        %691 = vrot.lane.b32.xlu0 %v578, 16
        %v692 = vpop.permute.xlu0 %691
        %693 = vrot.lane.b32.xlu0 %v579, 16
        %v694 = vpop.permute.xlu0 %693
        %695 = vrot.lane.b32.xlu0 %v580, 16
        %v696 = vpop.permute.xlu0 %695
        %697 = vrot.lane.b32.xlu0 %v581, 16
        %v698 = vpop.permute.xlu0 %697
        %699 = vrot.lane.b32.xlu0 %v582, 16
        %v700 = vpop.permute.xlu0 %699
        %701 = vrot.lane.b32.xlu0 %v583, 16
        %v702 = vpop.permute.xlu0 %701
        %703 = vrot.lane.b32.xlu0 %v584, 16
        %v704 = vpop.permute.xlu0 %703
        %705 = vrot.lane.b32.xlu0 %v585, 16
        %v706 = vpop.permute.xlu0 %705
        %707 = vrot.lane.b32.xlu0 %v586, 16
        %v708 = vpop.permute.xlu0 %707
        %709 = vrot.lane.b32.xlu0 %v587, 16
        %v710 = vpop.permute.xlu0 %709
        %711 = vrot.lane.b32.xlu0 %v588, 16
        %v712 = vpop.permute.xlu0 %711
        %713 = vrot.lane.b32.xlu0 %v589, 16
        %v714 = vpop.permute.xlu0 %713
        %715 = vrot.lane.b32.xlu0 %v590, 16
        %v716 = vpop.permute.xlu0 %715
        %717 = vrot.lane.b32.xlu0 %v591, 16
        %v718 = vpop.permute.xlu0 %717
        %719 = vrot.lane.b32.xlu0 %v592, 16
        %v720 = vpop.permute.xlu0 %719
        %785 = vrot.lane.b32.xlu0 %v593, 32
        %v786 = vpop.permute.xlu0 %785
        %787 = vrot.lane.b32.xlu0 %v594, 32
        %v788 = vpop.permute.xlu0 %787
        %789 = vrot.lane.b32.xlu0 %v595, 32
        %v790 = vpop.permute.xlu0 %789
        %791 = vrot.lane.b32.xlu0 %v596, 32
        %v792 = vpop.permute.xlu0 %791
        %793 = vrot.lane.b32.xlu0 %v597, 32
        %v794 = vpop.permute.xlu0 %793
        %795 = vrot.lane.b32.xlu0 %v598, 32
        %v796 = vpop.permute.xlu0 %795
        %797 = vrot.lane.b32.xlu0 %v599, 32
        %v798 = vpop.permute.xlu0 %797
        %799 = vrot.lane.b32.xlu0 %v600, 32
        %v800 = vpop.permute.xlu0 %799
        %801 = vrot.lane.b32.xlu0 %v601, 32
        %v802 = vpop.permute.xlu0 %801
        %803 = vrot.lane.b32.xlu0 %v602, 32
        %v804 = vpop.permute.xlu0 %803
        %805 = vrot.lane.b32.xlu0 %v603, 32
        %v806 = vpop.permute.xlu0 %805
        %807 = vrot.lane.b32.xlu0 %v604, 32
        %v808 = vpop.permute.xlu0 %807
        %809 = vrot.lane.b32.xlu0 %v605, 32
        %v810 = vpop.permute.xlu0 %809
        %811 = vrot.lane.b32.xlu0 %v606, 32
        %v812 = vpop.permute.xlu0 %811
        %813 = vrot.lane.b32.xlu0 %v607, 32
        %v814 = vpop.permute.xlu0 %813
        %815 = vrot.lane.b32.xlu0 %v608, 32
        %v816 = vpop.permute.xlu0 %815
        %817 = vrot.lane.b32.xlu0 %v609, 32
        %v818 = vpop.permute.xlu0 %817
        %819 = vrot.lane.b32.xlu0 %v610, 32
        %v820 = vpop.permute.xlu0 %819
        %821 = vrot.lane.b32.xlu0 %v611, 32
        %v822 = vpop.permute.xlu0 %821
        %823 = vrot.lane.b32.xlu0 %v612, 32
        %v824 = vpop.permute.xlu0 %823
        %825 = vrot.lane.b32.xlu0 %v613, 32
        %v826 = vpop.permute.xlu0 %825
        %827 = vrot.lane.b32.xlu0 %v614, 32
        %v828 = vpop.permute.xlu0 %827
        %829 = vrot.lane.b32.xlu0 %v615, 32
        %v830 = vpop.permute.xlu0 %829
        %831 = vrot.lane.b32.xlu0 %v616, 32
        %v832 = vpop.permute.xlu0 %831
        %833 = vrot.lane.b32.xlu0 %v617, 32
        %v834 = vpop.permute.xlu0 %833
        %835 = vrot.lane.b32.xlu0 %v618, 32
        %v836 = vpop.permute.xlu0 %835
        %837 = vrot.lane.b32.xlu0 %v619, 32
        %v838 = vpop.permute.xlu0 %837
        %839 = vrot.lane.b32.xlu0 %v620, 32
        %v840 = vpop.permute.xlu0 %839
        %841 = vrot.lane.b32.xlu0 %v621, 32
        %v842 = vpop.permute.xlu0 %841
        %843 = vrot.lane.b32.xlu0 %v622, 32
        %v844 = vpop.permute.xlu0 %843
        %845 = vrot.lane.b32.xlu0 %v623, 32
        %v846 = vpop.permute.xlu0 %845
        %847 = vrot.lane.b32.xlu0 %v624, 32
        %v848 = vpop.permute.xlu0 %847
        %v881 = vsel %vm417, %v529, %v658
        %v882 = vsel %vm417, %v530, %v660
        %v883 = vsel %vm417, %v531, %v662
        %v884 = vsel %vm417, %v532, %v664
        %v885 = vsel %vm417, %v533, %v666
        %v886 = vsel %vm417, %v534, %v668
        %v887 = vsel %vm417, %v535, %v670
        %v888 = vsel %vm417, %v536, %v672
        %v889 = vsel %vm417, %v537, %v674
        %v890 = vsel %vm417, %v538, %v676
        %v891 = vsel %vm417, %v539, %v678
        %v892 = vsel %vm417, %v540, %v680
        %v893 = vsel %vm417, %v541, %v682
        %v894 = vsel %vm417, %v542, %v684
        %v895 = vsel %vm417, %v543, %v686
        %v896 = vsel %vm417, %v544, %v688
        %v897 = vsel %vm417, %v545, %v690
        %v898 = vsel %vm417, %v546, %v692
        %v899 = vsel %vm417, %v547, %v694
        %v900 = vsel %vm417, %v548, %v696
        %v901 = vsel %vm417, %v549, %v698
        %v902 = vsel %vm417, %v550, %v700
        %v903 = vsel %vm417, %v551, %v702
        %v904 = vsel %vm417, %v552, %v704
        %v905 = vsel %vm417, %v553, %v706
        %v906 = vsel %vm417, %v554, %v708
        %v907 = vsel %vm417, %v555, %v710
        %v908 = vsel %vm417, %v556, %v712
        %v909 = vsel %vm417, %v557, %v714
        %v910 = vsel %vm417, %v558, %v716
        %v911 = vsel %vm417, %v559, %v718
        %v912 = vsel %vm417, %v560, %v720
        %vm913 = vcmask 261120
        %v914 = vsel %vm913, %v881, %v786
        %v915 = vsel %vm913, %v882, %v788
        %v916 = vsel %vm913, %v883, %v790
        %v917 = vsel %vm913, %v884, %v792
        %v918 = vsel %vm913, %v885, %v794
        %v919 = vsel %vm913, %v886, %v796
        %v920 = vsel %vm913, %v887, %v798
        %v921 = vsel %vm913, %v888, %v800
        %v922 = vsel %vm913, %v889, %v802
        %v923 = vsel %vm913, %v890, %v804
        %v924 = vsel %vm913, %v891, %v806
        %v925 = vsel %vm913, %v892, %v808
        %v926 = vsel %vm913, %v893, %v810
        %v927 = vsel %vm913, %v894, %v812
        %v928 = vsel %vm913, %v895, %v814
        %v929 = vsel %vm913, %v896, %v816
        %v930 = vsel %vm913, %v897, %v818
        %v931 = vsel %vm913, %v898, %v820
        %v932 = vsel %vm913, %v899, %v822
        %v933 = vsel %vm913, %v900, %v824
        %v934 = vsel %vm913, %v901, %v826
        %v935 = vsel %vm913, %v902, %v828
        %v936 = vsel %vm913, %v903, %v830
        %v937 = vsel %vm913, %v904, %v832
        %v938 = vsel %vm913, %v905, %v834
        %v939 = vsel %vm913, %v906, %v836
        %v940 = vsel %vm913, %v907, %v838
        %v941 = vsel %vm913, %v908, %v840
        %v942 = vsel %vm913, %v909, %v842
        %v943 = vsel %vm913, %v910, %v844
        %v944 = vsel %vm913, %v911, %v846
        %v945 = vsel %vm913, %v912, %v848
        %v946 = vld [vmem:[%s1] sm:$0xff]
        %v947 = vld [vmem:[%s1 + $0x8] sm:$0xff]
        %v948 = vld [vmem:[%s1 + $0x10] sm:$0xff]
        %v949 = vld [vmem:[%s1 + $0x18] sm:$0xff]
        %v950 = vld [vmem:[%s1 + $0x20] sm:$0xff]
        %v951 = vld [vmem:[%s1 + $0x28] sm:$0xff]
        %v952 = vld [vmem:[%s495] sm:$0xff]
        %v953 = vld [vmem:[%s495 + $0x8] sm:$0xff]
        %v954 = vld [vmem:[%s495 + $0x18] sm:$0xff]
        %v955 = vld [vmem:[%s495 + $0x20] sm:$0xff]
        %v956 = vld [vmem:[%s495 + $0x30] sm:$0xff]
        %v957 = vld [vmem:[%s495 + $0x38] sm:$0xff]
        %v958 = vld [vmem:[%s495 + $0x48] sm:$0xff]
        %v959 = vld [vmem:[%s495 + $0x50] sm:$0xff]
        %v960 = vld [vmem:[%s495 + $0x60] sm:$0xff]
        %v961 = vld [vmem:[%s495 + $0x68] sm:$0xff]
        %v962 = vld [vmem:[%s495 + $0x78] sm:$0xff]
        %v963 = vld [vmem:[%s495 + $0x80] sm:$0xff]
        %v964 = vld [vmem:[%s495 + $0x90] sm:$0xff]
        %v965 = vld [vmem:[%s495 + $0x98] sm:$0xff]
        %v966 = vld [vmem:[%s495 + $0xa8] sm:$0xff]
        %v967 = vld [vmem:[%s495 + $0xb0] sm:$0xff]
        %v968 = vld [vmem:[%s495 + $0xc0] sm:$0xff]
        %v969 = vld [vmem:[%s495 + $0xc8] sm:$0xff]
        %v970 = vld [vmem:[%s495 + $0xd8] sm:$0xff]
        %v971 = vld [vmem:[%s495 + $0xe0] sm:$0xff]
        %v972 = vld [vmem:[%s495 + $0xf0] sm:$0xff]
        %v973 = vld [vmem:[%s495 + $0xf8] sm:$0xff]
        %v974 = vld [vmem:[%s495 + $0x108] sm:$0xff]
        %v975 = vld [vmem:[%s495 + $0x110] sm:$0xff]
        %v976 = vld [vmem:[%s495 + $0x120] sm:$0xff]
        %v977 = vld [vmem:[%s495 + $0x128] sm:$0xff]
        %v978 = vld [vmem:[%s495 + $0x138] sm:$0xff]
        %v979 = vld [vmem:[%s495 + $0x140] sm:$0xff]
        %v980 = vld [vmem:[%s495 + $0x150] sm:$0xff]
        %v981 = vld [vmem:[%s495 + $0x158] sm:$0xff]
        %v982 = vld [vmem:[%s495 + $0x168] sm:$0xff]
        %v983 = vld [vmem:[%s495 + $0x170] sm:$0xff]
        %v984 = vld [vmem:[%s495 + $0x1] sm:$0xff]
        %v985 = vld [vmem:[%s495 + $0x9] sm:$0xff]
        %v986 = vld [vmem:[%s495 + $0x19] sm:$0xff]
        %v987 = vld [vmem:[%s495 + $0x21] sm:$0xff]
        %v988 = vld [vmem:[%s495 + $0x31] sm:$0xff]
        %v989 = vld [vmem:[%s495 + $0x39] sm:$0xff]
        %v990 = vld [vmem:[%s495 + $0x49] sm:$0xff]
        %v991 = vld [vmem:[%s495 + $0x51] sm:$0xff]
        %v992 = vld [vmem:[%s495 + $0x61] sm:$0xff]
        %v993 = vld [vmem:[%s495 + $0x69] sm:$0xff]
        %v994 = vld [vmem:[%s495 + $0x79] sm:$0xff]
        %v995 = vld [vmem:[%s495 + $0x81] sm:$0xff]
        %v996 = vld [vmem:[%s495 + $0x91] sm:$0xff]
        %v997 = vld [vmem:[%s495 + $0x99] sm:$0xff]
        %v998 = vld [vmem:[%s495 + $0xa9] sm:$0xff]
        %v999 = vld [vmem:[%s495 + $0xb1] sm:$0xff]
        %v1000 = vld [vmem:[%s495 + $0xc1] sm:$0xff]
        %v1001 = vld [vmem:[%s495 + $0xc9] sm:$0xff]
        %v1002 = vld [vmem:[%s495 + $0xd9] sm:$0xff]
        %v1003 = vld [vmem:[%s495 + $0xe1] sm:$0xff]
        %v1004 = vld [vmem:[%s495 + $0xf1] sm:$0xff]
        %v1005 = vld [vmem:[%s495 + $0xf9] sm:$0xff]
        %v1006 = vld [vmem:[%s495 + $0x109] sm:$0xff]
        %v1007 = vld [vmem:[%s495 + $0x111] sm:$0xff]
        %v1008 = vld [vmem:[%s495 + $0x121] sm:$0xff]
        %v1009 = vld [vmem:[%s495 + $0x129] sm:$0xff]
        %v1010 = vld [vmem:[%s495 + $0x139] sm:$0xff]
        %v1011 = vld [vmem:[%s495 + $0x141] sm:$0xff]
        %v1012 = vld [vmem:[%s495 + $0x151] sm:$0xff]
        %v1013 = vld [vmem:[%s495 + $0x159] sm:$0xff]
        %v1014 = vld [vmem:[%s495 + $0x169] sm:$0xff]
        %v1015 = vld [vmem:[%s495 + $0x171] sm:$0xff]
        %v1016 = vld [vmem:[%s495 + $0x2] sm:$0xff]
        %v1017 = vld [vmem:[%s495 + $0xa] sm:$0xff]
        %v1018 = vld [vmem:[%s495 + $0x1a] sm:$0xff]
        %v1019 = vld [vmem:[%s495 + $0x22] sm:$0xff]
        %v1020 = vld [vmem:[%s495 + $0x32] sm:$0xff]
        %v1021 = vld [vmem:[%s495 + $0x3a] sm:$0xff]
        %v1022 = vld [vmem:[%s495 + $0x4a] sm:$0xff]
        %v1023 = vld [vmem:[%s495 + $0x52] sm:$0xff]
        %v1024 = vld [vmem:[%s495 + $0x62] sm:$0xff]
        %v1025 = vld [vmem:[%s495 + $0x6a] sm:$0xff]
        %v1026 = vld [vmem:[%s495 + $0x7a] sm:$0xff]
        %v1027 = vld [vmem:[%s495 + $0x82] sm:$0xff]
        %v1028 = vld [vmem:[%s495 + $0x92] sm:$0xff]
        %v1029 = vld [vmem:[%s495 + $0x9a] sm:$0xff]
        %v1030 = vld [vmem:[%s495 + $0xaa] sm:$0xff]
        %v1031 = vld [vmem:[%s495 + $0xb2] sm:$0xff]
        %v1032 = vld [vmem:[%s495 + $0xc2] sm:$0xff]
        %v1033 = vld [vmem:[%s495 + $0xca] sm:$0xff]
        %v1034 = vld [vmem:[%s495 + $0xda] sm:$0xff]
        %v1035 = vld [vmem:[%s495 + $0xe2] sm:$0xff]
        %v1036 = vld [vmem:[%s495 + $0xf2] sm:$0xff]
        %v1037 = vld [vmem:[%s495 + $0xfa] sm:$0xff]
        %v1038 = vld [vmem:[%s495 + $0x10a] sm:$0xff]
        %v1039 = vld [vmem:[%s495 + $0x112] sm:$0xff]
        %v1040 = vld [vmem:[%s495 + $0x122] sm:$0xff]
        %v1041 = vld [vmem:[%s495 + $0x12a] sm:$0xff]
        %v1042 = vld [vmem:[%s495 + $0x13a] sm:$0xff]
        %v1043 = vld [vmem:[%s495 + $0x142] sm:$0xff]
        %v1044 = vld [vmem:[%s495 + $0x152] sm:$0xff]
        %v1045 = vld [vmem:[%s495 + $0x15a] sm:$0xff]
        %v1046 = vld [vmem:[%s495 + $0x16a] sm:$0xff]
        %v1047 = vld [vmem:[%s495 + $0x172] sm:$0xff]
        %1080 = vrot.lane.b32.xlu0 %v984, 16
        %v1081 = vpop.permute.xlu0 %1080
        %1082 = vrot.lane.b32.xlu0 %v985, 16
        %v1083 = vpop.permute.xlu0 %1082
        %1084 = vrot.lane.b32.xlu0 %v986, 16
        %v1085 = vpop.permute.xlu0 %1084
        %1086 = vrot.lane.b32.xlu0 %v987, 16
        %v1087 = vpop.permute.xlu0 %1086
        %1088 = vrot.lane.b32.xlu0 %v988, 16
        %v1089 = vpop.permute.xlu0 %1088
        %1090 = vrot.lane.b32.xlu0 %v989, 16
        %v1091 = vpop.permute.xlu0 %1090
        %1092 = vrot.lane.b32.xlu0 %v990, 16
        %v1093 = vpop.permute.xlu0 %1092
        %1094 = vrot.lane.b32.xlu0 %v991, 16
        %v1095 = vpop.permute.xlu0 %1094
        %1096 = vrot.lane.b32.xlu0 %v992, 16
        %v1097 = vpop.permute.xlu0 %1096
        %1098 = vrot.lane.b32.xlu0 %v993, 16
        %v1099 = vpop.permute.xlu0 %1098
        %1100 = vrot.lane.b32.xlu0 %v994, 16
        %v1101 = vpop.permute.xlu0 %1100
        %1102 = vrot.lane.b32.xlu0 %v995, 16
        %v1103 = vpop.permute.xlu0 %1102
        %1104 = vrot.lane.b32.xlu0 %v996, 16
        %v1105 = vpop.permute.xlu0 %1104
        %1106 = vrot.lane.b32.xlu0 %v997, 16
        %v1107 = vpop.permute.xlu0 %1106
        %1108 = vrot.lane.b32.xlu0 %v998, 16
        %v1109 = vpop.permute.xlu0 %1108
        %1110 = vrot.lane.b32.xlu0 %v999, 16
        %v1111 = vpop.permute.xlu0 %1110
        %1112 = vrot.lane.b32.xlu0 %v1000, 16
        %v1113 = vpop.permute.xlu0 %1112
        %1114 = vrot.lane.b32.xlu0 %v1001, 16
        %v1115 = vpop.permute.xlu0 %1114
        %1116 = vrot.lane.b32.xlu0 %v1002, 16
        %v1117 = vpop.permute.xlu0 %1116
        %1118 = vrot.lane.b32.xlu0 %v1003, 16
        %v1119 = vpop.permute.xlu0 %1118
        %1120 = vrot.lane.b32.xlu0 %v1004, 16
        %v1121 = vpop.permute.xlu0 %1120
        %1122 = vrot.lane.b32.xlu0 %v1005, 16
        %v1123 = vpop.permute.xlu0 %1122
        %1124 = vrot.lane.b32.xlu0 %v1006, 16
        %v1125 = vpop.permute.xlu0 %1124
        %1126 = vrot.lane.b32.xlu0 %v1007, 16
        %v1127 = vpop.permute.xlu0 %1126
        %1128 = vrot.lane.b32.xlu0 %v1008, 16
        %v1129 = vpop.permute.xlu0 %1128
        %1130 = vrot.lane.b32.xlu0 %v1009, 16
        %v1131 = vpop.permute.xlu0 %1130
        %1132 = vrot.lane.b32.xlu0 %v1010, 16
        %v1133 = vpop.permute.xlu0 %1132
        %1134 = vrot.lane.b32.xlu0 %v1011, 16
        %v1135 = vpop.permute.xlu0 %1134
        %1136 = vrot.lane.b32.xlu0 %v1012, 16
        %v1137 = vpop.permute.xlu0 %1136
        %1138 = vrot.lane.b32.xlu0 %v1013, 16
        %v1139 = vpop.permute.xlu0 %1138
        %1140 = vrot.lane.b32.xlu0 %v1014, 16
        %v1141 = vpop.permute.xlu0 %1140
        %1142 = vrot.lane.b32.xlu0 %v1015, 16
        %v1143 = vpop.permute.xlu0 %1142
        %1208 = vrot.lane.b32.xlu0 %v1016, 32
        %v1209 = vpop.permute.xlu0 %1208
        %1210 = vrot.lane.b32.xlu0 %v1017, 32
        %v1211 = vpop.permute.xlu0 %1210
        %1212 = vrot.lane.b32.xlu0 %v1018, 32
        %v1213 = vpop.permute.xlu0 %1212
        %1214 = vrot.lane.b32.xlu0 %v1019, 32
        %v1215 = vpop.permute.xlu0 %1214
        %1216 = vrot.lane.b32.xlu0 %v1020, 32
        %v1217 = vpop.permute.xlu0 %1216
        %1218 = vrot.lane.b32.xlu0 %v1021, 32
        %v1219 = vpop.permute.xlu0 %1218
        %1220 = vrot.lane.b32.xlu0 %v1022, 32
        %v1221 = vpop.permute.xlu0 %1220
        %1222 = vrot.lane.b32.xlu0 %v1023, 32
        %v1223 = vpop.permute.xlu0 %1222
        %1224 = vrot.lane.b32.xlu0 %v1024, 32
        %v1225 = vpop.permute.xlu0 %1224
        %1226 = vrot.lane.b32.xlu0 %v1025, 32
        %v1227 = vpop.permute.xlu0 %1226
        %1228 = vrot.lane.b32.xlu0 %v1026, 32
        %v1229 = vpop.permute.xlu0 %1228
        %1230 = vrot.lane.b32.xlu0 %v1027, 32
        %v1231 = vpop.permute.xlu0 %1230
        %1232 = vrot.lane.b32.xlu0 %v1028, 32
        %v1233 = vpop.permute.xlu0 %1232
        %1234 = vrot.lane.b32.xlu0 %v1029, 32
        %v1235 = vpop.permute.xlu0 %1234
        %1236 = vrot.lane.b32.xlu0 %v1030, 32
        %v1237 = vpop.permute.xlu0 %1236
        %1238 = vrot.lane.b32.xlu0 %v1031, 32
        %v1239 = vpop.permute.xlu0 %1238
        %1240 = vrot.lane.b32.xlu0 %v1032, 32
        %v1241 = vpop.permute.xlu0 %1240
        %1242 = vrot.lane.b32.xlu0 %v1033, 32
        %v1243 = vpop.permute.xlu0 %1242
        %1244 = vrot.lane.b32.xlu0 %v1034, 32
        %v1245 = vpop.permute.xlu0 %1244
        %1246 = vrot.lane.b32.xlu0 %v1035, 32
        %v1247 = vpop.permute.xlu0 %1246
        %1248 = vrot.lane.b32.xlu0 %v1036, 32
        %v1249 = vpop.permute.xlu0 %1248
        %1250 = vrot.lane.b32.xlu0 %v1037, 32
        %v1251 = vpop.permute.xlu0 %1250
        %1252 = vrot.lane.b32.xlu0 %v1038, 32
        %v1253 = vpop.permute.xlu0 %1252
        %1254 = vrot.lane.b32.xlu0 %v1039, 32
        %v1255 = vpop.permute.xlu0 %1254
        %1256 = vrot.lane.b32.xlu0 %v1040, 32
        %v1257 = vpop.permute.xlu0 %1256
        %1258 = vrot.lane.b32.xlu0 %v1041, 32
        %v1259 = vpop.permute.xlu0 %1258
        %1260 = vrot.lane.b32.xlu0 %v1042, 32
        %v1261 = vpop.permute.xlu0 %1260
        %1262 = vrot.lane.b32.xlu0 %v1043, 32
        %v1263 = vpop.permute.xlu0 %1262
        %1264 = vrot.lane.b32.xlu0 %v1044, 32
        %v1265 = vpop.permute.xlu0 %1264
        %1266 = vrot.lane.b32.xlu0 %v1045, 32
        %v1267 = vpop.permute.xlu0 %1266
        %1268 = vrot.lane.b32.xlu0 %v1046, 32
        %v1269 = vpop.permute.xlu0 %1268
        %1270 = vrot.lane.b32.xlu0 %v1047, 32
        %v1271 = vpop.permute.xlu0 %1270
        %v1304 = vsel %vm417, %v952, %v1081
        %v1305 = vsel %vm417, %v953, %v1083
        %v1306 = vsel %vm417, %v954, %v1085
        %v1307 = vsel %vm417, %v955, %v1087
        %v1308 = vsel %vm417, %v956, %v1089
        %v1309 = vsel %vm417, %v957, %v1091
        %v1310 = vsel %vm417, %v958, %v1093
        %v1311 = vsel %vm417, %v959, %v1095
        %v1312 = vsel %vm417, %v960, %v1097
        %v1313 = vsel %vm417, %v961, %v1099
        %v1314 = vsel %vm417, %v962, %v1101
        %v1315 = vsel %vm417, %v963, %v1103
        %v1316 = vsel %vm417, %v964, %v1105
        %v1317 = vsel %vm417, %v965, %v1107
        %v1318 = vsel %vm417, %v966, %v1109
        %v1319 = vsel %vm417, %v967, %v1111
        %v1320 = vsel %vm417, %v968, %v1113
        %v1321 = vsel %vm417, %v969, %v1115
        %v1322 = vsel %vm417, %v970, %v1117
        %v1323 = vsel %vm417, %v971, %v1119
        %v1324 = vsel %vm417, %v972, %v1121
        %v1325 = vsel %vm417, %v973, %v1123
        %v1326 = vsel %vm417, %v974, %v1125
        %v1327 = vsel %vm417, %v975, %v1127
        %v1328 = vsel %vm417, %v976, %v1129
        %v1329 = vsel %vm417, %v977, %v1131
        %v1330 = vsel %vm417, %v978, %v1133
        %v1331 = vsel %vm417, %v979, %v1135
        %v1332 = vsel %vm417, %v980, %v1137
        %v1333 = vsel %vm417, %v981, %v1139
        %v1334 = vsel %vm417, %v982, %v1141
        %v1335 = vsel %vm417, %v983, %v1143
        %v1336 = vsel %vm913, %v1304, %v1209
        %v1337 = vsel %vm913, %v1305, %v1211
        %v1338 = vsel %vm913, %v1306, %v1213
        %v1339 = vsel %vm913, %v1307, %v1215
        %v1340 = vsel %vm913, %v1308, %v1217
        %v1341 = vsel %vm913, %v1309, %v1219
        %v1342 = vsel %vm913, %v1310, %v1221
        %v1343 = vsel %vm913, %v1311, %v1223
        %v1344 = vsel %vm913, %v1312, %v1225
        %v1345 = vsel %vm913, %v1313, %v1227
        %v1346 = vsel %vm913, %v1314, %v1229
        %v1347 = vsel %vm913, %v1315, %v1231
        %v1348 = vsel %vm913, %v1316, %v1233
        %v1349 = vsel %vm913, %v1317, %v1235
        %v1350 = vsel %vm913, %v1318, %v1237
        %v1351 = vsel %vm913, %v1319, %v1239
        %v1352 = vsel %vm913, %v1320, %v1241
        %v1353 = vsel %vm913, %v1321, %v1243
        %v1354 = vsel %vm913, %v1322, %v1245
        %v1355 = vsel %vm913, %v1323, %v1247
        %v1356 = vsel %vm913, %v1324, %v1249
        %v1357 = vsel %vm913, %v1325, %v1251
        %v1358 = vsel %vm913, %v1326, %v1253
        %v1359 = vsel %vm913, %v1327, %v1255
        %v1360 = vsel %vm913, %v1328, %v1257
        %v1361 = vsel %vm913, %v1329, %v1259
        %v1362 = vsel %vm913, %v1330, %v1261
        %v1363 = vsel %vm913, %v1331, %v1263
        %v1364 = vsel %vm913, %v1332, %v1265
        %v1365 = vsel %vm913, %v1333, %v1267
        %v1366 = vsel %vm913, %v1334, %v1269
        %v1367 = vsel %vm913, %v1335, %v1271
        %s1368 = scalar_lea.vmem %s1, 48
        %v1369 = vld [vmem:[%s1368] sm:$0xff]
        %v1370 = vld [vmem:[%s1368 + $0x8] sm:$0xff]
        %v1371 = vld [vmem:[%s1368 + $0x10] sm:$0xff]
        %v1372 = vld [vmem:[%s1368 + $0x18] sm:$0xff]
        %v1373 = vld [vmem:[%s1368 + $0x20] sm:$0xff]
        %v1374 = vld [vmem:[%s1368 + $0x28] sm:$0xff]
        %vm1375 = vcmask 392192
        %v1377 = vsel %vm1375, %v1336, 0
        %v1380 = vsel %vm1375, %v1337, 0
        %v1383 = vsel %vm1375, %v1338, 0
        %v1386 = vsel %vm1375, %v1339, 0
        %v1389 = vsel %vm1375, %v1340, 0
        %v1392 = vsel %vm1375, %v1341, 0
        %v1395 = vsel %vm1375, %v1342, 0
        %v1398 = vsel %vm1375, %v1343, 0
        %v1401 = vsel %vm1375, %v1344, 0
        %v1404 = vsel %vm1375, %v1345, 0
        %v1407 = vsel %vm1375, %v1346, 0
        %v1410 = vsel %vm1375, %v1347, 0
        %v1413 = vsel %vm1375, %v1348, 0
        %v1416 = vsel %vm1375, %v1349, 0
        %v1419 = vsel %vm1375, %v1350, 0
        %v1422 = vsel %vm1375, %v1351, 0
        %v1425 = vsel %vm1375, %v1352, 0
        %v1428 = vsel %vm1375, %v1353, 0
        %v1431 = vsel %vm1375, %v1354, 0
        %v1434 = vsel %vm1375, %v1355, 0
        %v1437 = vsel %vm1375, %v1356, 0
        %v1440 = vsel %vm1375, %v1357, 0
        %v1443 = vsel %vm1375, %v1358, 0
        %v1446 = vsel %vm1375, %v1359, 0
        %v1449 = vsel %vm1375, %v1360, 0
        %v1452 = vsel %vm1375, %v1361, 0
        %v1455 = vsel %vm1375, %v1362, 0
        %v1458 = vsel %vm1375, %v1363, 0
        %v1461 = vsel %vm1375, %v1364, 0
        %v1464 = vsel %vm1375, %v1365, 0
        %v1467 = vsel %vm1375, %v1366, 0
        %v1470 = vsel %vm1375, %v1367, 0
        %1472 = vmatpush.msra.mxu0 0.0
        %1473 = vmatpush.msra.mxu0 0.0
        %1474 = vmatpush.msra.mxu0 0.0
        %1475 = vmatpush.msra.mxu0 0.0
        %1476 = vmatpush.msra.mxu0 0.0
        %1477 = vmatpush.msra.mxu0 0.0
        %1478 = vmatpush.msra.mxu0 0.0
        %1479 = vmatpush.msra.mxu0 0.0
        %1480 = vmatpush.msra.mxu0 0.0
        %1481 = vmatpush.msra.mxu0 0.0
        %1482 = vmatpush.msra.mxu0 %v1374
        %1483 = vmatpush.msra.mxu0 %v1373
        %1484 = vmatpush.msra.mxu0 %v1372
        %1485 = vmatpush.msra.mxu0 %v1371
        %1486 = vmatpush.msra.mxu0 %v1370
        %1487 = vmatpush.msra.mxu0 %v1369
        %1488 = vmatmul.f32.gmra.mxu0 %v1377
        %v1489 = vpop.f32.mrf.mxu0
        %v1490 = vadd.f32 0.0, %v1489
        %1491 = vmatmul.f32.gmra.mxu0 %v1380
        %v1492 = vpop.f32.mrf.mxu0
        %v1493 = vadd.f32 0.0, %v1492
        %1494 = vmatmul.f32.gmra.mxu0 %v1383
        %v1495 = vpop.f32.mrf.mxu0
        %v1496 = vadd.f32 0.0, %v1495
        %1497 = vmatmul.f32.gmra.mxu0 %v1386
        %v1498 = vpop.f32.mrf.mxu0
        %v1499 = vadd.f32 0.0, %v1498
        %1500 = vmatmul.f32.gmra.mxu0 %v1389
        %v1501 = vpop.f32.mrf.mxu0
        %v1502 = vadd.f32 0.0, %v1501
        %1503 = vmatmul.f32.gmra.mxu0 %v1392
        %v1504 = vpop.f32.mrf.mxu0
        %v1505 = vadd.f32 0.0, %v1504
        %1506 = vmatmul.f32.gmra.mxu0 %v1395
        %v1507 = vpop.f32.mrf.mxu0
        %v1508 = vadd.f32 0.0, %v1507
        %1509 = vmatmul.f32.gmra.mxu0 %v1398
        %v1510 = vpop.f32.mrf.mxu0
        %v1511 = vadd.f32 0.0, %v1510
        %1512 = vmatmul.f32.gmra.mxu0 %v1401
        %v1513 = vpop.f32.mrf.mxu0
        %v1514 = vadd.f32 0.0, %v1513
        %1515 = vmatmul.f32.gmra.mxu0 %v1404
        %v1516 = vpop.f32.mrf.mxu0
        %v1517 = vadd.f32 0.0, %v1516
        %1518 = vmatmul.f32.gmra.mxu0 %v1407
        %v1519 = vpop.f32.mrf.mxu0
        %v1520 = vadd.f32 0.0, %v1519
        %1521 = vmatmul.f32.gmra.mxu0 %v1410
        %v1522 = vpop.f32.mrf.mxu0
        %v1523 = vadd.f32 0.0, %v1522
        %1524 = vmatmul.f32.gmra.mxu0 %v1413
        %v1525 = vpop.f32.mrf.mxu0
        %v1526 = vadd.f32 0.0, %v1525
        %1527 = vmatmul.f32.gmra.mxu0 %v1416
        %v1528 = vpop.f32.mrf.mxu0
        %v1529 = vadd.f32 0.0, %v1528
        %1530 = vmatmul.f32.gmra.mxu0 %v1419
        %v1531 = vpop.f32.mrf.mxu0
        %v1532 = vadd.f32 0.0, %v1531
        %1533 = vmatmul.f32.gmra.mxu0 %v1422
        %v1534 = vpop.f32.mrf.mxu0
        %v1535 = vadd.f32 0.0, %v1534
        %1536 = vmatmul.f32.gmra.mxu0 %v1425
        %v1537 = vpop.f32.mrf.mxu0
        %v1538 = vadd.f32 0.0, %v1537
        %1539 = vmatmul.f32.gmra.mxu0 %v1428
        %v1540 = vpop.f32.mrf.mxu0
        %v1541 = vadd.f32 0.0, %v1540
        %1542 = vmatmul.f32.gmra.mxu0 %v1431
        %v1543 = vpop.f32.mrf.mxu0
        %v1544 = vadd.f32 0.0, %v1543
        %1545 = vmatmul.f32.gmra.mxu0 %v1434
        %v1546 = vpop.f32.mrf.mxu0
        %v1547 = vadd.f32 0.0, %v1546
        %1548 = vmatmul.f32.gmra.mxu0 %v1437
        %v1549 = vpop.f32.mrf.mxu0
        %v1550 = vadd.f32 0.0, %v1549
        %1551 = vmatmul.f32.gmra.mxu0 %v1440
        %v1552 = vpop.f32.mrf.mxu0
        %v1553 = vadd.f32 0.0, %v1552
        %1554 = vmatmul.f32.gmra.mxu0 %v1443
        %v1555 = vpop.f32.mrf.mxu0
        %v1556 = vadd.f32 0.0, %v1555
        %1557 = vmatmul.f32.gmra.mxu0 %v1446
        %v1558 = vpop.f32.mrf.mxu0
        %v1559 = vadd.f32 0.0, %v1558
        %1560 = vmatmul.f32.gmra.mxu0 %v1449
        %v1561 = vpop.f32.mrf.mxu0
        %v1562 = vadd.f32 0.0, %v1561
        %1563 = vmatmul.f32.gmra.mxu0 %v1452
        %v1564 = vpop.f32.mrf.mxu0
        %v1565 = vadd.f32 0.0, %v1564
        %1566 = vmatmul.f32.gmra.mxu0 %v1455
        %v1567 = vpop.f32.mrf.mxu0
        %v1568 = vadd.f32 0.0, %v1567
        %1569 = vmatmul.f32.gmra.mxu0 %v1458
        %v1570 = vpop.f32.mrf.mxu0
        %v1571 = vadd.f32 0.0, %v1570
        %1572 = vmatmul.f32.gmra.mxu0 %v1461
        %v1573 = vpop.f32.mrf.mxu0
        %v1574 = vadd.f32 0.0, %v1573
        %1575 = vmatmul.f32.gmra.mxu0 %v1464
        %v1576 = vpop.f32.mrf.mxu0
        %v1577 = vadd.f32 0.0, %v1576
        %1578 = vmatmul.f32.gmra.mxu0 %v1467
        %v1579 = vpop.f32.mrf.mxu0
        %v1580 = vadd.f32 0.0, %v1579
        %1581 = vmatmul.f32.gmra.mxu0 %v1470
        %v1582 = vpop.f32.mrf.mxu0
        %v1583 = vadd.f32 0.0, %v1582
        %1584 = vdwg.mxu0
        %v1586 = vsel %vm1375, %v914, 0
        %v1589 = vsel %vm1375, %v915, 0
        %v1592 = vsel %vm1375, %v916, 0
        %v1595 = vsel %vm1375, %v917, 0
        %v1598 = vsel %vm1375, %v918, 0
        %v1601 = vsel %vm1375, %v919, 0
        %v1604 = vsel %vm1375, %v920, 0
        %v1607 = vsel %vm1375, %v921, 0
        %v1610 = vsel %vm1375, %v922, 0
        %v1613 = vsel %vm1375, %v923, 0
        %v1616 = vsel %vm1375, %v924, 0
        %v1619 = vsel %vm1375, %v925, 0
        %v1622 = vsel %vm1375, %v926, 0
        %v1625 = vsel %vm1375, %v927, 0
        %v1628 = vsel %vm1375, %v928, 0
        %v1631 = vsel %vm1375, %v929, 0
        %v1634 = vsel %vm1375, %v930, 0
        %v1637 = vsel %vm1375, %v931, 0
        %v1640 = vsel %vm1375, %v932, 0
        %v1643 = vsel %vm1375, %v933, 0
        %v1646 = vsel %vm1375, %v934, 0
        %v1649 = vsel %vm1375, %v935, 0
        %v1652 = vsel %vm1375, %v936, 0
        %v1655 = vsel %vm1375, %v937, 0
        %v1658 = vsel %vm1375, %v938, 0
        %v1661 = vsel %vm1375, %v939, 0
        %v1664 = vsel %vm1375, %v940, 0
        %v1667 = vsel %vm1375, %v941, 0
        %v1670 = vsel %vm1375, %v942, 0
        %v1673 = vsel %vm1375, %v943, 0
        %v1676 = vsel %vm1375, %v944, 0
        %v1679 = vsel %vm1375, %v945, 0
        %1681 = vmatpush.msra.mxu0 0.0
        %1682 = vmatpush.msra.mxu0 0.0
        %1683 = vmatpush.msra.mxu0 0.0
        %1684 = vmatpush.msra.mxu0 0.0
        %1685 = vmatpush.msra.mxu0 0.0
        %1686 = vmatpush.msra.mxu0 0.0
        %1687 = vmatpush.msra.mxu0 0.0
        %1688 = vmatpush.msra.mxu0 0.0
        %1689 = vmatpush.msra.mxu0 0.0
        %1690 = vmatpush.msra.mxu0 0.0
        %1691 = vmatpush.msra.mxu0 %v951
        %1692 = vmatpush.msra.mxu0 %v950
        %1693 = vmatpush.msra.mxu0 %v949
        %1694 = vmatpush.msra.mxu0 %v948
        %1695 = vmatpush.msra.mxu0 %v947
        %1696 = vmatpush.msra.mxu0 %v946
        %1697 = vmatmul.f32.gmra.mxu0 %v1586
        %v1698 = vpop.f32.mrf.mxu0
        %v1699 = vadd.f32 %v1490, %v1698
        %1700 = vmatmul.f32.gmra.mxu0 %v1589
        %v1701 = vpop.f32.mrf.mxu0
        %v1702 = vadd.f32 %v1493, %v1701
        %1703 = vmatmul.f32.gmra.mxu0 %v1592
        %v1704 = vpop.f32.mrf.mxu0
        %v1705 = vadd.f32 %v1496, %v1704
        %1706 = vmatmul.f32.gmra.mxu0 %v1595
        %v1707 = vpop.f32.mrf.mxu0
        %v1708 = vadd.f32 %v1499, %v1707
        %1709 = vmatmul.f32.gmra.mxu0 %v1598
        %v1710 = vpop.f32.mrf.mxu0
        %v1711 = vadd.f32 %v1502, %v1710
        %1712 = vmatmul.f32.gmra.mxu0 %v1601
        %v1713 = vpop.f32.mrf.mxu0
        %v1714 = vadd.f32 %v1505, %v1713
        %1715 = vmatmul.f32.gmra.mxu0 %v1604
        %v1716 = vpop.f32.mrf.mxu0
        %v1717 = vadd.f32 %v1508, %v1716
        %1718 = vmatmul.f32.gmra.mxu0 %v1607
        %v1719 = vpop.f32.mrf.mxu0
        %v1720 = vadd.f32 %v1511, %v1719
        %1721 = vmatmul.f32.gmra.mxu0 %v1610
        %v1722 = vpop.f32.mrf.mxu0
        %v1723 = vadd.f32 %v1514, %v1722
        %1724 = vmatmul.f32.gmra.mxu0 %v1613
        %v1725 = vpop.f32.mrf.mxu0
        %v1726 = vadd.f32 %v1517, %v1725
        %1727 = vmatmul.f32.gmra.mxu0 %v1616
        %v1728 = vpop.f32.mrf.mxu0
        %v1729 = vadd.f32 %v1520, %v1728
        %1730 = vmatmul.f32.gmra.mxu0 %v1619
        %v1731 = vpop.f32.mrf.mxu0
        %v1732 = vadd.f32 %v1523, %v1731
        %1733 = vmatmul.f32.gmra.mxu0 %v1622
        %v1734 = vpop.f32.mrf.mxu0
        %v1735 = vadd.f32 %v1526, %v1734
        %1736 = vmatmul.f32.gmra.mxu0 %v1625
        %v1737 = vpop.f32.mrf.mxu0
        %v1738 = vadd.f32 %v1529, %v1737
        %1739 = vmatmul.f32.gmra.mxu0 %v1628
        %v1740 = vpop.f32.mrf.mxu0
        %v1741 = vadd.f32 %v1532, %v1740
        %1742 = vmatmul.f32.gmra.mxu0 %v1631
        %v1743 = vpop.f32.mrf.mxu0
        %v1744 = vadd.f32 %v1535, %v1743
        %1745 = vmatmul.f32.gmra.mxu0 %v1634
        %v1746 = vpop.f32.mrf.mxu0
        %v1747 = vadd.f32 %v1538, %v1746
        %1748 = vmatmul.f32.gmra.mxu0 %v1637
        %v1749 = vpop.f32.mrf.mxu0
        %v1750 = vadd.f32 %v1541, %v1749
        %1751 = vmatmul.f32.gmra.mxu0 %v1640
        %v1752 = vpop.f32.mrf.mxu0
        %v1753 = vadd.f32 %v1544, %v1752
        %1754 = vmatmul.f32.gmra.mxu0 %v1643
        %v1755 = vpop.f32.mrf.mxu0
        %v1756 = vadd.f32 %v1547, %v1755
        %1757 = vmatmul.f32.gmra.mxu0 %v1646
        %v1758 = vpop.f32.mrf.mxu0
        %v1759 = vadd.f32 %v1550, %v1758
        %1760 = vmatmul.f32.gmra.mxu0 %v1649
        %v1761 = vpop.f32.mrf.mxu0
        %v1762 = vadd.f32 %v1553, %v1761
        %1763 = vmatmul.f32.gmra.mxu0 %v1652
        %v1764 = vpop.f32.mrf.mxu0
        %v1765 = vadd.f32 %v1556, %v1764
        %1766 = vmatmul.f32.gmra.mxu0 %v1655
        %v1767 = vpop.f32.mrf.mxu0
        %v1768 = vadd.f32 %v1559, %v1767
        %1769 = vmatmul.f32.gmra.mxu0 %v1658
        %v1770 = vpop.f32.mrf.mxu0
        %v1771 = vadd.f32 %v1562, %v1770
        %1772 = vmatmul.f32.gmra.mxu0 %v1661
        %v1773 = vpop.f32.mrf.mxu0
        %v1774 = vadd.f32 %v1565, %v1773
        %1775 = vmatmul.f32.gmra.mxu0 %v1664
        %v1776 = vpop.f32.mrf.mxu0
        %v1777 = vadd.f32 %v1568, %v1776
        %1778 = vmatmul.f32.gmra.mxu0 %v1667
        %v1779 = vpop.f32.mrf.mxu0
        %v1780 = vadd.f32 %v1571, %v1779
        %1781 = vmatmul.f32.gmra.mxu0 %v1670
        %v1782 = vpop.f32.mrf.mxu0
        %v1783 = vadd.f32 %v1574, %v1782
        %1784 = vmatmul.f32.gmra.mxu0 %v1673
        %v1785 = vpop.f32.mrf.mxu0
        %v1786 = vadd.f32 %v1577, %v1785
        %1787 = vmatmul.f32.gmra.mxu0 %v1676
        %v1788 = vpop.f32.mrf.mxu0
        %v1789 = vadd.f32 %v1580, %v1788
        %1790 = vmatmul.f32.gmra.mxu0 %v1679
        %v1791 = vpop.f32.mrf.mxu0
        %v1792 = vadd.f32 %v1583, %v1791
        %1793 = vdwg.mxu0
        %s1794 = scalar_lea.vmem [#allocation2], 48
        %v1795 = vld [vmem:[%s1794] sm:$0xff]
        %v1796 = vld [vmem:[%s1794 + $0x8] sm:$0xff]
        %v1797 = vld [vmem:[%s1794 + $0x18] sm:$0xff]
        %v1798 = vld [vmem:[%s1794 + $0x20] sm:$0xff]
        %v1799 = vld [vmem:[%s1794 + $0x30] sm:$0xff]
        %v1800 = vld [vmem:[%s1794 + $0x38] sm:$0xff]
        %v1801 = vld [vmem:[%s1794 + $0x48] sm:$0xff]
        %v1802 = vld [vmem:[%s1794 + $0x50] sm:$0xff]
        %v1803 = vld [vmem:[%s1794 + $0x60] sm:$0xff]
        %v1804 = vld [vmem:[%s1794 + $0x68] sm:$0xff]
        %v1805 = vld [vmem:[%s1794 + $0x78] sm:$0xff]
        %v1806 = vld [vmem:[%s1794 + $0x80] sm:$0xff]
        %v1807 = vld [vmem:[%s1794 + $0x90] sm:$0xff]
        %v1808 = vld [vmem:[%s1794 + $0x98] sm:$0xff]
        %v1809 = vld [vmem:[%s1794 + $0xa8] sm:$0xff]
        %v1810 = vld [vmem:[%s1794 + $0xb0] sm:$0xff]
        %v1811 = vld [vmem:[%s1794 + $0xc0] sm:$0xff]
        %v1812 = vld [vmem:[%s1794 + $0xc8] sm:$0xff]
        %v1813 = vld [vmem:[%s1794 + $0xd8] sm:$0xff]
        %v1814 = vld [vmem:[%s1794 + $0xe0] sm:$0xff]
        %v1815 = vld [vmem:[%s1794 + $0xf0] sm:$0xff]
        %v1816 = vld [vmem:[%s1794 + $0xf8] sm:$0xff]
        %v1817 = vld [vmem:[%s1794 + $0x108] sm:$0xff]
        %v1818 = vld [vmem:[%s1794 + $0x110] sm:$0xff]
        %v1819 = vld [vmem:[%s1794 + $0x120] sm:$0xff]
        %v1820 = vld [vmem:[%s1794 + $0x128] sm:$0xff]
        %v1821 = vld [vmem:[%s1794 + $0x138] sm:$0xff]
        %v1822 = vld [vmem:[%s1794 + $0x140] sm:$0xff]
        %v1823 = vld [vmem:[%s1794 + $0x150] sm:$0xff]
        %v1824 = vld [vmem:[%s1794 + $0x158] sm:$0xff]
        %v1825 = vld [vmem:[%s1794 + $0x168] sm:$0xff]
        %v1826 = vld [vmem:[%s1794 + $0x170] sm:$0xff]
        %v1827 = vld [vmem:[%s1794 + $0x1] sm:$0xff]
        %v1828 = vld [vmem:[%s1794 + $0x9] sm:$0xff]
        %v1829 = vld [vmem:[%s1794 + $0x19] sm:$0xff]
        %v1830 = vld [vmem:[%s1794 + $0x21] sm:$0xff]
        %v1831 = vld [vmem:[%s1794 + $0x31] sm:$0xff]
        %v1832 = vld [vmem:[%s1794 + $0x39] sm:$0xff]
        %v1833 = vld [vmem:[%s1794 + $0x49] sm:$0xff]
        %v1834 = vld [vmem:[%s1794 + $0x51] sm:$0xff]
        %v1835 = vld [vmem:[%s1794 + $0x61] sm:$0xff]
        %v1836 = vld [vmem:[%s1794 + $0x69] sm:$0xff]
        %v1837 = vld [vmem:[%s1794 + $0x79] sm:$0xff]
        %v1838 = vld [vmem:[%s1794 + $0x81] sm:$0xff]
        %v1839 = vld [vmem:[%s1794 + $0x91] sm:$0xff]
        %v1840 = vld [vmem:[%s1794 + $0x99] sm:$0xff]
        %v1841 = vld [vmem:[%s1794 + $0xa9] sm:$0xff]
        %v1842 = vld [vmem:[%s1794 + $0xb1] sm:$0xff]
        %v1843 = vld [vmem:[%s1794 + $0xc1] sm:$0xff]
        %v1844 = vld [vmem:[%s1794 + $0xc9] sm:$0xff]
        %v1845 = vld [vmem:[%s1794 + $0xd9] sm:$0xff]
        %v1846 = vld [vmem:[%s1794 + $0xe1] sm:$0xff]
        %v1847 = vld [vmem:[%s1794 + $0xf1] sm:$0xff]
        %v1848 = vld [vmem:[%s1794 + $0xf9] sm:$0xff]
        %v1849 = vld [vmem:[%s1794 + $0x109] sm:$0xff]
        %v1850 = vld [vmem:[%s1794 + $0x111] sm:$0xff]
        %v1851 = vld [vmem:[%s1794 + $0x121] sm:$0xff]
        %v1852 = vld [vmem:[%s1794 + $0x129] sm:$0xff]
        %v1853 = vld [vmem:[%s1794 + $0x139] sm:$0xff]
        %v1854 = vld [vmem:[%s1794 + $0x141] sm:$0xff]
        %v1855 = vld [vmem:[%s1794 + $0x151] sm:$0xff]
        %v1856 = vld [vmem:[%s1794 + $0x159] sm:$0xff]
        %v1857 = vld [vmem:[%s1794 + $0x169] sm:$0xff]
        %v1858 = vld [vmem:[%s1794 + $0x171] sm:$0xff]
        %v1859 = vld [vmem:[%s1794 + $0x2] sm:$0xff]
        %v1860 = vld [vmem:[%s1794 + $0xa] sm:$0xff]
        %v1861 = vld [vmem:[%s1794 + $0x1a] sm:$0xff]
        %v1862 = vld [vmem:[%s1794 + $0x22] sm:$0xff]
        %v1863 = vld [vmem:[%s1794 + $0x32] sm:$0xff]
        %v1864 = vld [vmem:[%s1794 + $0x3a] sm:$0xff]
        %v1865 = vld [vmem:[%s1794 + $0x4a] sm:$0xff]
        %v1866 = vld [vmem:[%s1794 + $0x52] sm:$0xff]
        %v1867 = vld [vmem:[%s1794 + $0x62] sm:$0xff]
        %v1868 = vld [vmem:[%s1794 + $0x6a] sm:$0xff]
        %v1869 = vld [vmem:[%s1794 + $0x7a] sm:$0xff]
        %v1870 = vld [vmem:[%s1794 + $0x82] sm:$0xff]
        %v1871 = vld [vmem:[%s1794 + $0x92] sm:$0xff]
        %v1872 = vld [vmem:[%s1794 + $0x9a] sm:$0xff]
        %v1873 = vld [vmem:[%s1794 + $0xaa] sm:$0xff]
        %v1874 = vld [vmem:[%s1794 + $0xb2] sm:$0xff]
        %v1875 = vld [vmem:[%s1794 + $0xc2] sm:$0xff]
        %v1876 = vld [vmem:[%s1794 + $0xca] sm:$0xff]
        %v1877 = vld [vmem:[%s1794 + $0xda] sm:$0xff]
        %v1878 = vld [vmem:[%s1794 + $0xe2] sm:$0xff]
        %v1879 = vld [vmem:[%s1794 + $0xf2] sm:$0xff]
        %v1880 = vld [vmem:[%s1794 + $0xfa] sm:$0xff]
        %v1881 = vld [vmem:[%s1794 + $0x10a] sm:$0xff]
        %v1882 = vld [vmem:[%s1794 + $0x112] sm:$0xff]
        %v1883 = vld [vmem:[%s1794 + $0x122] sm:$0xff]
        %v1884 = vld [vmem:[%s1794 + $0x12a] sm:$0xff]
        %v1885 = vld [vmem:[%s1794 + $0x13a] sm:$0xff]
        %v1886 = vld [vmem:[%s1794 + $0x142] sm:$0xff]
        %v1887 = vld [vmem:[%s1794 + $0x152] sm:$0xff]
        %v1888 = vld [vmem:[%s1794 + $0x15a] sm:$0xff]
        %v1889 = vld [vmem:[%s1794 + $0x16a] sm:$0xff]
        %v1890 = vld [vmem:[%s1794 + $0x172] sm:$0xff]
        %1923 = vrot.lane.b32.xlu0 %v1827, 16
        %v1924 = vpop.permute.xlu0 %1923
        %1925 = vrot.lane.b32.xlu0 %v1828, 16
        %v1926 = vpop.permute.xlu0 %1925
        %1927 = vrot.lane.b32.xlu0 %v1829, 16
        %v1928 = vpop.permute.xlu0 %1927
        %1929 = vrot.lane.b32.xlu0 %v1830, 16
        %v1930 = vpop.permute.xlu0 %1929
        %1931 = vrot.lane.b32.xlu0 %v1831, 16
        %v1932 = vpop.permute.xlu0 %1931
        %1933 = vrot.lane.b32.xlu0 %v1832, 16
        %v1934 = vpop.permute.xlu0 %1933
        %1935 = vrot.lane.b32.xlu0 %v1833, 16
        %v1936 = vpop.permute.xlu0 %1935
        %1937 = vrot.lane.b32.xlu0 %v1834, 16
        %v1938 = vpop.permute.xlu0 %1937
        %1939 = vrot.lane.b32.xlu0 %v1835, 16
        %v1940 = vpop.permute.xlu0 %1939
        %1941 = vrot.lane.b32.xlu0 %v1836, 16
        %v1942 = vpop.permute.xlu0 %1941
        %1943 = vrot.lane.b32.xlu0 %v1837, 16
        %v1944 = vpop.permute.xlu0 %1943
        %1945 = vrot.lane.b32.xlu0 %v1838, 16
        %v1946 = vpop.permute.xlu0 %1945
        %1947 = vrot.lane.b32.xlu0 %v1839, 16
        %v1948 = vpop.permute.xlu0 %1947
        %1949 = vrot.lane.b32.xlu0 %v1840, 16
        %v1950 = vpop.permute.xlu0 %1949
        %1951 = vrot.lane.b32.xlu0 %v1841, 16
        %v1952 = vpop.permute.xlu0 %1951
        %1953 = vrot.lane.b32.xlu0 %v1842, 16
        %v1954 = vpop.permute.xlu0 %1953
        %1955 = vrot.lane.b32.xlu0 %v1843, 16
        %v1956 = vpop.permute.xlu0 %1955
        %1957 = vrot.lane.b32.xlu0 %v1844, 16
        %v1958 = vpop.permute.xlu0 %1957
        %1959 = vrot.lane.b32.xlu0 %v1845, 16
        %v1960 = vpop.permute.xlu0 %1959
        %1961 = vrot.lane.b32.xlu0 %v1846, 16
        %v1962 = vpop.permute.xlu0 %1961
        %1963 = vrot.lane.b32.xlu0 %v1847, 16
        %v1964 = vpop.permute.xlu0 %1963
        %1965 = vrot.lane.b32.xlu0 %v1848, 16
        %v1966 = vpop.permute.xlu0 %1965
        %1967 = vrot.lane.b32.xlu0 %v1849, 16
        %v1968 = vpop.permute.xlu0 %1967
        %1969 = vrot.lane.b32.xlu0 %v1850, 16
        %v1970 = vpop.permute.xlu0 %1969
        %1971 = vrot.lane.b32.xlu0 %v1851, 16
        %v1972 = vpop.permute.xlu0 %1971
        %1973 = vrot.lane.b32.xlu0 %v1852, 16
        %v1974 = vpop.permute.xlu0 %1973
        %1975 = vrot.lane.b32.xlu0 %v1853, 16
        %v1976 = vpop.permute.xlu0 %1975
        %1977 = vrot.lane.b32.xlu0 %v1854, 16
        %v1978 = vpop.permute.xlu0 %1977
        %1979 = vrot.lane.b32.xlu0 %v1855, 16
        %v1980 = vpop.permute.xlu0 %1979
        %1981 = vrot.lane.b32.xlu0 %v1856, 16
        %v1982 = vpop.permute.xlu0 %1981
        %1983 = vrot.lane.b32.xlu0 %v1857, 16
        %v1984 = vpop.permute.xlu0 %1983
        %1985 = vrot.lane.b32.xlu0 %v1858, 16
        %v1986 = vpop.permute.xlu0 %1985
        %2051 = vrot.lane.b32.xlu0 %v1859, 32
        %v2052 = vpop.permute.xlu0 %2051
        %2053 = vrot.lane.b32.xlu0 %v1860, 32
        %v2054 = vpop.permute.xlu0 %2053
        %2055 = vrot.lane.b32.xlu0 %v1861, 32
        %v2056 = vpop.permute.xlu0 %2055
        %2057 = vrot.lane.b32.xlu0 %v1862, 32
        %v2058 = vpop.permute.xlu0 %2057
        %2059 = vrot.lane.b32.xlu0 %v1863, 32
        %v2060 = vpop.permute.xlu0 %2059
        %2061 = vrot.lane.b32.xlu0 %v1864, 32
        %v2062 = vpop.permute.xlu0 %2061
        %2063 = vrot.lane.b32.xlu0 %v1865, 32
        %v2064 = vpop.permute.xlu0 %2063
        %2065 = vrot.lane.b32.xlu0 %v1866, 32
        %v2066 = vpop.permute.xlu0 %2065
        %2067 = vrot.lane.b32.xlu0 %v1867, 32
        %v2068 = vpop.permute.xlu0 %2067
        %2069 = vrot.lane.b32.xlu0 %v1868, 32
        %v2070 = vpop.permute.xlu0 %2069
        %2071 = vrot.lane.b32.xlu0 %v1869, 32
        %v2072 = vpop.permute.xlu0 %2071
        %2073 = vrot.lane.b32.xlu0 %v1870, 32
        %v2074 = vpop.permute.xlu0 %2073
        %2075 = vrot.lane.b32.xlu0 %v1871, 32
        %v2076 = vpop.permute.xlu0 %2075
        %2077 = vrot.lane.b32.xlu0 %v1872, 32
        %v2078 = vpop.permute.xlu0 %2077
        %2079 = vrot.lane.b32.xlu0 %v1873, 32
        %v2080 = vpop.permute.xlu0 %2079
        %2081 = vrot.lane.b32.xlu0 %v1874, 32
        %v2082 = vpop.permute.xlu0 %2081
        %2083 = vrot.lane.b32.xlu0 %v1875, 32
        %v2084 = vpop.permute.xlu0 %2083
        %2085 = vrot.lane.b32.xlu0 %v1876, 32
        %v2086 = vpop.permute.xlu0 %2085
        %2087 = vrot.lane.b32.xlu0 %v1877, 32
        %v2088 = vpop.permute.xlu0 %2087
        %2089 = vrot.lane.b32.xlu0 %v1878, 32
        %v2090 = vpop.permute.xlu0 %2089
        %2091 = vrot.lane.b32.xlu0 %v1879, 32
        %v2092 = vpop.permute.xlu0 %2091
        %2093 = vrot.lane.b32.xlu0 %v1880, 32
        %v2094 = vpop.permute.xlu0 %2093
        %2095 = vrot.lane.b32.xlu0 %v1881, 32
        %v2096 = vpop.permute.xlu0 %2095
        %2097 = vrot.lane.b32.xlu0 %v1882, 32
        %v2098 = vpop.permute.xlu0 %2097
        %2099 = vrot.lane.b32.xlu0 %v1883, 32
        %v2100 = vpop.permute.xlu0 %2099
        %2101 = vrot.lane.b32.xlu0 %v1884, 32
        %v2102 = vpop.permute.xlu0 %2101
        %2103 = vrot.lane.b32.xlu0 %v1885, 32
        %v2104 = vpop.permute.xlu0 %2103
        %2105 = vrot.lane.b32.xlu0 %v1886, 32
        %v2106 = vpop.permute.xlu0 %2105
        %2107 = vrot.lane.b32.xlu0 %v1887, 32
        %v2108 = vpop.permute.xlu0 %2107
        %2109 = vrot.lane.b32.xlu0 %v1888, 32
        %v2110 = vpop.permute.xlu0 %2109
        %2111 = vrot.lane.b32.xlu0 %v1889, 32
        %v2112 = vpop.permute.xlu0 %2111
        %2113 = vrot.lane.b32.xlu0 %v1890, 32
        %v2114 = vpop.permute.xlu0 %2113
        %v2147 = vsel %vm417, %v1795, %v1924
        %v2148 = vsel %vm417, %v1796, %v1926
        %v2149 = vsel %vm417, %v1797, %v1928
        %v2150 = vsel %vm417, %v1798, %v1930
        %v2151 = vsel %vm417, %v1799, %v1932
        %v2152 = vsel %vm417, %v1800, %v1934
        %v2153 = vsel %vm417, %v1801, %v1936
        %v2154 = vsel %vm417, %v1802, %v1938
        %v2155 = vsel %vm417, %v1803, %v1940
        %v2156 = vsel %vm417, %v1804, %v1942
        %v2157 = vsel %vm417, %v1805, %v1944
        %v2158 = vsel %vm417, %v1806, %v1946
        %v2159 = vsel %vm417, %v1807, %v1948
        %v2160 = vsel %vm417, %v1808, %v1950
        %v2161 = vsel %vm417, %v1809, %v1952
        %v2162 = vsel %vm417, %v1810, %v1954
        %v2163 = vsel %vm417, %v1811, %v1956
        %v2164 = vsel %vm417, %v1812, %v1958
        %v2165 = vsel %vm417, %v1813, %v1960
        %v2166 = vsel %vm417, %v1814, %v1962
        %v2167 = vsel %vm417, %v1815, %v1964
        %v2168 = vsel %vm417, %v1816, %v1966
        %v2169 = vsel %vm417, %v1817, %v1968
        %v2170 = vsel %vm417, %v1818, %v1970
        %v2171 = vsel %vm417, %v1819, %v1972
        %v2172 = vsel %vm417, %v1820, %v1974
        %v2173 = vsel %vm417, %v1821, %v1976
        %v2174 = vsel %vm417, %v1822, %v1978
        %v2175 = vsel %vm417, %v1823, %v1980
        %v2176 = vsel %vm417, %v1824, %v1982
        %v2177 = vsel %vm417, %v1825, %v1984
        %v2178 = vsel %vm417, %v1826, %v1986
        %v2179 = vsel %vm913, %v2147, %v2052
        %v2180 = vsel %vm913, %v2148, %v2054
        %v2181 = vsel %vm913, %v2149, %v2056
        %v2182 = vsel %vm913, %v2150, %v2058
        %v2183 = vsel %vm913, %v2151, %v2060
        %v2184 = vsel %vm913, %v2152, %v2062
        %v2185 = vsel %vm913, %v2153, %v2064
        %v2186 = vsel %vm913, %v2154, %v2066
        %v2187 = vsel %vm913, %v2155, %v2068
        %v2188 = vsel %vm913, %v2156, %v2070
        %v2189 = vsel %vm913, %v2157, %v2072
        %v2190 = vsel %vm913, %v2158, %v2074
        %v2191 = vsel %vm913, %v2159, %v2076
        %v2192 = vsel %vm913, %v2160, %v2078
        %v2193 = vsel %vm913, %v2161, %v2080
        %v2194 = vsel %vm913, %v2162, %v2082
        %v2195 = vsel %vm913, %v2163, %v2084
        %v2196 = vsel %vm913, %v2164, %v2086
        %v2197 = vsel %vm913, %v2165, %v2088
        %v2198 = vsel %vm913, %v2166, %v2090
        %v2199 = vsel %vm913, %v2167, %v2092
        %v2200 = vsel %vm913, %v2168, %v2094
        %v2201 = vsel %vm913, %v2169, %v2096
        %v2202 = vsel %vm913, %v2170, %v2098
        %v2203 = vsel %vm913, %v2171, %v2100
        %v2204 = vsel %vm913, %v2172, %v2102
        %v2205 = vsel %vm913, %v2173, %v2104
        %v2206 = vsel %vm913, %v2174, %v2106
        %v2207 = vsel %vm913, %v2175, %v2108
        %v2208 = vsel %vm913, %v2176, %v2110
        %v2209 = vsel %vm913, %v2177, %v2112
        %v2210 = vsel %vm913, %v2178, %v2114
        %s2211 = scalar_lea.vmem %s1, 96
        %v2212 = vld [vmem:[%s2211] sm:$0xff]
        %v2213 = vld [vmem:[%s2211 + $0x8] sm:$0xff]
        %v2214 = vld [vmem:[%s2211 + $0x10] sm:$0xff]
        %v2215 = vld [vmem:[%s2211 + $0x18] sm:$0xff]
        %v2216 = vld [vmem:[%s2211 + $0x20] sm:$0xff]
        %v2217 = vld [vmem:[%s2211 + $0x28] sm:$0xff]
        %v2219 = vsel %vm1375, %v2179, 0
        %v2222 = vsel %vm1375, %v2180, 0
        %v2225 = vsel %vm1375, %v2181, 0
        %v2228 = vsel %vm1375, %v2182, 0
        %v2231 = vsel %vm1375, %v2183, 0
        %v2234 = vsel %vm1375, %v2184, 0
        %v2237 = vsel %vm1375, %v2185, 0
        %v2240 = vsel %vm1375, %v2186, 0
        %v2243 = vsel %vm1375, %v2187, 0
        %v2246 = vsel %vm1375, %v2188, 0
        %v2249 = vsel %vm1375, %v2189, 0
        %v2252 = vsel %vm1375, %v2190, 0
        %v2255 = vsel %vm1375, %v2191, 0
        %v2258 = vsel %vm1375, %v2192, 0
        %v2261 = vsel %vm1375, %v2193, 0
        %v2264 = vsel %vm1375, %v2194, 0
        %v2267 = vsel %vm1375, %v2195, 0
        %v2270 = vsel %vm1375, %v2196, 0
        %v2273 = vsel %vm1375, %v2197, 0
        %v2276 = vsel %vm1375, %v2198, 0
        %v2279 = vsel %vm1375, %v2199, 0
        %v2282 = vsel %vm1375, %v2200, 0
        %v2285 = vsel %vm1375, %v2201, 0
        %v2288 = vsel %vm1375, %v2202, 0
        %v2291 = vsel %vm1375, %v2203, 0
        %v2294 = vsel %vm1375, %v2204, 0
        %v2297 = vsel %vm1375, %v2205, 0
        %v2300 = vsel %vm1375, %v2206, 0
        %v2303 = vsel %vm1375, %v2207, 0
        %v2306 = vsel %vm1375, %v2208, 0
        %v2309 = vsel %vm1375, %v2209, 0
        %v2312 = vsel %vm1375, %v2210, 0
        %2314 = vmatpush.msra.mxu0 0.0
        %2315 = vmatpush.msra.mxu0 0.0
        %2316 = vmatpush.msra.mxu0 0.0
        %2317 = vmatpush.msra.mxu0 0.0
        %2318 = vmatpush.msra.mxu0 0.0
        %2319 = vmatpush.msra.mxu0 0.0
        %2320 = vmatpush.msra.mxu0 0.0
        %2321 = vmatpush.msra.mxu0 0.0
        %2322 = vmatpush.msra.mxu0 0.0
        %2323 = vmatpush.msra.mxu0 0.0
        %2324 = vmatpush.msra.mxu0 %v2217
        %2325 = vmatpush.msra.mxu0 %v2216
        %2326 = vmatpush.msra.mxu0 %v2215
        %2327 = vmatpush.msra.mxu0 %v2214
        %2328 = vmatpush.msra.mxu0 %v2213
        %2329 = vmatpush.msra.mxu0 %v2212
        %2330 = vmatmul.f32.gmra.mxu0 %v2219
        %v2331 = vpop.f32.mrf.mxu0
        %v2332 = vadd.f32 0.0, %v2331
        %2333 = vmatmul.f32.gmra.mxu0 %v2222
        %v2334 = vpop.f32.mrf.mxu0
        %v2335 = vadd.f32 0.0, %v2334
        %2336 = vmatmul.f32.gmra.mxu0 %v2225
        %v2337 = vpop.f32.mrf.mxu0
        %v2338 = vadd.f32 0.0, %v2337
        %2339 = vmatmul.f32.gmra.mxu0 %v2228
        %v2340 = vpop.f32.mrf.mxu0
        %v2341 = vadd.f32 0.0, %v2340
        %2342 = vmatmul.f32.gmra.mxu0 %v2231
        %v2343 = vpop.f32.mrf.mxu0
        %v2344 = vadd.f32 0.0, %v2343
        %2345 = vmatmul.f32.gmra.mxu0 %v2234
        %v2346 = vpop.f32.mrf.mxu0
        %v2347 = vadd.f32 0.0, %v2346
        %2348 = vmatmul.f32.gmra.mxu0 %v2237
        %v2349 = vpop.f32.mrf.mxu0
        %v2350 = vadd.f32 0.0, %v2349
        %2351 = vmatmul.f32.gmra.mxu0 %v2240
        %v2352 = vpop.f32.mrf.mxu0
        %v2353 = vadd.f32 0.0, %v2352
        %2354 = vmatmul.f32.gmra.mxu0 %v2243
        %v2355 = vpop.f32.mrf.mxu0
        %v2356 = vadd.f32 0.0, %v2355
        %2357 = vmatmul.f32.gmra.mxu0 %v2246
        %v2358 = vpop.f32.mrf.mxu0
        %v2359 = vadd.f32 0.0, %v2358
        %2360 = vmatmul.f32.gmra.mxu0 %v2249
        %v2361 = vpop.f32.mrf.mxu0
        %v2362 = vadd.f32 0.0, %v2361
        %2363 = vmatmul.f32.gmra.mxu0 %v2252
        %v2364 = vpop.f32.mrf.mxu0
        %v2365 = vadd.f32 0.0, %v2364
        %2366 = vmatmul.f32.gmra.mxu0 %v2255
        %v2367 = vpop.f32.mrf.mxu0
        %v2368 = vadd.f32 0.0, %v2367
        %2369 = vmatmul.f32.gmra.mxu0 %v2258
        %v2370 = vpop.f32.mrf.mxu0
        %v2371 = vadd.f32 0.0, %v2370
        %2372 = vmatmul.f32.gmra.mxu0 %v2261
        %v2373 = vpop.f32.mrf.mxu0
        %v2374 = vadd.f32 0.0, %v2373
        %2375 = vmatmul.f32.gmra.mxu0 %v2264
        %v2376 = vpop.f32.mrf.mxu0
        %v2377 = vadd.f32 0.0, %v2376
        %2378 = vmatmul.f32.gmra.mxu0 %v2267
        %v2379 = vpop.f32.mrf.mxu0
        %v2380 = vadd.f32 0.0, %v2379
        %2381 = vmatmul.f32.gmra.mxu0 %v2270
        %v2382 = vpop.f32.mrf.mxu0
        %v2383 = vadd.f32 0.0, %v2382
        %2384 = vmatmul.f32.gmra.mxu0 %v2273
        %v2385 = vpop.f32.mrf.mxu0
        %v2386 = vadd.f32 0.0, %v2385
        %2387 = vmatmul.f32.gmra.mxu0 %v2276
        %v2388 = vpop.f32.mrf.mxu0
        %v2389 = vadd.f32 0.0, %v2388
        %2390 = vmatmul.f32.gmra.mxu0 %v2279
        %v2391 = vpop.f32.mrf.mxu0
        %v2392 = vadd.f32 0.0, %v2391
        %2393 = vmatmul.f32.gmra.mxu0 %v2282
        %v2394 = vpop.f32.mrf.mxu0
        %v2395 = vadd.f32 0.0, %v2394
        %2396 = vmatmul.f32.gmra.mxu0 %v2285
        %v2397 = vpop.f32.mrf.mxu0
        %v2398 = vadd.f32 0.0, %v2397
        %2399 = vmatmul.f32.gmra.mxu0 %v2288
        %v2400 = vpop.f32.mrf.mxu0
        %v2401 = vadd.f32 0.0, %v2400
        %2402 = vmatmul.f32.gmra.mxu0 %v2291
        %v2403 = vpop.f32.mrf.mxu0
        %v2404 = vadd.f32 0.0, %v2403
        %2405 = vmatmul.f32.gmra.mxu0 %v2294
        %v2406 = vpop.f32.mrf.mxu0
        %v2407 = vadd.f32 0.0, %v2406
        %2408 = vmatmul.f32.gmra.mxu0 %v2297
        %v2409 = vpop.f32.mrf.mxu0
        %v2410 = vadd.f32 0.0, %v2409
        %2411 = vmatmul.f32.gmra.mxu0 %v2300
        %v2412 = vpop.f32.mrf.mxu0
        %v2413 = vadd.f32 0.0, %v2412
        %2414 = vmatmul.f32.gmra.mxu0 %v2303
        %v2415 = vpop.f32.mrf.mxu0
        %v2416 = vadd.f32 0.0, %v2415
        %2417 = vmatmul.f32.gmra.mxu0 %v2306
        %v2418 = vpop.f32.mrf.mxu0
        %v2419 = vadd.f32 0.0, %v2418
        %2420 = vmatmul.f32.gmra.mxu0 %v2309
        %v2421 = vpop.f32.mrf.mxu0
        %v2422 = vadd.f32 0.0, %v2421
        %2423 = vmatmul.f32.gmra.mxu0 %v2312
        %v2424 = vpop.f32.mrf.mxu0
        %v2425 = vadd.f32 0.0, %v2424
        %2426 = vdwg.mxu0
        %v2427 = vadd.f32 %v1699, %v2332
        %v2428 = vadd.f32 %v1702, %v2335
        %v2429 = vadd.f32 %v1705, %v2338
        %v2430 = vadd.f32 %v1708, %v2341
        %v2431 = vadd.f32 %v1711, %v2344
        %v2432 = vadd.f32 %v1714, %v2347
        %v2433 = vadd.f32 %v1717, %v2350
        %v2434 = vadd.f32 %v1720, %v2353
        %v2435 = vadd.f32 %v1723, %v2356
        %v2436 = vadd.f32 %v1726, %v2359
        %v2437 = vadd.f32 %v1729, %v2362
        %v2438 = vadd.f32 %v1732, %v2365
        %v2439 = vadd.f32 %v1735, %v2368
        %v2440 = vadd.f32 %v1738, %v2371
        %v2441 = vadd.f32 %v1741, %v2374
        %v2442 = vadd.f32 %v1744, %v2377
        %v2443 = vadd.f32 %v1747, %v2380
        %v2444 = vadd.f32 %v1750, %v2383
        %v2445 = vadd.f32 %v1753, %v2386
        %v2446 = vadd.f32 %v1756, %v2389
        %v2447 = vadd.f32 %v1759, %v2392
        %v2448 = vadd.f32 %v1762, %v2395
        %v2449 = vadd.f32 %v1765, %v2398
        %v2450 = vadd.f32 %v1768, %v2401
        %v2451 = vadd.f32 %v1771, %v2404
        %v2452 = vadd.f32 %v1774, %v2407
        %v2453 = vadd.f32 %v1777, %v2410
        %v2454 = vadd.f32 %v1780, %v2413
        %v2455 = vadd.f32 %v1783, %v2416
        %v2456 = vadd.f32 %v1786, %v2419
        %v2457 = vadd.f32 %v1789, %v2422
        %v2458 = vadd.f32 %v1792, %v2425
        %v2460 = vperm.slane %v528, 0
        %v2462 = vadd.f32 %v2427, %v2460
        %v2463 = vadd.f32 %v2428, %v2460
        %v2464 = vadd.f32 %v2429, %v2460
        %v2465 = vadd.f32 %v2430, %v2460
        %v2466 = vadd.f32 %v2431, %v2460
        %v2467 = vadd.f32 %v2432, %v2460
        %v2468 = vadd.f32 %v2433, %v2460
        %v2469 = vadd.f32 %v2434, %v2460
        %v2470 = vadd.f32 %v2435, %v2460
        %v2471 = vadd.f32 %v2436, %v2460
        %v2472 = vadd.f32 %v2437, %v2460
        %v2473 = vadd.f32 %v2438, %v2460
        %v2474 = vadd.f32 %v2439, %v2460
        %v2475 = vadd.f32 %v2440, %v2460
        %v2476 = vadd.f32 %v2441, %v2460
        %v2477 = vadd.f32 %v2442, %v2460
        %v2478 = vadd.f32 %v2443, %v2460
        %v2479 = vadd.f32 %v2444, %v2460
        %v2480 = vadd.f32 %v2445, %v2460
        %v2481 = vadd.f32 %v2446, %v2460
        %v2482 = vadd.f32 %v2447, %v2460
        %v2483 = vadd.f32 %v2448, %v2460
        %v2484 = vadd.f32 %v2449, %v2460
        %v2485 = vadd.f32 %v2450, %v2460
        %v2486 = vadd.f32 %v2451, %v2460
        %v2487 = vadd.f32 %v2452, %v2460
        %v2488 = vadd.f32 %v2453, %v2460
        %v2489 = vadd.f32 %v2454, %v2460
        %v2490 = vadd.f32 %v2455, %v2460
        %v2491 = vadd.f32 %v2456, %v2460
        %v2492 = vadd.f32 %v2457, %v2460
        %v2493 = vadd.f32 %v2458, %v2460
        %v2494 = vld [vmem:[%s3] sm:$0x1]
        %v2495 = vld [vmem:[%s4] sm:$0x1]
        %v2496 = vsel %vm913, %v2462, 0.0
        %v2497 = vsel %vm913, %v2463, 0.0
        %v2498 = vadd.f32 %v2496, %v2497
        %v2499 = vsel %vm913, %v2464, 0.0
        %v2500 = vadd.f32 %v2498, %v2499
        %v2501 = vsel %vm913, %v2465, 0.0
        %v2502 = vadd.f32 %v2500, %v2501
        %v2503 = vsel %vm913, %v2466, 0.0
        %v2504 = vadd.f32 %v2502, %v2503
        %v2505 = vsel %vm913, %v2467, 0.0
        %v2506 = vadd.f32 %v2504, %v2505
        %v2507 = vsel %vm913, %v2468, 0.0
        %v2508 = vadd.f32 %v2506, %v2507
        %v2509 = vsel %vm913, %v2469, 0.0
        %v2510 = vadd.f32 %v2508, %v2509
        %v2511 = vsel %vm913, %v2470, 0.0
        %v2512 = vadd.f32 %v2510, %v2511
        %v2513 = vsel %vm913, %v2471, 0.0
        %v2514 = vadd.f32 %v2512, %v2513
        %v2515 = vsel %vm913, %v2472, 0.0
        %v2516 = vadd.f32 %v2514, %v2515
        %v2517 = vsel %vm913, %v2473, 0.0
        %v2518 = vadd.f32 %v2516, %v2517
        %v2519 = vsel %vm913, %v2474, 0.0
        %v2520 = vadd.f32 %v2518, %v2519
        %v2521 = vsel %vm913, %v2475, 0.0
        %v2522 = vadd.f32 %v2520, %v2521
        %v2523 = vsel %vm913, %v2476, 0.0
        %v2524 = vadd.f32 %v2522, %v2523
        %v2525 = vsel %vm913, %v2477, 0.0
        %v2526 = vadd.f32 %v2524, %v2525
        %v2527 = vsel %vm913, %v2478, 0.0
        %v2528 = vadd.f32 %v2526, %v2527
        %v2529 = vsel %vm913, %v2479, 0.0
        %v2530 = vadd.f32 %v2528, %v2529
        %v2531 = vsel %vm913, %v2480, 0.0
        %v2532 = vadd.f32 %v2530, %v2531
        %v2533 = vsel %vm913, %v2481, 0.0
        %v2534 = vadd.f32 %v2532, %v2533
        %v2535 = vsel %vm913, %v2482, 0.0
        %v2536 = vadd.f32 %v2534, %v2535
        %v2537 = vsel %vm913, %v2483, 0.0
        %v2538 = vadd.f32 %v2536, %v2537
        %v2539 = vsel %vm913, %v2484, 0.0
        %v2540 = vadd.f32 %v2538, %v2539
        %v2541 = vsel %vm913, %v2485, 0.0
        %v2542 = vadd.f32 %v2540, %v2541
        %v2543 = vsel %vm913, %v2486, 0.0
        %v2544 = vadd.f32 %v2542, %v2543
        %v2545 = vsel %vm913, %v2487, 0.0
        %v2546 = vadd.f32 %v2544, %v2545
        %v2547 = vsel %vm913, %v2488, 0.0
        %v2548 = vadd.f32 %v2546, %v2547
        %v2549 = vsel %vm913, %v2489, 0.0
        %v2550 = vadd.f32 %v2548, %v2549
        %v2551 = vsel %vm913, %v2490, 0.0
        %v2552 = vadd.f32 %v2550, %v2551
        %v2553 = vsel %vm913, %v2491, 0.0
        %v2554 = vadd.f32 %v2552, %v2553
        %v2555 = vsel %vm913, %v2492, 0.0
        %v2556 = vadd.f32 %v2554, %v2555
        %v2557 = vsel %vm913, %v2493, 0.0
        %v2558 = vadd.f32 %v2556, %v2557
        %v2559 = vrot.slane %v2558, 4
        %v2560 = vadd.f32 %v2558, %v2559
        %v2561 = vrot.slane %v2560, 2
        %v2562 = vadd.f32 %v2560, %v2561
        %v2563 = vrot.slane %v2562, 1
        %v2564 = vadd.f32 %v2562, %v2563
        %v2565 = vmul.f32 %v2462, %v2462
        %v2566 = vmul.f32 %v2463, %v2463
        %v2567 = vmul.f32 %v2464, %v2464
        %v2568 = vmul.f32 %v2465, %v2465
        %v2569 = vmul.f32 %v2466, %v2466
        %v2570 = vmul.f32 %v2467, %v2467
        %v2571 = vmul.f32 %v2468, %v2468
        %v2572 = vmul.f32 %v2469, %v2469
        %v2573 = vmul.f32 %v2470, %v2470
        %v2574 = vmul.f32 %v2471, %v2471
        %v2575 = vmul.f32 %v2472, %v2472
        %v2576 = vmul.f32 %v2473, %v2473
        %v2577 = vmul.f32 %v2474, %v2474
        %v2578 = vmul.f32 %v2475, %v2475
        %v2579 = vmul.f32 %v2476, %v2476
        %v2580 = vmul.f32 %v2477, %v2477
        %v2581 = vmul.f32 %v2478, %v2478
        %v2582 = vmul.f32 %v2479, %v2479
        %v2583 = vmul.f32 %v2480, %v2480
        %v2584 = vmul.f32 %v2481, %v2481
        %v2585 = vmul.f32 %v2482, %v2482
        %v2586 = vmul.f32 %v2483, %v2483
        %v2587 = vmul.f32 %v2484, %v2484
        %v2588 = vmul.f32 %v2485, %v2485
        %v2589 = vmul.f32 %v2486, %v2486
        %v2590 = vmul.f32 %v2487, %v2487
        %v2591 = vmul.f32 %v2488, %v2488
        %v2592 = vmul.f32 %v2489, %v2489
        %v2593 = vmul.f32 %v2490, %v2490
        %v2594 = vmul.f32 %v2491, %v2491
        %v2595 = vmul.f32 %v2492, %v2492
        %v2596 = vmul.f32 %v2493, %v2493
        %v2597 = vsel %vm913, %v2565, 0.0
        %v2598 = vsel %vm913, %v2566, 0.0
        %v2599 = vadd.f32 %v2597, %v2598
        %v2600 = vsel %vm913, %v2567, 0.0
        %v2601 = vadd.f32 %v2599, %v2600
        %v2602 = vsel %vm913, %v2568, 0.0
        %v2603 = vadd.f32 %v2601, %v2602
        %v2604 = vsel %vm913, %v2569, 0.0
        %v2605 = vadd.f32 %v2603, %v2604
        %v2606 = vsel %vm913, %v2570, 0.0
        %v2607 = vadd.f32 %v2605, %v2606
        %v2608 = vsel %vm913, %v2571, 0.0
        %v2609 = vadd.f32 %v2607, %v2608
        %v2610 = vsel %vm913, %v2572, 0.0
        %v2611 = vadd.f32 %v2609, %v2610
        %v2612 = vsel %vm913, %v2573, 0.0
        %v2613 = vadd.f32 %v2611, %v2612
        %v2614 = vsel %vm913, %v2574, 0.0
        %v2615 = vadd.f32 %v2613, %v2614
        %v2616 = vsel %vm913, %v2575, 0.0
        %v2617 = vadd.f32 %v2615, %v2616
        %v2618 = vsel %vm913, %v2576, 0.0
        %v2619 = vadd.f32 %v2617, %v2618
        %v2620 = vsel %vm913, %v2577, 0.0
        %v2621 = vadd.f32 %v2619, %v2620
        %v2622 = vsel %vm913, %v2578, 0.0
        %v2623 = vadd.f32 %v2621, %v2622
        %v2624 = vsel %vm913, %v2579, 0.0
        %v2625 = vadd.f32 %v2623, %v2624
        %v2626 = vsel %vm913, %v2580, 0.0
        %v2627 = vadd.f32 %v2625, %v2626
        %v2628 = vsel %vm913, %v2581, 0.0
        %v2629 = vadd.f32 %v2627, %v2628
        %v2630 = vsel %vm913, %v2582, 0.0
        %v2631 = vadd.f32 %v2629, %v2630
        %v2632 = vsel %vm913, %v2583, 0.0
        %v2633 = vadd.f32 %v2631, %v2632
        %v2634 = vsel %vm913, %v2584, 0.0
        %v2635 = vadd.f32 %v2633, %v2634
        %v2636 = vsel %vm913, %v2585, 0.0
        %v2637 = vadd.f32 %v2635, %v2636
        %v2638 = vsel %vm913, %v2586, 0.0
        %v2639 = vadd.f32 %v2637, %v2638
        %v2640 = vsel %vm913, %v2587, 0.0
        %v2641 = vadd.f32 %v2639, %v2640
        %v2642 = vsel %vm913, %v2588, 0.0
        %v2643 = vadd.f32 %v2641, %v2642
        %v2644 = vsel %vm913, %v2589, 0.0
        %v2645 = vadd.f32 %v2643, %v2644
        %v2646 = vsel %vm913, %v2590, 0.0
        %v2647 = vadd.f32 %v2645, %v2646
        %v2648 = vsel %vm913, %v2591, 0.0
        %v2649 = vadd.f32 %v2647, %v2648
        %v2650 = vsel %vm913, %v2592, 0.0
        %v2651 = vadd.f32 %v2649, %v2650
        %v2652 = vsel %vm913, %v2593, 0.0
        %v2653 = vadd.f32 %v2651, %v2652
        %v2654 = vsel %vm913, %v2594, 0.0
        %v2655 = vadd.f32 %v2653, %v2654
        %v2656 = vsel %vm913, %v2595, 0.0
        %v2657 = vadd.f32 %v2655, %v2656
        %v2658 = vsel %vm913, %v2596, 0.0
        %v2659 = vadd.f32 %v2657, %v2658
        %v2660 = vrot.slane %v2659, 4
        %v2661 = vadd.f32 %v2659, %v2660
        %v2662 = vrot.slane %v2661, 2
        %v2663 = vadd.f32 %v2661, %v2662
        %v2664 = vrot.slane %v2663, 1
        %v2665 = vadd.f32 %v2663, %v2664
        %vm2666 = vcmask 1040384
        %v2667 = vsel %vm2666, %v2564, %v2665
        %v2669 = vsel %vm913, %v2667, 0
        %2671 = vmatpush.msra.mxu0 0.0
        %2672 = vmatpush.msra.mxu0 0.0
        %2673 = vmatpush.msra.mxu0 0.0
        %2674 = vmatpush.msra.mxu0 0.0
        %2675 = vmatpush.msra.mxu0 0.0
        %2676 = vmatpush.msra.mxu0 0.0
        %2677 = vmatpush.msra.mxu0 0.0
        %2678 = vmatpush.msra.mxu0 0.0
        %2679 = vmatpush.msra.mxu0 0.0
        %2680 = vmatpush.msra.mxu0 0.0
        %2681 = vmatpush.msra.mxu0 0.0
        %2682 = vmatpush.msra.mxu0 0.0
        %2683 = vmatpush.msra.mxu0 %v416
        %2684 = vmatpush.msra.mxu0 %v415
        %2685 = vmatpush.msra.mxu0 %v414
        %2686 = vmatpush.msra.mxu0 %v413
        %2687 = vmatmul.f32.gmra.mxu0 %v2669
        %v2688 = vpop.f32.mrf.mxu0
        %v2689 = vadd.f32 0.0, %v2688
        %2690 = vdwg.mxu0
        %v2691 = vmul.f32 %v2689, 0.0009765625
        %v2692 = vmul.f32 %v2691, %v2691
        %v2694 = vrot.slane %v2692, 7
        %v2696 = vsub.f32 %v2691, %v2694
        %v2697 = vmax.f32 %v2696, 0.0
        %v2698 = vadd.f32 %v2697, 1e-05
        %v2699 = vrsqrt.pop %v2698
        %v2700 = vmul.f32 %v2699, %v2698
        %v2701 = vmul.f32 %v2700, %v2699
        %v2702 = vmul.f32 0.5, %v2701
        %v2703 = vsub.f32 1.5, %v2702
        %v2704 = vmul.f32 %v2699, %v2703
        %vm2705 = vweird.f32 %v2698
        %vm2706 = vweird.f32 %v2699
        %vm2707 = vmor %vm2705, %vm2706
        %v2708 = vsel %vm2707, %v2699, %v2704
        %v2709 = vperm.slane %v2691, 0
        %v2710 = vsub.f32 %v2462, %v2709
        %v2711 = vsub.f32 %v2463, %v2709
        %v2712 = vsub.f32 %v2464, %v2709
        %v2713 = vsub.f32 %v2465, %v2709
        %v2714 = vsub.f32 %v2466, %v2709
        %v2715 = vsub.f32 %v2467, %v2709
        %v2716 = vsub.f32 %v2468, %v2709
        %v2717 = vsub.f32 %v2469, %v2709
        %v2718 = vsub.f32 %v2470, %v2709
        %v2719 = vsub.f32 %v2471, %v2709
        %v2720 = vsub.f32 %v2472, %v2709
        %v2721 = vsub.f32 %v2473, %v2709
        %v2722 = vsub.f32 %v2474, %v2709
        %v2723 = vsub.f32 %v2475, %v2709
        %v2724 = vsub.f32 %v2476, %v2709
        %v2725 = vsub.f32 %v2477, %v2709
        %v2726 = vsub.f32 %v2478, %v2709
        %v2727 = vsub.f32 %v2479, %v2709
        %v2728 = vsub.f32 %v2480, %v2709
        %v2729 = vsub.f32 %v2481, %v2709
        %v2730 = vsub.f32 %v2482, %v2709
        %v2731 = vsub.f32 %v2483, %v2709
        %v2732 = vsub.f32 %v2484, %v2709
        %v2733 = vsub.f32 %v2485, %v2709
        %v2734 = vsub.f32 %v2486, %v2709
        %v2735 = vsub.f32 %v2487, %v2709
        %v2736 = vsub.f32 %v2488, %v2709
        %v2737 = vsub.f32 %v2489, %v2709
        %v2738 = vsub.f32 %v2490, %v2709
        %v2739 = vsub.f32 %v2491, %v2709
        %v2740 = vsub.f32 %v2492, %v2709
        %v2741 = vsub.f32 %v2493, %v2709
        %v2742 = vperm.slane %v2708, 1
        %v2743 = vmul.f32 %v2710, %v2742
        %v2744 = vmul.f32 %v2711, %v2742
        %v2745 = vmul.f32 %v2712, %v2742
        %v2746 = vmul.f32 %v2713, %v2742
        %v2747 = vmul.f32 %v2714, %v2742
        %v2748 = vmul.f32 %v2715, %v2742
        %v2749 = vmul.f32 %v2716, %v2742
        %v2750 = vmul.f32 %v2717, %v2742
        %v2751 = vmul.f32 %v2718, %v2742
        %v2752 = vmul.f32 %v2719, %v2742
        %v2753 = vmul.f32 %v2720, %v2742
        %v2754 = vmul.f32 %v2721, %v2742
        %v2755 = vmul.f32 %v2722, %v2742
        %v2756 = vmul.f32 %v2723, %v2742
        %v2757 = vmul.f32 %v2724, %v2742
        %v2758 = vmul.f32 %v2725, %v2742
        %v2759 = vmul.f32 %v2726, %v2742
        %v2760 = vmul.f32 %v2727, %v2742
        %v2761 = vmul.f32 %v2728, %v2742
        %v2762 = vmul.f32 %v2729, %v2742
        %v2763 = vmul.f32 %v2730, %v2742
        %v2764 = vmul.f32 %v2731, %v2742
        %v2765 = vmul.f32 %v2732, %v2742
        %v2766 = vmul.f32 %v2733, %v2742
        %v2767 = vmul.f32 %v2734, %v2742
        %v2768 = vmul.f32 %v2735, %v2742
        %v2769 = vmul.f32 %v2736, %v2742
        %v2770 = vmul.f32 %v2737, %v2742
        %v2771 = vmul.f32 %v2738, %v2742
        %v2772 = vmul.f32 %v2739, %v2742
        %v2773 = vmul.f32 %v2740, %v2742
        %v2774 = vmul.f32 %v2741, %v2742
        %v2776 = vperm.slane %v2494, 0
        %v2778 = vmul.f32 %v2743, %v2776
        %v2779 = vmul.f32 %v2744, %v2776
        %v2780 = vmul.f32 %v2745, %v2776
        %v2781 = vmul.f32 %v2746, %v2776
        %v2782 = vmul.f32 %v2747, %v2776
        %v2783 = vmul.f32 %v2748, %v2776
        %v2784 = vmul.f32 %v2749, %v2776
        %v2785 = vmul.f32 %v2750, %v2776
        %v2786 = vmul.f32 %v2751, %v2776
        %v2787 = vmul.f32 %v2752, %v2776
        %v2788 = vmul.f32 %v2753, %v2776
        %v2789 = vmul.f32 %v2754, %v2776
        %v2790 = vmul.f32 %v2755, %v2776
        %v2791 = vmul.f32 %v2756, %v2776
        %v2792 = vmul.f32 %v2757, %v2776
        %v2793 = vmul.f32 %v2758, %v2776
        %v2794 = vmul.f32 %v2759, %v2776
        %v2795 = vmul.f32 %v2760, %v2776
        %v2796 = vmul.f32 %v2761, %v2776
        %v2797 = vmul.f32 %v2762, %v2776
        %v2798 = vmul.f32 %v2763, %v2776
        %v2799 = vmul.f32 %v2764, %v2776
        %v2800 = vmul.f32 %v2765, %v2776
        %v2801 = vmul.f32 %v2766, %v2776
        %v2802 = vmul.f32 %v2767, %v2776
        %v2803 = vmul.f32 %v2768, %v2776
        %v2804 = vmul.f32 %v2769, %v2776
        %v2805 = vmul.f32 %v2770, %v2776
        %v2806 = vmul.f32 %v2771, %v2776
        %v2807 = vmul.f32 %v2772, %v2776
        %v2808 = vmul.f32 %v2773, %v2776
        %v2809 = vmul.f32 %v2774, %v2776
        %v2811 = vperm.slane %v2495, 0
        %v2813 = vadd.f32 %v2778, %v2811
        %v2814 = vadd.f32 %v2779, %v2811
        %v2815 = vadd.f32 %v2780, %v2811
        %v2816 = vadd.f32 %v2781, %v2811
        %v2817 = vadd.f32 %v2782, %v2811
        %v2818 = vadd.f32 %v2783, %v2811
        %v2819 = vadd.f32 %v2784, %v2811
        %v2820 = vadd.f32 %v2785, %v2811
        %v2821 = vadd.f32 %v2786, %v2811
        %v2822 = vadd.f32 %v2787, %v2811
        %v2823 = vadd.f32 %v2788, %v2811
        %v2824 = vadd.f32 %v2789, %v2811
        %v2825 = vadd.f32 %v2790, %v2811
        %v2826 = vadd.f32 %v2791, %v2811
        %v2827 = vadd.f32 %v2792, %v2811
        %v2828 = vadd.f32 %v2793, %v2811
        %v2829 = vadd.f32 %v2794, %v2811
        %v2830 = vadd.f32 %v2795, %v2811
        %v2831 = vadd.f32 %v2796, %v2811
        %v2832 = vadd.f32 %v2797, %v2811
        %v2833 = vadd.f32 %v2798, %v2811
        %v2834 = vadd.f32 %v2799, %v2811
        %v2835 = vadd.f32 %v2800, %v2811
        %v2836 = vadd.f32 %v2801, %v2811
        %v2837 = vadd.f32 %v2802, %v2811
        %v2838 = vadd.f32 %v2803, %v2811
        %v2839 = vadd.f32 %v2804, %v2811
        %v2840 = vadd.f32 %v2805, %v2811
        %v2841 = vadd.f32 %v2806, %v2811
        %v2842 = vadd.f32 %v2807, %v2811
        %v2843 = vadd.f32 %v2808, %v2811
        %v2844 = vadd.f32 %v2809, %v2811
        %v2845 = vxor.u32 %v2813, 2147483648
        %v2846 = vxor.u32 %v2814, 2147483648
        %v2847 = vxor.u32 %v2815, 2147483648
        %v2848 = vxor.u32 %v2816, 2147483648
        %v2849 = vxor.u32 %v2817, 2147483648
        %v2850 = vxor.u32 %v2818, 2147483648
        %v2851 = vxor.u32 %v2819, 2147483648
        %v2852 = vxor.u32 %v2820, 2147483648
        %v2853 = vxor.u32 %v2821, 2147483648
        %v2854 = vxor.u32 %v2822, 2147483648
        %v2855 = vxor.u32 %v2823, 2147483648
        %v2856 = vxor.u32 %v2824, 2147483648
        %v2857 = vxor.u32 %v2825, 2147483648
        %v2858 = vxor.u32 %v2826, 2147483648
        %v2859 = vxor.u32 %v2827, 2147483648
        %v2860 = vxor.u32 %v2828, 2147483648
        %v2861 = vxor.u32 %v2829, 2147483648
        %v2862 = vxor.u32 %v2830, 2147483648
        %v2863 = vxor.u32 %v2831, 2147483648
        %v2864 = vxor.u32 %v2832, 2147483648
        %v2865 = vxor.u32 %v2833, 2147483648
        %v2866 = vxor.u32 %v2834, 2147483648
        %v2867 = vxor.u32 %v2835, 2147483648
        %v2868 = vxor.u32 %v2836, 2147483648
        %v2869 = vxor.u32 %v2837, 2147483648
        %v2870 = vxor.u32 %v2838, 2147483648
        %v2871 = vxor.u32 %v2839, 2147483648
        %v2872 = vxor.u32 %v2840, 2147483648
        %v2873 = vxor.u32 %v2841, 2147483648
        %v2874 = vxor.u32 %v2842, 2147483648
        %v2875 = vxor.u32 %v2843, 2147483648
        %v2876 = vxor.u32 %v2844, 2147483648
        %v2877 = vmul.f32 %v2845, 1.442695
        %v2878 = vpow.pop %v2877
        %v2879 = vmul.f32 %v2846, 1.442695
        %v2880 = vpow.pop %v2879
        %v2881 = vmul.f32 %v2847, 1.442695
        %v2882 = vpow.pop %v2881
        %v2883 = vmul.f32 %v2848, 1.442695
        %v2884 = vpow.pop %v2883
        %v2885 = vmul.f32 %v2849, 1.442695
        %v2886 = vpow.pop %v2885
        %v2887 = vmul.f32 %v2850, 1.442695
        %v2888 = vpow.pop %v2887
        %v2889 = vmul.f32 %v2851, 1.442695
        %v2890 = vpow.pop %v2889
        %v2891 = vmul.f32 %v2852, 1.442695
        %v2892 = vpow.pop %v2891
        %v2893 = vmul.f32 %v2853, 1.442695
        %v2894 = vpow.pop %v2893
        %v2895 = vmul.f32 %v2854, 1.442695
        %v2896 = vpow.pop %v2895
        %v2897 = vmul.f32 %v2855, 1.442695
        %v2898 = vpow.pop %v2897
        %v2899 = vmul.f32 %v2856, 1.442695
        %v2900 = vpow.pop %v2899
        %v2901 = vmul.f32 %v2857, 1.442695
        %v2902 = vpow.pop %v2901
        %v2903 = vmul.f32 %v2858, 1.442695
        %v2904 = vpow.pop %v2903
        %v2905 = vmul.f32 %v2859, 1.442695
        %v2906 = vpow.pop %v2905
        %v2907 = vmul.f32 %v2860, 1.442695
        %v2908 = vpow.pop %v2907
        %v2909 = vmul.f32 %v2861, 1.442695
        %v2910 = vpow.pop %v2909
        %v2911 = vmul.f32 %v2862, 1.442695
        %v2912 = vpow.pop %v2911
        %v2913 = vmul.f32 %v2863, 1.442695
        %v2914 = vpow.pop %v2913
        %v2915 = vmul.f32 %v2864, 1.442695
        %v2916 = vpow.pop %v2915
        %v2917 = vmul.f32 %v2865, 1.442695
        %v2918 = vpow.pop %v2917
        %v2919 = vmul.f32 %v2866, 1.442695
        %v2920 = vpow.pop %v2919
        %v2921 = vmul.f32 %v2867, 1.442695
        %v2922 = vpow.pop %v2921
        %v2923 = vmul.f32 %v2868, 1.442695
        %v2924 = vpow.pop %v2923
        %v2925 = vmul.f32 %v2869, 1.442695
        %v2926 = vpow.pop %v2925
        %v2927 = vmul.f32 %v2870, 1.442695
        %v2928 = vpow.pop %v2927
        %v2929 = vmul.f32 %v2871, 1.442695
        %v2930 = vpow.pop %v2929
        %v2931 = vmul.f32 %v2872, 1.442695
        %v2932 = vpow.pop %v2931
        %v2933 = vmul.f32 %v2873, 1.442695
        %v2934 = vpow.pop %v2933
        %v2935 = vmul.f32 %v2874, 1.442695
        %v2936 = vpow.pop %v2935
        %v2937 = vmul.f32 %v2875, 1.442695
        %v2938 = vpow.pop %v2937
        %v2939 = vmul.f32 %v2876, 1.442695
        %v2940 = vpow.pop %v2939
        %v2941 = vadd.f32 %v2878, 1.0
        %v2942 = vadd.f32 %v2880, 1.0
        %v2943 = vadd.f32 %v2882, 1.0
        %v2944 = vadd.f32 %v2884, 1.0
        %v2945 = vadd.f32 %v2886, 1.0
        %v2946 = vadd.f32 %v2888, 1.0
        %v2947 = vadd.f32 %v2890, 1.0
        %v2948 = vadd.f32 %v2892, 1.0
        %v2949 = vadd.f32 %v2894, 1.0
        %v2950 = vadd.f32 %v2896, 1.0
        %v2951 = vadd.f32 %v2898, 1.0
        %v2952 = vadd.f32 %v2900, 1.0
        %v2953 = vadd.f32 %v2902, 1.0
        %v2954 = vadd.f32 %v2904, 1.0
        %v2955 = vadd.f32 %v2906, 1.0
        %v2956 = vadd.f32 %v2908, 1.0
        %v2957 = vadd.f32 %v2910, 1.0
        %v2958 = vadd.f32 %v2912, 1.0
        %v2959 = vadd.f32 %v2914, 1.0
        %v2960 = vadd.f32 %v2916, 1.0
        %v2961 = vadd.f32 %v2918, 1.0
        %v2962 = vadd.f32 %v2920, 1.0
        %v2963 = vadd.f32 %v2922, 1.0
        %v2964 = vadd.f32 %v2924, 1.0
        %v2965 = vadd.f32 %v2926, 1.0
        %v2966 = vadd.f32 %v2928, 1.0
        %v2967 = vadd.f32 %v2930, 1.0
        %v2968 = vadd.f32 %v2932, 1.0
        %v2969 = vadd.f32 %v2934, 1.0
        %v2970 = vadd.f32 %v2936, 1.0
        %v2971 = vadd.f32 %v2938, 1.0
        %v2972 = vadd.f32 %v2940, 1.0
        %v2973 = vrcp.pop %v2941
        %v2974 = vmul.f32 %v2941, %v2973
        %v2975 = vsub.f32 1.0, %v2974
        %v2976 = vmul.f32 %v2973, %v2975
        %v2977 = vadd.f32 %v2973, %v2976
        %vm2978 = vweird.f32 %v2941
        %vm2979 = vweird.f32 %v2973
        %vm2980 = vmor %vm2978, %vm2979
        %v2981 = vsel %vm2980, %v2973, %v2977
        %v2982 = vand.u32 2147483647, %v2941
        %vm2983 = vcmp.eq.f32.partialorder %v2982, 8.507059e+37
        %v2984 = vand.u32 %v2941, 2147483648
        %v2985 = vor.u32 1.1754944e-38, %v2984
        %v2986 = vsel %vm2983, %v2985, %v2981
        %v2987 = vmul.f32 1.0, %v2986
        %v2988 = vrcp.pop %v2942
        %v2989 = vmul.f32 %v2942, %v2988
        %v2990 = vsub.f32 1.0, %v2989
        %v2991 = vmul.f32 %v2988, %v2990
        %v2992 = vadd.f32 %v2988, %v2991
        %vm2993 = vweird.f32 %v2942
        %vm2994 = vweird.f32 %v2988
        %vm2995 = vmor %vm2993, %vm2994
        %v2996 = vsel %vm2995, %v2988, %v2992
        %v2997 = vand.u32 2147483647, %v2942
        %vm2998 = vcmp.eq.f32.partialorder %v2997, 8.507059e+37
        %v2999 = vand.u32 %v2942, 2147483648
        %v3000 = vor.u32 1.1754944e-38, %v2999
        %v3001 = vsel %vm2998, %v3000, %v2996
        %v3002 = vmul.f32 1.0, %v3001
        %v3003 = vrcp.pop %v2943
        %v3004 = vmul.f32 %v2943, %v3003
        %v3005 = vsub.f32 1.0, %v3004
        %v3006 = vmul.f32 %v3003, %v3005
        %v3007 = vadd.f32 %v3003, %v3006
        %vm3008 = vweird.f32 %v2943
        %vm3009 = vweird.f32 %v3003
        %vm3010 = vmor %vm3008, %vm3009
        %v3011 = vsel %vm3010, %v3003, %v3007
        %v3012 = vand.u32 2147483647, %v2943
        %vm3013 = vcmp.eq.f32.partialorder %v3012, 8.507059e+37
        %v3014 = vand.u32 %v2943, 2147483648
        %v3015 = vor.u32 1.1754944e-38, %v3014
        %v3016 = vsel %vm3013, %v3015, %v3011
        %v3017 = vmul.f32 1.0, %v3016
        %v3018 = vrcp.pop %v2944
        %v3019 = vmul.f32 %v2944, %v3018
        %v3020 = vsub.f32 1.0, %v3019
        %v3021 = vmul.f32 %v3018, %v3020
        %v3022 = vadd.f32 %v3018, %v3021
        %vm3023 = vweird.f32 %v2944
        %vm3024 = vweird.f32 %v3018
        %vm3025 = vmor %vm3023, %vm3024
        %v3026 = vsel %vm3025, %v3018, %v3022
        %v3027 = vand.u32 2147483647, %v2944
        %vm3028 = vcmp.eq.f32.partialorder %v3027, 8.507059e+37
        %v3029 = vand.u32 %v2944, 2147483648
        %v3030 = vor.u32 1.1754944e-38, %v3029
        %v3031 = vsel %vm3028, %v3030, %v3026
        %v3032 = vmul.f32 1.0, %v3031
        %v3033 = vrcp.pop %v2945
        %v3034 = vmul.f32 %v2945, %v3033
        %v3035 = vsub.f32 1.0, %v3034
        %v3036 = vmul.f32 %v3033, %v3035
        %v3037 = vadd.f32 %v3033, %v3036
        %vm3038 = vweird.f32 %v2945
        %vm3039 = vweird.f32 %v3033
        %vm3040 = vmor %vm3038, %vm3039
        %v3041 = vsel %vm3040, %v3033, %v3037
        %v3042 = vand.u32 2147483647, %v2945
        %vm3043 = vcmp.eq.f32.partialorder %v3042, 8.507059e+37
        %v3044 = vand.u32 %v2945, 2147483648
        %v3045 = vor.u32 1.1754944e-38, %v3044
        %v3046 = vsel %vm3043, %v3045, %v3041
        %v3047 = vmul.f32 1.0, %v3046
        %v3048 = vrcp.pop %v2946
        %v3049 = vmul.f32 %v2946, %v3048
        %v3050 = vsub.f32 1.0, %v3049
        %v3051 = vmul.f32 %v3048, %v3050
        %v3052 = vadd.f32 %v3048, %v3051
        %vm3053 = vweird.f32 %v2946
        %vm3054 = vweird.f32 %v3048
        %vm3055 = vmor %vm3053, %vm3054
        %v3056 = vsel %vm3055, %v3048, %v3052
        %v3057 = vand.u32 2147483647, %v2946
        %vm3058 = vcmp.eq.f32.partialorder %v3057, 8.507059e+37
        %v3059 = vand.u32 %v2946, 2147483648
        %v3060 = vor.u32 1.1754944e-38, %v3059
        %v3061 = vsel %vm3058, %v3060, %v3056
        %v3062 = vmul.f32 1.0, %v3061
        %v3063 = vrcp.pop %v2947
        %v3064 = vmul.f32 %v2947, %v3063
        %v3065 = vsub.f32 1.0, %v3064
        %v3066 = vmul.f32 %v3063, %v3065
        %v3067 = vadd.f32 %v3063, %v3066
        %vm3068 = vweird.f32 %v2947
        %vm3069 = vweird.f32 %v3063
        %vm3070 = vmor %vm3068, %vm3069
        %v3071 = vsel %vm3070, %v3063, %v3067
        %v3072 = vand.u32 2147483647, %v2947
        %vm3073 = vcmp.eq.f32.partialorder %v3072, 8.507059e+37
        %v3074 = vand.u32 %v2947, 2147483648
        %v3075 = vor.u32 1.1754944e-38, %v3074
        %v3076 = vsel %vm3073, %v3075, %v3071
        %v3077 = vmul.f32 1.0, %v3076
        %v3078 = vrcp.pop %v2948
        %v3079 = vmul.f32 %v2948, %v3078
        %v3080 = vsub.f32 1.0, %v3079
        %v3081 = vmul.f32 %v3078, %v3080
        %v3082 = vadd.f32 %v3078, %v3081
        %vm3083 = vweird.f32 %v2948
        %vm3084 = vweird.f32 %v3078
        %vm3085 = vmor %vm3083, %vm3084
        %v3086 = vsel %vm3085, %v3078, %v3082
        %v3087 = vand.u32 2147483647, %v2948
        %vm3088 = vcmp.eq.f32.partialorder %v3087, 8.507059e+37
        %v3089 = vand.u32 %v2948, 2147483648
        %v3090 = vor.u32 1.1754944e-38, %v3089
        %v3091 = vsel %vm3088, %v3090, %v3086
        %v3092 = vmul.f32 1.0, %v3091
        %v3093 = vrcp.pop %v2949
        %v3094 = vmul.f32 %v2949, %v3093
        %v3095 = vsub.f32 1.0, %v3094
        %v3096 = vmul.f32 %v3093, %v3095
        %v3097 = vadd.f32 %v3093, %v3096
        %vm3098 = vweird.f32 %v2949
        %vm3099 = vweird.f32 %v3093
        %vm3100 = vmor %vm3098, %vm3099
        %v3101 = vsel %vm3100, %v3093, %v3097
        %v3102 = vand.u32 2147483647, %v2949
        %vm3103 = vcmp.eq.f32.partialorder %v3102, 8.507059e+37
        %v3104 = vand.u32 %v2949, 2147483648
        %v3105 = vor.u32 1.1754944e-38, %v3104
        %v3106 = vsel %vm3103, %v3105, %v3101
        %v3107 = vmul.f32 1.0, %v3106
        %v3108 = vrcp.pop %v2950
        %v3109 = vmul.f32 %v2950, %v3108
        %v3110 = vsub.f32 1.0, %v3109
        %v3111 = vmul.f32 %v3108, %v3110
        %v3112 = vadd.f32 %v3108, %v3111
        %vm3113 = vweird.f32 %v2950
        %vm3114 = vweird.f32 %v3108
        %vm3115 = vmor %vm3113, %vm3114
        %v3116 = vsel %vm3115, %v3108, %v3112
        %v3117 = vand.u32 2147483647, %v2950
        %vm3118 = vcmp.eq.f32.partialorder %v3117, 8.507059e+37
        %v3119 = vand.u32 %v2950, 2147483648
        %v3120 = vor.u32 1.1754944e-38, %v3119
        %v3121 = vsel %vm3118, %v3120, %v3116
        %v3122 = vmul.f32 1.0, %v3121
        %v3123 = vrcp.pop %v2951
        %v3124 = vmul.f32 %v2951, %v3123
        %v3125 = vsub.f32 1.0, %v3124
        %v3126 = vmul.f32 %v3123, %v3125
        %v3127 = vadd.f32 %v3123, %v3126
        %vm3128 = vweird.f32 %v2951
        %vm3129 = vweird.f32 %v3123
        %vm3130 = vmor %vm3128, %vm3129
        %v3131 = vsel %vm3130, %v3123, %v3127
        %v3132 = vand.u32 2147483647, %v2951
        %vm3133 = vcmp.eq.f32.partialorder %v3132, 8.507059e+37
        %v3134 = vand.u32 %v2951, 2147483648
        %v3135 = vor.u32 1.1754944e-38, %v3134
        %v3136 = vsel %vm3133, %v3135, %v3131
        %v3137 = vmul.f32 1.0, %v3136
        %v3138 = vrcp.pop %v2952
        %v3139 = vmul.f32 %v2952, %v3138
        %v3140 = vsub.f32 1.0, %v3139
        %v3141 = vmul.f32 %v3138, %v3140
        %v3142 = vadd.f32 %v3138, %v3141
        %vm3143 = vweird.f32 %v2952
        %vm3144 = vweird.f32 %v3138
        %vm3145 = vmor %vm3143, %vm3144
        %v3146 = vsel %vm3145, %v3138, %v3142
        %v3147 = vand.u32 2147483647, %v2952
        %vm3148 = vcmp.eq.f32.partialorder %v3147, 8.507059e+37
        %v3149 = vand.u32 %v2952, 2147483648
        %v3150 = vor.u32 1.1754944e-38, %v3149
        %v3151 = vsel %vm3148, %v3150, %v3146
        %v3152 = vmul.f32 1.0, %v3151
        %v3153 = vrcp.pop %v2953
        %v3154 = vmul.f32 %v2953, %v3153
        %v3155 = vsub.f32 1.0, %v3154
        %v3156 = vmul.f32 %v3153, %v3155
        %v3157 = vadd.f32 %v3153, %v3156
        %vm3158 = vweird.f32 %v2953
        %vm3159 = vweird.f32 %v3153
        %vm3160 = vmor %vm3158, %vm3159
        %v3161 = vsel %vm3160, %v3153, %v3157
        %v3162 = vand.u32 2147483647, %v2953
        %vm3163 = vcmp.eq.f32.partialorder %v3162, 8.507059e+37
        %v3164 = vand.u32 %v2953, 2147483648
        %v3165 = vor.u32 1.1754944e-38, %v3164
        %v3166 = vsel %vm3163, %v3165, %v3161
        %v3167 = vmul.f32 1.0, %v3166
        %v3168 = vrcp.pop %v2954
        %v3169 = vmul.f32 %v2954, %v3168
        %v3170 = vsub.f32 1.0, %v3169
        %v3171 = vmul.f32 %v3168, %v3170
        %v3172 = vadd.f32 %v3168, %v3171
        %vm3173 = vweird.f32 %v2954
        %vm3174 = vweird.f32 %v3168
        %vm3175 = vmor %vm3173, %vm3174
        %v3176 = vsel %vm3175, %v3168, %v3172
        %v3177 = vand.u32 2147483647, %v2954
        %vm3178 = vcmp.eq.f32.partialorder %v3177, 8.507059e+37
        %v3179 = vand.u32 %v2954, 2147483648
        %v3180 = vor.u32 1.1754944e-38, %v3179
        %v3181 = vsel %vm3178, %v3180, %v3176
        %v3182 = vmul.f32 1.0, %v3181
        %v3183 = vrcp.pop %v2955
        %v3184 = vmul.f32 %v2955, %v3183
        %v3185 = vsub.f32 1.0, %v3184
        %v3186 = vmul.f32 %v3183, %v3185
        %v3187 = vadd.f32 %v3183, %v3186
        %vm3188 = vweird.f32 %v2955
        %vm3189 = vweird.f32 %v3183
        %vm3190 = vmor %vm3188, %vm3189
        %v3191 = vsel %vm3190, %v3183, %v3187
        %v3192 = vand.u32 2147483647, %v2955
        %vm3193 = vcmp.eq.f32.partialorder %v3192, 8.507059e+37
        %v3194 = vand.u32 %v2955, 2147483648
        %v3195 = vor.u32 1.1754944e-38, %v3194
        %v3196 = vsel %vm3193, %v3195, %v3191
        %v3197 = vmul.f32 1.0, %v3196
        %v3198 = vrcp.pop %v2956
        %v3199 = vmul.f32 %v2956, %v3198
        %v3200 = vsub.f32 1.0, %v3199
        %v3201 = vmul.f32 %v3198, %v3200
        %v3202 = vadd.f32 %v3198, %v3201
        %vm3203 = vweird.f32 %v2956
        %vm3204 = vweird.f32 %v3198
        %vm3205 = vmor %vm3203, %vm3204
        %v3206 = vsel %vm3205, %v3198, %v3202
        %v3207 = vand.u32 2147483647, %v2956
        %vm3208 = vcmp.eq.f32.partialorder %v3207, 8.507059e+37
        %v3209 = vand.u32 %v2956, 2147483648
        %v3210 = vor.u32 1.1754944e-38, %v3209
        %v3211 = vsel %vm3208, %v3210, %v3206
        %v3212 = vmul.f32 1.0, %v3211
        %v3213 = vrcp.pop %v2957
        %v3214 = vmul.f32 %v2957, %v3213
        %v3215 = vsub.f32 1.0, %v3214
        %v3216 = vmul.f32 %v3213, %v3215
        %v3217 = vadd.f32 %v3213, %v3216
        %vm3218 = vweird.f32 %v2957
        %vm3219 = vweird.f32 %v3213
        %vm3220 = vmor %vm3218, %vm3219
        %v3221 = vsel %vm3220, %v3213, %v3217
        %v3222 = vand.u32 2147483647, %v2957
        %vm3223 = vcmp.eq.f32.partialorder %v3222, 8.507059e+37
        %v3224 = vand.u32 %v2957, 2147483648
        %v3225 = vor.u32 1.1754944e-38, %v3224
        %v3226 = vsel %vm3223, %v3225, %v3221
        %v3227 = vmul.f32 1.0, %v3226
        %v3228 = vrcp.pop %v2958
        %v3229 = vmul.f32 %v2958, %v3228
        %v3230 = vsub.f32 1.0, %v3229
        %v3231 = vmul.f32 %v3228, %v3230
        %v3232 = vadd.f32 %v3228, %v3231
        %vm3233 = vweird.f32 %v2958
        %vm3234 = vweird.f32 %v3228
        %vm3235 = vmor %vm3233, %vm3234
        %v3236 = vsel %vm3235, %v3228, %v3232
        %v3237 = vand.u32 2147483647, %v2958
        %vm3238 = vcmp.eq.f32.partialorder %v3237, 8.507059e+37
        %v3239 = vand.u32 %v2958, 2147483648
        %v3240 = vor.u32 1.1754944e-38, %v3239
        %v3241 = vsel %vm3238, %v3240, %v3236
        %v3242 = vmul.f32 1.0, %v3241
        %v3243 = vrcp.pop %v2959
        %v3244 = vmul.f32 %v2959, %v3243
        %v3245 = vsub.f32 1.0, %v3244
        %v3246 = vmul.f32 %v3243, %v3245
        %v3247 = vadd.f32 %v3243, %v3246
        %vm3248 = vweird.f32 %v2959
        %vm3249 = vweird.f32 %v3243
        %vm3250 = vmor %vm3248, %vm3249
        %v3251 = vsel %vm3250, %v3243, %v3247
        %v3252 = vand.u32 2147483647, %v2959
        %vm3253 = vcmp.eq.f32.partialorder %v3252, 8.507059e+37
        %v3254 = vand.u32 %v2959, 2147483648
        %v3255 = vor.u32 1.1754944e-38, %v3254
        %v3256 = vsel %vm3253, %v3255, %v3251
        %v3257 = vmul.f32 1.0, %v3256
        %v3258 = vrcp.pop %v2960
        %v3259 = vmul.f32 %v2960, %v3258
        %v3260 = vsub.f32 1.0, %v3259
        %v3261 = vmul.f32 %v3258, %v3260
        %v3262 = vadd.f32 %v3258, %v3261
        %vm3263 = vweird.f32 %v2960
        %vm3264 = vweird.f32 %v3258
        %vm3265 = vmor %vm3263, %vm3264
        %v3266 = vsel %vm3265, %v3258, %v3262
        %v3267 = vand.u32 2147483647, %v2960
        %vm3268 = vcmp.eq.f32.partialorder %v3267, 8.507059e+37
        %v3269 = vand.u32 %v2960, 2147483648
        %v3270 = vor.u32 1.1754944e-38, %v3269
        %v3271 = vsel %vm3268, %v3270, %v3266
        %v3272 = vmul.f32 1.0, %v3271
        %v3273 = vrcp.pop %v2961
        %v3274 = vmul.f32 %v2961, %v3273
        %v3275 = vsub.f32 1.0, %v3274
        %v3276 = vmul.f32 %v3273, %v3275
        %v3277 = vadd.f32 %v3273, %v3276
        %vm3278 = vweird.f32 %v2961
        %vm3279 = vweird.f32 %v3273
        %vm3280 = vmor %vm3278, %vm3279
        %v3281 = vsel %vm3280, %v3273, %v3277
        %v3282 = vand.u32 2147483647, %v2961
        %vm3283 = vcmp.eq.f32.partialorder %v3282, 8.507059e+37
        %v3284 = vand.u32 %v2961, 2147483648
        %v3285 = vor.u32 1.1754944e-38, %v3284
        %v3286 = vsel %vm3283, %v3285, %v3281
        %v3287 = vmul.f32 1.0, %v3286
        %v3288 = vrcp.pop %v2962
        %v3289 = vmul.f32 %v2962, %v3288
        %v3290 = vsub.f32 1.0, %v3289
        %v3291 = vmul.f32 %v3288, %v3290
        %v3292 = vadd.f32 %v3288, %v3291
        %vm3293 = vweird.f32 %v2962
        %vm3294 = vweird.f32 %v3288
        %vm3295 = vmor %vm3293, %vm3294
        %v3296 = vsel %vm3295, %v3288, %v3292
        %v3297 = vand.u32 2147483647, %v2962
        %vm3298 = vcmp.eq.f32.partialorder %v3297, 8.507059e+37
        %v3299 = vand.u32 %v2962, 2147483648
        %v3300 = vor.u32 1.1754944e-38, %v3299
        %v3301 = vsel %vm3298, %v3300, %v3296
        %v3302 = vmul.f32 1.0, %v3301
        %v3303 = vrcp.pop %v2963
        %v3304 = vmul.f32 %v2963, %v3303
        %v3305 = vsub.f32 1.0, %v3304
        %v3306 = vmul.f32 %v3303, %v3305
        %v3307 = vadd.f32 %v3303, %v3306
        %vm3308 = vweird.f32 %v2963
        %vm3309 = vweird.f32 %v3303
        %vm3310 = vmor %vm3308, %vm3309
        %v3311 = vsel %vm3310, %v3303, %v3307
        %v3312 = vand.u32 2147483647, %v2963
        %vm3313 = vcmp.eq.f32.partialorder %v3312, 8.507059e+37
        %v3314 = vand.u32 %v2963, 2147483648
        %v3315 = vor.u32 1.1754944e-38, %v3314
        %v3316 = vsel %vm3313, %v3315, %v3311
        %v3317 = vmul.f32 1.0, %v3316
        %v3318 = vrcp.pop %v2964
        %v3319 = vmul.f32 %v2964, %v3318
        %v3320 = vsub.f32 1.0, %v3319
        %v3321 = vmul.f32 %v3318, %v3320
        %v3322 = vadd.f32 %v3318, %v3321
        %vm3323 = vweird.f32 %v2964
        %vm3324 = vweird.f32 %v3318
        %vm3325 = vmor %vm3323, %vm3324
        %v3326 = vsel %vm3325, %v3318, %v3322
        %v3327 = vand.u32 2147483647, %v2964
        %vm3328 = vcmp.eq.f32.partialorder %v3327, 8.507059e+37
        %v3329 = vand.u32 %v2964, 2147483648
        %v3330 = vor.u32 1.1754944e-38, %v3329
        %v3331 = vsel %vm3328, %v3330, %v3326
        %v3332 = vmul.f32 1.0, %v3331
        %v3333 = vrcp.pop %v2965
        %v3334 = vmul.f32 %v2965, %v3333
        %v3335 = vsub.f32 1.0, %v3334
        %v3336 = vmul.f32 %v3333, %v3335
        %v3337 = vadd.f32 %v3333, %v3336
        %vm3338 = vweird.f32 %v2965
        %vm3339 = vweird.f32 %v3333
        %vm3340 = vmor %vm3338, %vm3339
        %v3341 = vsel %vm3340, %v3333, %v3337
        %v3342 = vand.u32 2147483647, %v2965
        %vm3343 = vcmp.eq.f32.partialorder %v3342, 8.507059e+37
        %v3344 = vand.u32 %v2965, 2147483648
        %v3345 = vor.u32 1.1754944e-38, %v3344
        %v3346 = vsel %vm3343, %v3345, %v3341
        %v3347 = vmul.f32 1.0, %v3346
        %v3348 = vrcp.pop %v2966
        %v3349 = vmul.f32 %v2966, %v3348
        %v3350 = vsub.f32 1.0, %v3349
        %v3351 = vmul.f32 %v3348, %v3350
        %v3352 = vadd.f32 %v3348, %v3351
        %vm3353 = vweird.f32 %v2966
        %vm3354 = vweird.f32 %v3348
        %vm3355 = vmor %vm3353, %vm3354
        %v3356 = vsel %vm3355, %v3348, %v3352
        %v3357 = vand.u32 2147483647, %v2966
        %vm3358 = vcmp.eq.f32.partialorder %v3357, 8.507059e+37
        %v3359 = vand.u32 %v2966, 2147483648
        %v3360 = vor.u32 1.1754944e-38, %v3359
        %v3361 = vsel %vm3358, %v3360, %v3356
        %v3362 = vmul.f32 1.0, %v3361
        %v3363 = vrcp.pop %v2967
        %v3364 = vmul.f32 %v2967, %v3363
        %v3365 = vsub.f32 1.0, %v3364
        %v3366 = vmul.f32 %v3363, %v3365
        %v3367 = vadd.f32 %v3363, %v3366
        %vm3368 = vweird.f32 %v2967
        %vm3369 = vweird.f32 %v3363
        %vm3370 = vmor %vm3368, %vm3369
        %v3371 = vsel %vm3370, %v3363, %v3367
        %v3372 = vand.u32 2147483647, %v2967
        %vm3373 = vcmp.eq.f32.partialorder %v3372, 8.507059e+37
        %v3374 = vand.u32 %v2967, 2147483648
        %v3375 = vor.u32 1.1754944e-38, %v3374
        %v3376 = vsel %vm3373, %v3375, %v3371
        %v3377 = vmul.f32 1.0, %v3376
        %v3378 = vrcp.pop %v2968
        %v3379 = vmul.f32 %v2968, %v3378
        %v3380 = vsub.f32 1.0, %v3379
        %v3381 = vmul.f32 %v3378, %v3380
        %v3382 = vadd.f32 %v3378, %v3381
        %vm3383 = vweird.f32 %v2968
        %vm3384 = vweird.f32 %v3378
        %vm3385 = vmor %vm3383, %vm3384
        %v3386 = vsel %vm3385, %v3378, %v3382
        %v3387 = vand.u32 2147483647, %v2968
        %vm3388 = vcmp.eq.f32.partialorder %v3387, 8.507059e+37
        %v3389 = vand.u32 %v2968, 2147483648
        %v3390 = vor.u32 1.1754944e-38, %v3389
        %v3391 = vsel %vm3388, %v3390, %v3386
        %v3392 = vmul.f32 1.0, %v3391
        %v3393 = vrcp.pop %v2969
        %v3394 = vmul.f32 %v2969, %v3393
        %v3395 = vsub.f32 1.0, %v3394
        %v3396 = vmul.f32 %v3393, %v3395
        %v3397 = vadd.f32 %v3393, %v3396
        %vm3398 = vweird.f32 %v2969
        %vm3399 = vweird.f32 %v3393
        %vm3400 = vmor %vm3398, %vm3399
        %v3401 = vsel %vm3400, %v3393, %v3397
        %v3402 = vand.u32 2147483647, %v2969
        %vm3403 = vcmp.eq.f32.partialorder %v3402, 8.507059e+37
        %v3404 = vand.u32 %v2969, 2147483648
        %v3405 = vor.u32 1.1754944e-38, %v3404
        %v3406 = vsel %vm3403, %v3405, %v3401
        %v3407 = vmul.f32 1.0, %v3406
        %v3408 = vrcp.pop %v2970
        %v3409 = vmul.f32 %v2970, %v3408
        %v3410 = vsub.f32 1.0, %v3409
        %v3411 = vmul.f32 %v3408, %v3410
        %v3412 = vadd.f32 %v3408, %v3411
        %vm3413 = vweird.f32 %v2970
        %vm3414 = vweird.f32 %v3408
        %vm3415 = vmor %vm3413, %vm3414
        %v3416 = vsel %vm3415, %v3408, %v3412
        %v3417 = vand.u32 2147483647, %v2970
        %vm3418 = vcmp.eq.f32.partialorder %v3417, 8.507059e+37
        %v3419 = vand.u32 %v2970, 2147483648
        %v3420 = vor.u32 1.1754944e-38, %v3419
        %v3421 = vsel %vm3418, %v3420, %v3416
        %v3422 = vmul.f32 1.0, %v3421
        %v3423 = vrcp.pop %v2971
        %v3424 = vmul.f32 %v2971, %v3423
        %v3425 = vsub.f32 1.0, %v3424
        %v3426 = vmul.f32 %v3423, %v3425
        %v3427 = vadd.f32 %v3423, %v3426
        %vm3428 = vweird.f32 %v2971
        %vm3429 = vweird.f32 %v3423
        %vm3430 = vmor %vm3428, %vm3429
        %v3431 = vsel %vm3430, %v3423, %v3427
        %v3432 = vand.u32 2147483647, %v2971
        %vm3433 = vcmp.eq.f32.partialorder %v3432, 8.507059e+37
        %v3434 = vand.u32 %v2971, 2147483648
        %v3435 = vor.u32 1.1754944e-38, %v3434
        %v3436 = vsel %vm3433, %v3435, %v3431
        %v3437 = vmul.f32 1.0, %v3436
        %v3438 = vrcp.pop %v2972
        %v3439 = vmul.f32 %v2972, %v3438
        %v3440 = vsub.f32 1.0, %v3439
        %v3441 = vmul.f32 %v3438, %v3440
        %v3442 = vadd.f32 %v3438, %v3441
        %vm3443 = vweird.f32 %v2972
        %vm3444 = vweird.f32 %v3438
        %vm3445 = vmor %vm3443, %vm3444
        %v3446 = vsel %vm3445, %v3438, %v3442
        %v3447 = vand.u32 2147483647, %v2972
        %vm3448 = vcmp.eq.f32.partialorder %v3447, 8.507059e+37
        %v3449 = vand.u32 %v2972, 2147483648
        %v3450 = vor.u32 1.1754944e-38, %v3449
        %v3451 = vsel %vm3448, %v3450, %v3446
        %v3452 = vmul.f32 1.0, %v3451
        %v3453 = vmul.f32 %v2813, %v2987
        %v3454 = vmul.f32 %v2814, %v3002
        %v3455 = vmul.f32 %v2815, %v3017
        %v3456 = vmul.f32 %v2816, %v3032
        %v3457 = vmul.f32 %v2817, %v3047
        %v3458 = vmul.f32 %v2818, %v3062
        %v3459 = vmul.f32 %v2819, %v3077
        %v3460 = vmul.f32 %v2820, %v3092
        %v3461 = vmul.f32 %v2821, %v3107
        %v3462 = vmul.f32 %v2822, %v3122
        %v3463 = vmul.f32 %v2823, %v3137
        %v3464 = vmul.f32 %v2824, %v3152
        %v3465 = vmul.f32 %v2825, %v3167
        %v3466 = vmul.f32 %v2826, %v3182
        %v3467 = vmul.f32 %v2827, %v3197
        %v3468 = vmul.f32 %v2828, %v3212
        %v3469 = vmul.f32 %v2829, %v3227
        %v3470 = vmul.f32 %v2830, %v3242
        %v3471 = vmul.f32 %v2831, %v3257
        %v3472 = vmul.f32 %v2832, %v3272
        %v3473 = vmul.f32 %v2833, %v3287
        %v3474 = vmul.f32 %v2834, %v3302
        %v3475 = vmul.f32 %v2835, %v3317
        %v3476 = vmul.f32 %v2836, %v3332
        %v3477 = vmul.f32 %v2837, %v3347
        %v3478 = vmul.f32 %v2838, %v3362
        %v3479 = vmul.f32 %v2839, %v3377
        %v3480 = vmul.f32 %v2840, %v3392
        %v3481 = vmul.f32 %v2841, %v3407
        %v3482 = vmul.f32 %v2842, %v3422
        %v3483 = vmul.f32 %v2843, %v3437
        %v3484 = vmul.f32 %v2844, %v3452
        %3485 = vst.msk [vmem:[#allocation3] sm:$0xff] %vm913, 0.0
        %3486 = vst.msk [vmem:[#allocation3 + $0x8] sm:$0xff] %vm913, 0.0
        %vm3487 = vcmask 254976
        %3488 = vst.msk [vmem:[#allocation3 + $0x10] sm:$0x3] %vm3487, 0.0
        %s3489 = scalar_lea.vmem [#allocation3], 408
        %3490 = vst.msk [vmem:[%s3489] sm:$0xff] %vm913, 0.0
        %3491 = vst.msk [vmem:[%s3489 + $0x8] sm:$0xff] %vm913, 0.0
        %3492 = vst.msk [vmem:[%s3489 + $0x10] sm:$0x3] %vm3487, 0.0
        %vm3493 = vcmask 253952
        %3494 = vst.msk [vmem:[#allocation3] sm:$0x1] %vm3493, 0.0
        %3495 = vst.msk [vmem:[#allocation3 + $0x18] sm:$0x1] %vm3493, 0.0
        %3496 = vst.msk [vmem:[#allocation3 + $0x30] sm:$0x1] %vm3493, 0.0
        %3497 = vst.msk [vmem:[#allocation3 + $0x48] sm:$0x1] %vm3493, 0.0
        %3498 = vst.msk [vmem:[#allocation3 + $0x60] sm:$0x1] %vm3493, 0.0
        %3499 = vst.msk [vmem:[#allocation3 + $0x78] sm:$0x1] %vm3493, 0.0
        %3500 = vst.msk [vmem:[#allocation3 + $0x90] sm:$0x1] %vm3493, 0.0
        %3501 = vst.msk [vmem:[#allocation3 + $0xa8] sm:$0x1] %vm3493, 0.0
        %3502 = vst.msk [vmem:[#allocation3 + $0xc0] sm:$0x1] %vm3493, 0.0
        %3503 = vst.msk [vmem:[#allocation3 + $0xd8] sm:$0x1] %vm3493, 0.0
        %3504 = vst.msk [vmem:[#allocation3 + $0xf0] sm:$0x1] %vm3493, 0.0
        %3505 = vst.msk [vmem:[#allocation3 + $0x108] sm:$0x1] %vm3493, 0.0
        %3506 = vst.msk [vmem:[#allocation3 + $0x120] sm:$0x1] %vm3493, 0.0
        %3507 = vst.msk [vmem:[#allocation3 + $0x138] sm:$0x1] %vm3493, 0.0
        %3508 = vst.msk [vmem:[#allocation3 + $0x150] sm:$0x1] %vm3493, 0.0
        %3509 = vst.msk [vmem:[#allocation3 + $0x168] sm:$0x1] %vm3493, 0.0
        %3510 = vst.msk [vmem:[#allocation3 + $0x180] sm:$0x1] %vm3493, 0.0
        %3511 = vst.msk [vmem:[#allocation3 + $0x198] sm:$0x1] %vm3493, 0.0
        %3512 = vst.msk [vmem:[#allocation3 + $0x11] sm:$0x1] %vm3493, 0.0
        %3513 = vst.msk [vmem:[#allocation3 + $0x29] sm:$0x1] %vm3493, 0.0
        %3514 = vst.msk [vmem:[#allocation3 + $0x41] sm:$0x1] %vm3493, 0.0
        %3515 = vst.msk [vmem:[#allocation3 + $0x59] sm:$0x1] %vm3493, 0.0
        %3516 = vst.msk [vmem:[#allocation3 + $0x71] sm:$0x1] %vm3493, 0.0
        %3517 = vst.msk [vmem:[#allocation3 + $0x89] sm:$0x1] %vm3493, 0.0
        %3518 = vst.msk [vmem:[#allocation3 + $0xa1] sm:$0x1] %vm3493, 0.0
        %3519 = vst.msk [vmem:[#allocation3 + $0xb9] sm:$0x1] %vm3493, 0.0
        %3520 = vst.msk [vmem:[#allocation3 + $0xd1] sm:$0x1] %vm3493, 0.0
        %3521 = vst.msk [vmem:[#allocation3 + $0xe9] sm:$0x1] %vm3493, 0.0
        %3522 = vst.msk [vmem:[#allocation3 + $0x101] sm:$0x1] %vm3493, 0.0
        %3523 = vst.msk [vmem:[#allocation3 + $0x119] sm:$0x1] %vm3493, 0.0
        %3524 = vst.msk [vmem:[#allocation3 + $0x131] sm:$0x1] %vm3493, 0.0
        %3525 = vst.msk [vmem:[#allocation3 + $0x149] sm:$0x1] %vm3493, 0.0
        %3526 = vst.msk [vmem:[#allocation3 + $0x161] sm:$0x1] %vm3493, 0.0
        %3527 = vst.msk [vmem:[#allocation3 + $0x179] sm:$0x1] %vm3493, 0.0
        %3528 = vst.msk [vmem:[#allocation3 + $0x191] sm:$0x1] %vm3493, 0.0
        %3529 = vst.msk [vmem:[#allocation3 + $0x1a9] sm:$0x1] %vm3493, 0.0
        %s3530 = scalar_lea.vmem [#allocation3], 24
        %3531 = vst.msk [vmem:[%s3530 + $0x1] sm:$0xff] %vm913, %v3453
        %3532 = vst.msk [vmem:[%s3530 + $0x9] sm:$0xff] %vm913, %v3454
        %3533 = vst.msk [vmem:[%s3530 + $0x19] sm:$0xff] %vm913, %v3455
        %3534 = vst.msk [vmem:[%s3530 + $0x21] sm:$0xff] %vm913, %v3456
        %3535 = vst.msk [vmem:[%s3530 + $0x31] sm:$0xff] %vm913, %v3457
        %3536 = vst.msk [vmem:[%s3530 + $0x39] sm:$0xff] %vm913, %v3458
        %3537 = vst.msk [vmem:[%s3530 + $0x49] sm:$0xff] %vm913, %v3459
        %3538 = vst.msk [vmem:[%s3530 + $0x51] sm:$0xff] %vm913, %v3460
        %3539 = vst.msk [vmem:[%s3530 + $0x61] sm:$0xff] %vm913, %v3461
        %3540 = vst.msk [vmem:[%s3530 + $0x69] sm:$0xff] %vm913, %v3462
        %3541 = vst.msk [vmem:[%s3530 + $0x79] sm:$0xff] %vm913, %v3463
        %3542 = vst.msk [vmem:[%s3530 + $0x81] sm:$0xff] %vm913, %v3464
        %3543 = vst.msk [vmem:[%s3530 + $0x91] sm:$0xff] %vm913, %v3465
        %3544 = vst.msk [vmem:[%s3530 + $0x99] sm:$0xff] %vm913, %v3466
        %3545 = vst.msk [vmem:[%s3530 + $0xa9] sm:$0xff] %vm913, %v3467
        %3546 = vst.msk [vmem:[%s3530 + $0xb1] sm:$0xff] %vm913, %v3468
        %3547 = vst.msk [vmem:[%s3530 + $0xc1] sm:$0xff] %vm913, %v3469
        %3548 = vst.msk [vmem:[%s3530 + $0xc9] sm:$0xff] %vm913, %v3470
        %3549 = vst.msk [vmem:[%s3530 + $0xd9] sm:$0xff] %vm913, %v3471
        %3550 = vst.msk [vmem:[%s3530 + $0xe1] sm:$0xff] %vm913, %v3472
        %3551 = vst.msk [vmem:[%s3530 + $0xf1] sm:$0xff] %vm913, %v3473
        %3552 = vst.msk [vmem:[%s3530 + $0xf9] sm:$0xff] %vm913, %v3474
        %3553 = vst.msk [vmem:[%s3530 + $0x109] sm:$0xff] %vm913, %v3475
        %3554 = vst.msk [vmem:[%s3530 + $0x111] sm:$0xff] %vm913, %v3476
        %3555 = vst.msk [vmem:[%s3530 + $0x121] sm:$0xff] %vm913, %v3477
        %3556 = vst.msk [vmem:[%s3530 + $0x129] sm:$0xff] %vm913, %v3478
        %3557 = vst.msk [vmem:[%s3530 + $0x139] sm:$0xff] %vm913, %v3479
        %3558 = vst.msk [vmem:[%s3530 + $0x141] sm:$0xff] %vm913, %v3480
        %3559 = vst.msk [vmem:[%s3530 + $0x151] sm:$0xff] %vm913, %v3481
        %3560 = vst.msk [vmem:[%s3530 + $0x159] sm:$0xff] %vm913, %v3482
        %3561 = vst.msk [vmem:[%s3530 + $0x169] sm:$0xff] %vm913, %v3483
        %3562 = vst.msk [vmem:[%s3530 + $0x171] sm:$0xff] %vm913, %v3484
        %v3563 = vld [vmem:[%s6] sm:$0x1]
        %v3564 = vld [vmem:[#allocation3] sm:$0xff]
        %v3565 = vld [vmem:[#allocation3 + $0x8] sm:$0xff]
        %v3566 = vld [vmem:[#allocation3 + $0x18] sm:$0xff]
        %v3567 = vld [vmem:[#allocation3 + $0x20] sm:$0xff]
        %v3568 = vld [vmem:[#allocation3 + $0x30] sm:$0xff]
        %v3569 = vld [vmem:[#allocation3 + $0x38] sm:$0xff]
        %v3570 = vld [vmem:[#allocation3 + $0x48] sm:$0xff]
        %v3571 = vld [vmem:[#allocation3 + $0x50] sm:$0xff]
        %v3572 = vld [vmem:[#allocation3 + $0x60] sm:$0xff]
        %v3573 = vld [vmem:[#allocation3 + $0x68] sm:$0xff]
        %v3574 = vld [vmem:[#allocation3 + $0x78] sm:$0xff]
        %v3575 = vld [vmem:[#allocation3 + $0x80] sm:$0xff]
        %v3576 = vld [vmem:[#allocation3 + $0x90] sm:$0xff]
        %v3577 = vld [vmem:[#allocation3 + $0x98] sm:$0xff]
        %v3578 = vld [vmem:[#allocation3 + $0xa8] sm:$0xff]
        %v3579 = vld [vmem:[#allocation3 + $0xb0] sm:$0xff]
        %v3580 = vld [vmem:[#allocation3 + $0xc0] sm:$0xff]
        %v3581 = vld [vmem:[#allocation3 + $0xc8] sm:$0xff]
        %v3582 = vld [vmem:[#allocation3 + $0xd8] sm:$0xff]
        %v3583 = vld [vmem:[#allocation3 + $0xe0] sm:$0xff]
        %v3584 = vld [vmem:[#allocation3 + $0xf0] sm:$0xff]
        %v3585 = vld [vmem:[#allocation3 + $0xf8] sm:$0xff]
        %v3586 = vld [vmem:[#allocation3 + $0x108] sm:$0xff]
        %v3587 = vld [vmem:[#allocation3 + $0x110] sm:$0xff]
        %v3588 = vld [vmem:[#allocation3 + $0x120] sm:$0xff]
        %v3589 = vld [vmem:[#allocation3 + $0x128] sm:$0xff]
        %v3590 = vld [vmem:[#allocation3 + $0x138] sm:$0xff]
        %v3591 = vld [vmem:[#allocation3 + $0x140] sm:$0xff]
        %v3592 = vld [vmem:[#allocation3 + $0x150] sm:$0xff]
        %v3593 = vld [vmem:[#allocation3 + $0x158] sm:$0xff]
        %v3594 = vld [vmem:[#allocation3 + $0x168] sm:$0xff]
        %v3595 = vld [vmem:[#allocation3 + $0x170] sm:$0xff]
        %v3596 = vld [vmem:[#allocation3 + $0x1] sm:$0xff]
        %v3597 = vld [vmem:[#allocation3 + $0x9] sm:$0xff]
        %v3598 = vld [vmem:[#allocation3 + $0x19] sm:$0xff]
        %v3599 = vld [vmem:[#allocation3 + $0x21] sm:$0xff]
        %v3600 = vld [vmem:[#allocation3 + $0x31] sm:$0xff]
        %v3601 = vld [vmem:[#allocation3 + $0x39] sm:$0xff]
        %v3602 = vld [vmem:[#allocation3 + $0x49] sm:$0xff]
        %v3603 = vld [vmem:[#allocation3 + $0x51] sm:$0xff]
        %v3604 = vld [vmem:[#allocation3 + $0x61] sm:$0xff]
        %v3605 = vld [vmem:[#allocation3 + $0x69] sm:$0xff]
        %v3606 = vld [vmem:[#allocation3 + $0x79] sm:$0xff]
        %v3607 = vld [vmem:[#allocation3 + $0x81] sm:$0xff]
        %v3608 = vld [vmem:[#allocation3 + $0x91] sm:$0xff]
        %v3609 = vld [vmem:[#allocation3 + $0x99] sm:$0xff]
        %v3610 = vld [vmem:[#allocation3 + $0xa9] sm:$0xff]
        %v3611 = vld [vmem:[#allocation3 + $0xb1] sm:$0xff]
        %v3612 = vld [vmem:[#allocation3 + $0xc1] sm:$0xff]
        %v3613 = vld [vmem:[#allocation3 + $0xc9] sm:$0xff]
        %v3614 = vld [vmem:[#allocation3 + $0xd9] sm:$0xff]
        %v3615 = vld [vmem:[#allocation3 + $0xe1] sm:$0xff]
        %v3616 = vld [vmem:[#allocation3 + $0xf1] sm:$0xff]
        %v3617 = vld [vmem:[#allocation3 + $0xf9] sm:$0xff]
        %v3618 = vld [vmem:[#allocation3 + $0x109] sm:$0xff]
        %v3619 = vld [vmem:[#allocation3 + $0x111] sm:$0xff]
        %v3620 = vld [vmem:[#allocation3 + $0x121] sm:$0xff]
        %v3621 = vld [vmem:[#allocation3 + $0x129] sm:$0xff]
        %v3622 = vld [vmem:[#allocation3 + $0x139] sm:$0xff]
        %v3623 = vld [vmem:[#allocation3 + $0x141] sm:$0xff]
        %v3624 = vld [vmem:[#allocation3 + $0x151] sm:$0xff]
        %v3625 = vld [vmem:[#allocation3 + $0x159] sm:$0xff]
        %v3626 = vld [vmem:[#allocation3 + $0x169] sm:$0xff]
        %v3627 = vld [vmem:[#allocation3 + $0x171] sm:$0xff]
        %v3628 = vld [vmem:[#allocation3 + $0x2] sm:$0xff]
        %v3629 = vld [vmem:[#allocation3 + $0xa] sm:$0xff]
        %v3630 = vld [vmem:[#allocation3 + $0x1a] sm:$0xff]
        %v3631 = vld [vmem:[#allocation3 + $0x22] sm:$0xff]
        %v3632 = vld [vmem:[#allocation3 + $0x32] sm:$0xff]
        %v3633 = vld [vmem:[#allocation3 + $0x3a] sm:$0xff]
        %v3634 = vld [vmem:[#allocation3 + $0x4a] sm:$0xff]
        %v3635 = vld [vmem:[#allocation3 + $0x52] sm:$0xff]
        %v3636 = vld [vmem:[#allocation3 + $0x62] sm:$0xff]
        %v3637 = vld [vmem:[#allocation3 + $0x6a] sm:$0xff]
        %v3638 = vld [vmem:[#allocation3 + $0x7a] sm:$0xff]
        %v3639 = vld [vmem:[#allocation3 + $0x82] sm:$0xff]
        %v3640 = vld [vmem:[#allocation3 + $0x92] sm:$0xff]
        %v3641 = vld [vmem:[#allocation3 + $0x9a] sm:$0xff]
        %v3642 = vld [vmem:[#allocation3 + $0xaa] sm:$0xff]
        %v3643 = vld [vmem:[#allocation3 + $0xb2] sm:$0xff]
        %v3644 = vld [vmem:[#allocation3 + $0xc2] sm:$0xff]
        %v3645 = vld [vmem:[#allocation3 + $0xca] sm:$0xff]
        %v3646 = vld [vmem:[#allocation3 + $0xda] sm:$0xff]
        %v3647 = vld [vmem:[#allocation3 + $0xe2] sm:$0xff]
        %v3648 = vld [vmem:[#allocation3 + $0xf2] sm:$0xff]
        %v3649 = vld [vmem:[#allocation3 + $0xfa] sm:$0xff]
        %v3650 = vld [vmem:[#allocation3 + $0x10a] sm:$0xff]
        %v3651 = vld [vmem:[#allocation3 + $0x112] sm:$0xff]
        %v3652 = vld [vmem:[#allocation3 + $0x122] sm:$0xff]
        %v3653 = vld [vmem:[#allocation3 + $0x12a] sm:$0xff]
        %v3654 = vld [vmem:[#allocation3 + $0x13a] sm:$0xff]
        %v3655 = vld [vmem:[#allocation3 + $0x142] sm:$0xff]
        %v3656 = vld [vmem:[#allocation3 + $0x152] sm:$0xff]
        %v3657 = vld [vmem:[#allocation3 + $0x15a] sm:$0xff]
        %v3658 = vld [vmem:[#allocation3 + $0x16a] sm:$0xff]
        %v3659 = vld [vmem:[#allocation3 + $0x172] sm:$0xff]
        %3692 = vrot.lane.b32.xlu0 %v3596, 32
        %v3693 = vpop.permute.xlu0 %3692
        %3694 = vrot.lane.b32.xlu0 %v3597, 32
        %v3695 = vpop.permute.xlu0 %3694
        %3696 = vrot.lane.b32.xlu0 %v3598, 32
        %v3697 = vpop.permute.xlu0 %3696
        %3698 = vrot.lane.b32.xlu0 %v3599, 32
        %v3699 = vpop.permute.xlu0 %3698
        %3700 = vrot.lane.b32.xlu0 %v3600, 32
        %v3701 = vpop.permute.xlu0 %3700
        %3702 = vrot.lane.b32.xlu0 %v3601, 32
        %v3703 = vpop.permute.xlu0 %3702
        %3704 = vrot.lane.b32.xlu0 %v3602, 32
        %v3705 = vpop.permute.xlu0 %3704
        %3706 = vrot.lane.b32.xlu0 %v3603, 32
        %v3707 = vpop.permute.xlu0 %3706
        %3708 = vrot.lane.b32.xlu0 %v3604, 32
        %v3709 = vpop.permute.xlu0 %3708
        %3710 = vrot.lane.b32.xlu0 %v3605, 32
        %v3711 = vpop.permute.xlu0 %3710
        %3712 = vrot.lane.b32.xlu0 %v3606, 32
        %v3713 = vpop.permute.xlu0 %3712
        %3714 = vrot.lane.b32.xlu0 %v3607, 32
        %v3715 = vpop.permute.xlu0 %3714
        %3716 = vrot.lane.b32.xlu0 %v3608, 32
        %v3717 = vpop.permute.xlu0 %3716
        %3718 = vrot.lane.b32.xlu0 %v3609, 32
        %v3719 = vpop.permute.xlu0 %3718
        %3720 = vrot.lane.b32.xlu0 %v3610, 32
        %v3721 = vpop.permute.xlu0 %3720
        %3722 = vrot.lane.b32.xlu0 %v3611, 32
        %v3723 = vpop.permute.xlu0 %3722
        %3724 = vrot.lane.b32.xlu0 %v3612, 32
        %v3725 = vpop.permute.xlu0 %3724
        %3726 = vrot.lane.b32.xlu0 %v3613, 32
        %v3727 = vpop.permute.xlu0 %3726
        %3728 = vrot.lane.b32.xlu0 %v3614, 32
        %v3729 = vpop.permute.xlu0 %3728
        %3730 = vrot.lane.b32.xlu0 %v3615, 32
        %v3731 = vpop.permute.xlu0 %3730
        %3732 = vrot.lane.b32.xlu0 %v3616, 32
        %v3733 = vpop.permute.xlu0 %3732
        %3734 = vrot.lane.b32.xlu0 %v3617, 32
        %v3735 = vpop.permute.xlu0 %3734
        %3736 = vrot.lane.b32.xlu0 %v3618, 32
        %v3737 = vpop.permute.xlu0 %3736
        %3738 = vrot.lane.b32.xlu0 %v3619, 32
        %v3739 = vpop.permute.xlu0 %3738
        %3740 = vrot.lane.b32.xlu0 %v3620, 32
        %v3741 = vpop.permute.xlu0 %3740
        %3742 = vrot.lane.b32.xlu0 %v3621, 32
        %v3743 = vpop.permute.xlu0 %3742
        %3744 = vrot.lane.b32.xlu0 %v3622, 32
        %v3745 = vpop.permute.xlu0 %3744
        %3746 = vrot.lane.b32.xlu0 %v3623, 32
        %v3747 = vpop.permute.xlu0 %3746
        %3748 = vrot.lane.b32.xlu0 %v3624, 32
        %v3749 = vpop.permute.xlu0 %3748
        %3750 = vrot.lane.b32.xlu0 %v3625, 32
        %v3751 = vpop.permute.xlu0 %3750
        %3752 = vrot.lane.b32.xlu0 %v3626, 32
        %v3753 = vpop.permute.xlu0 %3752
        %3754 = vrot.lane.b32.xlu0 %v3627, 32
        %v3755 = vpop.permute.xlu0 %3754
        %3820 = vrot.lane.b32.xlu0 %v3628, 64
        %v3821 = vpop.permute.xlu0 %3820
        %3822 = vrot.lane.b32.xlu0 %v3629, 64
        %v3823 = vpop.permute.xlu0 %3822
        %3824 = vrot.lane.b32.xlu0 %v3630, 64
        %v3825 = vpop.permute.xlu0 %3824
        %3826 = vrot.lane.b32.xlu0 %v3631, 64
        %v3827 = vpop.permute.xlu0 %3826
        %3828 = vrot.lane.b32.xlu0 %v3632, 64
        %v3829 = vpop.permute.xlu0 %3828
        %3830 = vrot.lane.b32.xlu0 %v3633, 64
        %v3831 = vpop.permute.xlu0 %3830
        %3832 = vrot.lane.b32.xlu0 %v3634, 64
        %v3833 = vpop.permute.xlu0 %3832
        %3834 = vrot.lane.b32.xlu0 %v3635, 64
        %v3835 = vpop.permute.xlu0 %3834
        %3836 = vrot.lane.b32.xlu0 %v3636, 64
        %v3837 = vpop.permute.xlu0 %3836
        %3838 = vrot.lane.b32.xlu0 %v3637, 64
        %v3839 = vpop.permute.xlu0 %3838
        %3840 = vrot.lane.b32.xlu0 %v3638, 64
        %v3841 = vpop.permute.xlu0 %3840
        %3842 = vrot.lane.b32.xlu0 %v3639, 64
        %v3843 = vpop.permute.xlu0 %3842
        %3844 = vrot.lane.b32.xlu0 %v3640, 64
        %v3845 = vpop.permute.xlu0 %3844
        %3846 = vrot.lane.b32.xlu0 %v3641, 64
        %v3847 = vpop.permute.xlu0 %3846
        %3848 = vrot.lane.b32.xlu0 %v3642, 64
        %v3849 = vpop.permute.xlu0 %3848
        %3850 = vrot.lane.b32.xlu0 %v3643, 64
        %v3851 = vpop.permute.xlu0 %3850
        %3852 = vrot.lane.b32.xlu0 %v3644, 64
        %v3853 = vpop.permute.xlu0 %3852
        %3854 = vrot.lane.b32.xlu0 %v3645, 64
        %v3855 = vpop.permute.xlu0 %3854
        %3856 = vrot.lane.b32.xlu0 %v3646, 64
        %v3857 = vpop.permute.xlu0 %3856
        %3858 = vrot.lane.b32.xlu0 %v3647, 64
        %v3859 = vpop.permute.xlu0 %3858
        %3860 = vrot.lane.b32.xlu0 %v3648, 64
        %v3861 = vpop.permute.xlu0 %3860
        %3862 = vrot.lane.b32.xlu0 %v3649, 64
        %v3863 = vpop.permute.xlu0 %3862
        %3864 = vrot.lane.b32.xlu0 %v3650, 64
        %v3865 = vpop.permute.xlu0 %3864
        %3866 = vrot.lane.b32.xlu0 %v3651, 64
        %v3867 = vpop.permute.xlu0 %3866
        %3868 = vrot.lane.b32.xlu0 %v3652, 64
        %v3869 = vpop.permute.xlu0 %3868
        %3870 = vrot.lane.b32.xlu0 %v3653, 64
        %v3871 = vpop.permute.xlu0 %3870
        %3872 = vrot.lane.b32.xlu0 %v3654, 64
        %v3873 = vpop.permute.xlu0 %3872
        %3874 = vrot.lane.b32.xlu0 %v3655, 64
        %v3875 = vpop.permute.xlu0 %3874
        %3876 = vrot.lane.b32.xlu0 %v3656, 64
        %v3877 = vpop.permute.xlu0 %3876
        %3878 = vrot.lane.b32.xlu0 %v3657, 64
        %v3879 = vpop.permute.xlu0 %3878
        %3880 = vrot.lane.b32.xlu0 %v3658, 64
        %v3881 = vpop.permute.xlu0 %3880
        %3882 = vrot.lane.b32.xlu0 %v3659, 64
        %v3883 = vpop.permute.xlu0 %3882
        %v3916 = vsel %vm913, %v3564, %v3693
        %v3917 = vsel %vm913, %v3565, %v3695
        %v3918 = vsel %vm913, %v3566, %v3697
        %v3919 = vsel %vm913, %v3567, %v3699
        %v3920 = vsel %vm913, %v3568, %v3701
        %v3921 = vsel %vm913, %v3569, %v3703
        %v3922 = vsel %vm913, %v3570, %v3705
        %v3923 = vsel %vm913, %v3571, %v3707
        %v3924 = vsel %vm913, %v3572, %v3709
        %v3925 = vsel %vm913, %v3573, %v3711
        %v3926 = vsel %vm913, %v3574, %v3713
        %v3927 = vsel %vm913, %v3575, %v3715
        %v3928 = vsel %vm913, %v3576, %v3717
        %v3929 = vsel %vm913, %v3577, %v3719
        %v3930 = vsel %vm913, %v3578, %v3721
        %v3931 = vsel %vm913, %v3579, %v3723
        %v3932 = vsel %vm913, %v3580, %v3725
        %v3933 = vsel %vm913, %v3581, %v3727
        %v3934 = vsel %vm913, %v3582, %v3729
        %v3935 = vsel %vm913, %v3583, %v3731
        %v3936 = vsel %vm913, %v3584, %v3733
        %v3937 = vsel %vm913, %v3585, %v3735
        %v3938 = vsel %vm913, %v3586, %v3737
        %v3939 = vsel %vm913, %v3587, %v3739
        %v3940 = vsel %vm913, %v3588, %v3741
        %v3941 = vsel %vm913, %v3589, %v3743
        %v3942 = vsel %vm913, %v3590, %v3745
        %v3943 = vsel %vm913, %v3591, %v3747
        %v3944 = vsel %vm913, %v3592, %v3749
        %v3945 = vsel %vm913, %v3593, %v3751
        %v3946 = vsel %vm913, %v3594, %v3753
        %v3947 = vsel %vm913, %v3595, %v3755
        %vm3948 = vcmask 523264
        %v3949 = vsel %vm3948, %v3916, %v3821
        %v3950 = vsel %vm3948, %v3917, %v3823
        %v3951 = vsel %vm3948, %v3918, %v3825
        %v3952 = vsel %vm3948, %v3919, %v3827
        %v3953 = vsel %vm3948, %v3920, %v3829
        %v3954 = vsel %vm3948, %v3921, %v3831
        %v3955 = vsel %vm3948, %v3922, %v3833
        %v3956 = vsel %vm3948, %v3923, %v3835
        %v3957 = vsel %vm3948, %v3924, %v3837
        %v3958 = vsel %vm3948, %v3925, %v3839
        %v3959 = vsel %vm3948, %v3926, %v3841
        %v3960 = vsel %vm3948, %v3927, %v3843
        %v3961 = vsel %vm3948, %v3928, %v3845
        %v3962 = vsel %vm3948, %v3929, %v3847
        %v3963 = vsel %vm3948, %v3930, %v3849
        %v3964 = vsel %vm3948, %v3931, %v3851
        %v3965 = vsel %vm3948, %v3932, %v3853
        %v3966 = vsel %vm3948, %v3933, %v3855
        %v3967 = vsel %vm3948, %v3934, %v3857
        %v3968 = vsel %vm3948, %v3935, %v3859
        %v3969 = vsel %vm3948, %v3936, %v3861
        %v3970 = vsel %vm3948, %v3937, %v3863
        %v3971 = vsel %vm3948, %v3938, %v3865
        %v3972 = vsel %vm3948, %v3939, %v3867
        %v3973 = vsel %vm3948, %v3940, %v3869
        %v3974 = vsel %vm3948, %v3941, %v3871
        %v3975 = vsel %vm3948, %v3942, %v3873
        %v3976 = vsel %vm3948, %v3943, %v3875
        %v3977 = vsel %vm3948, %v3944, %v3877
        %v3978 = vsel %vm3948, %v3945, %v3879
        %v3979 = vsel %vm3948, %v3946, %v3881
        %v3980 = vsel %vm3948, %v3947, %v3883
        %v3981 = vld [vmem:[%s5] sm:$0xff]
        %v3982 = vld [vmem:[%s5 + $0x8] sm:$0xff]
        %v3983 = vld [vmem:[%s5 + $0x10] sm:$0xff]
        %v3984 = vld [vmem:[%s5 + $0x18] sm:$0xff]
        %v3985 = vld [vmem:[%s5 + $0x20] sm:$0xff]
        %v3986 = vld [vmem:[%s5 + $0x28] sm:$0xff]
        %v3987 = vld [vmem:[%s5 + $0x30] sm:$0xff]
        %v3988 = vld [vmem:[%s5 + $0x38] sm:$0xff]
        %v3989 = vld [vmem:[%s5 + $0x40] sm:$0xff]
        %v3990 = vld [vmem:[%s5 + $0x48] sm:$0xff]
        %v3991 = vld [vmem:[%s5 + $0x50] sm:$0xff]
        %v3992 = vld [vmem:[%s5 + $0x58] sm:$0xff]
        %v3993 = vld [vmem:[%s3530] sm:$0xff]
        %v3994 = vld [vmem:[%s3530 + $0x8] sm:$0xff]
        %v3995 = vld [vmem:[%s3530 + $0x18] sm:$0xff]
        %v3996 = vld [vmem:[%s3530 + $0x20] sm:$0xff]
        %v3997 = vld [vmem:[%s3530 + $0x30] sm:$0xff]
        %v3998 = vld [vmem:[%s3530 + $0x38] sm:$0xff]
        %v3999 = vld [vmem:[%s3530 + $0x48] sm:$0xff]
        %v4000 = vld [vmem:[%s3530 + $0x50] sm:$0xff]
        %v4001 = vld [vmem:[%s3530 + $0x60] sm:$0xff]
        %v4002 = vld [vmem:[%s3530 + $0x68] sm:$0xff]
        %v4003 = vld [vmem:[%s3530 + $0x78] sm:$0xff]
        %v4004 = vld [vmem:[%s3530 + $0x80] sm:$0xff]
        %v4005 = vld [vmem:[%s3530 + $0x90] sm:$0xff]
        %v4006 = vld [vmem:[%s3530 + $0x98] sm:$0xff]
        %v4007 = vld [vmem:[%s3530 + $0xa8] sm:$0xff]
        %v4008 = vld [vmem:[%s3530 + $0xb0] sm:$0xff]
        %v4009 = vld [vmem:[%s3530 + $0xc0] sm:$0xff]
        %v4010 = vld [vmem:[%s3530 + $0xc8] sm:$0xff]
        %v4011 = vld [vmem:[%s3530 + $0xd8] sm:$0xff]
        %v4012 = vld [vmem:[%s3530 + $0xe0] sm:$0xff]
        %v4013 = vld [vmem:[%s3530 + $0xf0] sm:$0xff]
        %v4014 = vld [vmem:[%s3530 + $0xf8] sm:$0xff]
        %v4015 = vld [vmem:[%s3530 + $0x108] sm:$0xff]
        %v4016 = vld [vmem:[%s3530 + $0x110] sm:$0xff]
        %v4017 = vld [vmem:[%s3530 + $0x120] sm:$0xff]
        %v4018 = vld [vmem:[%s3530 + $0x128] sm:$0xff]
        %v4019 = vld [vmem:[%s3530 + $0x138] sm:$0xff]
        %v4020 = vld [vmem:[%s3530 + $0x140] sm:$0xff]
        %v4021 = vld [vmem:[%s3530 + $0x150] sm:$0xff]
        %v4022 = vld [vmem:[%s3530 + $0x158] sm:$0xff]
        %v4023 = vld [vmem:[%s3530 + $0x168] sm:$0xff]
        %v4024 = vld [vmem:[%s3530 + $0x170] sm:$0xff]
        %v4025 = vld [vmem:[%s3530 + $0x1] sm:$0xff]
        %v4026 = vld [vmem:[%s3530 + $0x9] sm:$0xff]
        %v4027 = vld [vmem:[%s3530 + $0x19] sm:$0xff]
        %v4028 = vld [vmem:[%s3530 + $0x21] sm:$0xff]
        %v4029 = vld [vmem:[%s3530 + $0x31] sm:$0xff]
        %v4030 = vld [vmem:[%s3530 + $0x39] sm:$0xff]
        %v4031 = vld [vmem:[%s3530 + $0x49] sm:$0xff]
        %v4032 = vld [vmem:[%s3530 + $0x51] sm:$0xff]
        %v4033 = vld [vmem:[%s3530 + $0x61] sm:$0xff]
        %v4034 = vld [vmem:[%s3530 + $0x69] sm:$0xff]
        %v4035 = vld [vmem:[%s3530 + $0x79] sm:$0xff]
        %v4036 = vld [vmem:[%s3530 + $0x81] sm:$0xff]
        %v4037 = vld [vmem:[%s3530 + $0x91] sm:$0xff]
        %v4038 = vld [vmem:[%s3530 + $0x99] sm:$0xff]
        %v4039 = vld [vmem:[%s3530 + $0xa9] sm:$0xff]
        %v4040 = vld [vmem:[%s3530 + $0xb1] sm:$0xff]
        %v4041 = vld [vmem:[%s3530 + $0xc1] sm:$0xff]
        %v4042 = vld [vmem:[%s3530 + $0xc9] sm:$0xff]
        %v4043 = vld [vmem:[%s3530 + $0xd9] sm:$0xff]
        %v4044 = vld [vmem:[%s3530 + $0xe1] sm:$0xff]
        %v4045 = vld [vmem:[%s3530 + $0xf1] sm:$0xff]
        %v4046 = vld [vmem:[%s3530 + $0xf9] sm:$0xff]
        %v4047 = vld [vmem:[%s3530 + $0x109] sm:$0xff]
        %v4048 = vld [vmem:[%s3530 + $0x111] sm:$0xff]
        %v4049 = vld [vmem:[%s3530 + $0x121] sm:$0xff]
        %v4050 = vld [vmem:[%s3530 + $0x129] sm:$0xff]
        %v4051 = vld [vmem:[%s3530 + $0x139] sm:$0xff]
        %v4052 = vld [vmem:[%s3530 + $0x141] sm:$0xff]
        %v4053 = vld [vmem:[%s3530 + $0x151] sm:$0xff]
        %v4054 = vld [vmem:[%s3530 + $0x159] sm:$0xff]
        %v4055 = vld [vmem:[%s3530 + $0x169] sm:$0xff]
        %v4056 = vld [vmem:[%s3530 + $0x171] sm:$0xff]
        %v4057 = vld [vmem:[%s3530 + $0x2] sm:$0xff]
        %v4058 = vld [vmem:[%s3530 + $0xa] sm:$0xff]
        %v4059 = vld [vmem:[%s3530 + $0x1a] sm:$0xff]
        %v4060 = vld [vmem:[%s3530 + $0x22] sm:$0xff]
        %v4061 = vld [vmem:[%s3530 + $0x32] sm:$0xff]
        %v4062 = vld [vmem:[%s3530 + $0x3a] sm:$0xff]
        %v4063 = vld [vmem:[%s3530 + $0x4a] sm:$0xff]
        %v4064 = vld [vmem:[%s3530 + $0x52] sm:$0xff]
        %v4065 = vld [vmem:[%s3530 + $0x62] sm:$0xff]
        %v4066 = vld [vmem:[%s3530 + $0x6a] sm:$0xff]
        %v4067 = vld [vmem:[%s3530 + $0x7a] sm:$0xff]
        %v4068 = vld [vmem:[%s3530 + $0x82] sm:$0xff]
        %v4069 = vld [vmem:[%s3530 + $0x92] sm:$0xff]
        %v4070 = vld [vmem:[%s3530 + $0x9a] sm:$0xff]
        %v4071 = vld [vmem:[%s3530 + $0xaa] sm:$0xff]
        %v4072 = vld [vmem:[%s3530 + $0xb2] sm:$0xff]
        %v4073 = vld [vmem:[%s3530 + $0xc2] sm:$0xff]
        %v4074 = vld [vmem:[%s3530 + $0xca] sm:$0xff]
        %v4075 = vld [vmem:[%s3530 + $0xda] sm:$0xff]
        %v4076 = vld [vmem:[%s3530 + $0xe2] sm:$0xff]
        %v4077 = vld [vmem:[%s3530 + $0xf2] sm:$0xff]
        %v4078 = vld [vmem:[%s3530 + $0xfa] sm:$0xff]
        %v4079 = vld [vmem:[%s3530 + $0x10a] sm:$0xff]
        %v4080 = vld [vmem:[%s3530 + $0x112] sm:$0xff]
        %v4081 = vld [vmem:[%s3530 + $0x122] sm:$0xff]
        %v4082 = vld [vmem:[%s3530 + $0x12a] sm:$0xff]
        %v4083 = vld [vmem:[%s3530 + $0x13a] sm:$0xff]
        %v4084 = vld [vmem:[%s3530 + $0x142] sm:$0xff]
        %v4085 = vld [vmem:[%s3530 + $0x152] sm:$0xff]
        %v4086 = vld [vmem:[%s3530 + $0x15a] sm:$0xff]
        %v4087 = vld [vmem:[%s3530 + $0x16a] sm:$0xff]
        %v4088 = vld [vmem:[%s3530 + $0x172] sm:$0xff]
        %4121 = vrot.lane.b32.xlu0 %v4025, 32
        %v4122 = vpop.permute.xlu0 %4121
        %4123 = vrot.lane.b32.xlu0 %v4026, 32
        %v4124 = vpop.permute.xlu0 %4123
        %4125 = vrot.lane.b32.xlu0 %v4027, 32
        %v4126 = vpop.permute.xlu0 %4125
        %4127 = vrot.lane.b32.xlu0 %v4028, 32
        %v4128 = vpop.permute.xlu0 %4127
        %4129 = vrot.lane.b32.xlu0 %v4029, 32
        %v4130 = vpop.permute.xlu0 %4129
        %4131 = vrot.lane.b32.xlu0 %v4030, 32
        %v4132 = vpop.permute.xlu0 %4131
        %4133 = vrot.lane.b32.xlu0 %v4031, 32
        %v4134 = vpop.permute.xlu0 %4133
        %4135 = vrot.lane.b32.xlu0 %v4032, 32
        %v4136 = vpop.permute.xlu0 %4135
        %4137 = vrot.lane.b32.xlu0 %v4033, 32
        %v4138 = vpop.permute.xlu0 %4137
        %4139 = vrot.lane.b32.xlu0 %v4034, 32
        %v4140 = vpop.permute.xlu0 %4139
        %4141 = vrot.lane.b32.xlu0 %v4035, 32
        %v4142 = vpop.permute.xlu0 %4141
        %4143 = vrot.lane.b32.xlu0 %v4036, 32
        %v4144 = vpop.permute.xlu0 %4143
        %4145 = vrot.lane.b32.xlu0 %v4037, 32
        %v4146 = vpop.permute.xlu0 %4145
        %4147 = vrot.lane.b32.xlu0 %v4038, 32
        %v4148 = vpop.permute.xlu0 %4147
        %4149 = vrot.lane.b32.xlu0 %v4039, 32
        %v4150 = vpop.permute.xlu0 %4149
        %4151 = vrot.lane.b32.xlu0 %v4040, 32
        %v4152 = vpop.permute.xlu0 %4151
        %4153 = vrot.lane.b32.xlu0 %v4041, 32
        %v4154 = vpop.permute.xlu0 %4153
        %4155 = vrot.lane.b32.xlu0 %v4042, 32
        %v4156 = vpop.permute.xlu0 %4155
        %4157 = vrot.lane.b32.xlu0 %v4043, 32
        %v4158 = vpop.permute.xlu0 %4157
        %4159 = vrot.lane.b32.xlu0 %v4044, 32
        %v4160 = vpop.permute.xlu0 %4159
        %4161 = vrot.lane.b32.xlu0 %v4045, 32
        %v4162 = vpop.permute.xlu0 %4161
        %4163 = vrot.lane.b32.xlu0 %v4046, 32
        %v4164 = vpop.permute.xlu0 %4163
        %4165 = vrot.lane.b32.xlu0 %v4047, 32
        %v4166 = vpop.permute.xlu0 %4165
        %4167 = vrot.lane.b32.xlu0 %v4048, 32
        %v4168 = vpop.permute.xlu0 %4167
        %4169 = vrot.lane.b32.xlu0 %v4049, 32
        %v4170 = vpop.permute.xlu0 %4169
        %4171 = vrot.lane.b32.xlu0 %v4050, 32
        %v4172 = vpop.permute.xlu0 %4171
        %4173 = vrot.lane.b32.xlu0 %v4051, 32
        %v4174 = vpop.permute.xlu0 %4173
        %4175 = vrot.lane.b32.xlu0 %v4052, 32
        %v4176 = vpop.permute.xlu0 %4175
        %4177 = vrot.lane.b32.xlu0 %v4053, 32
        %v4178 = vpop.permute.xlu0 %4177
        %4179 = vrot.lane.b32.xlu0 %v4054, 32
        %v4180 = vpop.permute.xlu0 %4179
        %4181 = vrot.lane.b32.xlu0 %v4055, 32
        %v4182 = vpop.permute.xlu0 %4181
        %4183 = vrot.lane.b32.xlu0 %v4056, 32
        %v4184 = vpop.permute.xlu0 %4183
        %4249 = vrot.lane.b32.xlu0 %v4057, 64
        %v4250 = vpop.permute.xlu0 %4249
        %4251 = vrot.lane.b32.xlu0 %v4058, 64
        %v4252 = vpop.permute.xlu0 %4251
        %4253 = vrot.lane.b32.xlu0 %v4059, 64
        %v4254 = vpop.permute.xlu0 %4253
        %4255 = vrot.lane.b32.xlu0 %v4060, 64
        %v4256 = vpop.permute.xlu0 %4255
        %4257 = vrot.lane.b32.xlu0 %v4061, 64
        %v4258 = vpop.permute.xlu0 %4257
        %4259 = vrot.lane.b32.xlu0 %v4062, 64
        %v4260 = vpop.permute.xlu0 %4259
        %4261 = vrot.lane.b32.xlu0 %v4063, 64
        %v4262 = vpop.permute.xlu0 %4261
        %4263 = vrot.lane.b32.xlu0 %v4064, 64
        %v4264 = vpop.permute.xlu0 %4263
        %4265 = vrot.lane.b32.xlu0 %v4065, 64
        %v4266 = vpop.permute.xlu0 %4265
        %4267 = vrot.lane.b32.xlu0 %v4066, 64
        %v4268 = vpop.permute.xlu0 %4267
        %4269 = vrot.lane.b32.xlu0 %v4067, 64
        %v4270 = vpop.permute.xlu0 %4269
        %4271 = vrot.lane.b32.xlu0 %v4068, 64
        %v4272 = vpop.permute.xlu0 %4271
        %4273 = vrot.lane.b32.xlu0 %v4069, 64
        %v4274 = vpop.permute.xlu0 %4273
        %4275 = vrot.lane.b32.xlu0 %v4070, 64
        %v4276 = vpop.permute.xlu0 %4275
        %4277 = vrot.lane.b32.xlu0 %v4071, 64
        %v4278 = vpop.permute.xlu0 %4277
        %4279 = vrot.lane.b32.xlu0 %v4072, 64
        %v4280 = vpop.permute.xlu0 %4279
        %4281 = vrot.lane.b32.xlu0 %v4073, 64
        %v4282 = vpop.permute.xlu0 %4281
        %4283 = vrot.lane.b32.xlu0 %v4074, 64
        %v4284 = vpop.permute.xlu0 %4283
        %4285 = vrot.lane.b32.xlu0 %v4075, 64
        %v4286 = vpop.permute.xlu0 %4285
        %4287 = vrot.lane.b32.xlu0 %v4076, 64
        %v4288 = vpop.permute.xlu0 %4287
        %4289 = vrot.lane.b32.xlu0 %v4077, 64
        %v4290 = vpop.permute.xlu0 %4289
        %4291 = vrot.lane.b32.xlu0 %v4078, 64
        %v4292 = vpop.permute.xlu0 %4291
        %4293 = vrot.lane.b32.xlu0 %v4079, 64
        %v4294 = vpop.permute.xlu0 %4293
        %4295 = vrot.lane.b32.xlu0 %v4080, 64
        %v4296 = vpop.permute.xlu0 %4295
        %4297 = vrot.lane.b32.xlu0 %v4081, 64
        %v4298 = vpop.permute.xlu0 %4297
        %4299 = vrot.lane.b32.xlu0 %v4082, 64
        %v4300 = vpop.permute.xlu0 %4299
        %4301 = vrot.lane.b32.xlu0 %v4083, 64
        %v4302 = vpop.permute.xlu0 %4301
        %4303 = vrot.lane.b32.xlu0 %v4084, 64
        %v4304 = vpop.permute.xlu0 %4303
        %4305 = vrot.lane.b32.xlu0 %v4085, 64
        %v4306 = vpop.permute.xlu0 %4305
        %4307 = vrot.lane.b32.xlu0 %v4086, 64
        %v4308 = vpop.permute.xlu0 %4307
        %4309 = vrot.lane.b32.xlu0 %v4087, 64
        %v4310 = vpop.permute.xlu0 %4309
        %4311 = vrot.lane.b32.xlu0 %v4088, 64
        %v4312 = vpop.permute.xlu0 %4311
        %v4345 = vsel %vm913, %v3993, %v4122
        %v4346 = vsel %vm913, %v3994, %v4124
        %v4347 = vsel %vm913, %v3995, %v4126
        %v4348 = vsel %vm913, %v3996, %v4128
        %v4349 = vsel %vm913, %v3997, %v4130
        %v4350 = vsel %vm913, %v3998, %v4132
        %v4351 = vsel %vm913, %v3999, %v4134
        %v4352 = vsel %vm913, %v4000, %v4136
        %v4353 = vsel %vm913, %v4001, %v4138
        %v4354 = vsel %vm913, %v4002, %v4140
        %v4355 = vsel %vm913, %v4003, %v4142
        %v4356 = vsel %vm913, %v4004, %v4144
        %v4357 = vsel %vm913, %v4005, %v4146
        %v4358 = vsel %vm913, %v4006, %v4148
        %v4359 = vsel %vm913, %v4007, %v4150
        %v4360 = vsel %vm913, %v4008, %v4152
        %v4361 = vsel %vm913, %v4009, %v4154
        %v4362 = vsel %vm913, %v4010, %v4156
        %v4363 = vsel %vm913, %v4011, %v4158
        %v4364 = vsel %vm913, %v4012, %v4160
        %v4365 = vsel %vm913, %v4013, %v4162
        %v4366 = vsel %vm913, %v4014, %v4164
        %v4367 = vsel %vm913, %v4015, %v4166
        %v4368 = vsel %vm913, %v4016, %v4168
        %v4369 = vsel %vm913, %v4017, %v4170
        %v4370 = vsel %vm913, %v4018, %v4172
        %v4371 = vsel %vm913, %v4019, %v4174
        %v4372 = vsel %vm913, %v4020, %v4176
        %v4373 = vsel %vm913, %v4021, %v4178
        %v4374 = vsel %vm913, %v4022, %v4180
        %v4375 = vsel %vm913, %v4023, %v4182
        %v4376 = vsel %vm913, %v4024, %v4184
        %v4377 = vsel %vm3948, %v4345, %v4250
        %v4378 = vsel %vm3948, %v4346, %v4252
        %v4379 = vsel %vm3948, %v4347, %v4254
        %v4380 = vsel %vm3948, %v4348, %v4256
        %v4381 = vsel %vm3948, %v4349, %v4258
        %v4382 = vsel %vm3948, %v4350, %v4260
        %v4383 = vsel %vm3948, %v4351, %v4262
        %v4384 = vsel %vm3948, %v4352, %v4264
        %v4385 = vsel %vm3948, %v4353, %v4266
        %v4386 = vsel %vm3948, %v4354, %v4268
        %v4387 = vsel %vm3948, %v4355, %v4270
        %v4388 = vsel %vm3948, %v4356, %v4272
        %v4389 = vsel %vm3948, %v4357, %v4274
        %v4390 = vsel %vm3948, %v4358, %v4276
        %v4391 = vsel %vm3948, %v4359, %v4278
        %v4392 = vsel %vm3948, %v4360, %v4280
        %v4393 = vsel %vm3948, %v4361, %v4282
        %v4394 = vsel %vm3948, %v4362, %v4284
        %v4395 = vsel %vm3948, %v4363, %v4286
        %v4396 = vsel %vm3948, %v4364, %v4288
        %v4397 = vsel %vm3948, %v4365, %v4290
        %v4398 = vsel %vm3948, %v4366, %v4292
        %v4399 = vsel %vm3948, %v4367, %v4294
        %v4400 = vsel %vm3948, %v4368, %v4296
        %v4401 = vsel %vm3948, %v4369, %v4298
        %v4402 = vsel %vm3948, %v4370, %v4300
        %v4403 = vsel %vm3948, %v4371, %v4302
        %v4404 = vsel %vm3948, %v4372, %v4304
        %v4405 = vsel %vm3948, %v4373, %v4306
        %v4406 = vsel %vm3948, %v4374, %v4308
        %v4407 = vsel %vm3948, %v4375, %v4310
        %v4408 = vsel %vm3948, %v4376, %v4312
        %s4409 = scalar_lea.vmem %s5, 96
        %v4410 = vld [vmem:[%s4409] sm:$0xff]
        %v4411 = vld [vmem:[%s4409 + $0x8] sm:$0xff]
        %v4412 = vld [vmem:[%s4409 + $0x10] sm:$0xff]
        %v4413 = vld [vmem:[%s4409 + $0x18] sm:$0xff]
        %v4414 = vld [vmem:[%s4409 + $0x20] sm:$0xff]
        %v4415 = vld [vmem:[%s4409 + $0x28] sm:$0xff]
        %v4416 = vld [vmem:[%s4409 + $0x30] sm:$0xff]
        %v4417 = vld [vmem:[%s4409 + $0x38] sm:$0xff]
        %v4418 = vld [vmem:[%s4409 + $0x40] sm:$0xff]
        %v4419 = vld [vmem:[%s4409 + $0x48] sm:$0xff]
        %v4420 = vld [vmem:[%s4409 + $0x50] sm:$0xff]
        %v4421 = vld [vmem:[%s4409 + $0x58] sm:$0xff]
        %vm4422 = vcmask 785408
        %v4424 = vsel %vm4422, %v4377, 0
        %v4427 = vsel %vm4422, %v4378, 0
        %v4430 = vsel %vm4422, %v4379, 0
        %v4433 = vsel %vm4422, %v4380, 0
        %v4436 = vsel %vm4422, %v4381, 0
        %v4439 = vsel %vm4422, %v4382, 0
        %v4442 = vsel %vm4422, %v4383, 0
        %v4445 = vsel %vm4422, %v4384, 0
        %v4448 = vsel %vm4422, %v4385, 0
        %v4451 = vsel %vm4422, %v4386, 0
        %v4454 = vsel %vm4422, %v4387, 0
        %v4457 = vsel %vm4422, %v4388, 0
        %v4460 = vsel %vm4422, %v4389, 0
        %v4463 = vsel %vm4422, %v4390, 0
        %v4466 = vsel %vm4422, %v4391, 0
        %v4469 = vsel %vm4422, %v4392, 0
        %v4472 = vsel %vm4422, %v4393, 0
        %v4475 = vsel %vm4422, %v4394, 0
        %v4478 = vsel %vm4422, %v4395, 0
        %v4481 = vsel %vm4422, %v4396, 0
        %v4484 = vsel %vm4422, %v4397, 0
        %v4487 = vsel %vm4422, %v4398, 0
        %v4490 = vsel %vm4422, %v4399, 0
        %v4493 = vsel %vm4422, %v4400, 0
        %v4496 = vsel %vm4422, %v4401, 0
        %v4499 = vsel %vm4422, %v4402, 0
        %v4502 = vsel %vm4422, %v4403, 0
        %v4505 = vsel %vm4422, %v4404, 0
        %v4508 = vsel %vm4422, %v4405, 0
        %v4511 = vsel %vm4422, %v4406, 0
        %v4514 = vsel %vm4422, %v4407, 0
        %v4517 = vsel %vm4422, %v4408, 0
        %4519 = vmatpush.msra.mxu0 0.0
        %4520 = vmatpush.msra.mxu0 0.0
        %4521 = vmatpush.msra.mxu0 0.0
        %4522 = vmatpush.msra.mxu0 0.0
        %4523 = vmatpush.msra.mxu0 %v4421
        %4524 = vmatpush.msra.mxu0 %v4420
        %4525 = vmatpush.msra.mxu0 %v4419
        %4526 = vmatpush.msra.mxu0 %v4418
        %4527 = vmatpush.msra.mxu0 %v4417
        %4528 = vmatpush.msra.mxu0 %v4416
        %4529 = vmatpush.msra.mxu0 %v4415
        %4530 = vmatpush.msra.mxu0 %v4414
        %4531 = vmatpush.msra.mxu0 %v4413
        %4532 = vmatpush.msra.mxu0 %v4412
        %4533 = vmatpush.msra.mxu0 %v4411
        %4534 = vmatpush.msra.mxu0 %v4410
        %4535 = vmatmul.f32.gmra.mxu0 %v4424
        %v4536 = vpop.f32.mrf.mxu0
        %v4537 = vadd.f32 0.0, %v4536
        %4538 = vmatmul.f32.gmra.mxu0 %v4427
        %v4539 = vpop.f32.mrf.mxu0
        %v4540 = vadd.f32 0.0, %v4539
        %4541 = vmatmul.f32.gmra.mxu0 %v4430
        %v4542 = vpop.f32.mrf.mxu0
        %v4543 = vadd.f32 0.0, %v4542
        %4544 = vmatmul.f32.gmra.mxu0 %v4433
        %v4545 = vpop.f32.mrf.mxu0
        %v4546 = vadd.f32 0.0, %v4545
        %4547 = vmatmul.f32.gmra.mxu0 %v4436
        %v4548 = vpop.f32.mrf.mxu0
        %v4549 = vadd.f32 0.0, %v4548
        %4550 = vmatmul.f32.gmra.mxu0 %v4439
        %v4551 = vpop.f32.mrf.mxu0
        %v4552 = vadd.f32 0.0, %v4551
        %4553 = vmatmul.f32.gmra.mxu0 %v4442
        %v4554 = vpop.f32.mrf.mxu0
        %v4555 = vadd.f32 0.0, %v4554
        %4556 = vmatmul.f32.gmra.mxu0 %v4445
        %v4557 = vpop.f32.mrf.mxu0
        %v4558 = vadd.f32 0.0, %v4557
        %4559 = vmatmul.f32.gmra.mxu0 %v4448
        %v4560 = vpop.f32.mrf.mxu0
        %v4561 = vadd.f32 0.0, %v4560
        %4562 = vmatmul.f32.gmra.mxu0 %v4451
        %v4563 = vpop.f32.mrf.mxu0
        %v4564 = vadd.f32 0.0, %v4563
        %4565 = vmatmul.f32.gmra.mxu0 %v4454
        %v4566 = vpop.f32.mrf.mxu0
        %v4567 = vadd.f32 0.0, %v4566
        %4568 = vmatmul.f32.gmra.mxu0 %v4457
        %v4569 = vpop.f32.mrf.mxu0
        %v4570 = vadd.f32 0.0, %v4569
        %4571 = vmatmul.f32.gmra.mxu0 %v4460
        %v4572 = vpop.f32.mrf.mxu0
        %v4573 = vadd.f32 0.0, %v4572
        %4574 = vmatmul.f32.gmra.mxu0 %v4463
        %v4575 = vpop.f32.mrf.mxu0
        %v4576 = vadd.f32 0.0, %v4575
        %4577 = vmatmul.f32.gmra.mxu0 %v4466
        %v4578 = vpop.f32.mrf.mxu0
        %v4579 = vadd.f32 0.0, %v4578
        %4580 = vmatmul.f32.gmra.mxu0 %v4469
        %v4581 = vpop.f32.mrf.mxu0
        %v4582 = vadd.f32 0.0, %v4581
        %4583 = vmatmul.f32.gmra.mxu0 %v4472
        %v4584 = vpop.f32.mrf.mxu0
        %v4585 = vadd.f32 0.0, %v4584
        %4586 = vmatmul.f32.gmra.mxu0 %v4475
        %v4587 = vpop.f32.mrf.mxu0
        %v4588 = vadd.f32 0.0, %v4587
        %4589 = vmatmul.f32.gmra.mxu0 %v4478
        %v4590 = vpop.f32.mrf.mxu0
        %v4591 = vadd.f32 0.0, %v4590
        %4592 = vmatmul.f32.gmra.mxu0 %v4481
        %v4593 = vpop.f32.mrf.mxu0
        %v4594 = vadd.f32 0.0, %v4593
        %4595 = vmatmul.f32.gmra.mxu0 %v4484
        %v4596 = vpop.f32.mrf.mxu0
        %v4597 = vadd.f32 0.0, %v4596
        %4598 = vmatmul.f32.gmra.mxu0 %v4487
        %v4599 = vpop.f32.mrf.mxu0
        %v4600 = vadd.f32 0.0, %v4599
        %4601 = vmatmul.f32.gmra.mxu0 %v4490
        %v4602 = vpop.f32.mrf.mxu0
        %v4603 = vadd.f32 0.0, %v4602
        %4604 = vmatmul.f32.gmra.mxu0 %v4493
        %v4605 = vpop.f32.mrf.mxu0
        %v4606 = vadd.f32 0.0, %v4605
        %4607 = vmatmul.f32.gmra.mxu0 %v4496
        %v4608 = vpop.f32.mrf.mxu0
        %v4609 = vadd.f32 0.0, %v4608
        %4610 = vmatmul.f32.gmra.mxu0 %v4499
        %v4611 = vpop.f32.mrf.mxu0
        %v4612 = vadd.f32 0.0, %v4611
        %4613 = vmatmul.f32.gmra.mxu0 %v4502
        %v4614 = vpop.f32.mrf.mxu0
        %v4615 = vadd.f32 0.0, %v4614
        %4616 = vmatmul.f32.gmra.mxu0 %v4505
        %v4617 = vpop.f32.mrf.mxu0
        %v4618 = vadd.f32 0.0, %v4617
        %4619 = vmatmul.f32.gmra.mxu0 %v4508
        %v4620 = vpop.f32.mrf.mxu0
        %v4621 = vadd.f32 0.0, %v4620
        %4622 = vmatmul.f32.gmra.mxu0 %v4511
        %v4623 = vpop.f32.mrf.mxu0
        %v4624 = vadd.f32 0.0, %v4623
        %4625 = vmatmul.f32.gmra.mxu0 %v4514
        %v4626 = vpop.f32.mrf.mxu0
        %v4627 = vadd.f32 0.0, %v4626
        %4628 = vmatmul.f32.gmra.mxu0 %v4517
        %v4629 = vpop.f32.mrf.mxu0
        %v4630 = vadd.f32 0.0, %v4629
        %4631 = vdwg.mxu0
        %v4633 = vsel %vm4422, %v3949, 0
        %v4636 = vsel %vm4422, %v3950, 0
        %v4639 = vsel %vm4422, %v3951, 0
        %v4642 = vsel %vm4422, %v3952, 0
        %v4645 = vsel %vm4422, %v3953, 0
        %v4648 = vsel %vm4422, %v3954, 0
        %v4651 = vsel %vm4422, %v3955, 0
        %v4654 = vsel %vm4422, %v3956, 0
        %v4657 = vsel %vm4422, %v3957, 0
        %v4660 = vsel %vm4422, %v3958, 0
        %v4663 = vsel %vm4422, %v3959, 0
        %v4666 = vsel %vm4422, %v3960, 0
        %v4669 = vsel %vm4422, %v3961, 0
        %v4672 = vsel %vm4422, %v3962, 0
        %v4675 = vsel %vm4422, %v3963, 0
        %v4678 = vsel %vm4422, %v3964, 0
        %v4681 = vsel %vm4422, %v3965, 0
        %v4684 = vsel %vm4422, %v3966, 0
        %v4687 = vsel %vm4422, %v3967, 0
        %v4690 = vsel %vm4422, %v3968, 0
        %v4693 = vsel %vm4422, %v3969, 0
        %v4696 = vsel %vm4422, %v3970, 0
        %v4699 = vsel %vm4422, %v3971, 0
        %v4702 = vsel %vm4422, %v3972, 0
        %v4705 = vsel %vm4422, %v3973, 0
        %v4708 = vsel %vm4422, %v3974, 0
        %v4711 = vsel %vm4422, %v3975, 0
        %v4714 = vsel %vm4422, %v3976, 0
        %v4717 = vsel %vm4422, %v3977, 0
        %v4720 = vsel %vm4422, %v3978, 0
        %v4723 = vsel %vm4422, %v3979, 0
        %v4726 = vsel %vm4422, %v3980, 0
        %4728 = vmatpush.msra.mxu0 0.0
        %4729 = vmatpush.msra.mxu0 0.0
        %4730 = vmatpush.msra.mxu0 0.0
        %4731 = vmatpush.msra.mxu0 0.0
        %4732 = vmatpush.msra.mxu0 %v3992
        %4733 = vmatpush.msra.mxu0 %v3991
        %4734 = vmatpush.msra.mxu0 %v3990
        %4735 = vmatpush.msra.mxu0 %v3989
        %4736 = vmatpush.msra.mxu0 %v3988
        %4737 = vmatpush.msra.mxu0 %v3987
        %4738 = vmatpush.msra.mxu0 %v3986
        %4739 = vmatpush.msra.mxu0 %v3985
        %4740 = vmatpush.msra.mxu0 %v3984
        %4741 = vmatpush.msra.mxu0 %v3983
        %4742 = vmatpush.msra.mxu0 %v3982
        %4743 = vmatpush.msra.mxu0 %v3981
        %4744 = vmatmul.f32.gmra.mxu0 %v4633
        %v4745 = vpop.f32.mrf.mxu0
        %v4746 = vadd.f32 %v4537, %v4745
        %4747 = vmatmul.f32.gmra.mxu0 %v4636
        %v4748 = vpop.f32.mrf.mxu0
        %v4749 = vadd.f32 %v4540, %v4748
        %4750 = vmatmul.f32.gmra.mxu0 %v4639
        %v4751 = vpop.f32.mrf.mxu0
        %v4752 = vadd.f32 %v4543, %v4751
        %4753 = vmatmul.f32.gmra.mxu0 %v4642
        %v4754 = vpop.f32.mrf.mxu0
        %v4755 = vadd.f32 %v4546, %v4754
        %4756 = vmatmul.f32.gmra.mxu0 %v4645
        %v4757 = vpop.f32.mrf.mxu0
        %v4758 = vadd.f32 %v4549, %v4757
        %4759 = vmatmul.f32.gmra.mxu0 %v4648
        %v4760 = vpop.f32.mrf.mxu0
        %v4761 = vadd.f32 %v4552, %v4760
        %4762 = vmatmul.f32.gmra.mxu0 %v4651
        %v4763 = vpop.f32.mrf.mxu0
        %v4764 = vadd.f32 %v4555, %v4763
        %4765 = vmatmul.f32.gmra.mxu0 %v4654
        %v4766 = vpop.f32.mrf.mxu0
        %v4767 = vadd.f32 %v4558, %v4766
        %4768 = vmatmul.f32.gmra.mxu0 %v4657
        %v4769 = vpop.f32.mrf.mxu0
        %v4770 = vadd.f32 %v4561, %v4769
        %4771 = vmatmul.f32.gmra.mxu0 %v4660
        %v4772 = vpop.f32.mrf.mxu0
        %v4773 = vadd.f32 %v4564, %v4772
        %4774 = vmatmul.f32.gmra.mxu0 %v4663
        %v4775 = vpop.f32.mrf.mxu0
        %v4776 = vadd.f32 %v4567, %v4775
        %4777 = vmatmul.f32.gmra.mxu0 %v4666
        %v4778 = vpop.f32.mrf.mxu0
        %v4779 = vadd.f32 %v4570, %v4778
        %4780 = vmatmul.f32.gmra.mxu0 %v4669
        %v4781 = vpop.f32.mrf.mxu0
        %v4782 = vadd.f32 %v4573, %v4781
        %4783 = vmatmul.f32.gmra.mxu0 %v4672
        %v4784 = vpop.f32.mrf.mxu0
        %v4785 = vadd.f32 %v4576, %v4784
        %4786 = vmatmul.f32.gmra.mxu0 %v4675
        %v4787 = vpop.f32.mrf.mxu0
        %v4788 = vadd.f32 %v4579, %v4787
        %4789 = vmatmul.f32.gmra.mxu0 %v4678
        %v4790 = vpop.f32.mrf.mxu0
        %v4791 = vadd.f32 %v4582, %v4790
        %4792 = vmatmul.f32.gmra.mxu0 %v4681
        %v4793 = vpop.f32.mrf.mxu0
        %v4794 = vadd.f32 %v4585, %v4793
        %4795 = vmatmul.f32.gmra.mxu0 %v4684
        %v4796 = vpop.f32.mrf.mxu0
        %v4797 = vadd.f32 %v4588, %v4796
        %4798 = vmatmul.f32.gmra.mxu0 %v4687
        %v4799 = vpop.f32.mrf.mxu0
        %v4800 = vadd.f32 %v4591, %v4799
        %4801 = vmatmul.f32.gmra.mxu0 %v4690
        %v4802 = vpop.f32.mrf.mxu0
        %v4803 = vadd.f32 %v4594, %v4802
        %4804 = vmatmul.f32.gmra.mxu0 %v4693
        %v4805 = vpop.f32.mrf.mxu0
        %v4806 = vadd.f32 %v4597, %v4805
        %4807 = vmatmul.f32.gmra.mxu0 %v4696
        %v4808 = vpop.f32.mrf.mxu0
        %v4809 = vadd.f32 %v4600, %v4808
        %4810 = vmatmul.f32.gmra.mxu0 %v4699
        %v4811 = vpop.f32.mrf.mxu0
        %v4812 = vadd.f32 %v4603, %v4811
        %4813 = vmatmul.f32.gmra.mxu0 %v4702
        %v4814 = vpop.f32.mrf.mxu0
        %v4815 = vadd.f32 %v4606, %v4814
        %4816 = vmatmul.f32.gmra.mxu0 %v4705
        %v4817 = vpop.f32.mrf.mxu0
        %v4818 = vadd.f32 %v4609, %v4817
        %4819 = vmatmul.f32.gmra.mxu0 %v4708
        %v4820 = vpop.f32.mrf.mxu0
        %v4821 = vadd.f32 %v4612, %v4820
        %4822 = vmatmul.f32.gmra.mxu0 %v4711
        %v4823 = vpop.f32.mrf.mxu0
        %v4824 = vadd.f32 %v4615, %v4823
        %4825 = vmatmul.f32.gmra.mxu0 %v4714
        %v4826 = vpop.f32.mrf.mxu0
        %v4827 = vadd.f32 %v4618, %v4826
        %4828 = vmatmul.f32.gmra.mxu0 %v4717
        %v4829 = vpop.f32.mrf.mxu0
        %v4830 = vadd.f32 %v4621, %v4829
        %4831 = vmatmul.f32.gmra.mxu0 %v4720
        %v4832 = vpop.f32.mrf.mxu0
        %v4833 = vadd.f32 %v4624, %v4832
        %4834 = vmatmul.f32.gmra.mxu0 %v4723
        %v4835 = vpop.f32.mrf.mxu0
        %v4836 = vadd.f32 %v4627, %v4835
        %4837 = vmatmul.f32.gmra.mxu0 %v4726
        %v4838 = vpop.f32.mrf.mxu0
        %v4839 = vadd.f32 %v4630, %v4838
        %4840 = vdwg.mxu0
        %s4841 = scalar_lea.vmem [#allocation3], 48
        %v4842 = vld [vmem:[%s4841] sm:$0xff]
        %v4843 = vld [vmem:[%s4841 + $0x8] sm:$0xff]
        %v4844 = vld [vmem:[%s4841 + $0x18] sm:$0xff]
        %v4845 = vld [vmem:[%s4841 + $0x20] sm:$0xff]
        %v4846 = vld [vmem:[%s4841 + $0x30] sm:$0xff]
        %v4847 = vld [vmem:[%s4841 + $0x38] sm:$0xff]
        %v4848 = vld [vmem:[%s4841 + $0x48] sm:$0xff]
        %v4849 = vld [vmem:[%s4841 + $0x50] sm:$0xff]
        %v4850 = vld [vmem:[%s4841 + $0x60] sm:$0xff]
        %v4851 = vld [vmem:[%s4841 + $0x68] sm:$0xff]
        %v4852 = vld [vmem:[%s4841 + $0x78] sm:$0xff]
        %v4853 = vld [vmem:[%s4841 + $0x80] sm:$0xff]
        %v4854 = vld [vmem:[%s4841 + $0x90] sm:$0xff]
        %v4855 = vld [vmem:[%s4841 + $0x98] sm:$0xff]
        %v4856 = vld [vmem:[%s4841 + $0xa8] sm:$0xff]
        %v4857 = vld [vmem:[%s4841 + $0xb0] sm:$0xff]
        %v4858 = vld [vmem:[%s4841 + $0xc0] sm:$0xff]
        %v4859 = vld [vmem:[%s4841 + $0xc8] sm:$0xff]
        %v4860 = vld [vmem:[%s4841 + $0xd8] sm:$0xff]
        %v4861 = vld [vmem:[%s4841 + $0xe0] sm:$0xff]
        %v4862 = vld [vmem:[%s4841 + $0xf0] sm:$0xff]
        %v4863 = vld [vmem:[%s4841 + $0xf8] sm:$0xff]
        %v4864 = vld [vmem:[%s4841 + $0x108] sm:$0xff]
        %v4865 = vld [vmem:[%s4841 + $0x110] sm:$0xff]
        %v4866 = vld [vmem:[%s4841 + $0x120] sm:$0xff]
        %v4867 = vld [vmem:[%s4841 + $0x128] sm:$0xff]
        %v4868 = vld [vmem:[%s4841 + $0x138] sm:$0xff]
        %v4869 = vld [vmem:[%s4841 + $0x140] sm:$0xff]
        %v4870 = vld [vmem:[%s4841 + $0x150] sm:$0xff]
        %v4871 = vld [vmem:[%s4841 + $0x158] sm:$0xff]
        %v4872 = vld [vmem:[%s4841 + $0x168] sm:$0xff]
        %v4873 = vld [vmem:[%s4841 + $0x170] sm:$0xff]
        %v4874 = vld [vmem:[%s4841 + $0x1] sm:$0xff]
        %v4875 = vld [vmem:[%s4841 + $0x9] sm:$0xff]
        %v4876 = vld [vmem:[%s4841 + $0x19] sm:$0xff]
        %v4877 = vld [vmem:[%s4841 + $0x21] sm:$0xff]
        %v4878 = vld [vmem:[%s4841 + $0x31] sm:$0xff]
        %v4879 = vld [vmem:[%s4841 + $0x39] sm:$0xff]
        %v4880 = vld [vmem:[%s4841 + $0x49] sm:$0xff]
        %v4881 = vld [vmem:[%s4841 + $0x51] sm:$0xff]
        %v4882 = vld [vmem:[%s4841 + $0x61] sm:$0xff]
        %v4883 = vld [vmem:[%s4841 + $0x69] sm:$0xff]
        %v4884 = vld [vmem:[%s4841 + $0x79] sm:$0xff]
        %v4885 = vld [vmem:[%s4841 + $0x81] sm:$0xff]
        %v4886 = vld [vmem:[%s4841 + $0x91] sm:$0xff]
        %v4887 = vld [vmem:[%s4841 + $0x99] sm:$0xff]
        %v4888 = vld [vmem:[%s4841 + $0xa9] sm:$0xff]
        %v4889 = vld [vmem:[%s4841 + $0xb1] sm:$0xff]
        %v4890 = vld [vmem:[%s4841 + $0xc1] sm:$0xff]
        %v4891 = vld [vmem:[%s4841 + $0xc9] sm:$0xff]
        %v4892 = vld [vmem:[%s4841 + $0xd9] sm:$0xff]
        %v4893 = vld [vmem:[%s4841 + $0xe1] sm:$0xff]
        %v4894 = vld [vmem:[%s4841 + $0xf1] sm:$0xff]
        %v4895 = vld [vmem:[%s4841 + $0xf9] sm:$0xff]
        %v4896 = vld [vmem:[%s4841 + $0x109] sm:$0xff]
        %v4897 = vld [vmem:[%s4841 + $0x111] sm:$0xff]
        %v4898 = vld [vmem:[%s4841 + $0x121] sm:$0xff]
        %v4899 = vld [vmem:[%s4841 + $0x129] sm:$0xff]
        %v4900 = vld [vmem:[%s4841 + $0x139] sm:$0xff]
        %v4901 = vld [vmem:[%s4841 + $0x141] sm:$0xff]
        %v4902 = vld [vmem:[%s4841 + $0x151] sm:$0xff]
        %v4903 = vld [vmem:[%s4841 + $0x159] sm:$0xff]
        %v4904 = vld [vmem:[%s4841 + $0x169] sm:$0xff]
        %v4905 = vld [vmem:[%s4841 + $0x171] sm:$0xff]
        %v4906 = vld [vmem:[%s4841 + $0x2] sm:$0xff]
        %v4907 = vld [vmem:[%s4841 + $0xa] sm:$0xff]
        %v4908 = vld [vmem:[%s4841 + $0x1a] sm:$0xff]
        %v4909 = vld [vmem:[%s4841 + $0x22] sm:$0xff]
        %v4910 = vld [vmem:[%s4841 + $0x32] sm:$0xff]
        %v4911 = vld [vmem:[%s4841 + $0x3a] sm:$0xff]
        %v4912 = vld [vmem:[%s4841 + $0x4a] sm:$0xff]
        %v4913 = vld [vmem:[%s4841 + $0x52] sm:$0xff]
        %v4914 = vld [vmem:[%s4841 + $0x62] sm:$0xff]
        %v4915 = vld [vmem:[%s4841 + $0x6a] sm:$0xff]
        %v4916 = vld [vmem:[%s4841 + $0x7a] sm:$0xff]
        %v4917 = vld [vmem:[%s4841 + $0x82] sm:$0xff]
        %v4918 = vld [vmem:[%s4841 + $0x92] sm:$0xff]
        %v4919 = vld [vmem:[%s4841 + $0x9a] sm:$0xff]
        %v4920 = vld [vmem:[%s4841 + $0xaa] sm:$0xff]
        %v4921 = vld [vmem:[%s4841 + $0xb2] sm:$0xff]
        %v4922 = vld [vmem:[%s4841 + $0xc2] sm:$0xff]
        %v4923 = vld [vmem:[%s4841 + $0xca] sm:$0xff]
        %v4924 = vld [vmem:[%s4841 + $0xda] sm:$0xff]
        %v4925 = vld [vmem:[%s4841 + $0xe2] sm:$0xff]
        %v4926 = vld [vmem:[%s4841 + $0xf2] sm:$0xff]
        %v4927 = vld [vmem:[%s4841 + $0xfa] sm:$0xff]
        %v4928 = vld [vmem:[%s4841 + $0x10a] sm:$0xff]
        %v4929 = vld [vmem:[%s4841 + $0x112] sm:$0xff]
        %v4930 = vld [vmem:[%s4841 + $0x122] sm:$0xff]
        %v4931 = vld [vmem:[%s4841 + $0x12a] sm:$0xff]
        %v4932 = vld [vmem:[%s4841 + $0x13a] sm:$0xff]
        %v4933 = vld [vmem:[%s4841 + $0x142] sm:$0xff]
        %v4934 = vld [vmem:[%s4841 + $0x152] sm:$0xff]
        %v4935 = vld [vmem:[%s4841 + $0x15a] sm:$0xff]
        %v4936 = vld [vmem:[%s4841 + $0x16a] sm:$0xff]
        %v4937 = vld [vmem:[%s4841 + $0x172] sm:$0xff]
        %4970 = vrot.lane.b32.xlu0 %v4874, 32
        %v4971 = vpop.permute.xlu0 %4970
        %4972 = vrot.lane.b32.xlu0 %v4875, 32
        %v4973 = vpop.permute.xlu0 %4972
        %4974 = vrot.lane.b32.xlu0 %v4876, 32
        %v4975 = vpop.permute.xlu0 %4974
        %4976 = vrot.lane.b32.xlu0 %v4877, 32
        %v4977 = vpop.permute.xlu0 %4976
        %4978 = vrot.lane.b32.xlu0 %v4878, 32
        %v4979 = vpop.permute.xlu0 %4978
        %4980 = vrot.lane.b32.xlu0 %v4879, 32
        %v4981 = vpop.permute.xlu0 %4980
        %4982 = vrot.lane.b32.xlu0 %v4880, 32
        %v4983 = vpop.permute.xlu0 %4982
        %4984 = vrot.lane.b32.xlu0 %v4881, 32
        %v4985 = vpop.permute.xlu0 %4984
        %4986 = vrot.lane.b32.xlu0 %v4882, 32
        %v4987 = vpop.permute.xlu0 %4986
        %4988 = vrot.lane.b32.xlu0 %v4883, 32
        %v4989 = vpop.permute.xlu0 %4988
        %4990 = vrot.lane.b32.xlu0 %v4884, 32
        %v4991 = vpop.permute.xlu0 %4990
        %4992 = vrot.lane.b32.xlu0 %v4885, 32
        %v4993 = vpop.permute.xlu0 %4992
        %4994 = vrot.lane.b32.xlu0 %v4886, 32
        %v4995 = vpop.permute.xlu0 %4994
        %4996 = vrot.lane.b32.xlu0 %v4887, 32
        %v4997 = vpop.permute.xlu0 %4996
        %4998 = vrot.lane.b32.xlu0 %v4888, 32
        %v4999 = vpop.permute.xlu0 %4998
        %5000 = vrot.lane.b32.xlu0 %v4889, 32
        %v5001 = vpop.permute.xlu0 %5000
        %5002 = vrot.lane.b32.xlu0 %v4890, 32
        %v5003 = vpop.permute.xlu0 %5002
        %5004 = vrot.lane.b32.xlu0 %v4891, 32
        %v5005 = vpop.permute.xlu0 %5004
        %5006 = vrot.lane.b32.xlu0 %v4892, 32
        %v5007 = vpop.permute.xlu0 %5006
        %5008 = vrot.lane.b32.xlu0 %v4893, 32
        %v5009 = vpop.permute.xlu0 %5008
        %5010 = vrot.lane.b32.xlu0 %v4894, 32
        %v5011 = vpop.permute.xlu0 %5010
        %5012 = vrot.lane.b32.xlu0 %v4895, 32
        %v5013 = vpop.permute.xlu0 %5012
        %5014 = vrot.lane.b32.xlu0 %v4896, 32
        %v5015 = vpop.permute.xlu0 %5014
        %5016 = vrot.lane.b32.xlu0 %v4897, 32
        %v5017 = vpop.permute.xlu0 %5016
        %5018 = vrot.lane.b32.xlu0 %v4898, 32
        %v5019 = vpop.permute.xlu0 %5018
        %5020 = vrot.lane.b32.xlu0 %v4899, 32
        %v5021 = vpop.permute.xlu0 %5020
        %5022 = vrot.lane.b32.xlu0 %v4900, 32
        %v5023 = vpop.permute.xlu0 %5022
        %5024 = vrot.lane.b32.xlu0 %v4901, 32
        %v5025 = vpop.permute.xlu0 %5024
        %5026 = vrot.lane.b32.xlu0 %v4902, 32
        %v5027 = vpop.permute.xlu0 %5026
        %5028 = vrot.lane.b32.xlu0 %v4903, 32
        %v5029 = vpop.permute.xlu0 %5028
        %5030 = vrot.lane.b32.xlu0 %v4904, 32
        %v5031 = vpop.permute.xlu0 %5030
        %5032 = vrot.lane.b32.xlu0 %v4905, 32
        %v5033 = vpop.permute.xlu0 %5032
        %5098 = vrot.lane.b32.xlu0 %v4906, 64
        %v5099 = vpop.permute.xlu0 %5098
        %5100 = vrot.lane.b32.xlu0 %v4907, 64
        %v5101 = vpop.permute.xlu0 %5100
        %5102 = vrot.lane.b32.xlu0 %v4908, 64
        %v5103 = vpop.permute.xlu0 %5102
        %5104 = vrot.lane.b32.xlu0 %v4909, 64
        %v5105 = vpop.permute.xlu0 %5104
        %5106 = vrot.lane.b32.xlu0 %v4910, 64
        %v5107 = vpop.permute.xlu0 %5106
        %5108 = vrot.lane.b32.xlu0 %v4911, 64
        %v5109 = vpop.permute.xlu0 %5108
        %5110 = vrot.lane.b32.xlu0 %v4912, 64
        %v5111 = vpop.permute.xlu0 %5110
        %5112 = vrot.lane.b32.xlu0 %v4913, 64
        %v5113 = vpop.permute.xlu0 %5112
        %5114 = vrot.lane.b32.xlu0 %v4914, 64
        %v5115 = vpop.permute.xlu0 %5114
        %5116 = vrot.lane.b32.xlu0 %v4915, 64
        %v5117 = vpop.permute.xlu0 %5116
        %5118 = vrot.lane.b32.xlu0 %v4916, 64
        %v5119 = vpop.permute.xlu0 %5118
        %5120 = vrot.lane.b32.xlu0 %v4917, 64
        %v5121 = vpop.permute.xlu0 %5120
        %5122 = vrot.lane.b32.xlu0 %v4918, 64
        %v5123 = vpop.permute.xlu0 %5122
        %5124 = vrot.lane.b32.xlu0 %v4919, 64
        %v5125 = vpop.permute.xlu0 %5124
        %5126 = vrot.lane.b32.xlu0 %v4920, 64
        %v5127 = vpop.permute.xlu0 %5126
        %5128 = vrot.lane.b32.xlu0 %v4921, 64
        %v5129 = vpop.permute.xlu0 %5128
        %5130 = vrot.lane.b32.xlu0 %v4922, 64
        %v5131 = vpop.permute.xlu0 %5130
        %5132 = vrot.lane.b32.xlu0 %v4923, 64
        %v5133 = vpop.permute.xlu0 %5132
        %5134 = vrot.lane.b32.xlu0 %v4924, 64
        %v5135 = vpop.permute.xlu0 %5134
        %5136 = vrot.lane.b32.xlu0 %v4925, 64
        %v5137 = vpop.permute.xlu0 %5136
        %5138 = vrot.lane.b32.xlu0 %v4926, 64
        %v5139 = vpop.permute.xlu0 %5138
        %5140 = vrot.lane.b32.xlu0 %v4927, 64
        %v5141 = vpop.permute.xlu0 %5140
        %5142 = vrot.lane.b32.xlu0 %v4928, 64
        %v5143 = vpop.permute.xlu0 %5142
        %5144 = vrot.lane.b32.xlu0 %v4929, 64
        %v5145 = vpop.permute.xlu0 %5144
        %5146 = vrot.lane.b32.xlu0 %v4930, 64
        %v5147 = vpop.permute.xlu0 %5146
        %5148 = vrot.lane.b32.xlu0 %v4931, 64
        %v5149 = vpop.permute.xlu0 %5148
        %5150 = vrot.lane.b32.xlu0 %v4932, 64
        %v5151 = vpop.permute.xlu0 %5150
        %5152 = vrot.lane.b32.xlu0 %v4933, 64
        %v5153 = vpop.permute.xlu0 %5152
        %5154 = vrot.lane.b32.xlu0 %v4934, 64
        %v5155 = vpop.permute.xlu0 %5154
        %5156 = vrot.lane.b32.xlu0 %v4935, 64
        %v5157 = vpop.permute.xlu0 %5156
        %5158 = vrot.lane.b32.xlu0 %v4936, 64
        %v5159 = vpop.permute.xlu0 %5158
        %5160 = vrot.lane.b32.xlu0 %v4937, 64
        %v5161 = vpop.permute.xlu0 %5160
        %v5194 = vsel %vm913, %v4842, %v4971
        %v5195 = vsel %vm913, %v4843, %v4973
        %v5196 = vsel %vm913, %v4844, %v4975
        %v5197 = vsel %vm913, %v4845, %v4977
        %v5198 = vsel %vm913, %v4846, %v4979
        %v5199 = vsel %vm913, %v4847, %v4981
        %v5200 = vsel %vm913, %v4848, %v4983
        %v5201 = vsel %vm913, %v4849, %v4985
        %v5202 = vsel %vm913, %v4850, %v4987
        %v5203 = vsel %vm913, %v4851, %v4989
        %v5204 = vsel %vm913, %v4852, %v4991
        %v5205 = vsel %vm913, %v4853, %v4993
        %v5206 = vsel %vm913, %v4854, %v4995
        %v5207 = vsel %vm913, %v4855, %v4997
        %v5208 = vsel %vm913, %v4856, %v4999
        %v5209 = vsel %vm913, %v4857, %v5001
        %v5210 = vsel %vm913, %v4858, %v5003
        %v5211 = vsel %vm913, %v4859, %v5005
        %v5212 = vsel %vm913, %v4860, %v5007
        %v5213 = vsel %vm913, %v4861, %v5009
        %v5214 = vsel %vm913, %v4862, %v5011
        %v5215 = vsel %vm913, %v4863, %v5013
        %v5216 = vsel %vm913, %v4864, %v5015
        %v5217 = vsel %vm913, %v4865, %v5017
        %v5218 = vsel %vm913, %v4866, %v5019
        %v5219 = vsel %vm913, %v4867, %v5021
        %v5220 = vsel %vm913, %v4868, %v5023
        %v5221 = vsel %vm913, %v4869, %v5025
        %v5222 = vsel %vm913, %v4870, %v5027
        %v5223 = vsel %vm913, %v4871, %v5029
        %v5224 = vsel %vm913, %v4872, %v5031
        %v5225 = vsel %vm913, %v4873, %v5033
        %v5226 = vsel %vm3948, %v5194, %v5099
        %v5227 = vsel %vm3948, %v5195, %v5101
        %v5228 = vsel %vm3948, %v5196, %v5103
        %v5229 = vsel %vm3948, %v5197, %v5105
        %v5230 = vsel %vm3948, %v5198, %v5107
        %v5231 = vsel %vm3948, %v5199, %v5109
        %v5232 = vsel %vm3948, %v5200, %v5111
        %v5233 = vsel %vm3948, %v5201, %v5113
        %v5234 = vsel %vm3948, %v5202, %v5115
        %v5235 = vsel %vm3948, %v5203, %v5117
        %v5236 = vsel %vm3948, %v5204, %v5119
        %v5237 = vsel %vm3948, %v5205, %v5121
        %v5238 = vsel %vm3948, %v5206, %v5123
        %v5239 = vsel %vm3948, %v5207, %v5125
        %v5240 = vsel %vm3948, %v5208, %v5127
        %v5241 = vsel %vm3948, %v5209, %v5129
        %v5242 = vsel %vm3948, %v5210, %v5131
        %v5243 = vsel %vm3948, %v5211, %v5133
        %v5244 = vsel %vm3948, %v5212, %v5135
        %v5245 = vsel %vm3948, %v5213, %v5137
        %v5246 = vsel %vm3948, %v5214, %v5139
        %v5247 = vsel %vm3948, %v5215, %v5141
        %v5248 = vsel %vm3948, %v5216, %v5143
        %v5249 = vsel %vm3948, %v5217, %v5145
        %v5250 = vsel %vm3948, %v5218, %v5147
        %v5251 = vsel %vm3948, %v5219, %v5149
        %v5252 = vsel %vm3948, %v5220, %v5151
        %v5253 = vsel %vm3948, %v5221, %v5153
        %v5254 = vsel %vm3948, %v5222, %v5155
        %v5255 = vsel %vm3948, %v5223, %v5157
        %v5256 = vsel %vm3948, %v5224, %v5159
        %v5257 = vsel %vm3948, %v5225, %v5161
        %s5258 = scalar_lea.vmem %s5, 192
        %v5259 = vld [vmem:[%s5258] sm:$0xff]
        %v5260 = vld [vmem:[%s5258 + $0x8] sm:$0xff]
        %v5261 = vld [vmem:[%s5258 + $0x10] sm:$0xff]
        %v5262 = vld [vmem:[%s5258 + $0x18] sm:$0xff]
        %v5263 = vld [vmem:[%s5258 + $0x20] sm:$0xff]
        %v5264 = vld [vmem:[%s5258 + $0x28] sm:$0xff]
        %v5265 = vld [vmem:[%s5258 + $0x30] sm:$0xff]
        %v5266 = vld [vmem:[%s5258 + $0x38] sm:$0xff]
        %v5267 = vld [vmem:[%s5258 + $0x40] sm:$0xff]
        %v5268 = vld [vmem:[%s5258 + $0x48] sm:$0xff]
        %v5269 = vld [vmem:[%s5258 + $0x50] sm:$0xff]
        %v5270 = vld [vmem:[%s5258 + $0x58] sm:$0xff]
        %v5272 = vsel %vm4422, %v5226, 0
        %v5275 = vsel %vm4422, %v5227, 0
        %v5278 = vsel %vm4422, %v5228, 0
        %v5281 = vsel %vm4422, %v5229, 0
        %v5284 = vsel %vm4422, %v5230, 0
        %v5287 = vsel %vm4422, %v5231, 0
        %v5290 = vsel %vm4422, %v5232, 0
        %v5293 = vsel %vm4422, %v5233, 0
        %v5296 = vsel %vm4422, %v5234, 0
        %v5299 = vsel %vm4422, %v5235, 0
        %v5302 = vsel %vm4422, %v5236, 0
        %v5305 = vsel %vm4422, %v5237, 0
        %v5308 = vsel %vm4422, %v5238, 0
        %v5311 = vsel %vm4422, %v5239, 0
        %v5314 = vsel %vm4422, %v5240, 0
        %v5317 = vsel %vm4422, %v5241, 0
        %v5320 = vsel %vm4422, %v5242, 0
        %v5323 = vsel %vm4422, %v5243, 0
        %v5326 = vsel %vm4422, %v5244, 0
        %v5329 = vsel %vm4422, %v5245, 0
        %v5332 = vsel %vm4422, %v5246, 0
        %v5335 = vsel %vm4422, %v5247, 0
        %v5338 = vsel %vm4422, %v5248, 0
        %v5341 = vsel %vm4422, %v5249, 0
        %v5344 = vsel %vm4422, %v5250, 0
        %v5347 = vsel %vm4422, %v5251, 0
        %v5350 = vsel %vm4422, %v5252, 0
        %v5353 = vsel %vm4422, %v5253, 0
        %v5356 = vsel %vm4422, %v5254, 0
        %v5359 = vsel %vm4422, %v5255, 0
        %v5362 = vsel %vm4422, %v5256, 0
        %v5365 = vsel %vm4422, %v5257, 0
        %5367 = vmatpush.msra.mxu0 0.0
        %5368 = vmatpush.msra.mxu0 0.0
        %5369 = vmatpush.msra.mxu0 0.0
        %5370 = vmatpush.msra.mxu0 0.0
        %5371 = vmatpush.msra.mxu0 %v5270
        %5372 = vmatpush.msra.mxu0 %v5269
        %5373 = vmatpush.msra.mxu0 %v5268
        %5374 = vmatpush.msra.mxu0 %v5267
        %5375 = vmatpush.msra.mxu0 %v5266
        %5376 = vmatpush.msra.mxu0 %v5265
        %5377 = vmatpush.msra.mxu0 %v5264
        %5378 = vmatpush.msra.mxu0 %v5263
        %5379 = vmatpush.msra.mxu0 %v5262
        %5380 = vmatpush.msra.mxu0 %v5261
        %5381 = vmatpush.msra.mxu0 %v5260
        %5382 = vmatpush.msra.mxu0 %v5259
        %5383 = vmatmul.f32.gmra.mxu0 %v5272
        %v5384 = vpop.f32.mrf.mxu0
        %v5385 = vadd.f32 0.0, %v5384
        %5386 = vmatmul.f32.gmra.mxu0 %v5275
        %v5387 = vpop.f32.mrf.mxu0
        %v5388 = vadd.f32 0.0, %v5387
        %5389 = vmatmul.f32.gmra.mxu0 %v5278
        %v5390 = vpop.f32.mrf.mxu0
        %v5391 = vadd.f32 0.0, %v5390
        %5392 = vmatmul.f32.gmra.mxu0 %v5281
        %v5393 = vpop.f32.mrf.mxu0
        %v5394 = vadd.f32 0.0, %v5393
        %5395 = vmatmul.f32.gmra.mxu0 %v5284
        %v5396 = vpop.f32.mrf.mxu0
        %v5397 = vadd.f32 0.0, %v5396
        %5398 = vmatmul.f32.gmra.mxu0 %v5287
        %v5399 = vpop.f32.mrf.mxu0
        %v5400 = vadd.f32 0.0, %v5399
        %5401 = vmatmul.f32.gmra.mxu0 %v5290
        %v5402 = vpop.f32.mrf.mxu0
        %v5403 = vadd.f32 0.0, %v5402
        %5404 = vmatmul.f32.gmra.mxu0 %v5293
        %v5405 = vpop.f32.mrf.mxu0
        %v5406 = vadd.f32 0.0, %v5405
        %5407 = vmatmul.f32.gmra.mxu0 %v5296
        %v5408 = vpop.f32.mrf.mxu0
        %v5409 = vadd.f32 0.0, %v5408
        %5410 = vmatmul.f32.gmra.mxu0 %v5299
        %v5411 = vpop.f32.mrf.mxu0
        %v5412 = vadd.f32 0.0, %v5411
        %5413 = vmatmul.f32.gmra.mxu0 %v5302
        %v5414 = vpop.f32.mrf.mxu0
        %v5415 = vadd.f32 0.0, %v5414
        %5416 = vmatmul.f32.gmra.mxu0 %v5305
        %v5417 = vpop.f32.mrf.mxu0
        %v5418 = vadd.f32 0.0, %v5417
        %5419 = vmatmul.f32.gmra.mxu0 %v5308
        %v5420 = vpop.f32.mrf.mxu0
        %v5421 = vadd.f32 0.0, %v5420
        %5422 = vmatmul.f32.gmra.mxu0 %v5311
        %v5423 = vpop.f32.mrf.mxu0
        %v5424 = vadd.f32 0.0, %v5423
        %5425 = vmatmul.f32.gmra.mxu0 %v5314
        %v5426 = vpop.f32.mrf.mxu0
        %v5427 = vadd.f32 0.0, %v5426
        %5428 = vmatmul.f32.gmra.mxu0 %v5317
        %v5429 = vpop.f32.mrf.mxu0
        %v5430 = vadd.f32 0.0, %v5429
        %5431 = vmatmul.f32.gmra.mxu0 %v5320
        %v5432 = vpop.f32.mrf.mxu0
        %v5433 = vadd.f32 0.0, %v5432
        %5434 = vmatmul.f32.gmra.mxu0 %v5323
        %v5435 = vpop.f32.mrf.mxu0
        %v5436 = vadd.f32 0.0, %v5435
        %5437 = vmatmul.f32.gmra.mxu0 %v5326
        %v5438 = vpop.f32.mrf.mxu0
        %v5439 = vadd.f32 0.0, %v5438
        %5440 = vmatmul.f32.gmra.mxu0 %v5329
        %v5441 = vpop.f32.mrf.mxu0
        %v5442 = vadd.f32 0.0, %v5441
        %5443 = vmatmul.f32.gmra.mxu0 %v5332
        %v5444 = vpop.f32.mrf.mxu0
        %v5445 = vadd.f32 0.0, %v5444
        %5446 = vmatmul.f32.gmra.mxu0 %v5335
        %v5447 = vpop.f32.mrf.mxu0
        %v5448 = vadd.f32 0.0, %v5447
        %5449 = vmatmul.f32.gmra.mxu0 %v5338
        %v5450 = vpop.f32.mrf.mxu0
        %v5451 = vadd.f32 0.0, %v5450
        %5452 = vmatmul.f32.gmra.mxu0 %v5341
        %v5453 = vpop.f32.mrf.mxu0
        %v5454 = vadd.f32 0.0, %v5453
        %5455 = vmatmul.f32.gmra.mxu0 %v5344
        %v5456 = vpop.f32.mrf.mxu0
        %v5457 = vadd.f32 0.0, %v5456
        %5458 = vmatmul.f32.gmra.mxu0 %v5347
        %v5459 = vpop.f32.mrf.mxu0
        %v5460 = vadd.f32 0.0, %v5459
        %5461 = vmatmul.f32.gmra.mxu0 %v5350
        %v5462 = vpop.f32.mrf.mxu0
        %v5463 = vadd.f32 0.0, %v5462
        %5464 = vmatmul.f32.gmra.mxu0 %v5353
        %v5465 = vpop.f32.mrf.mxu0
        %v5466 = vadd.f32 0.0, %v5465
        %5467 = vmatmul.f32.gmra.mxu0 %v5356
        %v5468 = vpop.f32.mrf.mxu0
        %v5469 = vadd.f32 0.0, %v5468
        %5470 = vmatmul.f32.gmra.mxu0 %v5359
        %v5471 = vpop.f32.mrf.mxu0
        %v5472 = vadd.f32 0.0, %v5471
        %5473 = vmatmul.f32.gmra.mxu0 %v5362
        %v5474 = vpop.f32.mrf.mxu0
        %v5475 = vadd.f32 0.0, %v5474
        %5476 = vmatmul.f32.gmra.mxu0 %v5365
        %v5477 = vpop.f32.mrf.mxu0
        %v5478 = vadd.f32 0.0, %v5477
        %5479 = vdwg.mxu0
        %v5480 = vadd.f32 %v4746, %v5385
        %v5481 = vadd.f32 %v4749, %v5388
        %v5482 = vadd.f32 %v4752, %v5391
        %v5483 = vadd.f32 %v4755, %v5394
        %v5484 = vadd.f32 %v4758, %v5397
        %v5485 = vadd.f32 %v4761, %v5400
        %v5486 = vadd.f32 %v4764, %v5403
        %v5487 = vadd.f32 %v4767, %v5406
        %v5488 = vadd.f32 %v4770, %v5409
        %v5489 = vadd.f32 %v4773, %v5412
        %v5490 = vadd.f32 %v4776, %v5415
        %v5491 = vadd.f32 %v4779, %v5418
        %v5492 = vadd.f32 %v4782, %v5421
        %v5493 = vadd.f32 %v4785, %v5424
        %v5494 = vadd.f32 %v4788, %v5427
        %v5495 = vadd.f32 %v4791, %v5430
        %v5496 = vadd.f32 %v4794, %v5433
        %v5497 = vadd.f32 %v4797, %v5436
        %v5498 = vadd.f32 %v4800, %v5439
        %v5499 = vadd.f32 %v4803, %v5442
        %v5500 = vadd.f32 %v4806, %v5445
        %v5501 = vadd.f32 %v4809, %v5448
        %v5502 = vadd.f32 %v4812, %v5451
        %v5503 = vadd.f32 %v4815, %v5454
        %v5504 = vadd.f32 %v4818, %v5457
        %v5505 = vadd.f32 %v4821, %v5460
        %v5506 = vadd.f32 %v4824, %v5463
        %v5507 = vadd.f32 %v4827, %v5466
        %v5508 = vadd.f32 %v4830, %v5469
        %v5509 = vadd.f32 %v4833, %v5472
        %v5510 = vadd.f32 %v4836, %v5475
        %v5511 = vadd.f32 %v4839, %v5478
        %v5513 = vperm.slane %v3563, 0
        %v5515 = vadd.f32 %v5480, %v5513
        %v5516 = vadd.f32 %v5481, %v5513
        %v5517 = vadd.f32 %v5482, %v5513
        %v5518 = vadd.f32 %v5483, %v5513
        %v5519 = vadd.f32 %v5484, %v5513
        %v5520 = vadd.f32 %v5485, %v5513
        %v5521 = vadd.f32 %v5486, %v5513
        %v5522 = vadd.f32 %v5487, %v5513
        %v5523 = vadd.f32 %v5488, %v5513
        %v5524 = vadd.f32 %v5489, %v5513
        %v5525 = vadd.f32 %v5490, %v5513
        %v5526 = vadd.f32 %v5491, %v5513
        %v5527 = vadd.f32 %v5492, %v5513
        %v5528 = vadd.f32 %v5493, %v5513
        %v5529 = vadd.f32 %v5494, %v5513
        %v5530 = vadd.f32 %v5495, %v5513
        %v5531 = vadd.f32 %v5496, %v5513
        %v5532 = vadd.f32 %v5497, %v5513
        %v5533 = vadd.f32 %v5498, %v5513
        %v5534 = vadd.f32 %v5499, %v5513
        %v5535 = vadd.f32 %v5500, %v5513
        %v5536 = vadd.f32 %v5501, %v5513
        %v5537 = vadd.f32 %v5502, %v5513
        %v5538 = vadd.f32 %v5503, %v5513
        %v5539 = vadd.f32 %v5504, %v5513
        %v5540 = vadd.f32 %v5505, %v5513
        %v5541 = vadd.f32 %v5506, %v5513
        %v5542 = vadd.f32 %v5507, %v5513
        %v5543 = vadd.f32 %v5508, %v5513
        %v5544 = vadd.f32 %v5509, %v5513
        %v5545 = vadd.f32 %v5510, %v5513
        %v5546 = vadd.f32 %v5511, %v5513
        %v5547 = vld [vmem:[%s7] sm:$0x1]
        %v5548 = vld [vmem:[%s8] sm:$0x1]
        %v5549 = vsel %vm913, %v5515, 0.0
        %v5550 = vsel %vm913, %v5516, 0.0
        %v5551 = vadd.f32 %v5549, %v5550
        %v5552 = vsel %vm913, %v5517, 0.0
        %v5553 = vadd.f32 %v5551, %v5552
        %v5554 = vsel %vm913, %v5518, 0.0
        %v5555 = vadd.f32 %v5553, %v5554
        %v5556 = vsel %vm913, %v5519, 0.0
        %v5557 = vadd.f32 %v5555, %v5556
        %v5558 = vsel %vm913, %v5520, 0.0
        %v5559 = vadd.f32 %v5557, %v5558
        %v5560 = vsel %vm913, %v5521, 0.0
        %v5561 = vadd.f32 %v5559, %v5560
        %v5562 = vsel %vm913, %v5522, 0.0
        %v5563 = vadd.f32 %v5561, %v5562
        %v5564 = vsel %vm913, %v5523, 0.0
        %v5565 = vadd.f32 %v5563, %v5564
        %v5566 = vsel %vm913, %v5524, 0.0
        %v5567 = vadd.f32 %v5565, %v5566
        %v5568 = vsel %vm913, %v5525, 0.0
        %v5569 = vadd.f32 %v5567, %v5568
        %v5570 = vsel %vm913, %v5526, 0.0
        %v5571 = vadd.f32 %v5569, %v5570
        %v5572 = vsel %vm913, %v5527, 0.0
        %v5573 = vadd.f32 %v5571, %v5572
        %v5574 = vsel %vm913, %v5528, 0.0
        %v5575 = vadd.f32 %v5573, %v5574
        %v5576 = vsel %vm913, %v5529, 0.0
        %v5577 = vadd.f32 %v5575, %v5576
        %v5578 = vsel %vm913, %v5530, 0.0
        %v5579 = vadd.f32 %v5577, %v5578
        %v5580 = vsel %vm913, %v5531, 0.0
        %v5581 = vadd.f32 %v5579, %v5580
        %v5582 = vsel %vm913, %v5532, 0.0
        %v5583 = vadd.f32 %v5581, %v5582
        %v5584 = vsel %vm913, %v5533, 0.0
        %v5585 = vadd.f32 %v5583, %v5584
        %v5586 = vsel %vm913, %v5534, 0.0
        %v5587 = vadd.f32 %v5585, %v5586
        %v5588 = vsel %vm913, %v5535, 0.0
        %v5589 = vadd.f32 %v5587, %v5588
        %v5590 = vsel %vm913, %v5536, 0.0
        %v5591 = vadd.f32 %v5589, %v5590
        %v5592 = vsel %vm913, %v5537, 0.0
        %v5593 = vadd.f32 %v5591, %v5592
        %v5594 = vsel %vm913, %v5538, 0.0
        %v5595 = vadd.f32 %v5593, %v5594
        %v5596 = vsel %vm913, %v5539, 0.0
        %v5597 = vadd.f32 %v5595, %v5596
        %v5598 = vsel %vm913, %v5540, 0.0
        %v5599 = vadd.f32 %v5597, %v5598
        %v5600 = vsel %vm913, %v5541, 0.0
        %v5601 = vadd.f32 %v5599, %v5600
        %v5602 = vsel %vm913, %v5542, 0.0
        %v5603 = vadd.f32 %v5601, %v5602
        %v5604 = vsel %vm913, %v5543, 0.0
        %v5605 = vadd.f32 %v5603, %v5604
        %v5606 = vsel %vm913, %v5544, 0.0
        %v5607 = vadd.f32 %v5605, %v5606
        %v5608 = vsel %vm913, %v5545, 0.0
        %v5609 = vadd.f32 %v5607, %v5608
        %v5610 = vsel %vm913, %v5546, 0.0
        %v5611 = vadd.f32 %v5609, %v5610
        %v5612 = vrot.slane %v5611, 4
        %v5613 = vadd.f32 %v5611, %v5612
        %v5614 = vrot.slane %v5613, 2
        %v5615 = vadd.f32 %v5613, %v5614
        %v5616 = vrot.slane %v5615, 1
        %v5617 = vadd.f32 %v5615, %v5616
        %v5618 = vmul.f32 %v5515, %v5515
        %v5619 = vmul.f32 %v5516, %v5516
        %v5620 = vmul.f32 %v5517, %v5517
        %v5621 = vmul.f32 %v5518, %v5518
        %v5622 = vmul.f32 %v5519, %v5519
        %v5623 = vmul.f32 %v5520, %v5520
        %v5624 = vmul.f32 %v5521, %v5521
        %v5625 = vmul.f32 %v5522, %v5522
        %v5626 = vmul.f32 %v5523, %v5523
        %v5627 = vmul.f32 %v5524, %v5524
        %v5628 = vmul.f32 %v5525, %v5525
        %v5629 = vmul.f32 %v5526, %v5526
        %v5630 = vmul.f32 %v5527, %v5527
        %v5631 = vmul.f32 %v5528, %v5528
        %v5632 = vmul.f32 %v5529, %v5529
        %v5633 = vmul.f32 %v5530, %v5530
        %v5634 = vmul.f32 %v5531, %v5531
        %v5635 = vmul.f32 %v5532, %v5532
        %v5636 = vmul.f32 %v5533, %v5533
        %v5637 = vmul.f32 %v5534, %v5534
        %v5638 = vmul.f32 %v5535, %v5535
        %v5639 = vmul.f32 %v5536, %v5536
        %v5640 = vmul.f32 %v5537, %v5537
        %v5641 = vmul.f32 %v5538, %v5538
        %v5642 = vmul.f32 %v5539, %v5539
        %v5643 = vmul.f32 %v5540, %v5540
        %v5644 = vmul.f32 %v5541, %v5541
        %v5645 = vmul.f32 %v5542, %v5542
        %v5646 = vmul.f32 %v5543, %v5543
        %v5647 = vmul.f32 %v5544, %v5544
        %v5648 = vmul.f32 %v5545, %v5545
        %v5649 = vmul.f32 %v5546, %v5546
        %v5650 = vsel %vm913, %v5618, 0.0
        %v5651 = vsel %vm913, %v5619, 0.0
        %v5652 = vadd.f32 %v5650, %v5651
        %v5653 = vsel %vm913, %v5620, 0.0
        %v5654 = vadd.f32 %v5652, %v5653
        %v5655 = vsel %vm913, %v5621, 0.0
        %v5656 = vadd.f32 %v5654, %v5655
        %v5657 = vsel %vm913, %v5622, 0.0
        %v5658 = vadd.f32 %v5656, %v5657
        %v5659 = vsel %vm913, %v5623, 0.0
        %v5660 = vadd.f32 %v5658, %v5659
        %v5661 = vsel %vm913, %v5624, 0.0
        %v5662 = vadd.f32 %v5660, %v5661
        %v5663 = vsel %vm913, %v5625, 0.0
        %v5664 = vadd.f32 %v5662, %v5663
        %v5665 = vsel %vm913, %v5626, 0.0
        %v5666 = vadd.f32 %v5664, %v5665
        %v5667 = vsel %vm913, %v5627, 0.0
        %v5668 = vadd.f32 %v5666, %v5667
        %v5669 = vsel %vm913, %v5628, 0.0
        %v5670 = vadd.f32 %v5668, %v5669
        %v5671 = vsel %vm913, %v5629, 0.0
        %v5672 = vadd.f32 %v5670, %v5671
        %v5673 = vsel %vm913, %v5630, 0.0
        %v5674 = vadd.f32 %v5672, %v5673
        %v5675 = vsel %vm913, %v5631, 0.0
        %v5676 = vadd.f32 %v5674, %v5675
        %v5677 = vsel %vm913, %v5632, 0.0
        %v5678 = vadd.f32 %v5676, %v5677
        %v5679 = vsel %vm913, %v5633, 0.0
        %v5680 = vadd.f32 %v5678, %v5679
        %v5681 = vsel %vm913, %v5634, 0.0
        %v5682 = vadd.f32 %v5680, %v5681
        %v5683 = vsel %vm913, %v5635, 0.0
        %v5684 = vadd.f32 %v5682, %v5683
        %v5685 = vsel %vm913, %v5636, 0.0
        %v5686 = vadd.f32 %v5684, %v5685
        %v5687 = vsel %vm913, %v5637, 0.0
        %v5688 = vadd.f32 %v5686, %v5687
        %v5689 = vsel %vm913, %v5638, 0.0
        %v5690 = vadd.f32 %v5688, %v5689
        %v5691 = vsel %vm913, %v5639, 0.0
        %v5692 = vadd.f32 %v5690, %v5691
        %v5693 = vsel %vm913, %v5640, 0.0
        %v5694 = vadd.f32 %v5692, %v5693
        %v5695 = vsel %vm913, %v5641, 0.0
        %v5696 = vadd.f32 %v5694, %v5695
        %v5697 = vsel %vm913, %v5642, 0.0
        %v5698 = vadd.f32 %v5696, %v5697
        %v5699 = vsel %vm913, %v5643, 0.0
        %v5700 = vadd.f32 %v5698, %v5699
        %v5701 = vsel %vm913, %v5644, 0.0
        %v5702 = vadd.f32 %v5700, %v5701
        %v5703 = vsel %vm913, %v5645, 0.0
        %v5704 = vadd.f32 %v5702, %v5703
        %v5705 = vsel %vm913, %v5646, 0.0
        %v5706 = vadd.f32 %v5704, %v5705
        %v5707 = vsel %vm913, %v5647, 0.0
        %v5708 = vadd.f32 %v5706, %v5707
        %v5709 = vsel %vm913, %v5648, 0.0
        %v5710 = vadd.f32 %v5708, %v5709
        %v5711 = vsel %vm913, %v5649, 0.0
        %v5712 = vadd.f32 %v5710, %v5711
        %v5713 = vrot.slane %v5712, 4
        %v5714 = vadd.f32 %v5712, %v5713
        %v5715 = vrot.slane %v5714, 2
        %v5716 = vadd.f32 %v5714, %v5715
        %v5717 = vrot.slane %v5716, 1
        %v5718 = vadd.f32 %v5716, %v5717
        %v5719 = vsel %vm2666, %v5617, %v5718
        %v5721 = vsel %vm913, %v5719, 0
        %5723 = vmatpush.msra.mxu0 0.0
        %5724 = vmatpush.msra.mxu0 0.0
        %5725 = vmatpush.msra.mxu0 0.0
        %5726 = vmatpush.msra.mxu0 0.0
        %5727 = vmatpush.msra.mxu0 0.0
        %5728 = vmatpush.msra.mxu0 0.0
        %5729 = vmatpush.msra.mxu0 0.0
        %5730 = vmatpush.msra.mxu0 0.0
        %5731 = vmatpush.msra.mxu0 0.0
        %5732 = vmatpush.msra.mxu0 0.0
        %5733 = vmatpush.msra.mxu0 0.0
        %5734 = vmatpush.msra.mxu0 0.0
        %5735 = vmatpush.msra.mxu0 %v416
        %5736 = vmatpush.msra.mxu0 %v415
        %5737 = vmatpush.msra.mxu0 %v414
        %5738 = vmatpush.msra.mxu0 %v413
        %5739 = vmatmul.f32.gmra.mxu0 %v5721
        %v5740 = vpop.f32.mrf.mxu0
        %v5741 = vadd.f32 0.0, %v5740
        %5742 = vdwg.mxu0
        %v5743 = vmul.f32 %v5741, 0.0009765625
        %v5744 = vmul.f32 %v5743, %v5743
        %v5746 = vrot.slane %v5744, 7
        %v5748 = vsub.f32 %v5743, %v5746
        %v5749 = vmax.f32 %v5748, 0.0
        %v5750 = vadd.f32 %v5749, 1e-05
        %v5751 = vrsqrt.pop %v5750
        %v5752 = vmul.f32 %v5751, %v5750
        %v5753 = vmul.f32 %v5752, %v5751
        %v5754 = vmul.f32 0.5, %v5753
        %v5755 = vsub.f32 1.5, %v5754
        %v5756 = vmul.f32 %v5751, %v5755
        %vm5757 = vweird.f32 %v5750
        %vm5758 = vweird.f32 %v5751
        %vm5759 = vmor %vm5757, %vm5758
        %v5760 = vsel %vm5759, %v5751, %v5756
        %v5761 = vperm.slane %v5743, 0
        %v5762 = vsub.f32 %v5515, %v5761
        %v5763 = vsub.f32 %v5516, %v5761
        %v5764 = vsub.f32 %v5517, %v5761
        %v5765 = vsub.f32 %v5518, %v5761
        %v5766 = vsub.f32 %v5519, %v5761
        %v5767 = vsub.f32 %v5520, %v5761
        %v5768 = vsub.f32 %v5521, %v5761
        %v5769 = vsub.f32 %v5522, %v5761
        %v5770 = vsub.f32 %v5523, %v5761
        %v5771 = vsub.f32 %v5524, %v5761
        %v5772 = vsub.f32 %v5525, %v5761
        %v5773 = vsub.f32 %v5526, %v5761
        %v5774 = vsub.f32 %v5527, %v5761
        %v5775 = vsub.f32 %v5528, %v5761
        %v5776 = vsub.f32 %v5529, %v5761
        %v5777 = vsub.f32 %v5530, %v5761
        %v5778 = vsub.f32 %v5531, %v5761
        %v5779 = vsub.f32 %v5532, %v5761
        %v5780 = vsub.f32 %v5533, %v5761
        %v5781 = vsub.f32 %v5534, %v5761
        %v5782 = vsub.f32 %v5535, %v5761
        %v5783 = vsub.f32 %v5536, %v5761
        %v5784 = vsub.f32 %v5537, %v5761
        %v5785 = vsub.f32 %v5538, %v5761
        %v5786 = vsub.f32 %v5539, %v5761
        %v5787 = vsub.f32 %v5540, %v5761
        %v5788 = vsub.f32 %v5541, %v5761
        %v5789 = vsub.f32 %v5542, %v5761
        %v5790 = vsub.f32 %v5543, %v5761
        %v5791 = vsub.f32 %v5544, %v5761
        %v5792 = vsub.f32 %v5545, %v5761
        %v5793 = vsub.f32 %v5546, %v5761
        %v5794 = vperm.slane %v5760, 1
        %v5795 = vmul.f32 %v5762, %v5794
        %v5796 = vmul.f32 %v5763, %v5794
        %v5797 = vmul.f32 %v5764, %v5794
        %v5798 = vmul.f32 %v5765, %v5794
        %v5799 = vmul.f32 %v5766, %v5794
        %v5800 = vmul.f32 %v5767, %v5794
        %v5801 = vmul.f32 %v5768, %v5794
        %v5802 = vmul.f32 %v5769, %v5794
        %v5803 = vmul.f32 %v5770, %v5794
        %v5804 = vmul.f32 %v5771, %v5794
        %v5805 = vmul.f32 %v5772, %v5794
        %v5806 = vmul.f32 %v5773, %v5794
        %v5807 = vmul.f32 %v5774, %v5794
        %v5808 = vmul.f32 %v5775, %v5794
        %v5809 = vmul.f32 %v5776, %v5794
        %v5810 = vmul.f32 %v5777, %v5794
        %v5811 = vmul.f32 %v5778, %v5794
        %v5812 = vmul.f32 %v5779, %v5794
        %v5813 = vmul.f32 %v5780, %v5794
        %v5814 = vmul.f32 %v5781, %v5794
        %v5815 = vmul.f32 %v5782, %v5794
        %v5816 = vmul.f32 %v5783, %v5794
        %v5817 = vmul.f32 %v5784, %v5794
        %v5818 = vmul.f32 %v5785, %v5794
        %v5819 = vmul.f32 %v5786, %v5794
        %v5820 = vmul.f32 %v5787, %v5794
        %v5821 = vmul.f32 %v5788, %v5794
        %v5822 = vmul.f32 %v5789, %v5794
        %v5823 = vmul.f32 %v5790, %v5794
        %v5824 = vmul.f32 %v5791, %v5794
        %v5825 = vmul.f32 %v5792, %v5794
        %v5826 = vmul.f32 %v5793, %v5794
        %v5828 = vperm.slane %v5547, 0
        %v5830 = vmul.f32 %v5795, %v5828
        %v5831 = vmul.f32 %v5796, %v5828
        %v5832 = vmul.f32 %v5797, %v5828
        %v5833 = vmul.f32 %v5798, %v5828
        %v5834 = vmul.f32 %v5799, %v5828
        %v5835 = vmul.f32 %v5800, %v5828
        %v5836 = vmul.f32 %v5801, %v5828
        %v5837 = vmul.f32 %v5802, %v5828
        %v5838 = vmul.f32 %v5803, %v5828
        %v5839 = vmul.f32 %v5804, %v5828
        %v5840 = vmul.f32 %v5805, %v5828
        %v5841 = vmul.f32 %v5806, %v5828
        %v5842 = vmul.f32 %v5807, %v5828
        %v5843 = vmul.f32 %v5808, %v5828
        %v5844 = vmul.f32 %v5809, %v5828
        %v5845 = vmul.f32 %v5810, %v5828
        %v5846 = vmul.f32 %v5811, %v5828
        %v5847 = vmul.f32 %v5812, %v5828
        %v5848 = vmul.f32 %v5813, %v5828
        %v5849 = vmul.f32 %v5814, %v5828
        %v5850 = vmul.f32 %v5815, %v5828
        %v5851 = vmul.f32 %v5816, %v5828
        %v5852 = vmul.f32 %v5817, %v5828
        %v5853 = vmul.f32 %v5818, %v5828
        %v5854 = vmul.f32 %v5819, %v5828
        %v5855 = vmul.f32 %v5820, %v5828
        %v5856 = vmul.f32 %v5821, %v5828
        %v5857 = vmul.f32 %v5822, %v5828
        %v5858 = vmul.f32 %v5823, %v5828
        %v5859 = vmul.f32 %v5824, %v5828
        %v5860 = vmul.f32 %v5825, %v5828
        %v5861 = vmul.f32 %v5826, %v5828
        %v5863 = vperm.slane %v5548, 0
        %v5865 = vadd.f32 %v5830, %v5863
        %v5866 = vadd.f32 %v5831, %v5863
        %v5867 = vadd.f32 %v5832, %v5863
        %v5868 = vadd.f32 %v5833, %v5863
        %v5869 = vadd.f32 %v5834, %v5863
        %v5870 = vadd.f32 %v5835, %v5863
        %v5871 = vadd.f32 %v5836, %v5863
        %v5872 = vadd.f32 %v5837, %v5863
        %v5873 = vadd.f32 %v5838, %v5863
        %v5874 = vadd.f32 %v5839, %v5863
        %v5875 = vadd.f32 %v5840, %v5863
        %v5876 = vadd.f32 %v5841, %v5863
        %v5877 = vadd.f32 %v5842, %v5863
        %v5878 = vadd.f32 %v5843, %v5863
        %v5879 = vadd.f32 %v5844, %v5863
        %v5880 = vadd.f32 %v5845, %v5863
        %v5881 = vadd.f32 %v5846, %v5863
        %v5882 = vadd.f32 %v5847, %v5863
        %v5883 = vadd.f32 %v5848, %v5863
        %v5884 = vadd.f32 %v5849, %v5863
        %v5885 = vadd.f32 %v5850, %v5863
        %v5886 = vadd.f32 %v5851, %v5863
        %v5887 = vadd.f32 %v5852, %v5863
        %v5888 = vadd.f32 %v5853, %v5863
        %v5889 = vadd.f32 %v5854, %v5863
        %v5890 = vadd.f32 %v5855, %v5863
        %v5891 = vadd.f32 %v5856, %v5863
        %v5892 = vadd.f32 %v5857, %v5863
        %v5893 = vadd.f32 %v5858, %v5863
        %v5894 = vadd.f32 %v5859, %v5863
        %v5895 = vadd.f32 %v5860, %v5863
        %v5896 = vadd.f32 %v5861, %v5863
        %v5897 = vxor.u32 %v5865, 2147483648
        %v5898 = vxor.u32 %v5866, 2147483648
        %v5899 = vxor.u32 %v5867, 2147483648
        %v5900 = vxor.u32 %v5868, 2147483648
        %v5901 = vxor.u32 %v5869, 2147483648
        %v5902 = vxor.u32 %v5870, 2147483648
        %v5903 = vxor.u32 %v5871, 2147483648
        %v5904 = vxor.u32 %v5872, 2147483648
        %v5905 = vxor.u32 %v5873, 2147483648
        %v5906 = vxor.u32 %v5874, 2147483648
        %v5907 = vxor.u32 %v5875, 2147483648
        %v5908 = vxor.u32 %v5876, 2147483648
        %v5909 = vxor.u32 %v5877, 2147483648
        %v5910 = vxor.u32 %v5878, 2147483648
        %v5911 = vxor.u32 %v5879, 2147483648
        %v5912 = vxor.u32 %v5880, 2147483648
        %v5913 = vxor.u32 %v5881, 2147483648
        %v5914 = vxor.u32 %v5882, 2147483648
        %v5915 = vxor.u32 %v5883, 2147483648
        %v5916 = vxor.u32 %v5884, 2147483648
        %v5917 = vxor.u32 %v5885, 2147483648
        %v5918 = vxor.u32 %v5886, 2147483648
        %v5919 = vxor.u32 %v5887, 2147483648
        %v5920 = vxor.u32 %v5888, 2147483648
        %v5921 = vxor.u32 %v5889, 2147483648
        %v5922 = vxor.u32 %v5890, 2147483648
        %v5923 = vxor.u32 %v5891, 2147483648
        %v5924 = vxor.u32 %v5892, 2147483648
        %v5925 = vxor.u32 %v5893, 2147483648
        %v5926 = vxor.u32 %v5894, 2147483648
        %v5927 = vxor.u32 %v5895, 2147483648
        %v5928 = vxor.u32 %v5896, 2147483648
        %v5929 = vmul.f32 %v5897, 1.442695
        %v5930 = vpow.pop %v5929
        %v5931 = vmul.f32 %v5898, 1.442695
        %v5932 = vpow.pop %v5931
        %v5933 = vmul.f32 %v5899, 1.442695
        %v5934 = vpow.pop %v5933
        %v5935 = vmul.f32 %v5900, 1.442695
        %v5936 = vpow.pop %v5935
        %v5937 = vmul.f32 %v5901, 1.442695
        %v5938 = vpow.pop %v5937
        %v5939 = vmul.f32 %v5902, 1.442695
        %v5940 = vpow.pop %v5939
        %v5941 = vmul.f32 %v5903, 1.442695
        %v5942 = vpow.pop %v5941
        %v5943 = vmul.f32 %v5904, 1.442695
        %v5944 = vpow.pop %v5943
        %v5945 = vmul.f32 %v5905, 1.442695
        %v5946 = vpow.pop %v5945
        %v5947 = vmul.f32 %v5906, 1.442695
        %v5948 = vpow.pop %v5947
        %v5949 = vmul.f32 %v5907, 1.442695
        %v5950 = vpow.pop %v5949
        %v5951 = vmul.f32 %v5908, 1.442695
        %v5952 = vpow.pop %v5951
        %v5953 = vmul.f32 %v5909, 1.442695
        %v5954 = vpow.pop %v5953
        %v5955 = vmul.f32 %v5910, 1.442695
        %v5956 = vpow.pop %v5955
        %v5957 = vmul.f32 %v5911, 1.442695
        %v5958 = vpow.pop %v5957
        %v5959 = vmul.f32 %v5912, 1.442695
        %v5960 = vpow.pop %v5959
        %v5961 = vmul.f32 %v5913, 1.442695
        %v5962 = vpow.pop %v5961
        %v5963 = vmul.f32 %v5914, 1.442695
        %v5964 = vpow.pop %v5963
        %v5965 = vmul.f32 %v5915, 1.442695
        %v5966 = vpow.pop %v5965
        %v5967 = vmul.f32 %v5916, 1.442695
        %v5968 = vpow.pop %v5967
        %v5969 = vmul.f32 %v5917, 1.442695
        %v5970 = vpow.pop %v5969
        %v5971 = vmul.f32 %v5918, 1.442695
        %v5972 = vpow.pop %v5971
        %v5973 = vmul.f32 %v5919, 1.442695
        %v5974 = vpow.pop %v5973
        %v5975 = vmul.f32 %v5920, 1.442695
        %v5976 = vpow.pop %v5975
        %v5977 = vmul.f32 %v5921, 1.442695
        %v5978 = vpow.pop %v5977
        %v5979 = vmul.f32 %v5922, 1.442695
        %v5980 = vpow.pop %v5979
        %v5981 = vmul.f32 %v5923, 1.442695
        %v5982 = vpow.pop %v5981
        %v5983 = vmul.f32 %v5924, 1.442695
        %v5984 = vpow.pop %v5983
        %v5985 = vmul.f32 %v5925, 1.442695
        %v5986 = vpow.pop %v5985
        %v5987 = vmul.f32 %v5926, 1.442695
        %v5988 = vpow.pop %v5987
        %v5989 = vmul.f32 %v5927, 1.442695
        %v5990 = vpow.pop %v5989
        %v5991 = vmul.f32 %v5928, 1.442695
        %v5992 = vpow.pop %v5991
        %v5993 = vadd.f32 %v5930, 1.0
        %v5994 = vadd.f32 %v5932, 1.0
        %v5995 = vadd.f32 %v5934, 1.0
        %v5996 = vadd.f32 %v5936, 1.0
        %v5997 = vadd.f32 %v5938, 1.0
        %v5998 = vadd.f32 %v5940, 1.0
        %v5999 = vadd.f32 %v5942, 1.0
        %v6000 = vadd.f32 %v5944, 1.0
        %v6001 = vadd.f32 %v5946, 1.0
        %v6002 = vadd.f32 %v5948, 1.0
        %v6003 = vadd.f32 %v5950, 1.0
        %v6004 = vadd.f32 %v5952, 1.0
        %v6005 = vadd.f32 %v5954, 1.0
        %v6006 = vadd.f32 %v5956, 1.0
        %v6007 = vadd.f32 %v5958, 1.0
        %v6008 = vadd.f32 %v5960, 1.0
        %v6009 = vadd.f32 %v5962, 1.0
        %v6010 = vadd.f32 %v5964, 1.0
        %v6011 = vadd.f32 %v5966, 1.0
        %v6012 = vadd.f32 %v5968, 1.0
        %v6013 = vadd.f32 %v5970, 1.0
        %v6014 = vadd.f32 %v5972, 1.0
        %v6015 = vadd.f32 %v5974, 1.0
        %v6016 = vadd.f32 %v5976, 1.0
        %v6017 = vadd.f32 %v5978, 1.0
        %v6018 = vadd.f32 %v5980, 1.0
        %v6019 = vadd.f32 %v5982, 1.0
        %v6020 = vadd.f32 %v5984, 1.0
        %v6021 = vadd.f32 %v5986, 1.0
        %v6022 = vadd.f32 %v5988, 1.0
        %v6023 = vadd.f32 %v5990, 1.0
        %v6024 = vadd.f32 %v5992, 1.0
        %v6025 = vrcp.pop %v5993
        %v6026 = vmul.f32 %v5993, %v6025
        %v6027 = vsub.f32 1.0, %v6026
        %v6028 = vmul.f32 %v6025, %v6027
        %v6029 = vadd.f32 %v6025, %v6028
        %vm6030 = vweird.f32 %v5993
        %vm6031 = vweird.f32 %v6025
        %vm6032 = vmor %vm6030, %vm6031
        %v6033 = vsel %vm6032, %v6025, %v6029
        %v6034 = vand.u32 2147483647, %v5993
        %vm6035 = vcmp.eq.f32.partialorder %v6034, 8.507059e+37
        %v6036 = vand.u32 %v5993, 2147483648
        %v6037 = vor.u32 1.1754944e-38, %v6036
        %v6038 = vsel %vm6035, %v6037, %v6033
        %v6039 = vmul.f32 1.0, %v6038
        %v6040 = vrcp.pop %v5994
        %v6041 = vmul.f32 %v5994, %v6040
        %v6042 = vsub.f32 1.0, %v6041
        %v6043 = vmul.f32 %v6040, %v6042
        %v6044 = vadd.f32 %v6040, %v6043
        %vm6045 = vweird.f32 %v5994
        %vm6046 = vweird.f32 %v6040
        %vm6047 = vmor %vm6045, %vm6046
        %v6048 = vsel %vm6047, %v6040, %v6044
        %v6049 = vand.u32 2147483647, %v5994
        %vm6050 = vcmp.eq.f32.partialorder %v6049, 8.507059e+37
        %v6051 = vand.u32 %v5994, 2147483648
        %v6052 = vor.u32 1.1754944e-38, %v6051
        %v6053 = vsel %vm6050, %v6052, %v6048
        %v6054 = vmul.f32 1.0, %v6053
        %v6055 = vrcp.pop %v5995
        %v6056 = vmul.f32 %v5995, %v6055
        %v6057 = vsub.f32 1.0, %v6056
        %v6058 = vmul.f32 %v6055, %v6057
        %v6059 = vadd.f32 %v6055, %v6058
        %vm6060 = vweird.f32 %v5995
        %vm6061 = vweird.f32 %v6055
        %vm6062 = vmor %vm6060, %vm6061
        %v6063 = vsel %vm6062, %v6055, %v6059
        %v6064 = vand.u32 2147483647, %v5995
        %vm6065 = vcmp.eq.f32.partialorder %v6064, 8.507059e+37
        %v6066 = vand.u32 %v5995, 2147483648
        %v6067 = vor.u32 1.1754944e-38, %v6066
        %v6068 = vsel %vm6065, %v6067, %v6063
        %v6069 = vmul.f32 1.0, %v6068
        %v6070 = vrcp.pop %v5996
        %v6071 = vmul.f32 %v5996, %v6070
        %v6072 = vsub.f32 1.0, %v6071
        %v6073 = vmul.f32 %v6070, %v6072
        %v6074 = vadd.f32 %v6070, %v6073
        %vm6075 = vweird.f32 %v5996
        %vm6076 = vweird.f32 %v6070
        %vm6077 = vmor %vm6075, %vm6076
        %v6078 = vsel %vm6077, %v6070, %v6074
        %v6079 = vand.u32 2147483647, %v5996
        %vm6080 = vcmp.eq.f32.partialorder %v6079, 8.507059e+37
        %v6081 = vand.u32 %v5996, 2147483648
        %v6082 = vor.u32 1.1754944e-38, %v6081
        %v6083 = vsel %vm6080, %v6082, %v6078
        %v6084 = vmul.f32 1.0, %v6083
        %v6085 = vrcp.pop %v5997
        %v6086 = vmul.f32 %v5997, %v6085
        %v6087 = vsub.f32 1.0, %v6086
        %v6088 = vmul.f32 %v6085, %v6087
        %v6089 = vadd.f32 %v6085, %v6088
        %vm6090 = vweird.f32 %v5997
        %vm6091 = vweird.f32 %v6085
        %vm6092 = vmor %vm6090, %vm6091
        %v6093 = vsel %vm6092, %v6085, %v6089
        %v6094 = vand.u32 2147483647, %v5997
        %vm6095 = vcmp.eq.f32.partialorder %v6094, 8.507059e+37
        %v6096 = vand.u32 %v5997, 2147483648
        %v6097 = vor.u32 1.1754944e-38, %v6096
        %v6098 = vsel %vm6095, %v6097, %v6093
        %v6099 = vmul.f32 1.0, %v6098
        %v6100 = vrcp.pop %v5998
        %v6101 = vmul.f32 %v5998, %v6100
        %v6102 = vsub.f32 1.0, %v6101
        %v6103 = vmul.f32 %v6100, %v6102
        %v6104 = vadd.f32 %v6100, %v6103
        %vm6105 = vweird.f32 %v5998
        %vm6106 = vweird.f32 %v6100
        %vm6107 = vmor %vm6105, %vm6106
        %v6108 = vsel %vm6107, %v6100, %v6104
        %v6109 = vand.u32 2147483647, %v5998
        %vm6110 = vcmp.eq.f32.partialorder %v6109, 8.507059e+37
        %v6111 = vand.u32 %v5998, 2147483648
        %v6112 = vor.u32 1.1754944e-38, %v6111
        %v6113 = vsel %vm6110, %v6112, %v6108
        %v6114 = vmul.f32 1.0, %v6113
        %v6115 = vrcp.pop %v5999
        %v6116 = vmul.f32 %v5999, %v6115
        %v6117 = vsub.f32 1.0, %v6116
        %v6118 = vmul.f32 %v6115, %v6117
        %v6119 = vadd.f32 %v6115, %v6118
        %vm6120 = vweird.f32 %v5999
        %vm6121 = vweird.f32 %v6115
        %vm6122 = vmor %vm6120, %vm6121
        %v6123 = vsel %vm6122, %v6115, %v6119
        %v6124 = vand.u32 2147483647, %v5999
        %vm6125 = vcmp.eq.f32.partialorder %v6124, 8.507059e+37
        %v6126 = vand.u32 %v5999, 2147483648
        %v6127 = vor.u32 1.1754944e-38, %v6126
        %v6128 = vsel %vm6125, %v6127, %v6123
        %v6129 = vmul.f32 1.0, %v6128
        %v6130 = vrcp.pop %v6000
        %v6131 = vmul.f32 %v6000, %v6130
        %v6132 = vsub.f32 1.0, %v6131
        %v6133 = vmul.f32 %v6130, %v6132
        %v6134 = vadd.f32 %v6130, %v6133
        %vm6135 = vweird.f32 %v6000
        %vm6136 = vweird.f32 %v6130
        %vm6137 = vmor %vm6135, %vm6136
        %v6138 = vsel %vm6137, %v6130, %v6134
        %v6139 = vand.u32 2147483647, %v6000
        %vm6140 = vcmp.eq.f32.partialorder %v6139, 8.507059e+37
        %v6141 = vand.u32 %v6000, 2147483648
        %v6142 = vor.u32 1.1754944e-38, %v6141
        %v6143 = vsel %vm6140, %v6142, %v6138
        %v6144 = vmul.f32 1.0, %v6143
        %v6145 = vrcp.pop %v6001
        %v6146 = vmul.f32 %v6001, %v6145
        %v6147 = vsub.f32 1.0, %v6146
        %v6148 = vmul.f32 %v6145, %v6147
        %v6149 = vadd.f32 %v6145, %v6148
        %vm6150 = vweird.f32 %v6001
        %vm6151 = vweird.f32 %v6145
        %vm6152 = vmor %vm6150, %vm6151
        %v6153 = vsel %vm6152, %v6145, %v6149
        %v6154 = vand.u32 2147483647, %v6001
        %vm6155 = vcmp.eq.f32.partialorder %v6154, 8.507059e+37
        %v6156 = vand.u32 %v6001, 2147483648
        %v6157 = vor.u32 1.1754944e-38, %v6156
        %v6158 = vsel %vm6155, %v6157, %v6153
        %v6159 = vmul.f32 1.0, %v6158
        %v6160 = vrcp.pop %v6002
        %v6161 = vmul.f32 %v6002, %v6160
        %v6162 = vsub.f32 1.0, %v6161
        %v6163 = vmul.f32 %v6160, %v6162
        %v6164 = vadd.f32 %v6160, %v6163
        %vm6165 = vweird.f32 %v6002
        %vm6166 = vweird.f32 %v6160
        %vm6167 = vmor %vm6165, %vm6166
        %v6168 = vsel %vm6167, %v6160, %v6164
        %v6169 = vand.u32 2147483647, %v6002
        %vm6170 = vcmp.eq.f32.partialorder %v6169, 8.507059e+37
        %v6171 = vand.u32 %v6002, 2147483648
        %v6172 = vor.u32 1.1754944e-38, %v6171
        %v6173 = vsel %vm6170, %v6172, %v6168
        %v6174 = vmul.f32 1.0, %v6173
        %v6175 = vrcp.pop %v6003
        %v6176 = vmul.f32 %v6003, %v6175
        %v6177 = vsub.f32 1.0, %v6176
        %v6178 = vmul.f32 %v6175, %v6177
        %v6179 = vadd.f32 %v6175, %v6178
        %vm6180 = vweird.f32 %v6003
        %vm6181 = vweird.f32 %v6175
        %vm6182 = vmor %vm6180, %vm6181
        %v6183 = vsel %vm6182, %v6175, %v6179
        %v6184 = vand.u32 2147483647, %v6003
        %vm6185 = vcmp.eq.f32.partialorder %v6184, 8.507059e+37
        %v6186 = vand.u32 %v6003, 2147483648
        %v6187 = vor.u32 1.1754944e-38, %v6186
        %v6188 = vsel %vm6185, %v6187, %v6183
        %v6189 = vmul.f32 1.0, %v6188
        %v6190 = vrcp.pop %v6004
        %v6191 = vmul.f32 %v6004, %v6190
        %v6192 = vsub.f32 1.0, %v6191
        %v6193 = vmul.f32 %v6190, %v6192
        %v6194 = vadd.f32 %v6190, %v6193
        %vm6195 = vweird.f32 %v6004
        %vm6196 = vweird.f32 %v6190
        %vm6197 = vmor %vm6195, %vm6196
        %v6198 = vsel %vm6197, %v6190, %v6194
        %v6199 = vand.u32 2147483647, %v6004
        %vm6200 = vcmp.eq.f32.partialorder %v6199, 8.507059e+37
        %v6201 = vand.u32 %v6004, 2147483648
        %v6202 = vor.u32 1.1754944e-38, %v6201
        %v6203 = vsel %vm6200, %v6202, %v6198
        %v6204 = vmul.f32 1.0, %v6203
        %v6205 = vrcp.pop %v6005
        %v6206 = vmul.f32 %v6005, %v6205
        %v6207 = vsub.f32 1.0, %v6206
        %v6208 = vmul.f32 %v6205, %v6207
        %v6209 = vadd.f32 %v6205, %v6208
        %vm6210 = vweird.f32 %v6005
        %vm6211 = vweird.f32 %v6205
        %vm6212 = vmor %vm6210, %vm6211
        %v6213 = vsel %vm6212, %v6205, %v6209
        %v6214 = vand.u32 2147483647, %v6005
        %vm6215 = vcmp.eq.f32.partialorder %v6214, 8.507059e+37
        %v6216 = vand.u32 %v6005, 2147483648
        %v6217 = vor.u32 1.1754944e-38, %v6216
        %v6218 = vsel %vm6215, %v6217, %v6213
        %v6219 = vmul.f32 1.0, %v6218
        %v6220 = vrcp.pop %v6006
        %v6221 = vmul.f32 %v6006, %v6220
        %v6222 = vsub.f32 1.0, %v6221
        %v6223 = vmul.f32 %v6220, %v6222
        %v6224 = vadd.f32 %v6220, %v6223
        %vm6225 = vweird.f32 %v6006
        %vm6226 = vweird.f32 %v6220
        %vm6227 = vmor %vm6225, %vm6226
        %v6228 = vsel %vm6227, %v6220, %v6224
        %v6229 = vand.u32 2147483647, %v6006
        %vm6230 = vcmp.eq.f32.partialorder %v6229, 8.507059e+37
        %v6231 = vand.u32 %v6006, 2147483648
        %v6232 = vor.u32 1.1754944e-38, %v6231
        %v6233 = vsel %vm6230, %v6232, %v6228
        %v6234 = vmul.f32 1.0, %v6233
        %v6235 = vrcp.pop %v6007
        %v6236 = vmul.f32 %v6007, %v6235
        %v6237 = vsub.f32 1.0, %v6236
        %v6238 = vmul.f32 %v6235, %v6237
        %v6239 = vadd.f32 %v6235, %v6238
        %vm6240 = vweird.f32 %v6007
        %vm6241 = vweird.f32 %v6235
        %vm6242 = vmor %vm6240, %vm6241
        %v6243 = vsel %vm6242, %v6235, %v6239
        %v6244 = vand.u32 2147483647, %v6007
        %vm6245 = vcmp.eq.f32.partialorder %v6244, 8.507059e+37
        %v6246 = vand.u32 %v6007, 2147483648
        %v6247 = vor.u32 1.1754944e-38, %v6246
        %v6248 = vsel %vm6245, %v6247, %v6243
        %v6249 = vmul.f32 1.0, %v6248
        %v6250 = vrcp.pop %v6008
        %v6251 = vmul.f32 %v6008, %v6250
        %v6252 = vsub.f32 1.0, %v6251
        %v6253 = vmul.f32 %v6250, %v6252
        %v6254 = vadd.f32 %v6250, %v6253
        %vm6255 = vweird.f32 %v6008
        %vm6256 = vweird.f32 %v6250
        %vm6257 = vmor %vm6255, %vm6256
        %v6258 = vsel %vm6257, %v6250, %v6254
        %v6259 = vand.u32 2147483647, %v6008
        %vm6260 = vcmp.eq.f32.partialorder %v6259, 8.507059e+37
        %v6261 = vand.u32 %v6008, 2147483648
        %v6262 = vor.u32 1.1754944e-38, %v6261
        %v6263 = vsel %vm6260, %v6262, %v6258
        %v6264 = vmul.f32 1.0, %v6263
        %v6265 = vrcp.pop %v6009
        %v6266 = vmul.f32 %v6009, %v6265
        %v6267 = vsub.f32 1.0, %v6266
        %v6268 = vmul.f32 %v6265, %v6267
        %v6269 = vadd.f32 %v6265, %v6268
        %vm6270 = vweird.f32 %v6009
        %vm6271 = vweird.f32 %v6265
        %vm6272 = vmor %vm6270, %vm6271
        %v6273 = vsel %vm6272, %v6265, %v6269
        %v6274 = vand.u32 2147483647, %v6009
        %vm6275 = vcmp.eq.f32.partialorder %v6274, 8.507059e+37
        %v6276 = vand.u32 %v6009, 2147483648
        %v6277 = vor.u32 1.1754944e-38, %v6276
        %v6278 = vsel %vm6275, %v6277, %v6273
        %v6279 = vmul.f32 1.0, %v6278
        %v6280 = vrcp.pop %v6010
        %v6281 = vmul.f32 %v6010, %v6280
        %v6282 = vsub.f32 1.0, %v6281
        %v6283 = vmul.f32 %v6280, %v6282
        %v6284 = vadd.f32 %v6280, %v6283
        %vm6285 = vweird.f32 %v6010
        %vm6286 = vweird.f32 %v6280
        %vm6287 = vmor %vm6285, %vm6286
        %v6288 = vsel %vm6287, %v6280, %v6284
        %v6289 = vand.u32 2147483647, %v6010
        %vm6290 = vcmp.eq.f32.partialorder %v6289, 8.507059e+37
        %v6291 = vand.u32 %v6010, 2147483648
        %v6292 = vor.u32 1.1754944e-38, %v6291
        %v6293 = vsel %vm6290, %v6292, %v6288
        %v6294 = vmul.f32 1.0, %v6293
        %v6295 = vrcp.pop %v6011
        %v6296 = vmul.f32 %v6011, %v6295
        %v6297 = vsub.f32 1.0, %v6296
        %v6298 = vmul.f32 %v6295, %v6297
        %v6299 = vadd.f32 %v6295, %v6298
        %vm6300 = vweird.f32 %v6011
        %vm6301 = vweird.f32 %v6295
        %vm6302 = vmor %vm6300, %vm6301
        %v6303 = vsel %vm6302, %v6295, %v6299
        %v6304 = vand.u32 2147483647, %v6011
        %vm6305 = vcmp.eq.f32.partialorder %v6304, 8.507059e+37
        %v6306 = vand.u32 %v6011, 2147483648
        %v6307 = vor.u32 1.1754944e-38, %v6306
        %v6308 = vsel %vm6305, %v6307, %v6303
        %v6309 = vmul.f32 1.0, %v6308
        %v6310 = vrcp.pop %v6012
        %v6311 = vmul.f32 %v6012, %v6310
        %v6312 = vsub.f32 1.0, %v6311
        %v6313 = vmul.f32 %v6310, %v6312
        %v6314 = vadd.f32 %v6310, %v6313
        %vm6315 = vweird.f32 %v6012
        %vm6316 = vweird.f32 %v6310
        %vm6317 = vmor %vm6315, %vm6316
        %v6318 = vsel %vm6317, %v6310, %v6314
        %v6319 = vand.u32 2147483647, %v6012
        %vm6320 = vcmp.eq.f32.partialorder %v6319, 8.507059e+37
        %v6321 = vand.u32 %v6012, 2147483648
        %v6322 = vor.u32 1.1754944e-38, %v6321
        %v6323 = vsel %vm6320, %v6322, %v6318
        %v6324 = vmul.f32 1.0, %v6323
        %v6325 = vrcp.pop %v6013
        %v6326 = vmul.f32 %v6013, %v6325
        %v6327 = vsub.f32 1.0, %v6326
        %v6328 = vmul.f32 %v6325, %v6327
        %v6329 = vadd.f32 %v6325, %v6328
        %vm6330 = vweird.f32 %v6013
        %vm6331 = vweird.f32 %v6325
        %vm6332 = vmor %vm6330, %vm6331
        %v6333 = vsel %vm6332, %v6325, %v6329
        %v6334 = vand.u32 2147483647, %v6013
        %vm6335 = vcmp.eq.f32.partialorder %v6334, 8.507059e+37
        %v6336 = vand.u32 %v6013, 2147483648
        %v6337 = vor.u32 1.1754944e-38, %v6336
        %v6338 = vsel %vm6335, %v6337, %v6333
        %v6339 = vmul.f32 1.0, %v6338
        %v6340 = vrcp.pop %v6014
        %v6341 = vmul.f32 %v6014, %v6340
        %v6342 = vsub.f32 1.0, %v6341
        %v6343 = vmul.f32 %v6340, %v6342
        %v6344 = vadd.f32 %v6340, %v6343
        %vm6345 = vweird.f32 %v6014
        %vm6346 = vweird.f32 %v6340
        %vm6347 = vmor %vm6345, %vm6346
        %v6348 = vsel %vm6347, %v6340, %v6344
        %v6349 = vand.u32 2147483647, %v6014
        %vm6350 = vcmp.eq.f32.partialorder %v6349, 8.507059e+37
        %v6351 = vand.u32 %v6014, 2147483648
        %v6352 = vor.u32 1.1754944e-38, %v6351
        %v6353 = vsel %vm6350, %v6352, %v6348
        %v6354 = vmul.f32 1.0, %v6353
        %v6355 = vrcp.pop %v6015
        %v6356 = vmul.f32 %v6015, %v6355
        %v6357 = vsub.f32 1.0, %v6356
        %v6358 = vmul.f32 %v6355, %v6357
        %v6359 = vadd.f32 %v6355, %v6358
        %vm6360 = vweird.f32 %v6015
        %vm6361 = vweird.f32 %v6355
        %vm6362 = vmor %vm6360, %vm6361
        %v6363 = vsel %vm6362, %v6355, %v6359
        %v6364 = vand.u32 2147483647, %v6015
        %vm6365 = vcmp.eq.f32.partialorder %v6364, 8.507059e+37
        %v6366 = vand.u32 %v6015, 2147483648
        %v6367 = vor.u32 1.1754944e-38, %v6366
        %v6368 = vsel %vm6365, %v6367, %v6363
        %v6369 = vmul.f32 1.0, %v6368
        %v6370 = vrcp.pop %v6016
        %v6371 = vmul.f32 %v6016, %v6370
        %v6372 = vsub.f32 1.0, %v6371
        %v6373 = vmul.f32 %v6370, %v6372
        %v6374 = vadd.f32 %v6370, %v6373
        %vm6375 = vweird.f32 %v6016
        %vm6376 = vweird.f32 %v6370
        %vm6377 = vmor %vm6375, %vm6376
        %v6378 = vsel %vm6377, %v6370, %v6374
        %v6379 = vand.u32 2147483647, %v6016
        %vm6380 = vcmp.eq.f32.partialorder %v6379, 8.507059e+37
        %v6381 = vand.u32 %v6016, 2147483648
        %v6382 = vor.u32 1.1754944e-38, %v6381
        %v6383 = vsel %vm6380, %v6382, %v6378
        %v6384 = vmul.f32 1.0, %v6383
        %v6385 = vrcp.pop %v6017
        %v6386 = vmul.f32 %v6017, %v6385
        %v6387 = vsub.f32 1.0, %v6386
        %v6388 = vmul.f32 %v6385, %v6387
        %v6389 = vadd.f32 %v6385, %v6388
        %vm6390 = vweird.f32 %v6017
        %vm6391 = vweird.f32 %v6385
        %vm6392 = vmor %vm6390, %vm6391
        %v6393 = vsel %vm6392, %v6385, %v6389
        %v6394 = vand.u32 2147483647, %v6017
        %vm6395 = vcmp.eq.f32.partialorder %v6394, 8.507059e+37
        %v6396 = vand.u32 %v6017, 2147483648
        %v6397 = vor.u32 1.1754944e-38, %v6396
        %v6398 = vsel %vm6395, %v6397, %v6393
        %v6399 = vmul.f32 1.0, %v6398
        %v6400 = vrcp.pop %v6018
        %v6401 = vmul.f32 %v6018, %v6400
        %v6402 = vsub.f32 1.0, %v6401
        %v6403 = vmul.f32 %v6400, %v6402
        %v6404 = vadd.f32 %v6400, %v6403
        %vm6405 = vweird.f32 %v6018
        %vm6406 = vweird.f32 %v6400
        %vm6407 = vmor %vm6405, %vm6406
        %v6408 = vsel %vm6407, %v6400, %v6404
        %v6409 = vand.u32 2147483647, %v6018
        %vm6410 = vcmp.eq.f32.partialorder %v6409, 8.507059e+37
        %v6411 = vand.u32 %v6018, 2147483648
        %v6412 = vor.u32 1.1754944e-38, %v6411
        %v6413 = vsel %vm6410, %v6412, %v6408
        %v6414 = vmul.f32 1.0, %v6413
        %v6415 = vrcp.pop %v6019
        %v6416 = vmul.f32 %v6019, %v6415
        %v6417 = vsub.f32 1.0, %v6416
        %v6418 = vmul.f32 %v6415, %v6417
        %v6419 = vadd.f32 %v6415, %v6418
        %vm6420 = vweird.f32 %v6019
        %vm6421 = vweird.f32 %v6415
        %vm6422 = vmor %vm6420, %vm6421
        %v6423 = vsel %vm6422, %v6415, %v6419
        %v6424 = vand.u32 2147483647, %v6019
        %vm6425 = vcmp.eq.f32.partialorder %v6424, 8.507059e+37
        %v6426 = vand.u32 %v6019, 2147483648
        %v6427 = vor.u32 1.1754944e-38, %v6426
        %v6428 = vsel %vm6425, %v6427, %v6423
        %v6429 = vmul.f32 1.0, %v6428
        %v6430 = vrcp.pop %v6020
        %v6431 = vmul.f32 %v6020, %v6430
        %v6432 = vsub.f32 1.0, %v6431
        %v6433 = vmul.f32 %v6430, %v6432
        %v6434 = vadd.f32 %v6430, %v6433
        %vm6435 = vweird.f32 %v6020
        %vm6436 = vweird.f32 %v6430
        %vm6437 = vmor %vm6435, %vm6436
        %v6438 = vsel %vm6437, %v6430, %v6434
        %v6439 = vand.u32 2147483647, %v6020
        %vm6440 = vcmp.eq.f32.partialorder %v6439, 8.507059e+37
        %v6441 = vand.u32 %v6020, 2147483648
        %v6442 = vor.u32 1.1754944e-38, %v6441
        %v6443 = vsel %vm6440, %v6442, %v6438
        %v6444 = vmul.f32 1.0, %v6443
        %v6445 = vrcp.pop %v6021
        %v6446 = vmul.f32 %v6021, %v6445
        %v6447 = vsub.f32 1.0, %v6446
        %v6448 = vmul.f32 %v6445, %v6447
        %v6449 = vadd.f32 %v6445, %v6448
        %vm6450 = vweird.f32 %v6021
        %vm6451 = vweird.f32 %v6445
        %vm6452 = vmor %vm6450, %vm6451
        %v6453 = vsel %vm6452, %v6445, %v6449
        %v6454 = vand.u32 2147483647, %v6021
        %vm6455 = vcmp.eq.f32.partialorder %v6454, 8.507059e+37
        %v6456 = vand.u32 %v6021, 2147483648
        %v6457 = vor.u32 1.1754944e-38, %v6456
        %v6458 = vsel %vm6455, %v6457, %v6453
        %v6459 = vmul.f32 1.0, %v6458
        %v6460 = vrcp.pop %v6022
        %v6461 = vmul.f32 %v6022, %v6460
        %v6462 = vsub.f32 1.0, %v6461
        %v6463 = vmul.f32 %v6460, %v6462
        %v6464 = vadd.f32 %v6460, %v6463
        %vm6465 = vweird.f32 %v6022
        %vm6466 = vweird.f32 %v6460
        %vm6467 = vmor %vm6465, %vm6466
        %v6468 = vsel %vm6467, %v6460, %v6464
        %v6469 = vand.u32 2147483647, %v6022
        %vm6470 = vcmp.eq.f32.partialorder %v6469, 8.507059e+37
        %v6471 = vand.u32 %v6022, 2147483648
        %v6472 = vor.u32 1.1754944e-38, %v6471
        %v6473 = vsel %vm6470, %v6472, %v6468
        %v6474 = vmul.f32 1.0, %v6473
        %v6475 = vrcp.pop %v6023
        %v6476 = vmul.f32 %v6023, %v6475
        %v6477 = vsub.f32 1.0, %v6476
        %v6478 = vmul.f32 %v6475, %v6477
        %v6479 = vadd.f32 %v6475, %v6478
        %vm6480 = vweird.f32 %v6023
        %vm6481 = vweird.f32 %v6475
        %vm6482 = vmor %vm6480, %vm6481
        %v6483 = vsel %vm6482, %v6475, %v6479
        %v6484 = vand.u32 2147483647, %v6023
        %vm6485 = vcmp.eq.f32.partialorder %v6484, 8.507059e+37
        %v6486 = vand.u32 %v6023, 2147483648
        %v6487 = vor.u32 1.1754944e-38, %v6486
        %v6488 = vsel %vm6485, %v6487, %v6483
        %v6489 = vmul.f32 1.0, %v6488
        %v6490 = vrcp.pop %v6024
        %v6491 = vmul.f32 %v6024, %v6490
        %v6492 = vsub.f32 1.0, %v6491
        %v6493 = vmul.f32 %v6490, %v6492
        %v6494 = vadd.f32 %v6490, %v6493
        %vm6495 = vweird.f32 %v6024
        %vm6496 = vweird.f32 %v6490
        %vm6497 = vmor %vm6495, %vm6496
        %v6498 = vsel %vm6497, %v6490, %v6494
        %v6499 = vand.u32 2147483647, %v6024
        %vm6500 = vcmp.eq.f32.partialorder %v6499, 8.507059e+37
        %v6501 = vand.u32 %v6024, 2147483648
        %v6502 = vor.u32 1.1754944e-38, %v6501
        %v6503 = vsel %vm6500, %v6502, %v6498
        %v6504 = vmul.f32 1.0, %v6503
        %v6505 = vmul.f32 %v5865, %v6039
        %v6506 = vmul.f32 %v5866, %v6054
        %v6507 = vmul.f32 %v5867, %v6069
        %v6508 = vmul.f32 %v5868, %v6084
        %v6509 = vmul.f32 %v5869, %v6099
        %v6510 = vmul.f32 %v5870, %v6114
        %v6511 = vmul.f32 %v5871, %v6129
        %v6512 = vmul.f32 %v5872, %v6144
        %v6513 = vmul.f32 %v5873, %v6159
        %v6514 = vmul.f32 %v5874, %v6174
        %v6515 = vmul.f32 %v5875, %v6189
        %v6516 = vmul.f32 %v5876, %v6204
        %v6517 = vmul.f32 %v5877, %v6219
        %v6518 = vmul.f32 %v5878, %v6234
        %v6519 = vmul.f32 %v5879, %v6249
        %v6520 = vmul.f32 %v5880, %v6264
        %v6521 = vmul.f32 %v5881, %v6279
        %v6522 = vmul.f32 %v5882, %v6294
        %v6523 = vmul.f32 %v5883, %v6309
        %v6524 = vmul.f32 %v5884, %v6324
        %v6525 = vmul.f32 %v5885, %v6339
        %v6526 = vmul.f32 %v5886, %v6354
        %v6527 = vmul.f32 %v5887, %v6369
        %v6528 = vmul.f32 %v5888, %v6384
        %v6529 = vmul.f32 %v5889, %v6399
        %v6530 = vmul.f32 %v5890, %v6414
        %v6531 = vmul.f32 %v5891, %v6429
        %v6532 = vmul.f32 %v5892, %v6444
        %v6533 = vmul.f32 %v5893, %v6459
        %v6534 = vmul.f32 %v5894, %v6474
        %v6535 = vmul.f32 %v5895, %v6489
        %v6536 = vmul.f32 %v5896, %v6504
        %6537 = vst.msk [vmem:[%s400] sm:$0xff] %vm913, %v6505
        %6538 = vst.msk [vmem:[%s400 + $0x8] sm:$0xff] %vm913, %v6506
        %6539 = vst.msk [vmem:[%s400 + $0x10] sm:$0xff] %vm913, %v6507
        %6540 = vst.msk [vmem:[%s400 + $0x18] sm:$0xff] %vm913, %v6508
        %6541 = vst.msk [vmem:[%s400 + $0x20] sm:$0xff] %vm913, %v6509
        %6542 = vst.msk [vmem:[%s400 + $0x28] sm:$0xff] %vm913, %v6510
        %6543 = vst.msk [vmem:[%s400 + $0x30] sm:$0xff] %vm913, %v6511
        %6544 = vst.msk [vmem:[%s400 + $0x38] sm:$0xff] %vm913, %v6512
        %6545 = vst.msk [vmem:[%s400 + $0x40] sm:$0xff] %vm913, %v6513
        %6546 = vst.msk [vmem:[%s400 + $0x48] sm:$0xff] %vm913, %v6514
        %6547 = vst.msk [vmem:[%s400 + $0x50] sm:$0xff] %vm913, %v6515
        %6548 = vst.msk [vmem:[%s400 + $0x58] sm:$0xff] %vm913, %v6516
        %6549 = vst.msk [vmem:[%s400 + $0x60] sm:$0xff] %vm913, %v6517
        %6550 = vst.msk [vmem:[%s400 + $0x68] sm:$0xff] %vm913, %v6518
        %6551 = vst.msk [vmem:[%s400 + $0x70] sm:$0xff] %vm913, %v6519
        %6552 = vst.msk [vmem:[%s400 + $0x78] sm:$0xff] %vm913, %v6520
        %6553 = vst.msk [vmem:[%s400 + $0x80] sm:$0xff] %vm913, %v6521
        %6554 = vst.msk [vmem:[%s400 + $0x88] sm:$0xff] %vm913, %v6522
        %6555 = vst.msk [vmem:[%s400 + $0x90] sm:$0xff] %vm913, %v6523
        %6556 = vst.msk [vmem:[%s400 + $0x98] sm:$0xff] %vm913, %v6524
        %6557 = vst.msk [vmem:[%s400 + $0xa0] sm:$0xff] %vm913, %v6525
        %6558 = vst.msk [vmem:[%s400 + $0xa8] sm:$0xff] %vm913, %v6526
        %6559 = vst.msk [vmem:[%s400 + $0xb0] sm:$0xff] %vm913, %v6527
        %6560 = vst.msk [vmem:[%s400 + $0xb8] sm:$0xff] %vm913, %v6528
        %6561 = vst.msk [vmem:[%s400 + $0xc0] sm:$0xff] %vm913, %v6529
        %6562 = vst.msk [vmem:[%s400 + $0xc8] sm:$0xff] %vm913, %v6530
        %6563 = vst.msk [vmem:[%s400 + $0xd0] sm:$0xff] %vm913, %v6531
        %6564 = vst.msk [vmem:[%s400 + $0xd8] sm:$0xff] %vm913, %v6532
        %6565 = vst.msk [vmem:[%s400 + $0xe0] sm:$0xff] %vm913, %v6533
        %6566 = vst.msk [vmem:[%s400 + $0xe8] sm:$0xff] %vm913, %v6534
        %6567 = vst.msk [vmem:[%s400 + $0xf0] sm:$0xff] %vm913, %v6535
        %6568 = vst.msk [vmem:[%s400 + $0xf8] sm:$0xff] %vm913, %v6536
        %6569 = vst.msk [vmem:[%s3530 + $0x1] sm:$0xff] %vm913, %v6505
        %6570 = vst.msk [vmem:[%s3530 + $0x9] sm:$0xff] %vm913, %v6506
        %6571 = vst.msk [vmem:[%s3530 + $0x19] sm:$0xff] %vm913, %v6507
        %6572 = vst.msk [vmem:[%s3530 + $0x21] sm:$0xff] %vm913, %v6508
        %6573 = vst.msk [vmem:[%s3530 + $0x31] sm:$0xff] %vm913, %v6509
        %6574 = vst.msk [vmem:[%s3530 + $0x39] sm:$0xff] %vm913, %v6510
        %6575 = vst.msk [vmem:[%s3530 + $0x49] sm:$0xff] %vm913, %v6511
        %6576 = vst.msk [vmem:[%s3530 + $0x51] sm:$0xff] %vm913, %v6512
        %6577 = vst.msk [vmem:[%s3530 + $0x61] sm:$0xff] %vm913, %v6513
        %6578 = vst.msk [vmem:[%s3530 + $0x69] sm:$0xff] %vm913, %v6514
        %6579 = vst.msk [vmem:[%s3530 + $0x79] sm:$0xff] %vm913, %v6515
        %6580 = vst.msk [vmem:[%s3530 + $0x81] sm:$0xff] %vm913, %v6516
        %6581 = vst.msk [vmem:[%s3530 + $0x91] sm:$0xff] %vm913, %v6517
        %6582 = vst.msk [vmem:[%s3530 + $0x99] sm:$0xff] %vm913, %v6518
        %6583 = vst.msk [vmem:[%s3530 + $0xa9] sm:$0xff] %vm913, %v6519
        %6584 = vst.msk [vmem:[%s3530 + $0xb1] sm:$0xff] %vm913, %v6520
        %6585 = vst.msk [vmem:[%s3530 + $0xc1] sm:$0xff] %vm913, %v6521
        %6586 = vst.msk [vmem:[%s3530 + $0xc9] sm:$0xff] %vm913, %v6522
        %6587 = vst.msk [vmem:[%s3530 + $0xd9] sm:$0xff] %vm913, %v6523
        %6588 = vst.msk [vmem:[%s3530 + $0xe1] sm:$0xff] %vm913, %v6524
        %6589 = vst.msk [vmem:[%s3530 + $0xf1] sm:$0xff] %vm913, %v6525
        %6590 = vst.msk [vmem:[%s3530 + $0xf9] sm:$0xff] %vm913, %v6526
        %6591 = vst.msk [vmem:[%s3530 + $0x109] sm:$0xff] %vm913, %v6527
        %6592 = vst.msk [vmem:[%s3530 + $0x111] sm:$0xff] %vm913, %v6528
        %6593 = vst.msk [vmem:[%s3530 + $0x121] sm:$0xff] %vm913, %v6529
        %6594 = vst.msk [vmem:[%s3530 + $0x129] sm:$0xff] %vm913, %v6530
        %6595 = vst.msk [vmem:[%s3530 + $0x139] sm:$0xff] %vm913, %v6531
        %6596 = vst.msk [vmem:[%s3530 + $0x141] sm:$0xff] %vm913, %v6532
        %6597 = vst.msk [vmem:[%s3530 + $0x151] sm:$0xff] %vm913, %v6533
        %6598 = vst.msk [vmem:[%s3530 + $0x159] sm:$0xff] %vm913, %v6534
        %6599 = vst.msk [vmem:[%s3530 + $0x169] sm:$0xff] %vm913, %v6535
        %6600 = vst.msk [vmem:[%s3530 + $0x171] sm:$0xff] %vm913, %v6536
        %s6601 = scalar_lea.vmem %s3530, 1 [#allocation3]
        %v6602 = vld [vmem:[%s6601] ss:$2 sm:$0xff]
        %s6603 = scalar_lea.vmem %s3530, 49 [#allocation3]
        %v6604 = vld [vmem:[%s6603] ss:$2 sm:$0xff]
        %s6605 = scalar_lea.vmem %s3530, 97 [#allocation3]
        %v6606 = vld [vmem:[%s6605] ss:$2 sm:$0xff]
        %s6607 = scalar_lea.vmem %s3530, 145 [#allocation3]
        %v6608 = vld [vmem:[%s6607] ss:$2 sm:$0xff]
        %s6609 = scalar_lea.vmem %s3530, 193 [#allocation3]
        %v6610 = vld [vmem:[%s6609] ss:$2 sm:$0xff]
        %s6611 = scalar_lea.vmem %s3530, 241 [#allocation3]
        %v6612 = vld [vmem:[%s6611] ss:$2 sm:$0xff]
        %s6613 = scalar_lea.vmem %s3530, 289 [#allocation3]
        %v6614 = vld [vmem:[%s6613] ss:$2 sm:$0xff]
        %s6615 = scalar_lea.vmem %s3530, 337 [#allocation3]
        %v6616 = vld [vmem:[%s6615] ss:$2 sm:$0xff]
        %s6617 = scalar_lea.vmem %s3530, 2 [#allocation3]
        %v6618 = vld [vmem:[%s6617] ss:$2 sm:$0xff]
        %s6619 = scalar_lea.vmem %s3530, 50 [#allocation3]
        %v6620 = vld [vmem:[%s6619] ss:$2 sm:$0xff]
        %s6621 = scalar_lea.vmem %s3530, 98 [#allocation3]
        %v6622 = vld [vmem:[%s6621] ss:$2 sm:$0xff]
        %s6623 = scalar_lea.vmem %s3530, 146 [#allocation3]
        %v6624 = vld [vmem:[%s6623] ss:$2 sm:$0xff]
        %s6625 = scalar_lea.vmem %s3530, 194 [#allocation3]
        %v6626 = vld [vmem:[%s6625] ss:$2 sm:$0xff]
        %s6627 = scalar_lea.vmem %s3530, 242 [#allocation3]
        %v6628 = vld [vmem:[%s6627] ss:$2 sm:$0xff]
        %s6629 = scalar_lea.vmem %s3530, 290 [#allocation3]
        %v6630 = vld [vmem:[%s6629] ss:$2 sm:$0xff]
        %s6631 = scalar_lea.vmem %s3530, 338 [#allocation3]
        %v6632 = vld [vmem:[%s6631] ss:$2 sm:$0xff]
        %s6633 = scalar_lea.vmem %s4841, 1 [#allocation3]
        %v6634 = vld [vmem:[%s6633] ss:$2 sm:$0xff]
        %s6635 = scalar_lea.vmem %s4841, 49 [#allocation3]
        %v6636 = vld [vmem:[%s6635] ss:$2 sm:$0xff]
        %s6637 = scalar_lea.vmem %s4841, 97 [#allocation3]
        %v6638 = vld [vmem:[%s6637] ss:$2 sm:$0xff]
        %s6639 = scalar_lea.vmem %s4841, 145 [#allocation3]
        %v6640 = vld [vmem:[%s6639] ss:$2 sm:$0xff]
        %s6641 = scalar_lea.vmem %s4841, 193 [#allocation3]
        %v6642 = vld [vmem:[%s6641] ss:$2 sm:$0xff]
        %s6643 = scalar_lea.vmem %s4841, 241 [#allocation3]
        %v6644 = vld [vmem:[%s6643] ss:$2 sm:$0xff]
        %s6645 = scalar_lea.vmem %s4841, 289 [#allocation3]
        %v6646 = vld [vmem:[%s6645] ss:$2 sm:$0xff]
        %s6647 = scalar_lea.vmem %s4841, 337 [#allocation3]
        %v6648 = vld [vmem:[%s6647] ss:$2 sm:$0xff]
        %s6649 = scalar_lea.vmem %s4841, 2 [#allocation3]
        %v6650 = vld [vmem:[%s6649] ss:$2 sm:$0xff]
        %s6651 = scalar_lea.vmem %s4841, 50 [#allocation3]
        %v6652 = vld [vmem:[%s6651] ss:$2 sm:$0xff]
        %s6653 = scalar_lea.vmem %s4841, 98 [#allocation3]
        %v6654 = vld [vmem:[%s6653] ss:$2 sm:$0xff]
        %s6655 = scalar_lea.vmem %s4841, 146 [#allocation3]
        %v6656 = vld [vmem:[%s6655] ss:$2 sm:$0xff]
        %s6657 = scalar_lea.vmem %s4841, 194 [#allocation3]
        %v6658 = vld [vmem:[%s6657] ss:$2 sm:$0xff]
        %s6659 = scalar_lea.vmem %s4841, 242 [#allocation3]
        %v6660 = vld [vmem:[%s6659] ss:$2 sm:$0xff]
        %s6661 = scalar_lea.vmem %s4841, 290 [#allocation3]
        %v6662 = vld [vmem:[%s6661] ss:$2 sm:$0xff]
        %s6663 = scalar_lea.vmem %s4841, 338 [#allocation3]
        %v6664 = vld [vmem:[%s6663] ss:$2 sm:$0xff]
        %v6665 = vmax.f32 %v6602, %v6618
        %v6666 = vmax.f32 %v6604, %v6620
        %v6667 = vmax.f32 %v6606, %v6622
        %v6668 = vmax.f32 %v6608, %v6624
        %v6669 = vmax.f32 %v6610, %v6626
        %v6670 = vmax.f32 %v6612, %v6628
        %v6671 = vmax.f32 %v6614, %v6630
        %v6672 = vmax.f32 %v6616, %v6632
        %v6673 = vmax.f32 %v6634, %v6650
        %v6674 = vmax.f32 %v6636, %v6652
        %v6675 = vmax.f32 %v6638, %v6654
        %v6676 = vmax.f32 %v6640, %v6656
        %v6677 = vmax.f32 %v6642, %v6658
        %v6678 = vmax.f32 %v6644, %v6660
        %v6679 = vmax.f32 %v6646, %v6662
        %v6680 = vmax.f32 %v6648, %v6664
        %v6681 = vmax.f32 %v6665, %v6673
        %v6682 = vmax.f32 %v6666, %v6674
        %v6683 = vmax.f32 %v6667, %v6675
        %v6684 = vmax.f32 %v6668, %v6676
        %v6685 = vmax.f32 %v6669, %v6677
        %v6686 = vmax.f32 %v6670, %v6678
        %v6687 = vmax.f32 %v6671, %v6679
        %v6688 = vmax.f32 %v6672, %v6680
        %6689 = vst.msk [vmem:[%s407] sm:$0xff] %vm913, %v6681
        %6690 = vst.msk [vmem:[%s407 + $0x8] sm:$0xff] %vm913, %v6682
        %6691 = vst.msk [vmem:[%s407 + $0x10] sm:$0xff] %vm913, %v6683
        %6692 = vst.msk [vmem:[%s407 + $0x18] sm:$0xff] %vm913, %v6684
        %6693 = vst.msk [vmem:[%s407 + $0x20] sm:$0xff] %vm913, %v6685
        %6694 = vst.msk [vmem:[%s407 + $0x28] sm:$0xff] %vm913, %v6686
        %6695 = vst.msk [vmem:[%s407 + $0x30] sm:$0xff] %vm913, %v6687
        %6696 = vst.msk [vmem:[%s407 + $0x38] sm:$0xff] %vm913, %v6688
        %s6697 = sand.u32 %s253, 1
        %s6698 = scalar_lea.sflag [#allocation6], %s6697
        %s6699 = sand.u32 %s253, 1
        %s6700 = smul.addr %s6699, 256
        %s6701 = scalar_lea.vmem [#allocation7], %s6700
        %s6702 = sand.u32 %s279, 1
        %s6703 = scalar_lea.sflag [#allocation9], %s6702
        %s6704 = sand.u32 %s279, 1
        %s6705 = smul.addr %s6704, 64
        %s6706 = scalar_lea.vmem [#allocation8], %s6705
        // Predicated region
        $region65: #{tpu_custom_call.1} parent=59 // pred_check
          %p6707 = pneg %p263
        $region66: #{tpu_custom_call.1} parent=59 // pred_check_branch
          %6709 = sbr.rel (%p6707) target = $region68
        $region67: #{tpu_custom_call.1} parent=59 // pred_region
          %6711 = vsyncadd %s6698, 0
          %s6712 = smul.addr %s30, 32
          %s6713 = smul.addr %s6712, 8
          %s6714 = scalar_lea.hbm %s10, %s6713
          %s6715 = sshll.u32 %s6701, 4
          %s6716 = int_to_ptr.vmem [resolvable:$true] %s6715
          %s6717 = sshll.u32 %s6714, 4
          %s6718 = int_to_ptr.hbm [resolvable:$true] %s6717
          %6723 = dma.vmem_to_hbm [thread:$0]  %s6716, 4096, %s6718, %s6698, 128, 128, 8
        $region68: #{tpu_custom_call.1} parent=59 // pred_fallthru
          _
        // Predicated region
        $region69: #{tpu_custom_call.1} parent=59 // pred_check
          %p6724 = pneg %p289
        $region70: #{tpu_custom_call.1} parent=59 // pred_check_branch
          %6726 = sbr.rel (%p6724) target = $region72
        $region71: #{tpu_custom_call.1} parent=59 // pred_region
          %6728 = vsyncadd %s6703, 0
          %s6729 = smul.addr %s30, 8
          %s6730 = smul.addr %s6729, 8
          %s6731 = scalar_lea.hbm %s11, %s6730
          %s6732 = sshll.u32 %s6706, 4
          %s6733 = int_to_ptr.vmem [resolvable:$true] %s6732
          %s6734 = sshll.u32 %s6731, 4
          %s6735 = int_to_ptr.hbm [resolvable:$true] %s6734
          %6740 = dma.vmem_to_hbm [thread:$0]  %s6733, 1024, %s6735, %s6703, 128, 128, 8
        $region72: #{tpu_custom_call.1} parent=59 // pred_fallthru
          _
      $region60: #{tpu_custom_call.1} parent=5 // pred_fallthru
        _
      %p6741 = scmp.le.s32.totalorder 2, %s25
      // Predicated region
      $region73: #{tpu_custom_call.1} parent=5 // pred_check
        %p6742 = pneg %p6741
      $region74: #{tpu_custom_call.1} parent=5 // pred_check_branch
        %6744 = sbr.rel (%p6742) target = $region76
      $region75: #{tpu_custom_call.1} parent=5 // pred_region
        %s6745 = ssub.s32 %s25, 2
        // Predicated region
        $region77: #{tpu_custom_call.1} parent=75 // pred_check
          %p6746 = pneg %p269
        $region78: #{tpu_custom_call.1} parent=75 // pred_check_branch
          %6748 = sbr.rel (%p6746) target = $region80
        $region79: #{tpu_custom_call.1} parent=75 // pred_region
          %s6749 = sand.u32 %s254, 1
          %s6750 = scalar_lea.sflag [#allocation6], %s6749
          %s6751 = sand.u32 %s254, 1
          %s6752 = smul.addr %s6751, 256
          %s6753 = scalar_lea.vmem [#allocation7], %s6752
          %6755 = dma.done %s6750, 4096
        $region80: #{tpu_custom_call.1} parent=75 // pred_fallthru
          _
        // Predicated region
        $region81: #{tpu_custom_call.1} parent=75 // pred_check
          %p6756 = pneg %p295
        $region82: #{tpu_custom_call.1} parent=75 // pred_check_branch
          %6758 = sbr.rel (%p6756) target = $region84
        $region83: #{tpu_custom_call.1} parent=75 // pred_region
          %s6759 = sand.u32 %s280, 1
          %s6760 = scalar_lea.sflag [#allocation9], %s6759
          %s6761 = sand.u32 %s280, 1
          %s6762 = smul.addr %s6761, 64
          %s6763 = scalar_lea.vmem [#allocation8], %s6762
          %6765 = dma.done %s6760, 1024
        $region84: #{tpu_custom_call.1} parent=75 // pred_fallthru
          _
      $region76: #{tpu_custom_call.1} parent=5 // pred_fallthru
        _
    $region6: #{tpu_custom_call.1} parent=1 // loop_footer
      %s29 = sadd.s32 1, %s25
    $region7: #{tpu_custom_call.1} parent=1 // loop_footer_branch
      %24 = sbr.rel target = $region3
    $region8: #{tpu_custom_call.1} parent=1 // loop_exit
      _
    %6766 = vsyncpa [#allocation5], 1
    %s6767 = scalar_lea.sflag [#allocation5], 1
    %6768 = vsyncpa %s6767, 1
    %6769 = vsyncpa [#allocation6], 1
    %s6770 = scalar_lea.sflag [#allocation6], 1
    %6771 = vsyncpa %s6770, 1
    %6772 = vsyncpa [#allocation9], 1
    %s6773 = scalar_lea.sflag [#allocation9], 1
    %6774 = vsyncpa %s6773, 1

</llo_original>
